<compile_context>
chip_gen: v7x
topology: tpu7x:2x2x1
jax: 0.10.0
libtpu: 0.0.40
codegen_flags: <defaults>
</compile_context>

<pallas_src>
import functools

import jax
import jax.numpy as jnp
from jax.experimental import pallas as pl
from jax.experimental.pallas import tpu as pltpu

KSIZE = 5  # conv kernel size (padding = 2)


# ---------------------------------------------------------------------------
# Kernel 1/2: conv + BN(eval) + ReLU + 2x2 maxpool, a small batch tile per grid step
# ---------------------------------------------------------------------------

def _conv_bn_relu_pool_kernel(x_ref, w_ref, shift_ref, o_ref, *, cout):
    """x_ref    : (TB, K, rows)      bf16 transposed im2col taps, K = 4*25*cin,
                  rows = pooled H*W, column-group q = (qh*2+qw) pool parity.
       w_ref    : (4*cout, K)        bf16 conv weight (BN scale folded), row-group q' = parity.
       shift_ref: (cout, 1)          f32  per-channel shift (conv bias + BN shift).
       o_ref    : (TB, cout, rows)   bf16 pooled output, NCHW flatten order per image."""
    w = w_ref[...]
    shift = shift_ref[...]
    for b in range(x_ref.shape[0]):          # static unroll over the batch tile
        # One MXU matmul yields the conv output for all 4 positions of every 2x2 pool window,
        # stacked along sublanes in 4 cout-sized (8-aligned) row blocks.
        y = jnp.dot(w, x_ref[b], preferred_element_type=jnp.float32)   # (4*cout, rows)
        # 2x2 max-pool == max over the 4 parity row-blocks (lane-dense, sublane-aligned slices).
        p = jnp.maximum(jnp.maximum(y[:cout], y[cout:2 * cout]),
                        jnp.maximum(y[2 * cout:3 * cout], y[3 * cout:]))
        # Folded conv-bias + BN shift, then ReLU (both commute with the max-pool).
        o_ref[b] = jnp.maximum(p + shift, 0.0).astype(o_ref.dtype)


def _conv_block(x_taps, wmat, shift, *, cout):
    n, k, rows = x_taps.shape
    # >= 2 grid steps whenever possible (both v7x TensorCores get work); tile capped at 4 images so
    # the per-step footprint (taps x2 buffers + f32 y + out) stays < ~10 MB, under every VMEM default.
    tb = max(1, min(4, pl.cdiv(n, 2)))
    kernel = functools.partial(_conv_bn_relu_pool_kernel, cout=cout)
    return pl.pallas_call(
        kernel,
        out_shape=jax.ShapeDtypeStruct((n, cout, rows), jnp.bfloat16),
        grid_spec=pltpu.PrefetchScalarGridSpec(
            num_scalar_prefetch=0,
            grid=(pl.cdiv(n, tb),),
            in_specs=[
                pl.BlockSpec((tb, k, rows), lambda i: (i, 0, 0)),
                pl.BlockSpec(wmat.shape, lambda i: (0, 0)),     # weights stay resident
                pl.BlockSpec(shift.shape, lambda i: (0, 0)),
            ],
            out_specs=pl.BlockSpec((tb, cout, rows), lambda i: (i, 0, 0)),
        ),
        compiler_params=pltpu.CompilerParams(
            dimension_semantics=("parallel",),
            vmem_limit_bytes=32 * 1024 * 1024,   # <= scoped default on v6e/v7x, raises v5e's 16 MiB
        ),
    )(x_taps, wmat, shift)


def _pool_tap_stack(x_nchw, pho, pwo):
    """(N,C,H,W) -> (N, 4*25*C, pho*pwo) bf16 transposed im2col of the pooled 5x5 'same' conv:
       out[n, ((qh*2+qw)*25 + dh*5 + dw)*C + c, ph*pwo + pw] = x_zeropad[n, c, 2*ph+qh+dh, 2*pw+qw+dw]
       where x_zeropad is the 2-pixel zero-padded input (exactly the conv's padding)."""
    n, c, h, w = x_nchw.shape
    assert h == 2 * pho and w == 2 * pwo, "kernel assumes even H, W (80x60 / 40x30 for this net)"
    xp = jnp.pad(x_nchw, ((0, 0), (0, 0), (2, 2), (2, 2)))
    taps = [xp[:, :, qh + dh: qh + dh + 2 * pho: 2, qw + dw: qw + dw + 2 * pwo: 2]
            for qh in (0, 1) for qw in (0, 1)
            for dh in range(KSIZE) for dw in range(KSIZE)]
    xt = jnp.stack(taps, axis=1)                          # (N, 100, C, pho, pwo)
    return xt.reshape(n, 4 * KSIZE * KSIZE * c, pho * pwo).astype(jnp.bfloat16)


# ---------------------------------------------------------------------------
# Kernel 3: fused fc1 + ReLU + fc2 + ReLU + fc3 (t column handled separately)
# ---------------------------------------------------------------------------

def _fc_stack_kernel(feat_ref, t_ref, w1_ref, wt_ref, b1_ref,
                     w2_ref, b2_ref, w3_ref, b3_ref, o_ref):
    h = jnp.dot(feat_ref[...], w1_ref[...], preferred_element_type=jnp.float32)
    h = jnp.maximum(h + t_ref[...] * wt_ref[...] + b1_ref[...], 0.0)   # fc1's t column, no concat
    h = jnp.dot(h.astype(jnp.bfloat16), w2_ref[...],
                preferred_element_type=jnp.float32) + b2_ref[...]
    h = jnp.maximum(h, 0.0)
    h = jnp.dot(h.astype(jnp.bfloat16), w3_ref[...],
                preferred_element_type=jnp.float32) + b3_ref[...]
    o_ref[...] = h.astype(o_ref.dtype)


def _fc_stack(feat, t, p):
    n, d = feat.shape
    tb = n if n <= 1024 else 512                     # 512 is 8-aligned; boundary blocks padded
    args = (feat, t, p["fc1_w"], p["fc1_wt"], p["fc1_b"],
            p["fc2_w"], p["fc2_b"], p["fc3_w"], p["fc3_b"])

    def _resident(a):
        return pl.BlockSpec(a.shape, lambda i, _nd=a.ndim: (0,) * _nd)

    return pl.pallas_call(
        _fc_stack_kernel,
        out_shape=jax.ShapeDtypeStruct((n, 2), jnp.float32),
        grid_spec=pltpu.PrefetchScalarGridSpec(
            num_scalar_prefetch=0,
            grid=(pl.cdiv(n, tb),),
            in_specs=[pl.BlockSpec((tb, d), lambda i: (i, 0)),
                      pl.BlockSpec((tb, 1), lambda i: (i, 0))]
                     + [_resident(a) for a in args[2:]],
            out_specs=pl.BlockSpec((tb, 2), lambda i: (i, 0)),
        ),
        compiler_params=pltpu.CompilerParams(
            dimension_semantics=("parallel",),
            vmem_limit_bytes=32 * 1024 * 1024,
        ),
    )(*args)


# ---------------------------------------------------------------------------
# Parameter preparation (done once, outside the jitted forward)
# ---------------------------------------------------------------------------

def _fold_conv_bn(w_oihw, bias, gamma, beta, mean, var, eps=1e-5):
    """BN(eval) scale folded into the conv weight, laid out for the pooled-conv matmul:
       wmat[q'*cout + o, (q*25 + dh*5 + dw)*cin + c] = delta(q, q') * w[o,c,dh,dw] * s[o]
       shift[o] = (bias[o] - mean[o]) * s[o] + beta[o],  s = gamma / sqrt(var + eps)."""
    cout, cin, kh, kw = w_oihw.shape
    s = gamma / jnp.sqrt(var + eps)
    shift = ((bias - mean) * s + beta).reshape(cout, 1).astype(jnp.float32)
    base = jnp.transpose(w_oihw * s[:, None, None, None], (0, 2, 3, 1))   # (cout, kh, kw, cin)
    base = base.reshape(cout, kh * kw * cin)
    wz = jnp.zeros((4, cout, 4, kh * kw * cin), jnp.float32)
    for q in range(4):
        wz = wz.at[q, :, q, :].set(base)
    wmat = wz.reshape(4 * cout, 4 * kh * kw * cin).astype(jnp.bfloat16)
    return wmat, shift


def prepare_params(raw, eps=1e-5):
    """PyTorch-layout params -> kernel-ready layout (BN folded, weights pre-transposed, bf16)."""
    c1_w, c1_shift = _fold_conv_bn(raw["w1"], raw["b1"], raw["g1"], raw["be1"],
                                   raw["m1"], raw["v1"], eps)
    c2_w, c2_shift = _fold_conv_bn(raw["w2"], raw["b2"], raw["g2"], raw["be2"],
                                   raw["m2"], raw["v2"], eps)
    fc1_w = raw["fc1_w"].astype(jnp.float32)                         # (32, 9601), PyTorch (out,in)
    return {
        "c1_w": c1_w, "c1_shift": c1_shift,
        "c2_w": c2_w, "c2_shift": c2_shift,
        # The conv kernels emit features already in PyTorch's NCHW flatten order, so fc1's conv
        # columns are used as-is (just transposed to (in, out) and cast to bf16).
        "fc1_w": jnp.transpose(fc1_w[:, :9600]).astype(jnp.bfloat16),   # (9600, 32)
        "fc1_wt": fc1_w[:, 9600].reshape(1, 32),                        # weight column for t (f32)
        "fc1_b": raw["fc1_b"].reshape(1, 32).astype(jnp.float32),
        "fc2_w": jnp.transpose(raw["fc2_w"]).astype(jnp.bfloat16),      # (32, 32) (in, out)
        "fc2_b": raw["fc2_b"].reshape(1, 32).astype(jnp.float32),
        "fc3_w": jnp.transpose(raw["fc3_w"]).astype(jnp.bfloat16),      # (32, 2)  (in, out)
        "fc3_b": raw["fc3_b"].reshape(1, 2).astype(jnp.float32),
    }


# ---------------------------------------------------------------------------
# ConvNet forward
# ---------------------------------------------------------------------------

def convnet_forward(params, x_nchw, t):
    n, _, h, w = x_nchw.shape
    assert h % 4 == 0 and w % 4 == 0

    xt1 = _pool_tap_stack(x_nchw.astype(jnp.float32), h // 2, w // 2)   # (N, 200, 1200) bf16
    a1 = _conv_block(xt1, params["c1_w"], params["c1_shift"], cout=16)  # (N, 16, 1200)   bf16

    xt2 = _pool_tap_stack(a1.reshape(n, 16, h // 2, w // 2), h // 4, w // 4)   # (N, 1600, 300)
    a2 = _conv_block(xt2, params["c2_w"], params["c2_shift"], cout=32)  # (N, 32, 300)    bf16

    feat = a2.reshape(n, -1)            # NCHW flatten == PyTorch's flatten order, already bf16
    return _fc_stack(feat, t.reshape(n, 1).astype(jnp.float32), params)


def init_params(key):
    ks = jax.random.split(key, 8)
    return {
        # cnn1: Conv2d(2, 16, k=5) + BatchNorm2d(16)
        "w1": jax.random.normal(ks[0], (16, 2, 5, 5), jnp.float32) * 0.1,
        "b1": jax.random.normal(ks[1], (16,), jnp.float32) * 0.1,
        "g1": jnp.ones((16,), jnp.float32), "be1": jnp.zeros((16,), jnp.float32),
        "m1": jnp.zeros((16,), jnp.float32), "v1": jnp.ones((16,), jnp.float32),
        # cnn2: Conv2d(16, 32, k=5) + BatchNorm2d(32)
        "w2": jax.random.normal(ks[2], (32, 16, 5, 5), jnp.float32) * 0.05,
        "b2": jax.random.normal(ks[3], (32,), jnp.float32) * 0.1,
        "g2": jnp.ones((32,), jnp.float32), "be2": jnp.zeros((32,), jnp.float32),
        "m2": jnp.zeros((32,), jnp.float32), "v2": jnp.ones((32,), jnp.float32),
        # fc layers (PyTorch (out, in) layout)
        "fc1_w": jax.random.normal(ks[4], (32, 9601), jnp.float32) * 0.01,
        "fc1_b": jnp.zeros((32,), jnp.float32),
        "fc2_w": jax.random.normal(ks[5], (32, 32), jnp.float32) * 0.1,
        "fc2_b": jnp.zeros((32,), jnp.float32),
        "fc3_w": jax.random.normal(ks[6], (2, 32), jnp.float32) * 0.1,
        "fc3_b": jnp.zeros((2,), jnp.float32),
    }


if __name__ == "__main__":
    key = jax.random.PRNGKey(0)
    k_x, k_t, k_p = jax.random.split(key, 3)

    # Spatial size chosen so the flatten matches fc1's in_features: 32*(80/4)*(60/4) + 1 = 9601.
    N = 2
    x = jax.random.normal(k_x, (N, 2, 80, 60), jnp.float32)   # NCHW
    t = jax.random.normal(k_t, (N, 1), jnp.float32)

    raw = init_params(k_p)
    params = prepare_params(raw)      # BN folding / weight re-layout done once, outside the forward

    fwd = jax.jit(convnet_forward)
    out = jax.block_until_ready(fwd(params, x, t))

    assert out.shape == (N, 2) and out.dtype == jnp.float32
    assert bool(jnp.all(jnp.isfinite(out)))
    print("KERNEL_OK")
</pallas_src>

<mosaic_0001>
module attributes {stable_mosaic.version = 11 : i64} {
  func.func @_conv_bn_relu_pool_kernel(%arg0: i32, %arg1: memref<1x200x1200xbf16, #tpu.memory_space<vmem>>, %arg2: memref<64x200xbf16, #tpu.memory_space<vmem>>, %arg3: memref<16x1xf32, #tpu.memory_space<vmem>>, %arg4: memref<1x16x1200xbf16, #tpu.memory_space<vmem>>) attributes {dimension_semantics = [#tpu.dimension_semantics<parallel>], iteration_bounds = array<i64: 2>, scalar_prefetch = 0 : i64, scratch_operands = 0 : i64, tpu.core_type = #tpu.core_type<tc>, window_params = [{transform_indices = @transform_0, window_bounds = array<i64: 1, 200, 1200>}, {pipeline_mode = #tpu.pipeline_mode<synchronous>, transform_indices = @transform_1, window_bounds = array<i64: 64, 200>}, {pipeline_mode = #tpu.pipeline_mode<synchronous>, transform_indices = @transform_2, window_bounds = array<i64: 16, 1>}, {transform_indices = @transform_3, window_bounds = array<i64: 1, 16, 1200>}]} {
    %c0 = arith.constant 0 : index
    %c0_0 = arith.constant 0 : index
    %0 = vector.load %arg2[%c0, %c0_0] : memref<64x200xbf16, #tpu.memory_space<vmem>>, vector<64x200xbf16>
    %c0_1 = arith.constant 0 : index
    %c0_2 = arith.constant 0 : index
    %1 = vector.load %arg3[%c0_1, %c0_2] : memref<16x1xf32, #tpu.memory_space<vmem>>, vector<16x1xf32>
    %c0_3 = arith.constant 0 : index
    %c0_4 = arith.constant 0 : index
    %c0_5 = arith.constant 0 : index
    %2 = vector.load %arg1[%c0_3, %c0_4, %c0_5] : memref<1x200x1200xbf16, #tpu.memory_space<vmem>>, vector<1x200x1200xbf16>
    %3 = vector.shape_cast %2 : vector<1x200x1200xbf16> to vector<200x1200xbf16>
    %cst = arith.constant dense<0.000000e+00> : vector<64x1200xf32>
    %4 = tpu.matmul %0, %3, %cst {dimension_numbers = #tpu.dot_dimension_numbers<[1], [0], [0], [1], [0, 0, 1, 1], [], []>} : vector<64x200xbf16>, vector<200x1200xbf16>, vector<64x1200xf32> -> vector<64x1200xf32>
    %5 = vector.extract_strided_slice %4 {offsets = [0, 0], sizes = [16, 1200], strides = [1, 1]} : vector<64x1200xf32> to vector<16x1200xf32>
    %6 = vector.extract_strided_slice %4 {offsets = [16, 0], sizes = [16, 1200], strides = [1, 1]} : vector<64x1200xf32> to vector<16x1200xf32>
    %7 = arith.maximumf %5, %6 : vector<16x1200xf32>
    %8 = vector.extract_strided_slice %4 {offsets = [32, 0], sizes = [16, 1200], strides = [1, 1]} : vector<64x1200xf32> to vector<16x1200xf32>
    %9 = vector.extract_strided_slice %4 {offsets = [48, 0], sizes = [16, 1200], strides = [1, 1]} : vector<64x1200xf32> to vector<16x1200xf32>
    %10 = arith.maximumf %8, %9 : vector<16x1200xf32>
    %11 = arith.maximumf %7, %10 : vector<16x1200xf32>
    %12 = vector.broadcast %1 : vector<16x1xf32> to vector<16x1200xf32>
    %13 = arith.addf %11, %12 : vector<16x1200xf32>
    %cst_6 = arith.constant 0.000000e+00 : f32
    %14 = vector.broadcast %cst_6 : f32 to vector<16x1200xf32>
    %15 = arith.maximumf %13, %14 : vector<16x1200xf32>
    %16 = arith.truncf %15 : vector<16x1200xf32> to vector<16x1200xbf16>
    %c0_7 = arith.constant 0 : index
    %c0_8 = arith.constant 0 : index
    %c0_9 = arith.constant 0 : index
    %17 = vector.load %arg4[%c0_7, %c0_8, %c0_9] : memref<1x16x1200xbf16, #tpu.memory_space<vmem>>, vector<1x16x1200xbf16>
    %18 = vector.shape_cast %17 : vector<1x16x1200xbf16> to vector<16x1200xbf16>
    %19 = vector.shape_cast %16 : vector<16x1200xbf16> to vector<1x16x1200xbf16>
    tpu.vector_store %arg4[%c0_7, %c0_8, %c0_9], %19 {strides = array<i32>} : memref<1x16x1200xbf16, #tpu.memory_space<vmem>>, vector<1x16x1200xbf16>,
    return
  }
  func.func @transform_0(%arg0: i32) -> (i32, i32, i32) {
    %c0_i32 = arith.constant 0 : i32
    %c0_i32_0 = arith.constant 0 : i32
    %c0_i32_1 = arith.constant 0 : i32
    return %arg0, %c0_i32, %c0_i32_0 : i32, i32, i32
  }
  func.func @transform_1(%arg0: i32) -> (i32, i32) {
    %c0_i32 = arith.constant 0 : i32
    %c0_i32_0 = arith.constant 0 : i32
    %c0_i32_1 = arith.constant 0 : i32
    return %c0_i32, %c0_i32_0 : i32, i32
  }
  func.func @transform_2(%arg0: i32) -> (i32, i32) {
    %c0_i32 = arith.constant 0 : i32
    %c0_i32_0 = arith.constant 0 : i32
    %c0_i32_1 = arith.constant 0 : i32
    return %c0_i32, %c0_i32_0 : i32, i32
  }
  func.func @transform_3(%arg0: i32) -> (i32, i32, i32) {
    %c0_i32 = arith.constant 0 : i32
    %c0_i32_0 = arith.constant 0 : i32
    %c0_i32_1 = arith.constant 0 : i32
    return %arg0, %c0_i32, %c0_i32_0 : i32, i32, i32
  }
}

module attributes {stable_mosaic.version = 11 : i64} {
  func.func @_conv_bn_relu_pool_kernel(%arg0: i32, %arg1: memref<1x1600x300xbf16, #tpu.memory_space<vmem>>, %arg2: memref<128x1600xbf16, #tpu.memory_space<vmem>>, %arg3: memref<32x1xf32, #tpu.memory_space<vmem>>, %arg4: memref<1x32x300xbf16, #tpu.memory_space<vmem>>) attributes {dimension_semantics = [#tpu.dimension_semantics<parallel>], iteration_bounds = array<i64: 2>, scalar_prefetch = 0 : i64, scratch_operands = 0 : i64, tpu.core_type = #tpu.core_type<tc>, window_params = [{transform_indices = @transform_0, window_bounds = array<i64: 1, 1600, 300>}, {pipeline_mode = #tpu.pipeline_mode<synchronous>, transform_indices = @transform_1, window_bounds = array<i64: 128, 1600>}, {pipeline_mode = #tpu.pipeline_mode<synchronous>, transform_indices = @transform_2, window_bounds = array<i64: 32, 1>}, {transform_indices = @transform_3, window_bounds = array<i64: 1, 32, 300>}]} {
    %c0 = arith.constant 0 : index
    %c0_0 = arith.constant 0 : index
    %0 = vector.load %arg2[%c0, %c0_0] : memref<128x1600xbf16, #tpu.memory_space<vmem>>, vector<128x1600xbf16>
    %c0_1 = arith.constant 0 : index
    %c0_2 = arith.constant 0 : index
    %1 = vector.load %arg3[%c0_1, %c0_2] : memref<32x1xf32, #tpu.memory_space<vmem>>, vector<32x1xf32>
    %c0_3 = arith.constant 0 : index
    %c0_4 = arith.constant 0 : index
    %c0_5 = arith.constant 0 : index
    %2 = vector.load %arg1[%c0_3, %c0_4, %c0_5] : memref<1x1600x300xbf16, #tpu.memory_space<vmem>>, vector<1x1600x300xbf16>
    %3 = vector.shape_cast %2 : vector<1x1600x300xbf16> to vector<1600x300xbf16>
    %cst = arith.constant dense<0.000000e+00> : vector<128x300xf32>
    %4 = tpu.matmul %0, %3, %cst {dimension_numbers = #tpu.dot_dimension_numbers<[1], [0], [0], [1], [0, 0, 1, 1], [], []>} : vector<128x1600xbf16>, vector<1600x300xbf16>, vector<128x300xf32> -> vector<128x300xf32>
    %5 = vector.extract_strided_slice %4 {offsets = [0, 0], sizes = [32, 300], strides = [1, 1]} : vector<128x300xf32> to vector<32x300xf32>
    %6 = vector.extract_strided_slice %4 {offsets = [32, 0], sizes = [32, 300], strides = [1, 1]} : vector<128x300xf32> to vector<32x300xf32>
    %7 = arith.maximumf %5, %6 : vector<32x300xf32>
    %8 = vector.extract_strided_slice %4 {offsets = [64, 0], sizes = [32, 300], strides = [1, 1]} : vector<128x300xf32> to vector<32x300xf32>
    %9 = vector.extract_strided_slice %4 {offsets = [96, 0], sizes = [32, 300], strides = [1, 1]} : vector<128x300xf32> to vector<32x300xf32>
    %10 = arith.maximumf %8, %9 : vector<32x300xf32>
    %11 = arith.maximumf %7, %10 : vector<32x300xf32>
    %12 = vector.broadcast %1 : vector<32x1xf32> to vector<32x300xf32>
    %13 = arith.addf %11, %12 : vector<32x300xf32>
    %cst_6 = arith.constant 0.000000e+00 : f32
    %14 = vector.broadcast %cst_6 : f32 to vector<32x300xf32>
    %15 = arith.maximumf %13, %14 : vector<32x300xf32>
    %16 = arith.truncf %15 : vector<32x300xf32> to vector<32x300xbf16>
    %c0_7 = arith.constant 0 : index
    %c0_8 = arith.constant 0 : index
    %c0_9 = arith.constant 0 : index
    %17 = vector.load %arg4[%c0_7, %c0_8, %c0_9] : memref<1x32x300xbf16, #tpu.memory_space<vmem>>, vector<1x32x300xbf16>
    %18 = vector.shape_cast %17 : vector<1x32x300xbf16> to vector<32x300xbf16>
    %19 = vector.shape_cast %16 : vector<32x300xbf16> to vector<1x32x300xbf16>
    tpu.vector_store %arg4[%c0_7, %c0_8, %c0_9], %19 {strides = array<i32>} : memref<1x32x300xbf16, #tpu.memory_space<vmem>>, vector<1x32x300xbf16>,
    return
  }
  func.func @transform_0(%arg0: i32) -> (i32, i32, i32) {
    %c0_i32 = arith.constant 0 : i32
    %c0_i32_0 = arith.constant 0 : i32
    %c0_i32_1 = arith.constant 0 : i32
    return %arg0, %c0_i32, %c0_i32_0 : i32, i32, i32
  }
  func.func @transform_1(%arg0: i32) -> (i32, i32) {
    %c0_i32 = arith.constant 0 : i32
    %c0_i32_0 = arith.constant 0 : i32
    %c0_i32_1 = arith.constant 0 : i32
    return %c0_i32, %c0_i32_0 : i32, i32
  }
  func.func @transform_2(%arg0: i32) -> (i32, i32) {
    %c0_i32 = arith.constant 0 : i32
    %c0_i32_0 = arith.constant 0 : i32
    %c0_i32_1 = arith.constant 0 : i32
    return %c0_i32, %c0_i32_0 : i32, i32
  }
  func.func @transform_3(%arg0: i32) -> (i32, i32, i32) {
    %c0_i32 = arith.constant 0 : i32
    %c0_i32_0 = arith.constant 0 : i32
    %c0_i32_1 = arith.constant 0 : i32
    return %arg0, %c0_i32, %c0_i32_0 : i32, i32, i32
  }
}

module attributes {stable_mosaic.version = 11 : i64} {
  func.func @_fc_stack_kernel(%arg0: i32, %arg1: memref<2x9600xbf16, #tpu.memory_space<vmem>>, %arg2: memref<2x1xf32, #tpu.memory_space<vmem>>, %arg3: memref<9600x32xbf16, #tpu.memory_space<vmem>>, %arg4: memref<1x32xf32, #tpu.memory_space<vmem>>, %arg5: memref<1x32xf32, #tpu.memory_space<vmem>>, %arg6: memref<32x32xbf16, #tpu.memory_space<vmem>>, %arg7: memref<1x32xf32, #tpu.memory_space<vmem>>, %arg8: memref<32x2xbf16, #tpu.memory_space<vmem>>, %arg9: memref<1x2xf32, #tpu.memory_space<vmem>>, %arg10: memref<2x2xf32, #tpu.memory_space<vmem>>) attributes {dimension_semantics = [#tpu.dimension_semantics<parallel>], iteration_bounds = array<i64: 1>, scalar_prefetch = 0 : i64, scratch_operands = 0 : i64, tpu.core_type = #tpu.core_type<tc>, window_params = [{transform_indices = @transform_0, window_bounds = array<i64: 2, 9600>}, {transform_indices = @transform_1, window_bounds = array<i64: 2, 1>}, {pipeline_mode = #tpu.pipeline_mode<synchronous>, transform_indices = @transform_2, window_bounds = array<i64: 9600, 32>}, {pipeline_mode = #tpu.pipeline_mode<synchronous>, transform_indices = @transform_3, window_bounds = array<i64: 1, 32>}, {pipeline_mode = #tpu.pipeline_mode<synchronous>, transform_indices = @transform_4, window_bounds = array<i64: 1, 32>}, {pipeline_mode = #tpu.pipeline_mode<synchronous>, transform_indices = @transform_5, window_bounds = array<i64: 32, 32>}, {pipeline_mode = #tpu.pipeline_mode<synchronous>, transform_indices = @transform_6, window_bounds = array<i64: 1, 32>}, {pipeline_mode = #tpu.pipeline_mode<synchronous>, transform_indices = @transform_7, window_bounds = array<i64: 32, 2>}, {pipeline_mode = #tpu.pipeline_mode<synchronous>, transform_indices = @transform_8, window_bounds = array<i64: 1, 2>}, {transform_indices = @transform_9, window_bounds = array<i64: 2, 2>}]} {
    %c0 = arith.constant 0 : index
    %c0_0 = arith.constant 0 : index
    %0 = vector.load %arg1[%c0, %c0_0] : memref<2x9600xbf16, #tpu.memory_space<vmem>>, vector<2x9600xbf16>
    %c0_1 = arith.constant 0 : index
    %c0_2 = arith.constant 0 : index
    %1 = vector.load %arg3[%c0_1, %c0_2] : memref<9600x32xbf16, #tpu.memory_space<vmem>>, vector<9600x32xbf16>
    %cst = arith.constant dense<0.000000e+00> : vector<2x32xf32>
    %2 = tpu.matmul %0, %1, %cst {dimension_numbers = #tpu.dot_dimension_numbers<[1], [0], [0], [1], [0, 0, 1, 1], [], []>} : vector<2x9600xbf16>, vector<9600x32xbf16>, vector<2x32xf32> -> vector<2x32xf32>
    %c0_3 = arith.constant 0 : index
    %c0_4 = arith.constant 0 : index
    %3 = vector.load %arg2[%c0_3, %c0_4] : memref<2x1xf32, #tpu.memory_space<vmem>>, vector<2x1xf32>
    %c0_5 = arith.constant 0 : index
    %c0_6 = arith.constant 0 : index
    %4 = vector.load %arg4[%c0_5, %c0_6] : memref<1x32xf32, #tpu.memory_space<vmem>>, vector<1x32xf32>
    %5 = vector.broadcast %3 : vector<2x1xf32> to vector<2x32xf32>
    %6 = vector.broadcast %4 : vector<1x32xf32> to vector<2x32xf32>
    %7 = arith.mulf %5, %6 : vector<2x32xf32>
    %8 = arith.addf %2, %7 : vector<2x32xf32>
    %c0_7 = arith.constant 0 : index
    %c0_8 = arith.constant 0 : index
    %9 = vector.load %arg5[%c0_7, %c0_8] : memref<1x32xf32, #tpu.memory_space<vmem>>, vector<1x32xf32>
    %10 = vector.broadcast %9 : vector<1x32xf32> to vector<2x32xf32>
    %11 = arith.addf %8, %10 : vector<2x32xf32>
    %cst_9 = arith.constant 0.000000e+00 : f32
    %12 = vector.broadcast %cst_9 : f32 to vector<2x32xf32>
    %13 = arith.maximumf %11, %12 : vector<2x32xf32>
    %14 = arith.truncf %13 : vector<2x32xf32> to vector<2x32xbf16>
    %c0_10 = arith.constant 0 : index
    %c0_11 = arith.constant 0 : index
    %15 = vector.load %arg6[%c0_10, %c0_11] : memref<32x32xbf16, #tpu.memory_space<vmem>>, vector<32x32xbf16>
    %cst_12 = arith.constant dense<0.000000e+00> : vector<2x32xf32>
    %16 = tpu.matmul %14, %15, %cst_12 {dimension_numbers = #tpu.dot_dimension_numbers<[1], [0], [0], [1], [0, 0, 1, 1], [], []>} : vector<2x32xbf16>, vector<32x32xbf16>, vector<2x32xf32> -> vector<2x32xf32>
    %c0_13 = arith.constant 0 : index
    %c0_14 = arith.constant 0 : index
    %17 = vector.load %arg7[%c0_13, %c0_14] : memref<1x32xf32, #tpu.memory_space<vmem>>, vector<1x32xf32>
    %18 = vector.broadcast %17 : vector<1x32xf32> to vector<2x32xf32>
    %19 = arith.addf %16, %18 : vector<2x32xf32>
    %cst_15 = arith.constant 0.000000e+00 : f32
    %20 = vector.broadcast %cst_15 : f32 to vector<2x32xf32>
    %21 = arith.maximumf %19, %20 : vector<2x32xf32>
    %22 = arith.truncf %21 : vector<2x32xf32> to vector<2x32xbf16>
    %c0_16 = arith.constant 0 : index
    %c0_17 = arith.constant 0 : index
    %23 = vector.load %arg8[%c0_16, %c0_17] : memref<32x2xbf16, #tpu.memory_space<vmem>>, vector<32x2xbf16>
    %cst_18 = arith.constant dense<0.000000e+00> : vector<2x2xf32>
    %24 = tpu.matmul %22, %23, %cst_18 {dimension_numbers = #tpu.dot_dimension_numbers<[1], [0], [0], [1], [0, 0, 1, 1], [], []>} : vector<2x32xbf16>, vector<32x2xbf16>, vector<2x2xf32> -> vector<2x2xf32>
    %c0_19 = arith.constant 0 : index
    %c0_20 = arith.constant 0 : index
    %25 = vector.load %arg9[%c0_19, %c0_20] : memref<1x2xf32, #tpu.memory_space<vmem>>, vector<1x2xf32>
    %26 = vector.broadcast %25 : vector<1x2xf32> to vector<2x2xf32>
    %27 = arith.addf %24, %26 : vector<2x2xf32>
    %c0_21 = arith.constant 0 : index
    %c0_22 = arith.constant 0 : index
    %28 = vector.load %arg10[%c0_21, %c0_22] : memref<2x2xf32, #tpu.memory_space<vmem>>, vector<2x2xf32>
    tpu.vector_store %arg10[%c0_21, %c0_22], %27 {strides = array<i32>} : memref<2x2xf32, #tpu.memory_space<vmem>>, vector<2x2xf32>,
    return
  }
  func.func @transform_0(%arg0: i32) -> (i32, i32) {
    %c0_i32 = arith.constant 0 : i32
    %c0_i32_0 = arith.constant 0 : i32
    return %arg0, %c0_i32 : i32, i32
  }
  func.func @transform_1(%arg0: i32) -> (i32, i32) {
    %c0_i32 = arith.constant 0 : i32
    %c0_i32_0 = arith.constant 0 : i32
    return %arg0, %c0_i32 : i32, i32
  }
  func.func @transform_2(%arg0: i32) -> (i32, i32) {
    %c0_i32 = arith.constant 0 : i32
    %c0_i32_0 = arith.constant 0 : i32
    %c0_i32_1 = arith.constant 0 : i32
    return %c0_i32, %c0_i32_0 : i32, i32
  }
  func.func @transform_3(%arg0: i32) -> (i32, i32) {
    %c0_i32 = arith.constant 0 : i32
    %c0_i32_0 = arith.constant 0 : i32
    %c0_i32_1 = arith.constant 0 : i32
    return %c0_i32, %c0_i32_0 : i32, i32
  }
  func.func @transform_4(%arg0: i32) -> (i32, i32) {
    %c0_i32 = arith.constant 0 : i32
    %c0_i32_0 = arith.constant 0 : i32
    %c0_i32_1 = arith.constant 0 : i32
    return %c0_i32, %c0_i32_0 : i32, i32
  }
  func.func @transform_5(%arg0: i32) -> (i32, i32) {
    %c0_i32 = arith.constant 0 : i32
    %c0_i32_0 = arith.constant 0 : i32
    %c0_i32_1 = arith.constant 0 : i32
    return %c0_i32, %c0_i32_0 : i32, i32
  }
  func.func @transform_6(%arg0: i32) -> (i32, i32) {
    %c0_i32 = arith.constant 0 : i32
    %c0_i32_0 = arith.constant 0 : i32
    %c0_i32_1 = arith.constant 0 : i32
    return %c0_i32, %c0_i32_0 : i32, i32
  }
  func.func @transform_7(%arg0: i32) -> (i32, i32) {
    %c0_i32 = arith.constant 0 : i32
    %c0_i32_0 = arith.constant 0 : i32
    %c0_i32_1 = arith.constant 0 : i32
    return %c0_i32, %c0_i32_0 : i32, i32
  }
  func.func @transform_8(%arg0: i32) -> (i32, i32) {
    %c0_i32 = arith.constant 0 : i32
    %c0_i32_0 = arith.constant 0 : i32
    %c0_i32_1 = arith.constant 0 : i32
    return %c0_i32, %c0_i32_0 : i32, i32
  }
  func.func @transform_9(%arg0: i32) -> (i32, i32) {
    %c0_i32 = arith.constant 0 : i32
    %c0_i32_0 = arith.constant 0 : i32
    return %arg0, %c0_i32 : i32, i32
  }
}

</mosaic_0001>

<llo_original>
// kernel: convnet_forward.3
$region0: #{convnet_forward.3}
  #allocation0 [shape = 'u32[]', space=smem, size = 0x4, offset = 0x4, fixed_abs, tag = 'smem constant byte address 0x4 - core index']
  #allocation1 [shape = 'u32[144,128]{1,0:T(1,128)}', space=vmem, size = 0x12000, scoped, tag = 'internal scratch']
  %s0 = inlined_call_operand.vmem [shape: bf16[2,200,1200], index: 0, kind: input, shape index: {}]
  %s1 = inlined_call_operand.vmem [shape: bf16[64,200], index: 1, kind: input, shape index: {}]
  %s2 = inlined_call_operand.vmem [shape: f32[16,1], index: 2, kind: input, shape index: {}]
  %s3 = inlined_call_operand.vmem [shape: bf16[2,16,1200], index: 3, kind: output, shape index: {}]
  %s4 = sld [smem:[#allocation0]]
  $region45: #{convnet_forward.3} parent=0
    _
  %s6 = ssub.s32 1, %s4
  %s7 = scalar_select 0, %s6, %s4
  loop: start=0, step=1, limit=4
  $region2: #{convnet_forward.3} parent=0 // loop_pre_header
    _
  $region3: #{convnet_forward.3} parent=0 // loop_header
    %s9 = sphi 0, %s13
    %p10 = scmp.ge.s32.totalorder %s9, 4
    %s19 = sphi 0, %s21
    %s22 = sphi 0, %s19
    %s23 = sphi 0, %s22
    %s39 = sphi 0, %s23
    %s43 = sphi 0, %s43
    %s45 = sphi 0, %s43
    %s46 = sphi 0, %s45
    %s60 = sphi 0, %s46
    %s64 = sphi 0, %s64
    %s66 = sphi 0, %s64
    %s67 = sphi 0, %s66
    %s81 = sphi 0, %s67
    %s87 = sphi 0, %s89
    %s90 = sphi 0, %s87
    %s91 = sphi 0, %s90
    %s107 = sphi 0, %s91
  $region4: #{convnet_forward.3} parent=0 // loop_header_branch
    %12 = sbr.rel (%p10) target = $region8
  $region5: #{convnet_forward.3} parent=0 // loop_body
    %s14 = ssub.s32 %s9, 1
    %s15 = ssub.s32 %s9, 2
    %s16 = sadd.s32 %s9, 1
    %s17 = ssub.s32 %s9, %s16
    %p18 = scmp.eq.s32.totalorder %s17, 0
    %s20 = sadd.s32 %s19, 1
    %s21 = scalar_select %p18, %s19, %s20
    %p24 = pneg %p18
    %p25 = scmp.eq.s32.totalorder %s9, 1
    %p26 = por %p24, %p25
    %p27 = scmp.ne.s32.totalorder %s19, %s22
    %p28 = scmp.eq.s32.totalorder %s9, 0
    %p29 = por %p27, %p28
    %p30 = scmp.ne.s32.totalorder %s19, %s22
    %p31 = scmp.eq.s32.totalorder %s14, 1
    %p32 = por %p30, %p31
    %p33 = scmp.ne.s32.totalorder %s22, %s23
    %p34 = scmp.eq.s32.totalorder %s14, 0
    %p35 = por %p33, %p34
    %p36 = scmp.ne.s32.totalorder %s22, %s23
    %p37 = scmp.eq.s32.totalorder %s15, 1
    %p38 = por %p36, %p37
    %p40 = scmp.ne.s32.totalorder %s23, %s39
    %p41 = scmp.eq.s32.totalorder %s15, 0
    %p42 = por %p40, %p41
    %s44 = sadd.s32 %s43, 1
    %p47 = scmp.eq.s32.totalorder %s9, 1
    %p48 = scmp.ne.s32.totalorder %s43, %s45
    %p49 = scmp.eq.s32.totalorder %s9, 0
    %p50 = por %p48, %p49
    %p51 = scmp.ne.s32.totalorder %s43, %s45
    %p52 = scmp.eq.s32.totalorder %s14, 1
    %p53 = por %p51, %p52
    %p54 = scmp.ne.s32.totalorder %s45, %s46
    %p55 = scmp.eq.s32.totalorder %s14, 0
    %p56 = por %p54, %p55
    %p57 = scmp.ne.s32.totalorder %s45, %s46
    %p58 = scmp.eq.s32.totalorder %s15, 1
    %p59 = por %p57, %p58
    %p61 = scmp.ne.s32.totalorder %s46, %s60
    %p62 = scmp.eq.s32.totalorder %s15, 0
    %p63 = por %p61, %p62
    %s65 = sadd.s32 %s64, 1
    %p68 = scmp.eq.s32.totalorder %s9, 1
    %p69 = scmp.ne.s32.totalorder %s64, %s66
    %p70 = scmp.eq.s32.totalorder %s9, 0
    %p71 = por %p69, %p70
    %p72 = scmp.ne.s32.totalorder %s64, %s66
    %p73 = scmp.eq.s32.totalorder %s14, 1
    %p74 = por %p72, %p73
    %p75 = scmp.ne.s32.totalorder %s66, %s67
    %p76 = scmp.eq.s32.totalorder %s14, 0
    %p77 = por %p75, %p76
    %p78 = scmp.ne.s32.totalorder %s66, %s67
    %p79 = scmp.eq.s32.totalorder %s15, 1
    %p80 = por %p78, %p79
    %p82 = scmp.ne.s32.totalorder %s67, %s81
    %p83 = scmp.eq.s32.totalorder %s15, 0
    %p84 = por %p82, %p83
    %s85 = ssub.s32 %s9, %s16
    %p86 = scmp.eq.s32.totalorder %s85, 0
    %s88 = sadd.s32 %s87, 1
    %s89 = scalar_select %p86, %s87, %s88
    %p92 = pneg %p86
    %p93 = scmp.eq.s32.totalorder %s9, 1
    %p94 = por %p92, %p93
    %p95 = scmp.ne.s32.totalorder %s87, %s90
    %p96 = scmp.eq.s32.totalorder %s9, 0
    %p97 = por %p95, %p96
    %p98 = scmp.ne.s32.totalorder %s87, %s90
    %p99 = scmp.eq.s32.totalorder %s14, 1
    %p100 = por %p98, %p99
    %p101 = scmp.ne.s32.totalorder %s90, %s91
    %p102 = scmp.eq.s32.totalorder %s14, 0
    %p103 = por %p101, %p102
    %p104 = scmp.ne.s32.totalorder %s90, %s91
    %p105 = scmp.eq.s32.totalorder %s15, 1
    %p106 = por %p104, %p105
    %p108 = scmp.ne.s32.totalorder %s91, %s107
    %p109 = scmp.eq.s32.totalorder %s15, 0
    %p110 = por %p108, %p109
    %p111 = scmp.le.s32.totalorder 1, %s9
    %p112 = scmp.lt.s32.totalorder %s9, 3
    %p113 = pnand %p111, %p112
    %p114 = pneg %p113
    // Predicated region
    $region9: #{convnet_forward.3} parent=5 // pred_check
      _
    $region10: #{convnet_forward.3} parent=5 // pred_check_branch
      %116 = sbr.rel (%p113) target = $region12
    $region11: #{convnet_forward.3} parent=5 // pred_region
      %s117 = ssub.s32 %s9, 1
      // Predicated region
      $region13: #{convnet_forward.3} parent=11 // pred_check
        %p118 = pneg %p56
      $region14: #{convnet_forward.3} parent=11 // pred_check_branch
        %120 = sbr.rel (%p118) target = $region16
      $region15: #{convnet_forward.3} parent=11 // pred_region
        _
      $region16: #{convnet_forward.3} parent=11 // pred_fallthru
        _
      // Predicated region
      $region17: #{convnet_forward.3} parent=11 // pred_check
        %p121 = pneg %p77
      $region18: #{convnet_forward.3} parent=11 // pred_check_branch
        %123 = sbr.rel (%p121) target = $region20
      $region19: #{convnet_forward.3} parent=11 // pred_region
        _
      $region20: #{convnet_forward.3} parent=11 // pred_fallthru
        _
    $region12: #{convnet_forward.3} parent=5 // pred_fallthru
      _
    %p124 = scmp.lt.s32.totalorder %s9, 2
    // Predicated region
    $region21: #{convnet_forward.3} parent=5 // pred_check
      %p125 = pneg %p124
    $region22: #{convnet_forward.3} parent=5 // pred_check_branch
      %127 = sbr.rel (%p125) target = $region24
    $region23: #{convnet_forward.3} parent=5 // pred_region
      // Predicated region
      $region25: #{convnet_forward.3} parent=23 // pred_check
        %p128 = pneg %p29
      $region26: #{convnet_forward.3} parent=23 // pred_check_branch
        %130 = sbr.rel (%p128) target = $region28
      $region27: #{convnet_forward.3} parent=23 // pred_region
        %p131 = scmp.lt.s32.totalorder %s9, 1
        %s132 = scalar_select %p131, %s9, 1
        %s133 = smul.addr %s132, 250
        %s134 = smul.addr %s133, 4
        %s135 = scalar_lea.vmem %s0, %s134
      $region28: #{convnet_forward.3} parent=23 // pred_fallthru
        _
    $region24: #{convnet_forward.3} parent=5 // pred_fallthru
      _
    %p136 = scmp.le.s32.totalorder 1, %s9
    %p137 = scmp.lt.s32.totalorder %s9, 3
    %p138 = pnand %p136, %p137
    %p139 = pneg %p138
    // Predicated region
    $region29: #{convnet_forward.3} parent=5 // pred_check
      _
    $region30: #{convnet_forward.3} parent=5 // pred_check_branch
      %141 = sbr.rel (%p138) target = $region32
    $region31: #{convnet_forward.3} parent=5 // pred_region
      %s142 = ssub.s32 %s9, 1
      %p143 = scmp.lt.s32.totalorder %s14, 1
      %s144 = scalar_select %p143, %s14, 1
      %s145 = smul.addr %s144, 250
      %s146 = smul.addr %s145, 4
      %s147 = scalar_lea.vmem %s0, %s146
      %p148 = pneg %p35
      %p149 = pneg %p32
      %p150 = pneg %p56
      %p151 = pneg %p53
      %p152 = pneg %p77
      %p153 = pneg %p74
      %p154 = pneg %p103
      %p155 = pneg %p100
      %p156 = scmp.lt.s32.totalorder %s14, 1
      %s157 = scalar_select %p156, %s14, 1
      %s158 = smul.addr %s157, 20
      %s159 = smul.addr %s158, 4
      %s160 = scalar_lea.vmem %s3, %s159
      %p161 = scmp.lt.s32.totalorder %s14, 1
      %s162 = scalar_select %p161, %s14, 1
      %s163 = smul.addr %s162, 250
      %s164 = smul.addr %s163, 4
      %s165 = scalar_lea.vmem %s0, %s164
      %p166 = scmp.lt.s32.totalorder %s14, 1
      %s167 = scalar_select %p166, %s14, 1
      %s168 = smul.addr %s167, 20
      %s169 = smul.addr %s168, 4
      %s170 = scalar_lea.vmem %s3, %s169
      %v172 = vld [vmem:[%s1] sm:$0xff]
      %v173 = vld [vmem:[%s1 + $0x8] sm:$0xff]
      %v174 = vld [vmem:[%s1 + $0x10] sm:$0xff]
      %v175 = vld [vmem:[%s1 + $0x18] sm:$0xff]
      %v176 = vld [vmem:[%s1 + $0x20] sm:$0xff]
      %v177 = vld [vmem:[%s1 + $0x28] sm:$0xff]
      %v178 = vld [vmem:[%s1 + $0x30] sm:$0xff]
      %v179 = vld [vmem:[%s1 + $0x38] sm:$0xff]
      %v180 = vld [vmem:[%s2] sm:$0xff]
      %v181 = vld [vmem:[%s2 + $0x8] sm:$0xff]
      %v182 = vld [vmem:[%s165] sm:$0xff]
      %v183 = vld [vmem:[%s165 + $0x8] sm:$0xff]
      %v184 = vld [vmem:[%s165 + $0x10] sm:$0xff]
      %v185 = vld [vmem:[%s165 + $0x18] sm:$0xff]
      %v186 = vld [vmem:[%s165 + $0x20] sm:$0xff]
      %v187 = vld [vmem:[%s165 + $0x28] sm:$0xff]
      %v188 = vld [vmem:[%s165 + $0x30] sm:$0xff]
      %v189 = vld [vmem:[%s165 + $0x38] sm:$0xff]
      %v190 = vld [vmem:[%s165 + $0x40] sm:$0xff]
      %v191 = vld [vmem:[%s165 + $0x48] sm:$0xff]
      %v192 = vld [vmem:[%s165 + $0x50] sm:$0xff]
      %v193 = vld [vmem:[%s165 + $0x58] sm:$0xff]
      %v194 = vld [vmem:[%s165 + $0x60] sm:$0xff]
      %v195 = vld [vmem:[%s165 + $0x68] sm:$0xff]
      %v196 = vld [vmem:[%s165 + $0x70] sm:$0xff]
      %v197 = vld [vmem:[%s165 + $0x78] sm:$0xff]
      %v198 = vld [vmem:[%s165 + $0x80] sm:$0xff]
      %v199 = vld [vmem:[%s165 + $0x88] sm:$0xff]
      %v200 = vld [vmem:[%s165 + $0x90] sm:$0xff]
      %v201 = vld [vmem:[%s165 + $0x98] sm:$0xff]
      %v202 = vld [vmem:[%s165 + $0xa0] sm:$0xff]
      %v203 = vld [vmem:[%s165 + $0xa8] sm:$0xff]
      %v204 = vld [vmem:[%s165 + $0xb0] sm:$0xff]
      %v205 = vld [vmem:[%s165 + $0xb8] sm:$0xff]
      %v206 = vld [vmem:[%s165 + $0xc0] sm:$0xff]
      %v207 = vld [vmem:[%s165 + $0xc8] sm:$0xff]
      %v208 = vld [vmem:[%s165 + $0xd0] sm:$0xff]
      %v209 = vld [vmem:[%s165 + $0xd8] sm:$0xff]
      %v210 = vld [vmem:[%s165 + $0xe0] sm:$0xff]
      %v211 = vld [vmem:[%s165 + $0xe8] sm:$0xff]
      %v212 = vld [vmem:[%s165 + $0xf0] sm:$0xff]
      %v213 = vld [vmem:[%s165 + $0xf8] sm:$0xff]
      %v214 = vld [vmem:[%s165 + $0x100] sm:$0xff]
      %v215 = vld [vmem:[%s165 + $0x108] sm:$0xff]
      %v216 = vld [vmem:[%s165 + $0x110] sm:$0xff]
      %v217 = vld [vmem:[%s165 + $0x118] sm:$0xff]
      %v218 = vld [vmem:[%s165 + $0x120] sm:$0xff]
      %v219 = vld [vmem:[%s165 + $0x128] sm:$0xff]
      %v220 = vld [vmem:[%s165 + $0x130] sm:$0xff]
      %v221 = vld [vmem:[%s165 + $0x138] sm:$0xff]
      %v222 = vld [vmem:[%s165 + $0x140] sm:$0xff]
      %v223 = vld [vmem:[%s165 + $0x148] sm:$0xff]
      %v224 = vld [vmem:[%s165 + $0x150] sm:$0xff]
      %v225 = vld [vmem:[%s165 + $0x158] sm:$0xff]
      %v226 = vld [vmem:[%s165 + $0x160] sm:$0xff]
      %v227 = vld [vmem:[%s165 + $0x168] sm:$0xff]
      %v228 = vld [vmem:[%s165 + $0x170] sm:$0xff]
      %v229 = vld [vmem:[%s165 + $0x178] sm:$0xff]
      %v230 = vld [vmem:[%s165 + $0x180] sm:$0xff]
      %v231 = vld [vmem:[%s165 + $0x188] sm:$0xff]
      %v232 = vld [vmem:[%s165 + $0x190] sm:$0xff]
      %v233 = vld [vmem:[%s165 + $0x198] sm:$0xff]
      %v234 = vld [vmem:[%s165 + $0x1a0] sm:$0xff]
      %v235 = vld [vmem:[%s165 + $0x1a8] sm:$0xff]
      %v236 = vld [vmem:[%s165 + $0x1b0] sm:$0xff]
      %v237 = vld [vmem:[%s165 + $0x1b8] sm:$0xff]
      %v238 = vld [vmem:[%s165 + $0x1c0] sm:$0xff]
      %v239 = vld [vmem:[%s165 + $0x1c8] sm:$0xff]
      %v240 = vld [vmem:[%s165 + $0x1d0] sm:$0xff]
      %v241 = vld [vmem:[%s165 + $0x1d8] sm:$0xff]
      %v242 = vld [vmem:[%s165 + $0x1e0] sm:$0xff]
      %v243 = vld [vmem:[%s165 + $0x1e8] sm:$0xff]
      %v244 = vld [vmem:[%s165 + $0x1f0] sm:$0xff]
      %v245 = vld [vmem:[%s165 + $0x1f8] sm:$0xff]
      %v246 = vld [vmem:[%s165 + $0x200] sm:$0xff]
      %v247 = vld [vmem:[%s165 + $0x208] sm:$0xff]
      %v248 = vld [vmem:[%s165 + $0x210] sm:$0xff]
      %v249 = vld [vmem:[%s165 + $0x218] sm:$0xff]
      %v250 = vld [vmem:[%s165 + $0x220] sm:$0xff]
      %v251 = vld [vmem:[%s165 + $0x228] sm:$0xff]
      %v252 = vld [vmem:[%s165 + $0x230] sm:$0xff]
      %v253 = vld [vmem:[%s165 + $0x238] sm:$0xff]
      %v254 = vld [vmem:[%s165 + $0x240] sm:$0xff]
      %v255 = vld [vmem:[%s165 + $0x248] sm:$0xff]
      %v256 = vld [vmem:[%s165 + $0x250] sm:$0xff]
      %v257 = vld [vmem:[%s165 + $0x258] sm:$0xff]
      %v258 = vld [vmem:[%s165 + $0x260] sm:$0xff]
      %v259 = vld [vmem:[%s165 + $0x268] sm:$0xff]
      %v260 = vld [vmem:[%s165 + $0x270] sm:$0xff]
      %v261 = vld [vmem:[%s165 + $0x278] sm:$0xff]
      %v262 = vld [vmem:[%s165 + $0x280] sm:$0xff]
      %v263 = vld [vmem:[%s165 + $0x288] sm:$0xff]
      %v264 = vld [vmem:[%s165 + $0x290] sm:$0xff]
      %v265 = vld [vmem:[%s165 + $0x298] sm:$0xff]
      %v266 = vld [vmem:[%s165 + $0x2a0] sm:$0xff]
      %v267 = vld [vmem:[%s165 + $0x2a8] sm:$0xff]
      %v268 = vld [vmem:[%s165 + $0x2b0] sm:$0xff]
      %v269 = vld [vmem:[%s165 + $0x2b8] sm:$0xff]
      %v270 = vld [vmem:[%s165 + $0x2c0] sm:$0xff]
      %v271 = vld [vmem:[%s165 + $0x2c8] sm:$0xff]
      %v272 = vld [vmem:[%s165 + $0x2d0] sm:$0xff]
      %v273 = vld [vmem:[%s165 + $0x2d8] sm:$0xff]
      %v274 = vld [vmem:[%s165 + $0x2e0] sm:$0xff]
      %v275 = vld [vmem:[%s165 + $0x2e8] sm:$0xff]
      %v276 = vld [vmem:[%s165 + $0x2f0] sm:$0xff]
      %v277 = vld [vmem:[%s165 + $0x2f8] sm:$0xff]
      %v278 = vld [vmem:[%s165 + $0x300] sm:$0xff]
      %v279 = vld [vmem:[%s165 + $0x308] sm:$0xff]
      %v280 = vld [vmem:[%s165 + $0x310] sm:$0xff]
      %v281 = vld [vmem:[%s165 + $0x318] sm:$0xff]
      %v282 = vld [vmem:[%s165 + $0x320] sm:$0xff]
      %v283 = vld [vmem:[%s165 + $0x328] sm:$0xff]
      %v284 = vld [vmem:[%s165 + $0x330] sm:$0xff]
      %v285 = vld [vmem:[%s165 + $0x338] sm:$0xff]
      %v286 = vld [vmem:[%s165 + $0x340] sm:$0xff]
      %v287 = vld [vmem:[%s165 + $0x348] sm:$0xff]
      %v288 = vld [vmem:[%s165 + $0x350] sm:$0xff]
      %v289 = vld [vmem:[%s165 + $0x358] sm:$0xff]
      %v290 = vld [vmem:[%s165 + $0x360] sm:$0xff]
      %v291 = vld [vmem:[%s165 + $0x368] sm:$0xff]
      %v292 = vld [vmem:[%s165 + $0x370] sm:$0xff]
      %v293 = vld [vmem:[%s165 + $0x378] sm:$0xff]
      %v294 = vld [vmem:[%s165 + $0x380] sm:$0xff]
      %v295 = vld [vmem:[%s165 + $0x388] sm:$0xff]
      %v296 = vld [vmem:[%s165 + $0x390] sm:$0xff]
      %v297 = vld [vmem:[%s165 + $0x398] sm:$0xff]
      %v298 = vld [vmem:[%s165 + $0x3a0] sm:$0xff]
      %v299 = vld [vmem:[%s165 + $0x3a8] sm:$0xff]
      %v300 = vld [vmem:[%s165 + $0x3b0] sm:$0xff]
      %v301 = vld [vmem:[%s165 + $0x3b8] sm:$0xff]
      %v302 = vld [vmem:[%s165 + $0x3c0] sm:$0xff]
      %v303 = vld [vmem:[%s165 + $0x3c8] sm:$0xff]
      %v304 = vld [vmem:[%s165 + $0x3d0] sm:$0xff]
      %v305 = vld [vmem:[%s165 + $0x3d8] sm:$0xff]
      %v306 = vld [vmem:[%s165 + $0x3e0] sm:$0xff]
      %v315 = vunpack.c.l.b16 %v172
      %v316 = vunpack.c.h.b16 %v172
      %v317 = vunpack.c.l.b16 %v173
      %v318 = vunpack.c.h.b16 %v173
      %v319 = vunpack.c.l.b16 %v174
      %v320 = vunpack.c.h.b16 %v174
      %v321 = vunpack.c.l.b16 %v175
      %v322 = vunpack.c.h.b16 %v175
      %v323 = vunpack.c.l.b16 %v176
      %v324 = vunpack.c.h.b16 %v176
      %v325 = vunpack.c.l.b16 %v177
      %v326 = vunpack.c.h.b16 %v177
      %v327 = vunpack.c.l.b16 %v178
      %v328 = vunpack.c.h.b16 %v178
      %v329 = vunpack.c.l.b16 %v179
      %v330 = vunpack.c.h.b16 %v179
      %v331 = vpack.c.b16 %v317, %v315
      %v332 = vpack.c.b16 %v318, %v316
      %v333 = vpack.c.b16 %v321, %v319
      %v334 = vpack.c.b16 %v322, %v320
      %v335 = vpack.c.b16 %v325, %v323
      %v336 = vpack.c.b16 %v326, %v324
      %v337 = vpack.c.b16 %v329, %v327
      %v338 = vpack.c.b16 %v330, %v328
      %v468 = vunpack.c.l.b16 %v182
      %v469 = vunpack.c.h.b16 %v182
      %v470 = vunpack.c.l.b16 %v183
      %v471 = vunpack.c.h.b16 %v183
      %v472 = vunpack.c.l.b16 %v184
      %v473 = vunpack.c.h.b16 %v184
      %v474 = vunpack.c.l.b16 %v185
      %v475 = vunpack.c.h.b16 %v185
      %v476 = vunpack.c.l.b16 %v186
      %v477 = vunpack.c.h.b16 %v186
      %v478 = vunpack.c.l.b16 %v187
      %v479 = vunpack.c.h.b16 %v187
      %v480 = vunpack.c.l.b16 %v188
      %v481 = vunpack.c.h.b16 %v188
      %v482 = vunpack.c.l.b16 %v189
      %v483 = vunpack.c.h.b16 %v189
      %v484 = vunpack.c.l.b16 %v190
      %v485 = vunpack.c.h.b16 %v190
      %v486 = vunpack.c.l.b16 %v191
      %v487 = vunpack.c.h.b16 %v191
      %v488 = vunpack.c.l.b16 %v192
      %v489 = vunpack.c.h.b16 %v192
      %v490 = vunpack.c.l.b16 %v193
      %v491 = vunpack.c.h.b16 %v193
      %v492 = vunpack.c.l.b16 %v194
      %v493 = vunpack.c.h.b16 %v194
      %v494 = vunpack.c.l.b16 %v195
      %v495 = vunpack.c.h.b16 %v195
      %v496 = vunpack.c.l.b16 %v196
      %v497 = vunpack.c.h.b16 %v196
      %v498 = vunpack.c.l.b16 %v197
      %v499 = vunpack.c.h.b16 %v197
      %v500 = vunpack.c.l.b16 %v198
      %v501 = vunpack.c.h.b16 %v198
      %v502 = vunpack.c.l.b16 %v199
      %v503 = vunpack.c.h.b16 %v199
      %v504 = vunpack.c.l.b16 %v200
      %v505 = vunpack.c.h.b16 %v200
      %v506 = vunpack.c.l.b16 %v201
      %v507 = vunpack.c.h.b16 %v201
      %v508 = vunpack.c.l.b16 %v202
      %v509 = vunpack.c.h.b16 %v202
      %v510 = vunpack.c.l.b16 %v203
      %v511 = vunpack.c.h.b16 %v203
      %v512 = vunpack.c.l.b16 %v204
      %v513 = vunpack.c.h.b16 %v204
      %v514 = vunpack.c.l.b16 %v205
      %v515 = vunpack.c.h.b16 %v205
      %v516 = vunpack.c.l.b16 %v206
      %v517 = vunpack.c.h.b16 %v206
      %v518 = vunpack.c.l.b16 %v207
      %v519 = vunpack.c.h.b16 %v207
      %v520 = vunpack.c.l.b16 %v208
      %v521 = vunpack.c.h.b16 %v208
      %v522 = vunpack.c.l.b16 %v209
      %v523 = vunpack.c.h.b16 %v209
      %v524 = vunpack.c.l.b16 %v210
      %v525 = vunpack.c.h.b16 %v210
      %v526 = vunpack.c.l.b16 %v211
      %v527 = vunpack.c.h.b16 %v211
      %v528 = vunpack.c.l.b16 %v212
      %v529 = vunpack.c.h.b16 %v212
      %v530 = vunpack.c.l.b16 %v213
      %v531 = vunpack.c.h.b16 %v213
      %v532 = vunpack.c.l.b16 %v214
      %v533 = vunpack.c.h.b16 %v214
      %v534 = vunpack.c.l.b16 %v215
      %v535 = vunpack.c.h.b16 %v215
      %v536 = vunpack.c.l.b16 %v216
      %v537 = vunpack.c.h.b16 %v216
      %v538 = vunpack.c.l.b16 %v217
      %v539 = vunpack.c.h.b16 %v217
      %v540 = vunpack.c.l.b16 %v218
      %v541 = vunpack.c.h.b16 %v218
      %v542 = vunpack.c.l.b16 %v219
      %v543 = vunpack.c.h.b16 %v219
      %v544 = vunpack.c.l.b16 %v220
      %v545 = vunpack.c.h.b16 %v220
      %v546 = vunpack.c.l.b16 %v221
      %v547 = vunpack.c.h.b16 %v221
      %v548 = vunpack.c.l.b16 %v222
      %v549 = vunpack.c.h.b16 %v222
      %v550 = vunpack.c.l.b16 %v223
      %v551 = vunpack.c.h.b16 %v223
      %v552 = vunpack.c.l.b16 %v224
      %v553 = vunpack.c.h.b16 %v224
      %v554 = vunpack.c.l.b16 %v225
      %v555 = vunpack.c.h.b16 %v225
      %v556 = vunpack.c.l.b16 %v226
      %v557 = vunpack.c.h.b16 %v226
      %v558 = vunpack.c.l.b16 %v227
      %v559 = vunpack.c.h.b16 %v227
      %v560 = vunpack.c.l.b16 %v228
      %v561 = vunpack.c.h.b16 %v228
      %v562 = vunpack.c.l.b16 %v229
      %v563 = vunpack.c.h.b16 %v229
      %v564 = vunpack.c.l.b16 %v230
      %v565 = vunpack.c.h.b16 %v230
      %v566 = vunpack.c.l.b16 %v231
      %v567 = vunpack.c.h.b16 %v231
      %v568 = vunpack.c.l.b16 %v232
      %v569 = vunpack.c.h.b16 %v232
      %v570 = vunpack.c.l.b16 %v233
      %v571 = vunpack.c.h.b16 %v233
      %v572 = vunpack.c.l.b16 %v234
      %v573 = vunpack.c.h.b16 %v234
      %v574 = vunpack.c.l.b16 %v235
      %v575 = vunpack.c.h.b16 %v235
      %v576 = vunpack.c.l.b16 %v236
      %v577 = vunpack.c.h.b16 %v236
      %v578 = vunpack.c.l.b16 %v237
      %v579 = vunpack.c.h.b16 %v237
      %v580 = vunpack.c.l.b16 %v238
      %v581 = vunpack.c.h.b16 %v238
      %v582 = vunpack.c.l.b16 %v239
      %v583 = vunpack.c.h.b16 %v239
      %v584 = vunpack.c.l.b16 %v240
      %v585 = vunpack.c.h.b16 %v240
      %v586 = vunpack.c.l.b16 %v241
      %v587 = vunpack.c.h.b16 %v241
      %v588 = vunpack.c.l.b16 %v242
      %v589 = vunpack.c.h.b16 %v242
      %v590 = vunpack.c.l.b16 %v243
      %v591 = vunpack.c.h.b16 %v243
      %v592 = vunpack.c.l.b16 %v244
      %v593 = vunpack.c.h.b16 %v244
      %v594 = vunpack.c.l.b16 %v245
      %v595 = vunpack.c.h.b16 %v245
      %v596 = vunpack.c.l.b16 %v246
      %v597 = vunpack.c.h.b16 %v246
      %v598 = vunpack.c.l.b16 %v247
      %v599 = vunpack.c.h.b16 %v247
      %v600 = vunpack.c.l.b16 %v248
      %v601 = vunpack.c.h.b16 %v248
      %v602 = vunpack.c.l.b16 %v249
      %v603 = vunpack.c.h.b16 %v249
      %v604 = vunpack.c.l.b16 %v250
      %v605 = vunpack.c.h.b16 %v250
      %v606 = vunpack.c.l.b16 %v251
      %v607 = vunpack.c.h.b16 %v251
      %v608 = vunpack.c.l.b16 %v252
      %v609 = vunpack.c.h.b16 %v252
      %v610 = vunpack.c.l.b16 %v253
      %v611 = vunpack.c.h.b16 %v253
      %v612 = vunpack.c.l.b16 %v254
      %v613 = vunpack.c.h.b16 %v254
      %v614 = vunpack.c.l.b16 %v255
      %v615 = vunpack.c.h.b16 %v255
      %v616 = vunpack.c.l.b16 %v256
      %v617 = vunpack.c.h.b16 %v256
      %v618 = vunpack.c.l.b16 %v257
      %v619 = vunpack.c.h.b16 %v257
      %v620 = vunpack.c.l.b16 %v258
      %v621 = vunpack.c.h.b16 %v258
      %v622 = vunpack.c.l.b16 %v259
      %v623 = vunpack.c.h.b16 %v259
      %v624 = vunpack.c.l.b16 %v260
      %v625 = vunpack.c.h.b16 %v260
      %v626 = vunpack.c.l.b16 %v261
      %v627 = vunpack.c.h.b16 %v261
      %v628 = vunpack.c.l.b16 %v262
      %v629 = vunpack.c.h.b16 %v262
      %v630 = vunpack.c.l.b16 %v263
      %v631 = vunpack.c.h.b16 %v263
      %v632 = vunpack.c.l.b16 %v264
      %v633 = vunpack.c.h.b16 %v264
      %v634 = vunpack.c.l.b16 %v265
      %v635 = vunpack.c.h.b16 %v265
      %v636 = vunpack.c.l.b16 %v266
      %v637 = vunpack.c.h.b16 %v266
      %v638 = vunpack.c.l.b16 %v267
      %v639 = vunpack.c.h.b16 %v267
      %v640 = vunpack.c.l.b16 %v268
      %v641 = vunpack.c.h.b16 %v268
      %v642 = vunpack.c.l.b16 %v269
      %v643 = vunpack.c.h.b16 %v269
      %v644 = vunpack.c.l.b16 %v270
      %v645 = vunpack.c.h.b16 %v270
      %v646 = vunpack.c.l.b16 %v271
      %v647 = vunpack.c.h.b16 %v271
      %v648 = vunpack.c.l.b16 %v272
      %v649 = vunpack.c.h.b16 %v272
      %v650 = vunpack.c.l.b16 %v273
      %v651 = vunpack.c.h.b16 %v273
      %v652 = vunpack.c.l.b16 %v274
      %v653 = vunpack.c.h.b16 %v274
      %v654 = vunpack.c.l.b16 %v275
      %v655 = vunpack.c.h.b16 %v275
      %v656 = vunpack.c.l.b16 %v276
      %v657 = vunpack.c.h.b16 %v276
      %v658 = vunpack.c.l.b16 %v277
      %v659 = vunpack.c.h.b16 %v277
      %v660 = vunpack.c.l.b16 %v278
      %v661 = vunpack.c.h.b16 %v278
      %v662 = vunpack.c.l.b16 %v279
      %v663 = vunpack.c.h.b16 %v279
      %v664 = vunpack.c.l.b16 %v280
      %v665 = vunpack.c.h.b16 %v280
      %v666 = vunpack.c.l.b16 %v281
      %v667 = vunpack.c.h.b16 %v281
      %v668 = vunpack.c.l.b16 %v282
      %v669 = vunpack.c.h.b16 %v282
      %v670 = vunpack.c.l.b16 %v283
      %v671 = vunpack.c.h.b16 %v283
      %v672 = vunpack.c.l.b16 %v284
      %v673 = vunpack.c.h.b16 %v284
      %v674 = vunpack.c.l.b16 %v285
      %v675 = vunpack.c.h.b16 %v285
      %v676 = vunpack.c.l.b16 %v286
      %v677 = vunpack.c.h.b16 %v286
      %v678 = vunpack.c.l.b16 %v287
      %v679 = vunpack.c.h.b16 %v287
      %v680 = vunpack.c.l.b16 %v288
      %v681 = vunpack.c.h.b16 %v288
      %v682 = vunpack.c.l.b16 %v289
      %v683 = vunpack.c.h.b16 %v289
      %v684 = vunpack.c.l.b16 %v290
      %v685 = vunpack.c.h.b16 %v290
      %v686 = vunpack.c.l.b16 %v291
      %v687 = vunpack.c.h.b16 %v291
      %v688 = vunpack.c.l.b16 %v292
      %v689 = vunpack.c.h.b16 %v292
      %v690 = vunpack.c.l.b16 %v293
      %v691 = vunpack.c.h.b16 %v293
      %v692 = vunpack.c.l.b16 %v294
      %v693 = vunpack.c.h.b16 %v294
      %v694 = vunpack.c.l.b16 %v295
      %v695 = vunpack.c.h.b16 %v295
      %v696 = vunpack.c.l.b16 %v296
      %v697 = vunpack.c.h.b16 %v296
      %v698 = vunpack.c.l.b16 %v297
      %v699 = vunpack.c.h.b16 %v297
      %v700 = vunpack.c.l.b16 %v298
      %v701 = vunpack.c.h.b16 %v298
      %v702 = vunpack.c.l.b16 %v299
      %v703 = vunpack.c.h.b16 %v299
      %v704 = vunpack.c.l.b16 %v300
      %v705 = vunpack.c.h.b16 %v300
      %v706 = vunpack.c.l.b16 %v301
      %v707 = vunpack.c.h.b16 %v301
      %v708 = vunpack.c.l.b16 %v302
      %v709 = vunpack.c.h.b16 %v302
      %v710 = vunpack.c.l.b16 %v303
      %v711 = vunpack.c.h.b16 %v303
      %v712 = vunpack.c.l.b16 %v304
      %v713 = vunpack.c.h.b16 %v304
      %v714 = vunpack.c.l.b16 %v305
      %v715 = vunpack.c.h.b16 %v305
      %v716 = vunpack.c.l.b16 %v306
      %v717 = vunpack.c.h.b16 %v306
      %v718 = vpack.c.b16 %v478, %v468
      %v719 = vpack.c.b16 %v479, %v469
      %v720 = vpack.c.b16 %v480, %v470
      %v721 = vpack.c.b16 %v481, %v471
      %v722 = vpack.c.b16 %v482, %v472
      %v723 = vpack.c.b16 %v483, %v473
      %v724 = vpack.c.b16 %v484, %v474
      %v725 = vpack.c.b16 %v485, %v475
      %v726 = vpack.c.b16 %v486, %v476
      %v727 = vpack.c.b16 %v487, %v477
      %v728 = vpack.c.b16 %v498, %v488
      %v729 = vpack.c.b16 %v499, %v489
      %v730 = vpack.c.b16 %v500, %v490
      %v731 = vpack.c.b16 %v501, %v491
      %v732 = vpack.c.b16 %v502, %v492
      %v733 = vpack.c.b16 %v503, %v493
      %v734 = vpack.c.b16 %v504, %v494
      %v735 = vpack.c.b16 %v505, %v495
      %v736 = vpack.c.b16 %v506, %v496
      %v737 = vpack.c.b16 %v507, %v497
      %v738 = vpack.c.b16 %v518, %v508
      %v739 = vpack.c.b16 %v519, %v509
      %v740 = vpack.c.b16 %v520, %v510
      %v741 = vpack.c.b16 %v521, %v511
      %v742 = vpack.c.b16 %v522, %v512
      %v743 = vpack.c.b16 %v523, %v513
      %v744 = vpack.c.b16 %v524, %v514
      %v745 = vpack.c.b16 %v525, %v515
      %v746 = vpack.c.b16 %v526, %v516
      %v747 = vpack.c.b16 %v527, %v517
      %v748 = vpack.c.b16 %v538, %v528
      %v749 = vpack.c.b16 %v539, %v529
      %v750 = vpack.c.b16 %v540, %v530
      %v751 = vpack.c.b16 %v541, %v531
      %v752 = vpack.c.b16 %v542, %v532
      %v753 = vpack.c.b16 %v543, %v533
      %v754 = vpack.c.b16 %v544, %v534
      %v755 = vpack.c.b16 %v545, %v535
      %v756 = vpack.c.b16 %v546, %v536
      %v757 = vpack.c.b16 %v547, %v537
      %v758 = vpack.c.b16 %v558, %v548
      %v759 = vpack.c.b16 %v559, %v549
      %v760 = vpack.c.b16 %v560, %v550
      %v761 = vpack.c.b16 %v561, %v551
      %v762 = vpack.c.b16 %v562, %v552
      %v763 = vpack.c.b16 %v563, %v553
      %v764 = vpack.c.b16 %v564, %v554
      %v765 = vpack.c.b16 %v565, %v555
      %v766 = vpack.c.b16 %v566, %v556
      %v767 = vpack.c.b16 %v567, %v557
      %v768 = vpack.c.b16 %v578, %v568
      %v769 = vpack.c.b16 %v579, %v569
      %v770 = vpack.c.b16 %v580, %v570
      %v771 = vpack.c.b16 %v581, %v571
      %v772 = vpack.c.b16 %v582, %v572
      %v773 = vpack.c.b16 %v583, %v573
      %v774 = vpack.c.b16 %v584, %v574
      %v775 = vpack.c.b16 %v585, %v575
      %v776 = vpack.c.b16 %v586, %v576
      %v777 = vpack.c.b16 %v587, %v577
      %v778 = vpack.c.b16 %v598, %v588
      %v779 = vpack.c.b16 %v599, %v589
      %v780 = vpack.c.b16 %v600, %v590
      %v781 = vpack.c.b16 %v601, %v591
      %v782 = vpack.c.b16 %v602, %v592
      %v783 = vpack.c.b16 %v603, %v593
      %v784 = vpack.c.b16 %v604, %v594
      %v785 = vpack.c.b16 %v605, %v595
      %v786 = vpack.c.b16 %v606, %v596
      %v787 = vpack.c.b16 %v607, %v597
      %v788 = vpack.c.b16 %v618, %v608
      %v789 = vpack.c.b16 %v619, %v609
      %v790 = vpack.c.b16 %v620, %v610
      %v791 = vpack.c.b16 %v621, %v611
      %v792 = vpack.c.b16 %v622, %v612
      %v793 = vpack.c.b16 %v623, %v613
      %v794 = vpack.c.b16 %v624, %v614
      %v795 = vpack.c.b16 %v625, %v615
      %v796 = vpack.c.b16 %v626, %v616
      %v797 = vpack.c.b16 %v627, %v617
      %v798 = vpack.c.b16 %v638, %v628
      %v799 = vpack.c.b16 %v639, %v629
      %v800 = vpack.c.b16 %v640, %v630
      %v801 = vpack.c.b16 %v641, %v631
      %v802 = vpack.c.b16 %v642, %v632
      %v803 = vpack.c.b16 %v643, %v633
      %v804 = vpack.c.b16 %v644, %v634
      %v805 = vpack.c.b16 %v645, %v635
      %v806 = vpack.c.b16 %v646, %v636
      %v807 = vpack.c.b16 %v647, %v637
      %v808 = vpack.c.b16 %v658, %v648
      %v809 = vpack.c.b16 %v659, %v649
      %v810 = vpack.c.b16 %v660, %v650
      %v811 = vpack.c.b16 %v661, %v651
      %v812 = vpack.c.b16 %v662, %v652
      %v813 = vpack.c.b16 %v663, %v653
      %v814 = vpack.c.b16 %v664, %v654
      %v815 = vpack.c.b16 %v665, %v655
      %v816 = vpack.c.b16 %v666, %v656
      %v817 = vpack.c.b16 %v667, %v657
      %v818 = vpack.c.b16 %v678, %v668
      %v819 = vpack.c.b16 %v679, %v669
      %v820 = vpack.c.b16 %v680, %v670
      %v821 = vpack.c.b16 %v681, %v671
      %v822 = vpack.c.b16 %v682, %v672
      %v823 = vpack.c.b16 %v683, %v673
      %v824 = vpack.c.b16 %v684, %v674
      %v825 = vpack.c.b16 %v685, %v675
      %v826 = vpack.c.b16 %v686, %v676
      %v827 = vpack.c.b16 %v687, %v677
      %v828 = vpack.c.b16 %v698, %v688
      %v829 = vpack.c.b16 %v699, %v689
      %v830 = vpack.c.b16 %v700, %v690
      %v831 = vpack.c.b16 %v701, %v691
      %v832 = vpack.c.b16 %v702, %v692
      %v833 = vpack.c.b16 %v703, %v693
      %v834 = vpack.c.b16 %v704, %v694
      %v835 = vpack.c.b16 %v705, %v695
      %v836 = vpack.c.b16 %v706, %v696
      %v837 = vpack.c.b16 %v707, %v697
      %v838 = vpack.c.b16 %v708, %v708
      %v839 = vpack.c.b16 %v709, %v709
      %v840 = vpack.c.b16 %v710, %v710
      %v841 = vpack.c.b16 %v711, %v711
      %v842 = vpack.c.b16 %v712, %v712
      %v843 = vpack.c.b16 %v713, %v713
      %v844 = vpack.c.b16 %v714, %v714
      %v845 = vpack.c.b16 %v715, %v715
      %v846 = vpack.c.b16 %v716, %v716
      %v847 = vpack.c.b16 %v717, %v717
      %vm968 = vcmask 588800
      %v970 = vsel %vm968, %v332, 0
      %v973 = vsel %vm968, %v334, 0
      %v976 = vsel %vm968, %v336, 0
      %v979 = vsel %vm968, %v338, 0
      %vm981 = vcmask 1043456
      %v983 = vsel %vm981, %v838, 0
      %v986 = vsel %vm981, %v839, 0
      %v989 = vsel %vm981, %v840, 0
      %v992 = vsel %vm981, %v841, 0
      %v995 = vsel %vm981, %v842, 0
      %v998 = vsel %vm981, %v843, 0
      %v1001 = vsel %vm981, %v844, 0
      %v1004 = vsel %vm981, %v845, 0
      %v1007 = vsel %vm981, %v846, 0
      %v1010 = vsel %vm981, %v847, 0
      %1012 = vmatprep.subr.bf16.mxu0 %v719
      %1013 = vmatpush1.bf16.msra.mxu0 %v718
      %1014 = vmatprep.subr.bf16.mxu0 %v729
      %1015 = vmatpush1.bf16.msra.mxu0 %v728
      %1016 = vmatprep.subr.bf16.mxu0 %v739
      %1017 = vmatpush1.bf16.msra.mxu0 %v738
      %1018 = vmatprep.subr.bf16.mxu0 %v749
      %1019 = vmatpush1.bf16.msra.mxu0 %v748
      %1020 = vmatprep.subr.bf16.mxu0 %v759
      %1021 = vmatpush1.bf16.msra.mxu0 %v758
      %1022 = vmatprep.subr.bf16.mxu0 %v769
      %1023 = vmatpush1.bf16.msra.mxu0 %v768
      %1024 = vmatprep.subr.bf16.mxu0 %v779
      %1025 = vmatpush1.bf16.msra.mxu0 %v778
      %1026 = vmatprep.subr.bf16.mxu0 %v789
      %1027 = vmatpush1.bf16.msra.mxu0 %v788
      %1028 = vmatprep.subr.bf16.mxu0 %v799
      %1029 = vmatpush1.bf16.msra.mxu0 %v798
      %1030 = vmatprep.subr.bf16.mxu0 %v809
      %1031 = vmatpush1.bf16.msra.mxu0 %v808
      %1032 = vmatprep.subr.bf16.mxu0 %v819
      %1033 = vmatpush1.bf16.msra.mxu0 %v818
      %1034 = vmatprep.subr.bf16.mxu0 %v829
      %1035 = vmatpush1.bf16.msra.mxu0 %v828
      %1036 = vmatprep.subr.bf16.mxu0 %v986
      %1037 = vmatpush1.bf16.msra.mxu0 %v983
      %1038 = vmatprep.subr.bf16.mxu0 0
      %1039 = vmatpush1.bf16.msra.mxu0 0
      %1040 = vmatprep.subr.bf16.mxu0 0
      %1041 = vmatpush1.bf16.msra.mxu0 0
      %1042 = vmatprep.subr.bf16.mxu0 0
      %1043 = vmatpush1.bf16.msra.mxu0 0
      %1044 = vmatprep.mubr.bf16.mxu0 %v970
      %1045 = vmatmul.mubr.bf16.gmra.mrb[0].mxu0 %v331
      %v1046 = vpop.f32.mrb[0].mxu0
      %v1047 = vadd.f32 0.0, %v1046
      %v1048 = vpop.f32.mrb[0].mxu0
      %v1049 = vadd.f32 0.0, %v1048
      %v1050 = vpop.f32.mrb[0].mxu0
      %v1051 = vadd.f32 0.0, %v1050
      %v1052 = vpop.f32.mrb[0].mxu0
      %v1053 = vadd.f32 0.0, %v1052
      %1054 = vmatprep.mubr.bf16.mxu0 %v973
      %1055 = vmatmul.mubr.bf16.gmra.mrb[0].mxu0 %v333
      %v1056 = vpop.f32.mrb[0].mxu0
      %v1057 = vadd.f32 0.0, %v1056
      %v1058 = vpop.f32.mrb[0].mxu0
      %v1059 = vadd.f32 0.0, %v1058
      %v1060 = vpop.f32.mrb[0].mxu0
      %v1061 = vadd.f32 0.0, %v1060
      %v1062 = vpop.f32.mrb[0].mxu0
      %v1063 = vadd.f32 0.0, %v1062
      %1064 = vmatprep.mubr.bf16.mxu0 %v976
      %1065 = vmatmul.mubr.bf16.gmra.mrb[0].mxu0 %v335
      %v1066 = vpop.f32.mrb[0].mxu0
      %v1067 = vadd.f32 0.0, %v1066
      %v1068 = vpop.f32.mrb[0].mxu0
      %v1069 = vadd.f32 0.0, %v1068
      %v1070 = vpop.f32.mrb[0].mxu0
      %v1071 = vadd.f32 0.0, %v1070
      %v1072 = vpop.f32.mrb[0].mxu0
      %v1073 = vadd.f32 0.0, %v1072
      %1074 = vmatprep.mubr.bf16.mxu0 %v979
      %1075 = vmatmul.mubr.bf16.gmra.mrb[0].mxu0 %v337
      %v1076 = vpop.f32.mrb[0].mxu0
      %v1077 = vadd.f32 0.0, %v1076
      %v1078 = vpop.f32.mrb[0].mxu0
      %v1079 = vadd.f32 0.0, %v1078
      %v1080 = vpop.f32.mrb[0].mxu0
      %v1081 = vadd.f32 0.0, %v1080
      %v1082 = vpop.f32.mrb[0].mxu0
      %v1083 = vadd.f32 0.0, %v1082
      %1084 = vdwg.mxu0
      %1085 = vmatprep.subr.bf16.mxu0 %v721
      %1086 = vmatpush1.bf16.msra.mxu0 %v720
      %1087 = vmatprep.subr.bf16.mxu0 %v731
      %1088 = vmatpush1.bf16.msra.mxu0 %v730
      %1089 = vmatprep.subr.bf16.mxu0 %v741
      %1090 = vmatpush1.bf16.msra.mxu0 %v740
      %1091 = vmatprep.subr.bf16.mxu0 %v751
      %1092 = vmatpush1.bf16.msra.mxu0 %v750
      %1093 = vmatprep.subr.bf16.mxu0 %v761
      %1094 = vmatpush1.bf16.msra.mxu0 %v760
      %1095 = vmatprep.subr.bf16.mxu0 %v771
      %1096 = vmatpush1.bf16.msra.mxu0 %v770
      %1097 = vmatprep.subr.bf16.mxu0 %v781
      %1098 = vmatpush1.bf16.msra.mxu0 %v780
      %1099 = vmatprep.subr.bf16.mxu0 %v791
      %1100 = vmatpush1.bf16.msra.mxu0 %v790
      %1101 = vmatprep.subr.bf16.mxu0 %v801
      %1102 = vmatpush1.bf16.msra.mxu0 %v800
      %1103 = vmatprep.subr.bf16.mxu0 %v811
      %1104 = vmatpush1.bf16.msra.mxu0 %v810
      %1105 = vmatprep.subr.bf16.mxu0 %v821
      %1106 = vmatpush1.bf16.msra.mxu0 %v820
      %1107 = vmatprep.subr.bf16.mxu0 %v831
      %1108 = vmatpush1.bf16.msra.mxu0 %v830
      %1109 = vmatprep.subr.bf16.mxu0 %v992
      %1110 = vmatpush1.bf16.msra.mxu0 %v989
      %1111 = vmatprep.subr.bf16.mxu0 0
      %1112 = vmatpush1.bf16.msra.mxu0 0
      %1113 = vmatprep.subr.bf16.mxu0 0
      %1114 = vmatpush1.bf16.msra.mxu0 0
      %1115 = vmatprep.subr.bf16.mxu0 0
      %1116 = vmatpush1.bf16.msra.mxu0 0
      %1117 = vmatprep.mubr.bf16.mxu0 %v970
      %1118 = vmatmul.mubr.bf16.gmra.mrb[0].mxu0 %v331
      %v1119 = vpop.f32.mrb[0].mxu0
      %v1120 = vadd.f32 0.0, %v1119
      %v1121 = vpop.f32.mrb[0].mxu0
      %v1122 = vadd.f32 0.0, %v1121
      %v1123 = vpop.f32.mrb[0].mxu0
      %v1124 = vadd.f32 0.0, %v1123
      %v1125 = vpop.f32.mrb[0].mxu0
      %v1126 = vadd.f32 0.0, %v1125
      %1127 = vmatprep.mubr.bf16.mxu0 %v973
      %1128 = vmatmul.mubr.bf16.gmra.mrb[0].mxu0 %v333
      %v1129 = vpop.f32.mrb[0].mxu0
      %v1130 = vadd.f32 0.0, %v1129
      %v1131 = vpop.f32.mrb[0].mxu0
      %v1132 = vadd.f32 0.0, %v1131
      %v1133 = vpop.f32.mrb[0].mxu0
      %v1134 = vadd.f32 0.0, %v1133
      %v1135 = vpop.f32.mrb[0].mxu0
      %v1136 = vadd.f32 0.0, %v1135
      %1137 = vmatprep.mubr.bf16.mxu0 %v976
      %1138 = vmatmul.mubr.bf16.gmra.mrb[0].mxu0 %v335
      %v1139 = vpop.f32.mrb[0].mxu0
      %v1140 = vadd.f32 0.0, %v1139
      %v1141 = vpop.f32.mrb[0].mxu0
      %v1142 = vadd.f32 0.0, %v1141
      %v1143 = vpop.f32.mrb[0].mxu0
      %v1144 = vadd.f32 0.0, %v1143
      %v1145 = vpop.f32.mrb[0].mxu0
      %v1146 = vadd.f32 0.0, %v1145
      %1147 = vmatprep.mubr.bf16.mxu0 %v979
      %1148 = vmatmul.mubr.bf16.gmra.mrb[0].mxu0 %v337
      %v1149 = vpop.f32.mrb[0].mxu0
      %v1150 = vadd.f32 0.0, %v1149
      %v1151 = vpop.f32.mrb[0].mxu0
      %v1152 = vadd.f32 0.0, %v1151
      %v1153 = vpop.f32.mrb[0].mxu0
      %v1154 = vadd.f32 0.0, %v1153
      %v1155 = vpop.f32.mrb[0].mxu0
      %v1156 = vadd.f32 0.0, %v1155
      %1157 = vdwg.mxu0
      %1158 = vmatprep.subr.bf16.mxu0 %v723
      %1159 = vmatpush1.bf16.msra.mxu0 %v722
      %1160 = vmatprep.subr.bf16.mxu0 %v733
      %1161 = vmatpush1.bf16.msra.mxu0 %v732
      %1162 = vmatprep.subr.bf16.mxu0 %v743
      %1163 = vmatpush1.bf16.msra.mxu0 %v742
      %1164 = vmatprep.subr.bf16.mxu0 %v753
      %1165 = vmatpush1.bf16.msra.mxu0 %v752
      %1166 = vmatprep.subr.bf16.mxu0 %v763
      %1167 = vmatpush1.bf16.msra.mxu0 %v762
      %1168 = vmatprep.subr.bf16.mxu0 %v773
      %1169 = vmatpush1.bf16.msra.mxu0 %v772
      %1170 = vmatprep.subr.bf16.mxu0 %v783
      %1171 = vmatpush1.bf16.msra.mxu0 %v782
      %1172 = vmatprep.subr.bf16.mxu0 %v793
      %1173 = vmatpush1.bf16.msra.mxu0 %v792
      %1174 = vmatprep.subr.bf16.mxu0 %v803
      %1175 = vmatpush1.bf16.msra.mxu0 %v802
      %1176 = vmatprep.subr.bf16.mxu0 %v813
      %1177 = vmatpush1.bf16.msra.mxu0 %v812
      %1178 = vmatprep.subr.bf16.mxu0 %v823
      %1179 = vmatpush1.bf16.msra.mxu0 %v822
      %1180 = vmatprep.subr.bf16.mxu0 %v833
      %1181 = vmatpush1.bf16.msra.mxu0 %v832
      %1182 = vmatprep.subr.bf16.mxu0 %v998
      %1183 = vmatpush1.bf16.msra.mxu0 %v995
      %1184 = vmatprep.subr.bf16.mxu0 0
      %1185 = vmatpush1.bf16.msra.mxu0 0
      %1186 = vmatprep.subr.bf16.mxu0 0
      %1187 = vmatpush1.bf16.msra.mxu0 0
      %1188 = vmatprep.subr.bf16.mxu0 0
      %1189 = vmatpush1.bf16.msra.mxu0 0
      %1190 = vmatprep.mubr.bf16.mxu0 %v970
      %1191 = vmatmul.mubr.bf16.gmra.mrb[0].mxu0 %v331
      %v1192 = vpop.f32.mrb[0].mxu0
      %v1193 = vadd.f32 0.0, %v1192
      %v1194 = vpop.f32.mrb[0].mxu0
      %v1195 = vadd.f32 0.0, %v1194
      %v1196 = vpop.f32.mrb[0].mxu0
      %v1197 = vadd.f32 0.0, %v1196
      %v1198 = vpop.f32.mrb[0].mxu0
      %v1199 = vadd.f32 0.0, %v1198
      %1200 = vmatprep.mubr.bf16.mxu0 %v973
      %1201 = vmatmul.mubr.bf16.gmra.mrb[0].mxu0 %v333
      %v1202 = vpop.f32.mrb[0].mxu0
      %v1203 = vadd.f32 0.0, %v1202
      %v1204 = vpop.f32.mrb[0].mxu0
      %v1205 = vadd.f32 0.0, %v1204
      %v1206 = vpop.f32.mrb[0].mxu0
      %v1207 = vadd.f32 0.0, %v1206
      %v1208 = vpop.f32.mrb[0].mxu0
      %v1209 = vadd.f32 0.0, %v1208
      %1210 = vmatprep.mubr.bf16.mxu0 %v976
      %1211 = vmatmul.mubr.bf16.gmra.mrb[0].mxu0 %v335
      %v1212 = vpop.f32.mrb[0].mxu0
      %v1213 = vadd.f32 0.0, %v1212
      %v1214 = vpop.f32.mrb[0].mxu0
      %v1215 = vadd.f32 0.0, %v1214
      %v1216 = vpop.f32.mrb[0].mxu0
      %v1217 = vadd.f32 0.0, %v1216
      %v1218 = vpop.f32.mrb[0].mxu0
      %v1219 = vadd.f32 0.0, %v1218
      %1220 = vmatprep.mubr.bf16.mxu0 %v979
      %1221 = vmatmul.mubr.bf16.gmra.mrb[0].mxu0 %v337
      %v1222 = vpop.f32.mrb[0].mxu0
      %v1223 = vadd.f32 0.0, %v1222
      %v1224 = vpop.f32.mrb[0].mxu0
      %v1225 = vadd.f32 0.0, %v1224
      %v1226 = vpop.f32.mrb[0].mxu0
      %v1227 = vadd.f32 0.0, %v1226
      %v1228 = vpop.f32.mrb[0].mxu0
      %v1229 = vadd.f32 0.0, %v1228
      %1230 = vdwg.mxu0
      %1231 = vmatprep.subr.bf16.mxu0 %v725
      %1232 = vmatpush1.bf16.msra.mxu0 %v724
      %1233 = vmatprep.subr.bf16.mxu0 %v735
      %1234 = vmatpush1.bf16.msra.mxu0 %v734
      %1235 = vmatprep.subr.bf16.mxu0 %v745
      %1236 = vmatpush1.bf16.msra.mxu0 %v744
      %1237 = vmatprep.subr.bf16.mxu0 %v755
      %1238 = vmatpush1.bf16.msra.mxu0 %v754
      %1239 = vmatprep.subr.bf16.mxu0 %v765
      %1240 = vmatpush1.bf16.msra.mxu0 %v764
      %1241 = vmatprep.subr.bf16.mxu0 %v775
      %1242 = vmatpush1.bf16.msra.mxu0 %v774
      %1243 = vmatprep.subr.bf16.mxu0 %v785
      %1244 = vmatpush1.bf16.msra.mxu0 %v784
      %1245 = vmatprep.subr.bf16.mxu0 %v795
      %1246 = vmatpush1.bf16.msra.mxu0 %v794
      %1247 = vmatprep.subr.bf16.mxu0 %v805
      %1248 = vmatpush1.bf16.msra.mxu0 %v804
      %1249 = vmatprep.subr.bf16.mxu0 %v815
      %1250 = vmatpush1.bf16.msra.mxu0 %v814
      %1251 = vmatprep.subr.bf16.mxu0 %v825
      %1252 = vmatpush1.bf16.msra.mxu0 %v824
      %1253 = vmatprep.subr.bf16.mxu0 %v835
      %1254 = vmatpush1.bf16.msra.mxu0 %v834
      %1255 = vmatprep.subr.bf16.mxu0 %v1004
      %1256 = vmatpush1.bf16.msra.mxu0 %v1001
      %1257 = vmatprep.subr.bf16.mxu0 0
      %1258 = vmatpush1.bf16.msra.mxu0 0
      %1259 = vmatprep.subr.bf16.mxu0 0
      %1260 = vmatpush1.bf16.msra.mxu0 0
      %1261 = vmatprep.subr.bf16.mxu0 0
      %1262 = vmatpush1.bf16.msra.mxu0 0
      %1263 = vmatprep.mubr.bf16.mxu0 %v970
      %1264 = vmatmul.mubr.bf16.gmra.mrb[0].mxu0 %v331
      %v1265 = vpop.f32.mrb[0].mxu0
      %v1266 = vadd.f32 0.0, %v1265
      %v1267 = vpop.f32.mrb[0].mxu0
      %v1268 = vadd.f32 0.0, %v1267
      %v1269 = vpop.f32.mrb[0].mxu0
      %v1270 = vadd.f32 0.0, %v1269
      %v1271 = vpop.f32.mrb[0].mxu0
      %v1272 = vadd.f32 0.0, %v1271
      %1273 = vmatprep.mubr.bf16.mxu0 %v973
      %1274 = vmatmul.mubr.bf16.gmra.mrb[0].mxu0 %v333
      %v1275 = vpop.f32.mrb[0].mxu0
      %v1276 = vadd.f32 0.0, %v1275
      %v1277 = vpop.f32.mrb[0].mxu0
      %v1278 = vadd.f32 0.0, %v1277
      %v1279 = vpop.f32.mrb[0].mxu0
      %v1280 = vadd.f32 0.0, %v1279
      %v1281 = vpop.f32.mrb[0].mxu0
      %v1282 = vadd.f32 0.0, %v1281
      %1283 = vmatprep.mubr.bf16.mxu0 %v976
      %1284 = vmatmul.mubr.bf16.gmra.mrb[0].mxu0 %v335
      %v1285 = vpop.f32.mrb[0].mxu0
      %v1286 = vadd.f32 0.0, %v1285
      %v1287 = vpop.f32.mrb[0].mxu0
      %v1288 = vadd.f32 0.0, %v1287
      %v1289 = vpop.f32.mrb[0].mxu0
      %v1290 = vadd.f32 0.0, %v1289
      %v1291 = vpop.f32.mrb[0].mxu0
      %v1292 = vadd.f32 0.0, %v1291
      %1293 = vmatprep.mubr.bf16.mxu0 %v979
      %1294 = vmatmul.mubr.bf16.gmra.mrb[0].mxu0 %v337
      %v1295 = vpop.f32.mrb[0].mxu0
      %v1296 = vadd.f32 0.0, %v1295
      %v1297 = vpop.f32.mrb[0].mxu0
      %v1298 = vadd.f32 0.0, %v1297
      %v1299 = vpop.f32.mrb[0].mxu0
      %v1300 = vadd.f32 0.0, %v1299
      %v1301 = vpop.f32.mrb[0].mxu0
      %v1302 = vadd.f32 0.0, %v1301
      %1303 = vdwg.mxu0
      %1304 = vmatprep.subr.bf16.mxu0 %v727
      %1305 = vmatpush1.bf16.msra.mxu0 %v726
      %1306 = vmatprep.subr.bf16.mxu0 %v737
      %1307 = vmatpush1.bf16.msra.mxu0 %v736
      %1308 = vmatprep.subr.bf16.mxu0 %v747
      %1309 = vmatpush1.bf16.msra.mxu0 %v746
      %1310 = vmatprep.subr.bf16.mxu0 %v757
      %1311 = vmatpush1.bf16.msra.mxu0 %v756
      %1312 = vmatprep.subr.bf16.mxu0 %v767
      %1313 = vmatpush1.bf16.msra.mxu0 %v766
      %1314 = vmatprep.subr.bf16.mxu0 %v777
      %1315 = vmatpush1.bf16.msra.mxu0 %v776
      %1316 = vmatprep.subr.bf16.mxu0 %v787
      %1317 = vmatpush1.bf16.msra.mxu0 %v786
      %1318 = vmatprep.subr.bf16.mxu0 %v797
      %1319 = vmatpush1.bf16.msra.mxu0 %v796
      %1320 = vmatprep.subr.bf16.mxu0 %v807
      %1321 = vmatpush1.bf16.msra.mxu0 %v806
      %1322 = vmatprep.subr.bf16.mxu0 %v817
      %1323 = vmatpush1.bf16.msra.mxu0 %v816
      %1324 = vmatprep.subr.bf16.mxu0 %v827
      %1325 = vmatpush1.bf16.msra.mxu0 %v826
      %1326 = vmatprep.subr.bf16.mxu0 %v837
      %1327 = vmatpush1.bf16.msra.mxu0 %v836
      %1328 = vmatprep.subr.bf16.mxu0 %v1010
      %1329 = vmatpush1.bf16.msra.mxu0 %v1007
      %1330 = vmatprep.subr.bf16.mxu0 0
      %1331 = vmatpush1.bf16.msra.mxu0 0
      %1332 = vmatprep.subr.bf16.mxu0 0
      %1333 = vmatpush1.bf16.msra.mxu0 0
      %1334 = vmatprep.subr.bf16.mxu0 0
      %1335 = vmatpush1.bf16.msra.mxu0 0
      %1336 = vmatprep.mubr.bf16.mxu0 %v970
      %1337 = vmatmul.mubr.bf16.gmra.mrb[0].mxu0 %v331
      %v1338 = vpop.f32.mrb[0].mxu0
      %v1339 = vadd.f32 0.0, %v1338
      %v1340 = vpop.f32.mrb[0].mxu0
      %v1341 = vadd.f32 0.0, %v1340
      %v1342 = vpop.f32.mrb[0].mxu0
      %v1343 = vadd.f32 0.0, %v1342
      %v1344 = vpop.f32.mrb[0].mxu0
      %v1345 = vadd.f32 0.0, %v1344
      %1346 = vmatprep.mubr.bf16.mxu0 %v973
      %1347 = vmatmul.mubr.bf16.gmra.mrb[0].mxu0 %v333
      %v1348 = vpop.f32.mrb[0].mxu0
      %v1349 = vadd.f32 0.0, %v1348
      %v1350 = vpop.f32.mrb[0].mxu0
      %v1351 = vadd.f32 0.0, %v1350
      %v1352 = vpop.f32.mrb[0].mxu0
      %v1353 = vadd.f32 0.0, %v1352
      %v1354 = vpop.f32.mrb[0].mxu0
      %v1355 = vadd.f32 0.0, %v1354
      %1356 = vmatprep.mubr.bf16.mxu0 %v976
      %1357 = vmatmul.mubr.bf16.gmra.mrb[0].mxu0 %v335
      %v1358 = vpop.f32.mrb[0].mxu0
      %v1359 = vadd.f32 0.0, %v1358
      %v1360 = vpop.f32.mrb[0].mxu0
      %v1361 = vadd.f32 0.0, %v1360
      %v1362 = vpop.f32.mrb[0].mxu0
      %v1363 = vadd.f32 0.0, %v1362
      %v1364 = vpop.f32.mrb[0].mxu0
      %v1365 = vadd.f32 0.0, %v1364
      %1366 = vmatprep.mubr.bf16.mxu0 %v979
      %1367 = vmatmul.mubr.bf16.gmra.mrb[0].mxu0 %v337
      %v1368 = vpop.f32.mrb[0].mxu0
      %v1369 = vadd.f32 0.0, %v1368
      %v1370 = vpop.f32.mrb[0].mxu0
      %v1371 = vadd.f32 0.0, %v1370
      %v1372 = vpop.f32.mrb[0].mxu0
      %v1373 = vadd.f32 0.0, %v1372
      %v1374 = vpop.f32.mrb[0].mxu0
      %v1375 = vadd.f32 0.0, %v1374
      %1376 = vdwg.mxu0
      %v1377 = vmax.f32 %v1047, %v1057
      %v1378 = vmax.f32 %v1049, %v1059
      %v1379 = vmax.f32 %v1120, %v1130
      %v1380 = vmax.f32 %v1122, %v1132
      %v1381 = vmax.f32 %v1193, %v1203
      %v1382 = vmax.f32 %v1195, %v1205
      %v1383 = vmax.f32 %v1266, %v1276
      %v1384 = vmax.f32 %v1268, %v1278
      %v1385 = vmax.f32 %v1339, %v1349
      %v1386 = vmax.f32 %v1341, %v1351
      %v1387 = vmax.f32 %v1051, %v1061
      %v1388 = vmax.f32 %v1053, %v1063
      %v1389 = vmax.f32 %v1124, %v1134
      %v1390 = vmax.f32 %v1126, %v1136
      %v1391 = vmax.f32 %v1197, %v1207
      %v1392 = vmax.f32 %v1199, %v1209
      %v1393 = vmax.f32 %v1270, %v1280
      %v1394 = vmax.f32 %v1272, %v1282
      %v1395 = vmax.f32 %v1343, %v1353
      %v1396 = vmax.f32 %v1345, %v1355
      %v1397 = vmax.f32 %v1067, %v1077
      %v1398 = vmax.f32 %v1069, %v1079
      %v1399 = vmax.f32 %v1140, %v1150
      %v1400 = vmax.f32 %v1142, %v1152
      %v1401 = vmax.f32 %v1213, %v1223
      %v1402 = vmax.f32 %v1215, %v1225
      %v1403 = vmax.f32 %v1286, %v1296
      %v1404 = vmax.f32 %v1288, %v1298
      %v1405 = vmax.f32 %v1359, %v1369
      %v1406 = vmax.f32 %v1361, %v1371
      %v1407 = vmax.f32 %v1071, %v1081
      %v1408 = vmax.f32 %v1073, %v1083
      %v1409 = vmax.f32 %v1144, %v1154
      %v1410 = vmax.f32 %v1146, %v1156
      %v1411 = vmax.f32 %v1217, %v1227
      %v1412 = vmax.f32 %v1219, %v1229
      %v1413 = vmax.f32 %v1290, %v1300
      %v1414 = vmax.f32 %v1292, %v1302
      %v1415 = vmax.f32 %v1363, %v1373
      %v1416 = vmax.f32 %v1365, %v1375
      %v1417 = vmax.f32 %v1377, %v1397
      %v1418 = vmax.f32 %v1378, %v1398
      %v1419 = vmax.f32 %v1379, %v1399
      %v1420 = vmax.f32 %v1380, %v1400
      %v1421 = vmax.f32 %v1381, %v1401
      %v1422 = vmax.f32 %v1382, %v1402
      %v1423 = vmax.f32 %v1383, %v1403
      %v1424 = vmax.f32 %v1384, %v1404
      %v1425 = vmax.f32 %v1385, %v1405
      %v1426 = vmax.f32 %v1386, %v1406
      %v1427 = vmax.f32 %v1387, %v1407
      %v1428 = vmax.f32 %v1388, %v1408
      %v1429 = vmax.f32 %v1389, %v1409
      %v1430 = vmax.f32 %v1390, %v1410
      %v1431 = vmax.f32 %v1391, %v1411
      %v1432 = vmax.f32 %v1392, %v1412
      %v1433 = vmax.f32 %v1393, %v1413
      %v1434 = vmax.f32 %v1394, %v1414
      %v1435 = vmax.f32 %v1395, %v1415
      %v1436 = vmax.f32 %v1396, %v1416
      %1438 = vset.pattern.permute.xlu0 0
      %1439 = vperm.xlu0 %1438, %v180
      %v1440 = vpop.permute.xlu0 %1439
      %1443 = vset.pattern.permute.xlu0 0
      %1444 = vperm.xlu0 %1443, %v181
      %v1445 = vpop.permute.xlu0 %1444
      %v1447 = vadd.f32 %v1417, %v1440
      %v1448 = vadd.f32 %v1418, %v1440
      %v1449 = vadd.f32 %v1419, %v1440
      %v1450 = vadd.f32 %v1420, %v1440
      %v1451 = vadd.f32 %v1421, %v1440
      %v1452 = vadd.f32 %v1422, %v1440
      %v1453 = vadd.f32 %v1423, %v1440
      %v1454 = vadd.f32 %v1424, %v1440
      %v1455 = vadd.f32 %v1425, %v1440
      %v1456 = vadd.f32 %v1426, %v1440
      %v1457 = vadd.f32 %v1427, %v1445
      %v1458 = vadd.f32 %v1428, %v1445
      %v1459 = vadd.f32 %v1429, %v1445
      %v1460 = vadd.f32 %v1430, %v1445
      %v1461 = vadd.f32 %v1431, %v1445
      %v1462 = vadd.f32 %v1432, %v1445
      %v1463 = vadd.f32 %v1433, %v1445
      %v1464 = vadd.f32 %v1434, %v1445
      %v1465 = vadd.f32 %v1435, %v1445
      %v1466 = vadd.f32 %v1436, %v1445
      %v1467 = vmax.f32 %v1447, 0.0
      %v1468 = vmax.f32 %v1448, 0.0
      %v1469 = vmax.f32 %v1449, 0.0
      %v1470 = vmax.f32 %v1450, 0.0
      %v1471 = vmax.f32 %v1451, 0.0
      %v1472 = vmax.f32 %v1452, 0.0
      %v1473 = vmax.f32 %v1453, 0.0
      %v1474 = vmax.f32 %v1454, 0.0
      %v1475 = vmax.f32 %v1455, 0.0
      %v1476 = vmax.f32 %v1456, 0.0
      %v1477 = vmax.f32 %v1457, 0.0
      %v1478 = vmax.f32 %v1458, 0.0
      %v1479 = vmax.f32 %v1459, 0.0
      %v1480 = vmax.f32 %v1460, 0.0
      %v1481 = vmax.f32 %v1461, 0.0
      %v1482 = vmax.f32 %v1462, 0.0
      %v1483 = vmax.f32 %v1463, 0.0
      %v1484 = vmax.f32 %v1464, 0.0
      %v1485 = vmax.f32 %v1465, 0.0
      %v1486 = vmax.f32 %v1466, 0.0
      %v1487 = vpack.c.bf16 %v1477, %v1467
      %v1488 = vpack.c.bf16 %v1478, %v1468
      %v1489 = vpack.c.bf16 %v1479, %v1469
      %v1490 = vpack.c.bf16 %v1480, %v1470
      %v1491 = vpack.c.bf16 %v1481, %v1471
      %v1492 = vpack.c.bf16 %v1482, %v1472
      %v1493 = vpack.c.bf16 %v1483, %v1473
      %v1494 = vpack.c.bf16 %v1484, %v1474
      %v1495 = vpack.c.bf16 %v1485, %v1475
      %v1496 = vpack.c.bf16 %v1486, %v1476
      %v1507 = vunpack.c.l.b16 %v1487
      %v1508 = vunpack.c.l.b16 %v1488
      %v1509 = vunpack.c.l.b16 %v1489
      %v1510 = vunpack.c.l.b16 %v1490
      %v1511 = vunpack.c.l.b16 %v1491
      %v1512 = vunpack.c.l.b16 %v1492
      %v1513 = vunpack.c.l.b16 %v1493
      %v1514 = vunpack.c.l.b16 %v1494
      %v1515 = vunpack.c.l.b16 %v1495
      %v1516 = vunpack.c.l.b16 %v1496
      %v1517 = vunpack.c.h.b16 %v1487
      %v1518 = vunpack.c.h.b16 %v1488
      %v1519 = vunpack.c.h.b16 %v1489
      %v1520 = vunpack.c.h.b16 %v1490
      %v1521 = vunpack.c.h.b16 %v1491
      %v1522 = vunpack.c.h.b16 %v1492
      %v1523 = vunpack.c.h.b16 %v1493
      %v1524 = vunpack.c.h.b16 %v1494
      %v1525 = vunpack.c.h.b16 %v1495
      %v1526 = vunpack.c.h.b16 %v1496
      %v1527 = vpack.c.b16 %v1508, %v1507
      %v1528 = vpack.c.b16 %v1510, %v1509
      %v1529 = vpack.c.b16 %v1512, %v1511
      %v1530 = vpack.c.b16 %v1514, %v1513
      %v1531 = vpack.c.b16 %v1516, %v1515
      %v1532 = vpack.c.b16 %v1518, %v1517
      %v1533 = vpack.c.b16 %v1520, %v1519
      %v1534 = vpack.c.b16 %v1522, %v1521
      %v1535 = vpack.c.b16 %v1524, %v1523
      %v1536 = vpack.c.b16 %v1526, %v1525
      %1547 = vst [vmem:[%s170] sm:$0xff] %v1527
      %1548 = vst [vmem:[%s170 + $0x8] sm:$0xff] %v1528
      %1549 = vst [vmem:[%s170 + $0x10] sm:$0xff] %v1529
      %1550 = vst [vmem:[%s170 + $0x18] sm:$0xff] %v1530
      %vm1551 = vcmask 392196
      %vm1552 = vmor %vm1551, %vm981
      %1553 = vst.msk [vmem:[%s170 + $0x20] sm:$0xff] %vm1552, %v1531
      %1554 = vst [vmem:[%s170 + $0x28] sm:$0xff] %v1532
      %1555 = vst [vmem:[%s170 + $0x30] sm:$0xff] %v1533
      %1556 = vst [vmem:[%s170 + $0x38] sm:$0xff] %v1534
      %1557 = vst [vmem:[%s170 + $0x40] sm:$0xff] %v1535
      %1558 = vst.msk [vmem:[%s170 + $0x48] sm:$0xff] %vm1552, %v1536
      %p1559 = scmp.lt.s32.totalorder %s14, 1
      %s1560 = scalar_select %p1559, %s14, 1
      %s1561 = smul.addr %s1560, 20
      %s1562 = smul.addr %s1561, 4
      %s1563 = scalar_lea.vmem %s3, %s1562
      // Predicated region
      $region33: #{convnet_forward.3} parent=31 // pred_check
        %p1564 = pneg %p100
      $region34: #{convnet_forward.3} parent=31 // pred_check_branch
        %1566 = sbr.rel (%p1564) target = $region36
      $region35: #{convnet_forward.3} parent=31 // pred_region
        _
      $region36: #{convnet_forward.3} parent=31 // pred_fallthru
        _
    $region32: #{convnet_forward.3} parent=5 // pred_fallthru
      _
    %p1567 = scmp.le.s32.totalorder 2, %s9
    // Predicated region
    $region37: #{convnet_forward.3} parent=5 // pred_check
      %p1568 = pneg %p1567
    $region38: #{convnet_forward.3} parent=5 // pred_check_branch
      %1570 = sbr.rel (%p1568) target = $region40
    $region39: #{convnet_forward.3} parent=5 // pred_region
      %s1571 = ssub.s32 %s9, 2
      // Predicated region
      $region41: #{convnet_forward.3} parent=39 // pred_check
        %p1572 = pneg %p106
      $region42: #{convnet_forward.3} parent=39 // pred_check_branch
        %1574 = sbr.rel (%p1572) target = $region44
      $region43: #{convnet_forward.3} parent=39 // pred_region
        %p1575 = scmp.lt.s32.totalorder %s15, 1
        %s1576 = scalar_select %p1575, %s15, 1
        %s1577 = smul.addr %s1576, 20
        %s1578 = smul.addr %s1577, 4
        %s1579 = scalar_lea.vmem %s3, %s1578
      $region44: #{convnet_forward.3} parent=39 // pred_fallthru
        _
    $region40: #{convnet_forward.3} parent=5 // pred_fallthru
      _
  $region6: #{convnet_forward.3} parent=0 // loop_footer
    %s13 = sadd.s32 1, %s9
  $region7: #{convnet_forward.3} parent=0 // loop_footer_branch
    %8 = sbr.rel target = $region3
  $region8: #{convnet_forward.3} parent=0 // loop_exit
    _

// kernel: convnet_forward.4
$region0: #{convnet_forward.4}
  #allocation0 [shape = 'u32[]', space=smem, size = 0x4, offset = 0x4, fixed_abs, tag = 'smem constant byte address 0x4 - core index']
  #allocation1 [shape = 'u32[144,128]{1,0:T(1,128)}', space=vmem, size = 0x12000, scoped, tag = 'internal scratch']
  %s0 = inlined_call_operand.vmem [shape: bf16[2,1600,300], index: 0, kind: input, shape index: {}]
  %s1 = inlined_call_operand.vmem [shape: bf16[128,1600], index: 1, kind: input, shape index: {}]
  %s2 = inlined_call_operand.vmem [shape: f32[32,1], index: 2, kind: input, shape index: {}]
  %s3 = inlined_call_operand.vmem [shape: bf16[2,32,300], index: 3, kind: output, shape index: {}]
  %s4 = sld [smem:[#allocation0]]
  $region45: #{convnet_forward.4} parent=0
    _
  %s6 = ssub.s32 1, %s4
  %s7 = scalar_select 0, %s6, %s4
  loop: start=0, step=1, limit=4
  $region2: #{convnet_forward.4} parent=0 // loop_pre_header
    _
  $region3: #{convnet_forward.4} parent=0 // loop_header
    %s9 = sphi 0, %s13
    %p10 = scmp.ge.s32.totalorder %s9, 4
    %s19 = sphi 0, %s21
    %s22 = sphi 0, %s19
    %s23 = sphi 0, %s22
    %s39 = sphi 0, %s23
    %s43 = sphi 0, %s43
    %s45 = sphi 0, %s43
    %s46 = sphi 0, %s45
    %s60 = sphi 0, %s46
    %s64 = sphi 0, %s64
    %s66 = sphi 0, %s64
    %s67 = sphi 0, %s66
    %s81 = sphi 0, %s67
    %s87 = sphi 0, %s89
    %s90 = sphi 0, %s87
    %s91 = sphi 0, %s90
    %s107 = sphi 0, %s91
  $region4: #{convnet_forward.4} parent=0 // loop_header_branch
    %12 = sbr.rel (%p10) target = $region8
  $region5: #{convnet_forward.4} parent=0 // loop_body
    %s14 = ssub.s32 %s9, 1
    %s15 = ssub.s32 %s9, 2
    %s16 = sadd.s32 %s9, 1
    %s17 = ssub.s32 %s9, %s16
    %p18 = scmp.eq.s32.totalorder %s17, 0
    %s20 = sadd.s32 %s19, 1
    %s21 = scalar_select %p18, %s19, %s20
    %p24 = pneg %p18
    %p25 = scmp.eq.s32.totalorder %s9, 1
    %p26 = por %p24, %p25
    %p27 = scmp.ne.s32.totalorder %s19, %s22
    %p28 = scmp.eq.s32.totalorder %s9, 0
    %p29 = por %p27, %p28
    %p30 = scmp.ne.s32.totalorder %s19, %s22
    %p31 = scmp.eq.s32.totalorder %s14, 1
    %p32 = por %p30, %p31
    %p33 = scmp.ne.s32.totalorder %s22, %s23
    %p34 = scmp.eq.s32.totalorder %s14, 0
    %p35 = por %p33, %p34
    %p36 = scmp.ne.s32.totalorder %s22, %s23
    %p37 = scmp.eq.s32.totalorder %s15, 1
    %p38 = por %p36, %p37
    %p40 = scmp.ne.s32.totalorder %s23, %s39
    %p41 = scmp.eq.s32.totalorder %s15, 0
    %p42 = por %p40, %p41
    %s44 = sadd.s32 %s43, 1
    %p47 = scmp.eq.s32.totalorder %s9, 1
    %p48 = scmp.ne.s32.totalorder %s43, %s45
    %p49 = scmp.eq.s32.totalorder %s9, 0
    %p50 = por %p48, %p49
    %p51 = scmp.ne.s32.totalorder %s43, %s45
    %p52 = scmp.eq.s32.totalorder %s14, 1
    %p53 = por %p51, %p52
    %p54 = scmp.ne.s32.totalorder %s45, %s46
    %p55 = scmp.eq.s32.totalorder %s14, 0
    %p56 = por %p54, %p55
    %p57 = scmp.ne.s32.totalorder %s45, %s46
    %p58 = scmp.eq.s32.totalorder %s15, 1
    %p59 = por %p57, %p58
    %p61 = scmp.ne.s32.totalorder %s46, %s60
    %p62 = scmp.eq.s32.totalorder %s15, 0
    %p63 = por %p61, %p62
    %s65 = sadd.s32 %s64, 1
    %p68 = scmp.eq.s32.totalorder %s9, 1
    %p69 = scmp.ne.s32.totalorder %s64, %s66
    %p70 = scmp.eq.s32.totalorder %s9, 0
    %p71 = por %p69, %p70
    %p72 = scmp.ne.s32.totalorder %s64, %s66
    %p73 = scmp.eq.s32.totalorder %s14, 1
    %p74 = por %p72, %p73
    %p75 = scmp.ne.s32.totalorder %s66, %s67
    %p76 = scmp.eq.s32.totalorder %s14, 0
    %p77 = por %p75, %p76
    %p78 = scmp.ne.s32.totalorder %s66, %s67
    %p79 = scmp.eq.s32.totalorder %s15, 1
    %p80 = por %p78, %p79
    %p82 = scmp.ne.s32.totalorder %s67, %s81
    %p83 = scmp.eq.s32.totalorder %s15, 0
    %p84 = por %p82, %p83
    %s85 = ssub.s32 %s9, %s16
    %p86 = scmp.eq.s32.totalorder %s85, 0
    %s88 = sadd.s32 %s87, 1
    %s89 = scalar_select %p86, %s87, %s88
    %p92 = pneg %p86
    %p93 = scmp.eq.s32.totalorder %s9, 1
    %p94 = por %p92, %p93
    %p95 = scmp.ne.s32.totalorder %s87, %s90
    %p96 = scmp.eq.s32.totalorder %s9, 0
    %p97 = por %p95, %p96
    %p98 = scmp.ne.s32.totalorder %s87, %s90
    %p99 = scmp.eq.s32.totalorder %s14, 1
    %p100 = por %p98, %p99
    %p101 = scmp.ne.s32.totalorder %s90, %s91
    %p102 = scmp.eq.s32.totalorder %s14, 0
    %p103 = por %p101, %p102
    %p104 = scmp.ne.s32.totalorder %s90, %s91
    %p105 = scmp.eq.s32.totalorder %s15, 1
    %p106 = por %p104, %p105
    %p108 = scmp.ne.s32.totalorder %s91, %s107
    %p109 = scmp.eq.s32.totalorder %s15, 0
    %p110 = por %p108, %p109
    %p111 = scmp.le.s32.totalorder 1, %s9
    %p112 = scmp.lt.s32.totalorder %s9, 3
    %p113 = pnand %p111, %p112
    %p114 = pneg %p113
    // Predicated region
    $region9: #{convnet_forward.4} parent=5 // pred_check
      _
    $region10: #{convnet_forward.4} parent=5 // pred_check_branch
      %116 = sbr.rel (%p113) target = $region12
    $region11: #{convnet_forward.4} parent=5 // pred_region
      %s117 = ssub.s32 %s9, 1
      // Predicated region
      $region13: #{convnet_forward.4} parent=11 // pred_check
        %p118 = pneg %p56
      $region14: #{convnet_forward.4} parent=11 // pred_check_branch
        %120 = sbr.rel (%p118) target = $region16
      $region15: #{convnet_forward.4} parent=11 // pred_region
        _
      $region16: #{convnet_forward.4} parent=11 // pred_fallthru
        _
      // Predicated region
      $region17: #{convnet_forward.4} parent=11 // pred_check
        %p121 = pneg %p77
      $region18: #{convnet_forward.4} parent=11 // pred_check_branch
        %123 = sbr.rel (%p121) target = $region20
      $region19: #{convnet_forward.4} parent=11 // pred_region
        _
      $region20: #{convnet_forward.4} parent=11 // pred_fallthru
        _
    $region12: #{convnet_forward.4} parent=5 // pred_fallthru
      _
    %p124 = scmp.lt.s32.totalorder %s9, 2
    // Predicated region
    $region21: #{convnet_forward.4} parent=5 // pred_check
      %p125 = pneg %p124
    $region22: #{convnet_forward.4} parent=5 // pred_check_branch
      %127 = sbr.rel (%p125) target = $region24
    $region23: #{convnet_forward.4} parent=5 // pred_region
      // Predicated region
      $region25: #{convnet_forward.4} parent=23 // pred_check
        %p128 = pneg %p29
      $region26: #{convnet_forward.4} parent=23 // pred_check_branch
        %130 = sbr.rel (%p128) target = $region28
      $region27: #{convnet_forward.4} parent=23 // pred_region
        %p131 = scmp.lt.s32.totalorder %s9, 1
        %s132 = scalar_select %p131, %s9, 1
        %s133 = smul.addr %s132, 600
        %s134 = smul.addr %s133, 4
        %s135 = scalar_lea.vmem %s0, %s134
      $region28: #{convnet_forward.4} parent=23 // pred_fallthru
        _
    $region24: #{convnet_forward.4} parent=5 // pred_fallthru
      _
    %p136 = scmp.le.s32.totalorder 1, %s9
    %p137 = scmp.lt.s32.totalorder %s9, 3
    %p138 = pnand %p136, %p137
    %p139 = pneg %p138
    // Predicated region
    $region29: #{convnet_forward.4} parent=5 // pred_check
      _
    $region30: #{convnet_forward.4} parent=5 // pred_check_branch
      %141 = sbr.rel (%p138) target = $region32
    $region31: #{convnet_forward.4} parent=5 // pred_region
      %s142 = ssub.s32 %s9, 1
      %p143 = scmp.lt.s32.totalorder %s14, 1
      %s144 = scalar_select %p143, %s14, 1
      %s145 = smul.addr %s144, 600
      %s146 = smul.addr %s145, 4
      %s147 = scalar_lea.vmem %s0, %s146
      %p148 = pneg %p35
      %p149 = pneg %p32
      %p150 = pneg %p56
      %p151 = pneg %p53
      %p152 = pneg %p77
      %p153 = pneg %p74
      %p154 = pneg %p103
      %p155 = pneg %p100
      %p156 = scmp.lt.s32.totalorder %s14, 1
      %s157 = scalar_select %p156, %s14, 1
      %s158 = smul.addr %s157, 12
      %s159 = smul.addr %s158, 4
      %s160 = scalar_lea.vmem %s3, %s159
      %p161 = scmp.lt.s32.totalorder %s14, 1
      %s162 = scalar_select %p161, %s14, 1
      %s163 = smul.addr %s162, 600
      %s164 = smul.addr %s163, 4
      %s165 = scalar_lea.vmem %s0, %s164
      %p166 = scmp.lt.s32.totalorder %s14, 1
      %s167 = scalar_select %p166, %s14, 1
      %s168 = smul.addr %s167, 12
      %s169 = smul.addr %s168, 4
      %s170 = scalar_lea.vmem %s3, %s169
      %v172 = vld [vmem:[%s1] sm:$0xff]
      %v173 = vld [vmem:[%s1 + $0x8] sm:$0xff]
      %v174 = vld [vmem:[%s1 + $0x10] sm:$0xff]
      %v175 = vld [vmem:[%s1 + $0x18] sm:$0xff]
      %v176 = vld [vmem:[%s1 + $0x20] sm:$0xff]
      %v177 = vld [vmem:[%s1 + $0x28] sm:$0xff]
      %v178 = vld [vmem:[%s1 + $0x30] sm:$0xf]
      %v179 = vld [vmem:[%s1 + $0x34] sm:$0xff]
      %v180 = vld [vmem:[%s1 + $0x3c] sm:$0xff]
      %v181 = vld [vmem:[%s1 + $0x44] sm:$0xff]
      %v182 = vld [vmem:[%s1 + $0x4c] sm:$0xff]
      %v183 = vld [vmem:[%s1 + $0x54] sm:$0xff]
      %v184 = vld [vmem:[%s1 + $0x5c] sm:$0xff]
      %v185 = vld [vmem:[%s1 + $0x64] sm:$0xf]
      %v186 = vld [vmem:[%s1 + $0x68] sm:$0xff]
      %v187 = vld [vmem:[%s1 + $0x70] sm:$0xff]
      %v188 = vld [vmem:[%s1 + $0x78] sm:$0xff]
      %v189 = vld [vmem:[%s1 + $0x80] sm:$0xff]
      %v190 = vld [vmem:[%s1 + $0x88] sm:$0xff]
      %v191 = vld [vmem:[%s1 + $0x90] sm:$0xff]
      %v192 = vld [vmem:[%s1 + $0x98] sm:$0xf]
      %v193 = vld [vmem:[%s1 + $0x9c] sm:$0xff]
      %v194 = vld [vmem:[%s1 + $0xa4] sm:$0xff]
      %v195 = vld [vmem:[%s1 + $0xac] sm:$0xff]
      %v196 = vld [vmem:[%s1 + $0xb4] sm:$0xff]
      %v197 = vld [vmem:[%s1 + $0xbc] sm:$0xff]
      %v198 = vld [vmem:[%s1 + $0xc4] sm:$0xff]
      %v199 = vld [vmem:[%s1 + $0xcc] sm:$0xf]
      %v200 = vld [vmem:[%s1 + $0xd0] sm:$0xff]
      %v201 = vld [vmem:[%s1 + $0xd8] sm:$0xff]
      %v202 = vld [vmem:[%s1 + $0xe0] sm:$0xff]
      %v203 = vld [vmem:[%s1 + $0xe8] sm:$0xff]
      %v204 = vld [vmem:[%s1 + $0xf0] sm:$0xff]
      %v205 = vld [vmem:[%s1 + $0xf8] sm:$0xff]
      %v206 = vld [vmem:[%s1 + $0x100] sm:$0xf]
      %v207 = vld [vmem:[%s1 + $0x104] sm:$0xff]
      %v208 = vld [vmem:[%s1 + $0x10c] sm:$0xff]
      %v209 = vld [vmem:[%s1 + $0x114] sm:$0xff]
      %v210 = vld [vmem:[%s1 + $0x11c] sm:$0xff]
      %v211 = vld [vmem:[%s1 + $0x124] sm:$0xff]
      %v212 = vld [vmem:[%s1 + $0x12c] sm:$0xff]
      %v213 = vld [vmem:[%s1 + $0x134] sm:$0xf]
      %v214 = vld [vmem:[%s1 + $0x138] sm:$0xff]
      %v215 = vld [vmem:[%s1 + $0x140] sm:$0xff]
      %v216 = vld [vmem:[%s1 + $0x148] sm:$0xff]
      %v217 = vld [vmem:[%s1 + $0x150] sm:$0xff]
      %v218 = vld [vmem:[%s1 + $0x158] sm:$0xff]
      %v219 = vld [vmem:[%s1 + $0x160] sm:$0xff]
      %v220 = vld [vmem:[%s1 + $0x168] sm:$0xf]
      %v221 = vld [vmem:[%s1 + $0x16c] sm:$0xff]
      %v222 = vld [vmem:[%s1 + $0x174] sm:$0xff]
      %v223 = vld [vmem:[%s1 + $0x17c] sm:$0xff]
      %v224 = vld [vmem:[%s1 + $0x184] sm:$0xff]
      %v225 = vld [vmem:[%s1 + $0x18c] sm:$0xff]
      %v226 = vld [vmem:[%s1 + $0x194] sm:$0xff]
      %v227 = vld [vmem:[%s1 + $0x19c] sm:$0xf]
      %v228 = vld [vmem:[%s1 + $0x1a0] sm:$0xff]
      %v229 = vld [vmem:[%s1 + $0x1a8] sm:$0xff]
      %v230 = vld [vmem:[%s1 + $0x1b0] sm:$0xff]
      %v231 = vld [vmem:[%s1 + $0x1b8] sm:$0xff]
      %v232 = vld [vmem:[%s1 + $0x1c0] sm:$0xff]
      %v233 = vld [vmem:[%s1 + $0x1c8] sm:$0xff]
      %v234 = vld [vmem:[%s1 + $0x1d0] sm:$0xf]
      %v235 = vld [vmem:[%s1 + $0x1d4] sm:$0xff]
      %v236 = vld [vmem:[%s1 + $0x1dc] sm:$0xff]
      %v237 = vld [vmem:[%s1 + $0x1e4] sm:$0xff]
      %v238 = vld [vmem:[%s1 + $0x1ec] sm:$0xff]
      %v239 = vld [vmem:[%s1 + $0x1f4] sm:$0xff]
      %v240 = vld [vmem:[%s1 + $0x1fc] sm:$0xff]
      %v241 = vld [vmem:[%s1 + $0x204] sm:$0xf]
      %v242 = vld [vmem:[%s1 + $0x208] sm:$0xff]
      %v243 = vld [vmem:[%s1 + $0x210] sm:$0xff]
      %v244 = vld [vmem:[%s1 + $0x218] sm:$0xff]
      %v245 = vld [vmem:[%s1 + $0x220] sm:$0xff]
      %v246 = vld [vmem:[%s1 + $0x228] sm:$0xff]
      %v247 = vld [vmem:[%s1 + $0x230] sm:$0xff]
      %v248 = vld [vmem:[%s1 + $0x238] sm:$0xf]
      %v249 = vld [vmem:[%s1 + $0x23c] sm:$0xff]
      %v250 = vld [vmem:[%s1 + $0x244] sm:$0xff]
      %v251 = vld [vmem:[%s1 + $0x24c] sm:$0xff]
      %v252 = vld [vmem:[%s1 + $0x254] sm:$0xff]
      %v253 = vld [vmem:[%s1 + $0x25c] sm:$0xff]
      %v254 = vld [vmem:[%s1 + $0x264] sm:$0xff]
      %v255 = vld [vmem:[%s1 + $0x26c] sm:$0xf]
      %v256 = vld [vmem:[%s1 + $0x270] sm:$0xff]
      %v257 = vld [vmem:[%s1 + $0x278] sm:$0xff]
      %v258 = vld [vmem:[%s1 + $0x280] sm:$0xff]
      %v259 = vld [vmem:[%s1 + $0x288] sm:$0xff]
      %v260 = vld [vmem:[%s1 + $0x290] sm:$0xff]
      %v261 = vld [vmem:[%s1 + $0x298] sm:$0xff]
      %v262 = vld [vmem:[%s1 + $0x2a0] sm:$0xf]
      %v263 = vld [vmem:[%s1 + $0x2a4] sm:$0xff]
      %v264 = vld [vmem:[%s1 + $0x2ac] sm:$0xff]
      %v265 = vld [vmem:[%s1 + $0x2b4] sm:$0xff]
      %v266 = vld [vmem:[%s1 + $0x2bc] sm:$0xff]
      %v267 = vld [vmem:[%s1 + $0x2c4] sm:$0xff]
      %v268 = vld [vmem:[%s1 + $0x2cc] sm:$0xff]
      %v269 = vld [vmem:[%s1 + $0x2d4] sm:$0xf]
      %v270 = vld [vmem:[%s1 + $0x2d8] sm:$0xff]
      %v271 = vld [vmem:[%s1 + $0x2e0] sm:$0xff]
      %v272 = vld [vmem:[%s1 + $0x2e8] sm:$0xff]
      %v273 = vld [vmem:[%s1 + $0x2f0] sm:$0xff]
      %v274 = vld [vmem:[%s1 + $0x2f8] sm:$0xff]
      %v275 = vld [vmem:[%s1 + $0x300] sm:$0xff]
      %v276 = vld [vmem:[%s1 + $0x308] sm:$0xf]
      %v277 = vld [vmem:[%s1 + $0x30c] sm:$0xff]
      %v278 = vld [vmem:[%s1 + $0x314] sm:$0xff]
      %v279 = vld [vmem:[%s1 + $0x31c] sm:$0xff]
      %v280 = vld [vmem:[%s1 + $0x324] sm:$0xff]
      %v281 = vld [vmem:[%s1 + $0x32c] sm:$0xff]
      %v282 = vld [vmem:[%s1 + $0x334] sm:$0xff]
      %v283 = vld [vmem:[%s1 + $0x33c] sm:$0xf]
      %v284 = vld [vmem:[%s2] sm:$0xff]
      %v285 = vld [vmem:[%s2 + $0x8] sm:$0xff]
      %v286 = vld [vmem:[%s2 + $0x10] sm:$0xff]
      %v287 = vld [vmem:[%s2 + $0x18] sm:$0xff]
      %v288 = vld [vmem:[%s165] sm:$0xff]
      %v289 = vld [vmem:[%s165 + $0x8] sm:$0xf]
      %v290 = vld [vmem:[%s165 + $0xc] sm:$0xff]
      %v291 = vld [vmem:[%s165 + $0x14] sm:$0xf]
      %v292 = vld [vmem:[%s165 + $0x18] sm:$0xff]
      %v293 = vld [vmem:[%s165 + $0x20] sm:$0xf]
      %v294 = vld [vmem:[%s165 + $0x24] sm:$0xff]
      %v295 = vld [vmem:[%s165 + $0x2c] sm:$0xf]
      %v296 = vld [vmem:[%s165 + $0x30] sm:$0xff]
      %v297 = vld [vmem:[%s165 + $0x38] sm:$0xf]
      %v298 = vld [vmem:[%s165 + $0x3c] sm:$0xff]
      %v299 = vld [vmem:[%s165 + $0x44] sm:$0xf]
      %v300 = vld [vmem:[%s165 + $0x48] sm:$0xff]
      %v301 = vld [vmem:[%s165 + $0x50] sm:$0xf]
      %v302 = vld [vmem:[%s165 + $0x54] sm:$0xff]
      %v303 = vld [vmem:[%s165 + $0x5c] sm:$0xf]
      %v304 = vld [vmem:[%s165 + $0x60] sm:$0xff]
      %v305 = vld [vmem:[%s165 + $0x68] sm:$0xf]
      %v306 = vld [vmem:[%s165 + $0x6c] sm:$0xff]
      %v307 = vld [vmem:[%s165 + $0x74] sm:$0xf]
      %v308 = vld [vmem:[%s165 + $0x78] sm:$0xff]
      %v309 = vld [vmem:[%s165 + $0x80] sm:$0xf]
      %v310 = vld [vmem:[%s165 + $0x84] sm:$0xff]
      %v311 = vld [vmem:[%s165 + $0x8c] sm:$0xf]
      %v312 = vld [vmem:[%s165 + $0x90] sm:$0xff]
      %v313 = vld [vmem:[%s165 + $0x98] sm:$0xf]
      %v314 = vld [vmem:[%s165 + $0x9c] sm:$0xff]
      %v315 = vld [vmem:[%s165 + $0xa4] sm:$0xf]
      %v316 = vld [vmem:[%s165 + $0xa8] sm:$0xff]
      %v317 = vld [vmem:[%s165 + $0xb0] sm:$0xf]
      %v318 = vld [vmem:[%s165 + $0xb4] sm:$0xff]
      %v319 = vld [vmem:[%s165 + $0xbc] sm:$0xf]
      %v320 = vld [vmem:[%s165 + $0xc0] sm:$0xff]
      %v321 = vld [vmem:[%s165 + $0xc8] sm:$0xf]
      %v322 = vld [vmem:[%s165 + $0xcc] sm:$0xff]
      %v323 = vld [vmem:[%s165 + $0xd4] sm:$0xf]
      %v324 = vld [vmem:[%s165 + $0xd8] sm:$0xff]
      %v325 = vld [vmem:[%s165 + $0xe0] sm:$0xf]
      %v326 = vld [vmem:[%s165 + $0xe4] sm:$0xff]
      %v327 = vld [vmem:[%s165 + $0xec] sm:$0xf]
      %v328 = vld [vmem:[%s165 + $0xf0] sm:$0xff]
      %v329 = vld [vmem:[%s165 + $0xf8] sm:$0xf]
      %v330 = vld [vmem:[%s165 + $0xfc] sm:$0xff]
      %v331 = vld [vmem:[%s165 + $0x104] sm:$0xf]
      %v332 = vld [vmem:[%s165 + $0x108] sm:$0xff]
      %v333 = vld [vmem:[%s165 + $0x110] sm:$0xf]
      %v334 = vld [vmem:[%s165 + $0x114] sm:$0xff]
      %v335 = vld [vmem:[%s165 + $0x11c] sm:$0xf]
      %v336 = vld [vmem:[%s165 + $0x120] sm:$0xff]
      %v337 = vld [vmem:[%s165 + $0x128] sm:$0xf]
      %v338 = vld [vmem:[%s165 + $0x12c] sm:$0xff]
      %v339 = vld [vmem:[%s165 + $0x134] sm:$0xf]
      %v340 = vld [vmem:[%s165 + $0x138] sm:$0xff]
      %v341 = vld [vmem:[%s165 + $0x140] sm:$0xf]
      %v342 = vld [vmem:[%s165 + $0x144] sm:$0xff]
      %v343 = vld [vmem:[%s165 + $0x14c] sm:$0xf]
      %v344 = vld [vmem:[%s165 + $0x150] sm:$0xff]
      %v345 = vld [vmem:[%s165 + $0x158] sm:$0xf]
      %v346 = vld [vmem:[%s165 + $0x15c] sm:$0xff]
      %v347 = vld [vmem:[%s165 + $0x164] sm:$0xf]
      %v348 = vld [vmem:[%s165 + $0x168] sm:$0xff]
      %v349 = vld [vmem:[%s165 + $0x170] sm:$0xf]
      %v350 = vld [vmem:[%s165 + $0x174] sm:$0xff]
      %v351 = vld [vmem:[%s165 + $0x17c] sm:$0xf]
      %v352 = vld [vmem:[%s165 + $0x180] sm:$0xff]
      %v353 = vld [vmem:[%s165 + $0x188] sm:$0xf]
      %v354 = vld [vmem:[%s165 + $0x18c] sm:$0xff]
      %v355 = vld [vmem:[%s165 + $0x194] sm:$0xf]
      %v356 = vld [vmem:[%s165 + $0x198] sm:$0xff]
      %v357 = vld [vmem:[%s165 + $0x1a0] sm:$0xf]
      %v358 = vld [vmem:[%s165 + $0x1a4] sm:$0xff]
      %v359 = vld [vmem:[%s165 + $0x1ac] sm:$0xf]
      %v360 = vld [vmem:[%s165 + $0x1b0] sm:$0xff]
      %v361 = vld [vmem:[%s165 + $0x1b8] sm:$0xf]
      %v362 = vld [vmem:[%s165 + $0x1bc] sm:$0xff]
      %v363 = vld [vmem:[%s165 + $0x1c4] sm:$0xf]
      %v364 = vld [vmem:[%s165 + $0x1c8] sm:$0xff]
      %v365 = vld [vmem:[%s165 + $0x1d0] sm:$0xf]
      %v366 = vld [vmem:[%s165 + $0x1d4] sm:$0xff]
      %v367 = vld [vmem:[%s165 + $0x1dc] sm:$0xf]
      %v368 = vld [vmem:[%s165 + $0x1e0] sm:$0xff]
      %v369 = vld [vmem:[%s165 + $0x1e8] sm:$0xf]
      %v370 = vld [vmem:[%s165 + $0x1ec] sm:$0xff]
      %v371 = vld [vmem:[%s165 + $0x1f4] sm:$0xf]
      %v372 = vld [vmem:[%s165 + $0x1f8] sm:$0xff]
      %v373 = vld [vmem:[%s165 + $0x200] sm:$0xf]
      %v374 = vld [vmem:[%s165 + $0x204] sm:$0xff]
      %v375 = vld [vmem:[%s165 + $0x20c] sm:$0xf]
      %v376 = vld [vmem:[%s165 + $0x210] sm:$0xff]
      %v377 = vld [vmem:[%s165 + $0x218] sm:$0xf]
      %v378 = vld [vmem:[%s165 + $0x21c] sm:$0xff]
      %v379 = vld [vmem:[%s165 + $0x224] sm:$0xf]
      %v380 = vld [vmem:[%s165 + $0x228] sm:$0xff]
      %v381 = vld [vmem:[%s165 + $0x230] sm:$0xf]
      %v382 = vld [vmem:[%s165 + $0x234] sm:$0xff]
      %v383 = vld [vmem:[%s165 + $0x23c] sm:$0xf]
      %v384 = vld [vmem:[%s165 + $0x240] sm:$0xff]
      %v385 = vld [vmem:[%s165 + $0x248] sm:$0xf]
      %v386 = vld [vmem:[%s165 + $0x24c] sm:$0xff]
      %v387 = vld [vmem:[%s165 + $0x254] sm:$0xf]
      %v388 = vld [vmem:[%s165 + $0x258] sm:$0xff]
      %v389 = vld [vmem:[%s165 + $0x260] sm:$0xf]
      %v390 = vld [vmem:[%s165 + $0x264] sm:$0xff]
      %v391 = vld [vmem:[%s165 + $0x26c] sm:$0xf]
      %v392 = vld [vmem:[%s165 + $0x270] sm:$0xff]
      %v393 = vld [vmem:[%s165 + $0x278] sm:$0xf]
      %v394 = vld [vmem:[%s165 + $0x27c] sm:$0xff]
      %v395 = vld [vmem:[%s165 + $0x284] sm:$0xf]
      %v396 = vld [vmem:[%s165 + $0x288] sm:$0xff]
      %v397 = vld [vmem:[%s165 + $0x290] sm:$0xf]
      %v398 = vld [vmem:[%s165 + $0x294] sm:$0xff]
      %v399 = vld [vmem:[%s165 + $0x29c] sm:$0xf]
      %v400 = vld [vmem:[%s165 + $0x2a0] sm:$0xff]
      %v401 = vld [vmem:[%s165 + $0x2a8] sm:$0xf]
      %v402 = vld [vmem:[%s165 + $0x2ac] sm:$0xff]
      %v403 = vld [vmem:[%s165 + $0x2b4] sm:$0xf]
      %v404 = vld [vmem:[%s165 + $0x2b8] sm:$0xff]
      %v405 = vld [vmem:[%s165 + $0x2c0] sm:$0xf]
      %v406 = vld [vmem:[%s165 + $0x2c4] sm:$0xff]
      %v407 = vld [vmem:[%s165 + $0x2cc] sm:$0xf]
      %v408 = vld [vmem:[%s165 + $0x2d0] sm:$0xff]
      %v409 = vld [vmem:[%s165 + $0x2d8] sm:$0xf]
      %v410 = vld [vmem:[%s165 + $0x2dc] sm:$0xff]
      %v411 = vld [vmem:[%s165 + $0x2e4] sm:$0xf]
      %v412 = vld [vmem:[%s165 + $0x2e8] sm:$0xff]
      %v413 = vld [vmem:[%s165 + $0x2f0] sm:$0xf]
      %v414 = vld [vmem:[%s165 + $0x2f4] sm:$0xff]
      %v415 = vld [vmem:[%s165 + $0x2fc] sm:$0xf]
      %v416 = vld [vmem:[%s165 + $0x300] sm:$0xff]
      %v417 = vld [vmem:[%s165 + $0x308] sm:$0xf]
      %v418 = vld [vmem:[%s165 + $0x30c] sm:$0xff]
      %v419 = vld [vmem:[%s165 + $0x314] sm:$0xf]
      %v420 = vld [vmem:[%s165 + $0x318] sm:$0xff]
      %v421 = vld [vmem:[%s165 + $0x320] sm:$0xf]
      %v422 = vld [vmem:[%s165 + $0x324] sm:$0xff]
      %v423 = vld [vmem:[%s165 + $0x32c] sm:$0xf]
      %v424 = vld [vmem:[%s165 + $0x330] sm:$0xff]
      %v425 = vld [vmem:[%s165 + $0x338] sm:$0xf]
      %v426 = vld [vmem:[%s165 + $0x33c] sm:$0xff]
      %v427 = vld [vmem:[%s165 + $0x344] sm:$0xf]
      %v428 = vld [vmem:[%s165 + $0x348] sm:$0xff]
      %v429 = vld [vmem:[%s165 + $0x350] sm:$0xf]
      %v430 = vld [vmem:[%s165 + $0x354] sm:$0xff]
      %v431 = vld [vmem:[%s165 + $0x35c] sm:$0xf]
      %v432 = vld [vmem:[%s165 + $0x360] sm:$0xff]
      %v433 = vld [vmem:[%s165 + $0x368] sm:$0xf]
      %v434 = vld [vmem:[%s165 + $0x36c] sm:$0xff]
      %v435 = vld [vmem:[%s165 + $0x374] sm:$0xf]
      %v436 = vld [vmem:[%s165 + $0x378] sm:$0xff]
      %v437 = vld [vmem:[%s165 + $0x380] sm:$0xf]
      %v438 = vld [vmem:[%s165 + $0x384] sm:$0xff]
      %v439 = vld [vmem:[%s165 + $0x38c] sm:$0xf]
      %v440 = vld [vmem:[%s165 + $0x390] sm:$0xff]
      %v441 = vld [vmem:[%s165 + $0x398] sm:$0xf]
      %v442 = vld [vmem:[%s165 + $0x39c] sm:$0xff]
      %v443 = vld [vmem:[%s165 + $0x3a4] sm:$0xf]
      %v444 = vld [vmem:[%s165 + $0x3a8] sm:$0xff]
      %v445 = vld [vmem:[%s165 + $0x3b0] sm:$0xf]
      %v446 = vld [vmem:[%s165 + $0x3b4] sm:$0xff]
      %v447 = vld [vmem:[%s165 + $0x3bc] sm:$0xf]
      %v448 = vld [vmem:[%s165 + $0x3c0] sm:$0xff]
      %v449 = vld [vmem:[%s165 + $0x3c8] sm:$0xf]
      %v450 = vld [vmem:[%s165 + $0x3cc] sm:$0xff]
      %v451 = vld [vmem:[%s165 + $0x3d4] sm:$0xf]
      %v452 = vld [vmem:[%s165 + $0x3d8] sm:$0xff]
      %v453 = vld [vmem:[%s165 + $0x3e0] sm:$0xf]
      %v454 = vld [vmem:[%s165 + $0x3e4] sm:$0xff]
      %v455 = vld [vmem:[%s165 + $0x3ec] sm:$0xf]
      %v456 = vld [vmem:[%s165 + $0x3f0] sm:$0xff]
      %v457 = vld [vmem:[%s165 + $0x3f8] sm:$0xf]
      %v458 = vld [vmem:[%s165 + $0x3fc] sm:$0xff]
      %v459 = vld [vmem:[%s165 + $0x404] sm:$0xf]
      %v460 = vld [vmem:[%s165 + $0x408] sm:$0xff]
      %v461 = vld [vmem:[%s165 + $0x410] sm:$0xf]
      %v462 = vld [vmem:[%s165 + $0x414] sm:$0xff]
      %v463 = vld [vmem:[%s165 + $0x41c] sm:$0xf]
      %v464 = vld [vmem:[%s165 + $0x420] sm:$0xff]
      %v465 = vld [vmem:[%s165 + $0x428] sm:$0xf]
      %v466 = vld [vmem:[%s165 + $0x42c] sm:$0xff]
      %v467 = vld [vmem:[%s165 + $0x434] sm:$0xf]
      %v468 = vld [vmem:[%s165 + $0x438] sm:$0xff]
      %v469 = vld [vmem:[%s165 + $0x440] sm:$0xf]
      %v470 = vld [vmem:[%s165 + $0x444] sm:$0xff]
      %v471 = vld [vmem:[%s165 + $0x44c] sm:$0xf]
      %v472 = vld [vmem:[%s165 + $0x450] sm:$0xff]
      %v473 = vld [vmem:[%s165 + $0x458] sm:$0xf]
      %v474 = vld [vmem:[%s165 + $0x45c] sm:$0xff]
      %v475 = vld [vmem:[%s165 + $0x464] sm:$0xf]
      %v476 = vld [vmem:[%s165 + $0x468] sm:$0xff]
      %v477 = vld [vmem:[%s165 + $0x470] sm:$0xf]
      %v478 = vld [vmem:[%s165 + $0x474] sm:$0xff]
      %v479 = vld [vmem:[%s165 + $0x47c] sm:$0xf]
      %v480 = vld [vmem:[%s165 + $0x480] sm:$0xff]
      %v481 = vld [vmem:[%s165 + $0x488] sm:$0xf]
      %v482 = vld [vmem:[%s165 + $0x48c] sm:$0xff]
      %v483 = vld [vmem:[%s165 + $0x494] sm:$0xf]
      %v484 = vld [vmem:[%s165 + $0x498] sm:$0xff]
      %v485 = vld [vmem:[%s165 + $0x4a0] sm:$0xf]
      %v486 = vld [vmem:[%s165 + $0x4a4] sm:$0xff]
      %v487 = vld [vmem:[%s165 + $0x4ac] sm:$0xf]
      %v488 = vld [vmem:[%s165 + $0x4b0] sm:$0xff]
      %v489 = vld [vmem:[%s165 + $0x4b8] sm:$0xf]
      %v490 = vld [vmem:[%s165 + $0x4bc] sm:$0xff]
      %v491 = vld [vmem:[%s165 + $0x4c4] sm:$0xf]
      %v492 = vld [vmem:[%s165 + $0x4c8] sm:$0xff]
      %v493 = vld [vmem:[%s165 + $0x4d0] sm:$0xf]
      %v494 = vld [vmem:[%s165 + $0x4d4] sm:$0xff]
      %v495 = vld [vmem:[%s165 + $0x4dc] sm:$0xf]
      %v496 = vld [vmem:[%s165 + $0x4e0] sm:$0xff]
      %v497 = vld [vmem:[%s165 + $0x4e8] sm:$0xf]
      %v498 = vld [vmem:[%s165 + $0x4ec] sm:$0xff]
      %v499 = vld [vmem:[%s165 + $0x4f4] sm:$0xf]
      %v500 = vld [vmem:[%s165 + $0x4f8] sm:$0xff]
      %v501 = vld [vmem:[%s165 + $0x500] sm:$0xf]
      %v502 = vld [vmem:[%s165 + $0x504] sm:$0xff]
      %v503 = vld [vmem:[%s165 + $0x50c] sm:$0xf]
      %v504 = vld [vmem:[%s165 + $0x510] sm:$0xff]
      %v505 = vld [vmem:[%s165 + $0x518] sm:$0xf]
      %v506 = vld [vmem:[%s165 + $0x51c] sm:$0xff]
      %v507 = vld [vmem:[%s165 + $0x524] sm:$0xf]
      %v508 = vld [vmem:[%s165 + $0x528] sm:$0xff]
      %v509 = vld [vmem:[%s165 + $0x530] sm:$0xf]
      %v510 = vld [vmem:[%s165 + $0x534] sm:$0xff]
      %v511 = vld [vmem:[%s165 + $0x53c] sm:$0xf]
      %v512 = vld [vmem:[%s165 + $0x540] sm:$0xff]
      %v513 = vld [vmem:[%s165 + $0x548] sm:$0xf]
      %v514 = vld [vmem:[%s165 + $0x54c] sm:$0xff]
      %v515 = vld [vmem:[%s165 + $0x554] sm:$0xf]
      %v516 = vld [vmem:[%s165 + $0x558] sm:$0xff]
      %v517 = vld [vmem:[%s165 + $0x560] sm:$0xf]
      %v518 = vld [vmem:[%s165 + $0x564] sm:$0xff]
      %v519 = vld [vmem:[%s165 + $0x56c] sm:$0xf]
      %v520 = vld [vmem:[%s165 + $0x570] sm:$0xff]
      %v521 = vld [vmem:[%s165 + $0x578] sm:$0xf]
      %v522 = vld [vmem:[%s165 + $0x57c] sm:$0xff]
      %v523 = vld [vmem:[%s165 + $0x584] sm:$0xf]
      %v524 = vld [vmem:[%s165 + $0x588] sm:$0xff]
      %v525 = vld [vmem:[%s165 + $0x590] sm:$0xf]
      %v526 = vld [vmem:[%s165 + $0x594] sm:$0xff]
      %v527 = vld [vmem:[%s165 + $0x59c] sm:$0xf]
      %v528 = vld [vmem:[%s165 + $0x5a0] sm:$0xff]
      %v529 = vld [vmem:[%s165 + $0x5a8] sm:$0xf]
      %v530 = vld [vmem:[%s165 + $0x5ac] sm:$0xff]
      %v531 = vld [vmem:[%s165 + $0x5b4] sm:$0xf]
      %v532 = vld [vmem:[%s165 + $0x5b8] sm:$0xff]
      %v533 = vld [vmem:[%s165 + $0x5c0] sm:$0xf]
      %v534 = vld [vmem:[%s165 + $0x5c4] sm:$0xff]
      %v535 = vld [vmem:[%s165 + $0x5cc] sm:$0xf]
      %v536 = vld [vmem:[%s165 + $0x5d0] sm:$0xff]
      %v537 = vld [vmem:[%s165 + $0x5d8] sm:$0xf]
      %v538 = vld [vmem:[%s165 + $0x5dc] sm:$0xff]
      %v539 = vld [vmem:[%s165 + $0x5e4] sm:$0xf]
      %v540 = vld [vmem:[%s165 + $0x5e8] sm:$0xff]
      %v541 = vld [vmem:[%s165 + $0x5f0] sm:$0xf]
      %v542 = vld [vmem:[%s165 + $0x5f4] sm:$0xff]
      %v543 = vld [vmem:[%s165 + $0x5fc] sm:$0xf]
      %v544 = vld [vmem:[%s165 + $0x600] sm:$0xff]
      %v545 = vld [vmem:[%s165 + $0x608] sm:$0xf]
      %v546 = vld [vmem:[%s165 + $0x60c] sm:$0xff]
      %v547 = vld [vmem:[%s165 + $0x614] sm:$0xf]
      %v548 = vld [vmem:[%s165 + $0x618] sm:$0xff]
      %v549 = vld [vmem:[%s165 + $0x620] sm:$0xf]
      %v550 = vld [vmem:[%s165 + $0x624] sm:$0xff]
      %v551 = vld [vmem:[%s165 + $0x62c] sm:$0xf]
      %v552 = vld [vmem:[%s165 + $0x630] sm:$0xff]
      %v553 = vld [vmem:[%s165 + $0x638] sm:$0xf]
      %v554 = vld [vmem:[%s165 + $0x63c] sm:$0xff]
      %v555 = vld [vmem:[%s165 + $0x644] sm:$0xf]
      %v556 = vld [vmem:[%s165 + $0x648] sm:$0xff]
      %v557 = vld [vmem:[%s165 + $0x650] sm:$0xf]
      %v558 = vld [vmem:[%s165 + $0x654] sm:$0xff]
      %v559 = vld [vmem:[%s165 + $0x65c] sm:$0xf]
      %v560 = vld [vmem:[%s165 + $0x660] sm:$0xff]
      %v561 = vld [vmem:[%s165 + $0x668] sm:$0xf]
      %v562 = vld [vmem:[%s165 + $0x66c] sm:$0xff]
      %v563 = vld [vmem:[%s165 + $0x674] sm:$0xf]
      %v564 = vld [vmem:[%s165 + $0x678] sm:$0xff]
      %v565 = vld [vmem:[%s165 + $0x680] sm:$0xf]
      %v566 = vld [vmem:[%s165 + $0x684] sm:$0xff]
      %v567 = vld [vmem:[%s165 + $0x68c] sm:$0xf]
      %v568 = vld [vmem:[%s165 + $0x690] sm:$0xff]
      %v569 = vld [vmem:[%s165 + $0x698] sm:$0xf]
      %v570 = vld [vmem:[%s165 + $0x69c] sm:$0xff]
      %v571 = vld [vmem:[%s165 + $0x6a4] sm:$0xf]
      %v572 = vld [vmem:[%s165 + $0x6a8] sm:$0xff]
      %v573 = vld [vmem:[%s165 + $0x6b0] sm:$0xf]
      %v574 = vld [vmem:[%s165 + $0x6b4] sm:$0xff]
      %v575 = vld [vmem:[%s165 + $0x6bc] sm:$0xf]
      %v576 = vld [vmem:[%s165 + $0x6c0] sm:$0xff]
      %v577 = vld [vmem:[%s165 + $0x6c8] sm:$0xf]
      %v578 = vld [vmem:[%s165 + $0x6cc] sm:$0xff]
      %v579 = vld [vmem:[%s165 + $0x6d4] sm:$0xf]
      %v580 = vld [vmem:[%s165 + $0x6d8] sm:$0xff]
      %v581 = vld [vmem:[%s165 + $0x6e0] sm:$0xf]
      %v582 = vld [vmem:[%s165 + $0x6e4] sm:$0xff]
      %v583 = vld [vmem:[%s165 + $0x6ec] sm:$0xf]
      %v584 = vld [vmem:[%s165 + $0x6f0] sm:$0xff]
      %v585 = vld [vmem:[%s165 + $0x6f8] sm:$0xf]
      %v586 = vld [vmem:[%s165 + $0x6fc] sm:$0xff]
      %v587 = vld [vmem:[%s165 + $0x704] sm:$0xf]
      %v588 = vld [vmem:[%s165 + $0x708] sm:$0xff]
      %v589 = vld [vmem:[%s165 + $0x710] sm:$0xf]
      %v590 = vld [vmem:[%s165 + $0x714] sm:$0xff]
      %v591 = vld [vmem:[%s165 + $0x71c] sm:$0xf]
      %v592 = vld [vmem:[%s165 + $0x720] sm:$0xff]
      %v593 = vld [vmem:[%s165 + $0x728] sm:$0xf]
      %v594 = vld [vmem:[%s165 + $0x72c] sm:$0xff]
      %v595 = vld [vmem:[%s165 + $0x734] sm:$0xf]
      %v596 = vld [vmem:[%s165 + $0x738] sm:$0xff]
      %v597 = vld [vmem:[%s165 + $0x740] sm:$0xf]
      %v598 = vld [vmem:[%s165 + $0x744] sm:$0xff]
      %v599 = vld [vmem:[%s165 + $0x74c] sm:$0xf]
      %v600 = vld [vmem:[%s165 + $0x750] sm:$0xff]
      %v601 = vld [vmem:[%s165 + $0x758] sm:$0xf]
      %v602 = vld [vmem:[%s165 + $0x75c] sm:$0xff]
      %v603 = vld [vmem:[%s165 + $0x764] sm:$0xf]
      %v604 = vld [vmem:[%s165 + $0x768] sm:$0xff]
      %v605 = vld [vmem:[%s165 + $0x770] sm:$0xf]
      %v606 = vld [vmem:[%s165 + $0x774] sm:$0xff]
      %v607 = vld [vmem:[%s165 + $0x77c] sm:$0xf]
      %v608 = vld [vmem:[%s165 + $0x780] sm:$0xff]
      %v609 = vld [vmem:[%s165 + $0x788] sm:$0xf]
      %v610 = vld [vmem:[%s165 + $0x78c] sm:$0xff]
      %v611 = vld [vmem:[%s165 + $0x794] sm:$0xf]
      %v612 = vld [vmem:[%s165 + $0x798] sm:$0xff]
      %v613 = vld [vmem:[%s165 + $0x7a0] sm:$0xf]
      %v614 = vld [vmem:[%s165 + $0x7a4] sm:$0xff]
      %v615 = vld [vmem:[%s165 + $0x7ac] sm:$0xf]
      %v616 = vld [vmem:[%s165 + $0x7b0] sm:$0xff]
      %v617 = vld [vmem:[%s165 + $0x7b8] sm:$0xf]
      %v618 = vld [vmem:[%s165 + $0x7bc] sm:$0xff]
      %v619 = vld [vmem:[%s165 + $0x7c4] sm:$0xf]
      %v620 = vld [vmem:[%s165 + $0x7c8] sm:$0xff]
      %v621 = vld [vmem:[%s165 + $0x7d0] sm:$0xf]
      %v622 = vld [vmem:[%s165 + $0x7d4] sm:$0xff]
      %v623 = vld [vmem:[%s165 + $0x7dc] sm:$0xf]
      %v624 = vld [vmem:[%s165 + $0x7e0] sm:$0xff]
      %v625 = vld [vmem:[%s165 + $0x7e8] sm:$0xf]
      %v626 = vld [vmem:[%s165 + $0x7ec] sm:$0xff]
      %v627 = vld [vmem:[%s165 + $0x7f4] sm:$0xf]
      %v628 = vld [vmem:[%s165 + $0x7f8] sm:$0xff]
      %v629 = vld [vmem:[%s165 + $0x800] sm:$0xf]
      %v630 = vld [vmem:[%s165 + $0x804] sm:$0xff]
      %v631 = vld [vmem:[%s165 + $0x80c] sm:$0xf]
      %v632 = vld [vmem:[%s165 + $0x810] sm:$0xff]
      %v633 = vld [vmem:[%s165 + $0x818] sm:$0xf]
      %v634 = vld [vmem:[%s165 + $0x81c] sm:$0xff]
      %v635 = vld [vmem:[%s165 + $0x824] sm:$0xf]
      %v636 = vld [vmem:[%s165 + $0x828] sm:$0xff]
      %v637 = vld [vmem:[%s165 + $0x830] sm:$0xf]
      %v638 = vld [vmem:[%s165 + $0x834] sm:$0xff]
      %v639 = vld [vmem:[%s165 + $0x83c] sm:$0xf]
      %v640 = vld [vmem:[%s165 + $0x840] sm:$0xff]
      %v641 = vld [vmem:[%s165 + $0x848] sm:$0xf]
      %v642 = vld [vmem:[%s165 + $0x84c] sm:$0xff]
      %v643 = vld [vmem:[%s165 + $0x854] sm:$0xf]
      %v644 = vld [vmem:[%s165 + $0x858] sm:$0xff]
      %v645 = vld [vmem:[%s165 + $0x860] sm:$0xf]
      %v646 = vld [vmem:[%s165 + $0x864] sm:$0xff]
      %v647 = vld [vmem:[%s165 + $0x86c] sm:$0xf]
      %v648 = vld [vmem:[%s165 + $0x870] sm:$0xff]
      %v649 = vld [vmem:[%s165 + $0x878] sm:$0xf]
      %v650 = vld [vmem:[%s165 + $0x87c] sm:$0xff]
      %v651 = vld [vmem:[%s165 + $0x884] sm:$0xf]
      %v652 = vld [vmem:[%s165 + $0x888] sm:$0xff]
      %v653 = vld [vmem:[%s165 + $0x890] sm:$0xf]
      %v654 = vld [vmem:[%s165 + $0x894] sm:$0xff]
      %v655 = vld [vmem:[%s165 + $0x89c] sm:$0xf]
      %v656 = vld [vmem:[%s165 + $0x8a0] sm:$0xff]
      %v657 = vld [vmem:[%s165 + $0x8a8] sm:$0xf]
      %v658 = vld [vmem:[%s165 + $0x8ac] sm:$0xff]
      %v659 = vld [vmem:[%s165 + $0x8b4] sm:$0xf]
      %v660 = vld [vmem:[%s165 + $0x8b8] sm:$0xff]
      %v661 = vld [vmem:[%s165 + $0x8c0] sm:$0xf]
      %v662 = vld [vmem:[%s165 + $0x8c4] sm:$0xff]
      %v663 = vld [vmem:[%s165 + $0x8cc] sm:$0xf]
      %v664 = vld [vmem:[%s165 + $0x8d0] sm:$0xff]
      %v665 = vld [vmem:[%s165 + $0x8d8] sm:$0xf]
      %v666 = vld [vmem:[%s165 + $0x8dc] sm:$0xff]
      %v667 = vld [vmem:[%s165 + $0x8e4] sm:$0xf]
      %v668 = vld [vmem:[%s165 + $0x8e8] sm:$0xff]
      %v669 = vld [vmem:[%s165 + $0x8f0] sm:$0xf]
      %v670 = vld [vmem:[%s165 + $0x8f4] sm:$0xff]
      %v671 = vld [vmem:[%s165 + $0x8fc] sm:$0xf]
      %v672 = vld [vmem:[%s165 + $0x900] sm:$0xff]
      %v673 = vld [vmem:[%s165 + $0x908] sm:$0xf]
      %v674 = vld [vmem:[%s165 + $0x90c] sm:$0xff]
      %v675 = vld [vmem:[%s165 + $0x914] sm:$0xf]
      %v676 = vld [vmem:[%s165 + $0x918] sm:$0xff]
      %v677 = vld [vmem:[%s165 + $0x920] sm:$0xf]
      %v678 = vld [vmem:[%s165 + $0x924] sm:$0xff]
      %v679 = vld [vmem:[%s165 + $0x92c] sm:$0xf]
      %v680 = vld [vmem:[%s165 + $0x930] sm:$0xff]
      %v681 = vld [vmem:[%s165 + $0x938] sm:$0xf]
      %v682 = vld [vmem:[%s165 + $0x93c] sm:$0xff]
      %v683 = vld [vmem:[%s165 + $0x944] sm:$0xf]
      %v684 = vld [vmem:[%s165 + $0x948] sm:$0xff]
      %v685 = vld [vmem:[%s165 + $0x950] sm:$0xf]
      %v686 = vld [vmem:[%s165 + $0x954] sm:$0xff]
      %v687 = vld [vmem:[%s165 + $0x95c] sm:$0xf]
      %v800 = vunpack.c.l.b16 %v172
      %v801 = vunpack.c.h.b16 %v172
      %v802 = vunpack.c.l.b16 %v173
      %v803 = vunpack.c.h.b16 %v173
      %v804 = vunpack.c.l.b16 %v174
      %v805 = vunpack.c.h.b16 %v174
      %v806 = vunpack.c.l.b16 %v175
      %v807 = vunpack.c.h.b16 %v175
      %v808 = vunpack.c.l.b16 %v176
      %v809 = vunpack.c.h.b16 %v176
      %v810 = vunpack.c.l.b16 %v177
      %v811 = vunpack.c.h.b16 %v177
      %v812 = vunpack.c.l.b16 %v178
      %v813 = vunpack.c.l.b16 %v179
      %v814 = vunpack.c.h.b16 %v179
      %v815 = vunpack.c.l.b16 %v180
      %v816 = vunpack.c.h.b16 %v180
      %v817 = vunpack.c.l.b16 %v181
      %v818 = vunpack.c.h.b16 %v181
      %v819 = vunpack.c.l.b16 %v182
      %v820 = vunpack.c.h.b16 %v182
      %v821 = vunpack.c.l.b16 %v183
      %v822 = vunpack.c.h.b16 %v183
      %v823 = vunpack.c.l.b16 %v184
      %v824 = vunpack.c.h.b16 %v184
      %v825 = vunpack.c.l.b16 %v185
      %v826 = vunpack.c.l.b16 %v186
      %v827 = vunpack.c.h.b16 %v186
      %v828 = vunpack.c.l.b16 %v187
      %v829 = vunpack.c.h.b16 %v187
      %v830 = vunpack.c.l.b16 %v188
      %v831 = vunpack.c.h.b16 %v188
      %v832 = vunpack.c.l.b16 %v189
      %v833 = vunpack.c.h.b16 %v189
      %v834 = vunpack.c.l.b16 %v190
      %v835 = vunpack.c.h.b16 %v190
      %v836 = vunpack.c.l.b16 %v191
      %v837 = vunpack.c.h.b16 %v191
      %v838 = vunpack.c.l.b16 %v192
      %v839 = vunpack.c.l.b16 %v193
      %v840 = vunpack.c.h.b16 %v193
      %v841 = vunpack.c.l.b16 %v194
      %v842 = vunpack.c.h.b16 %v194
      %v843 = vunpack.c.l.b16 %v195
      %v844 = vunpack.c.h.b16 %v195
      %v845 = vunpack.c.l.b16 %v196
      %v846 = vunpack.c.h.b16 %v196
      %v847 = vunpack.c.l.b16 %v197
      %v848 = vunpack.c.h.b16 %v197
      %v849 = vunpack.c.l.b16 %v198
      %v850 = vunpack.c.h.b16 %v198
      %v851 = vunpack.c.l.b16 %v199
      %v852 = vunpack.c.l.b16 %v200
      %v853 = vunpack.c.h.b16 %v200
      %v854 = vunpack.c.l.b16 %v201
      %v855 = vunpack.c.h.b16 %v201
      %v856 = vunpack.c.l.b16 %v202
      %v857 = vunpack.c.h.b16 %v202
      %v858 = vunpack.c.l.b16 %v203
      %v859 = vunpack.c.h.b16 %v203
      %v860 = vunpack.c.l.b16 %v204
      %v861 = vunpack.c.h.b16 %v204
      %v862 = vunpack.c.l.b16 %v205
      %v863 = vunpack.c.h.b16 %v205
      %v864 = vunpack.c.l.b16 %v206
      %v865 = vunpack.c.l.b16 %v207
      %v866 = vunpack.c.h.b16 %v207
      %v867 = vunpack.c.l.b16 %v208
      %v868 = vunpack.c.h.b16 %v208
      %v869 = vunpack.c.l.b16 %v209
      %v870 = vunpack.c.h.b16 %v209
      %v871 = vunpack.c.l.b16 %v210
      %v872 = vunpack.c.h.b16 %v210
      %v873 = vunpack.c.l.b16 %v211
      %v874 = vunpack.c.h.b16 %v211
      %v875 = vunpack.c.l.b16 %v212
      %v876 = vunpack.c.h.b16 %v212
      %v877 = vunpack.c.l.b16 %v213
      %v878 = vunpack.c.l.b16 %v214
      %v879 = vunpack.c.h.b16 %v214
      %v880 = vunpack.c.l.b16 %v215
      %v881 = vunpack.c.h.b16 %v215
      %v882 = vunpack.c.l.b16 %v216
      %v883 = vunpack.c.h.b16 %v216
      %v884 = vunpack.c.l.b16 %v217
      %v885 = vunpack.c.h.b16 %v217
      %v886 = vunpack.c.l.b16 %v218
      %v887 = vunpack.c.h.b16 %v218
      %v888 = vunpack.c.l.b16 %v219
      %v889 = vunpack.c.h.b16 %v219
      %v890 = vunpack.c.l.b16 %v220
      %v891 = vunpack.c.l.b16 %v221
      %v892 = vunpack.c.h.b16 %v221
      %v893 = vunpack.c.l.b16 %v222
      %v894 = vunpack.c.h.b16 %v222
      %v895 = vunpack.c.l.b16 %v223
      %v896 = vunpack.c.h.b16 %v223
      %v897 = vunpack.c.l.b16 %v224
      %v898 = vunpack.c.h.b16 %v224
      %v899 = vunpack.c.l.b16 %v225
      %v900 = vunpack.c.h.b16 %v225
      %v901 = vunpack.c.l.b16 %v226
      %v902 = vunpack.c.h.b16 %v226
      %v903 = vunpack.c.l.b16 %v227
      %v904 = vunpack.c.l.b16 %v228
      %v905 = vunpack.c.h.b16 %v228
      %v906 = vunpack.c.l.b16 %v229
      %v907 = vunpack.c.h.b16 %v229
      %v908 = vunpack.c.l.b16 %v230
      %v909 = vunpack.c.h.b16 %v230
      %v910 = vunpack.c.l.b16 %v231
      %v911 = vunpack.c.h.b16 %v231
      %v912 = vunpack.c.l.b16 %v232
      %v913 = vunpack.c.h.b16 %v232
      %v914 = vunpack.c.l.b16 %v233
      %v915 = vunpack.c.h.b16 %v233
      %v916 = vunpack.c.l.b16 %v234
      %v917 = vunpack.c.l.b16 %v235
      %v918 = vunpack.c.h.b16 %v235
      %v919 = vunpack.c.l.b16 %v236
      %v920 = vunpack.c.h.b16 %v236
      %v921 = vunpack.c.l.b16 %v237
      %v922 = vunpack.c.h.b16 %v237
      %v923 = vunpack.c.l.b16 %v238
      %v924 = vunpack.c.h.b16 %v238
      %v925 = vunpack.c.l.b16 %v239
      %v926 = vunpack.c.h.b16 %v239
      %v927 = vunpack.c.l.b16 %v240
      %v928 = vunpack.c.h.b16 %v240
      %v929 = vunpack.c.l.b16 %v241
      %v930 = vunpack.c.l.b16 %v242
      %v931 = vunpack.c.h.b16 %v242
      %v932 = vunpack.c.l.b16 %v243
      %v933 = vunpack.c.h.b16 %v243
      %v934 = vunpack.c.l.b16 %v244
      %v935 = vunpack.c.h.b16 %v244
      %v936 = vunpack.c.l.b16 %v245
      %v937 = vunpack.c.h.b16 %v245
      %v938 = vunpack.c.l.b16 %v246
      %v939 = vunpack.c.h.b16 %v246
      %v940 = vunpack.c.l.b16 %v247
      %v941 = vunpack.c.h.b16 %v247
      %v942 = vunpack.c.l.b16 %v248
      %v943 = vunpack.c.l.b16 %v249
      %v944 = vunpack.c.h.b16 %v249
      %v945 = vunpack.c.l.b16 %v250
      %v946 = vunpack.c.h.b16 %v250
      %v947 = vunpack.c.l.b16 %v251
      %v948 = vunpack.c.h.b16 %v251
      %v949 = vunpack.c.l.b16 %v252
      %v950 = vunpack.c.h.b16 %v252
      %v951 = vunpack.c.l.b16 %v253
      %v952 = vunpack.c.h.b16 %v253
      %v953 = vunpack.c.l.b16 %v254
      %v954 = vunpack.c.h.b16 %v254
      %v955 = vunpack.c.l.b16 %v255
      %v956 = vunpack.c.l.b16 %v256
      %v957 = vunpack.c.h.b16 %v256
      %v958 = vunpack.c.l.b16 %v257
      %v959 = vunpack.c.h.b16 %v257
      %v960 = vunpack.c.l.b16 %v258
      %v961 = vunpack.c.h.b16 %v258
      %v962 = vunpack.c.l.b16 %v259
      %v963 = vunpack.c.h.b16 %v259
      %v964 = vunpack.c.l.b16 %v260
      %v965 = vunpack.c.h.b16 %v260
      %v966 = vunpack.c.l.b16 %v261
      %v967 = vunpack.c.h.b16 %v261
      %v968 = vunpack.c.l.b16 %v262
      %v969 = vunpack.c.l.b16 %v263
      %v970 = vunpack.c.h.b16 %v263
      %v971 = vunpack.c.l.b16 %v264
      %v972 = vunpack.c.h.b16 %v264
      %v973 = vunpack.c.l.b16 %v265
      %v974 = vunpack.c.h.b16 %v265
      %v975 = vunpack.c.l.b16 %v266
      %v976 = vunpack.c.h.b16 %v266
      %v977 = vunpack.c.l.b16 %v267
      %v978 = vunpack.c.h.b16 %v267
      %v979 = vunpack.c.l.b16 %v268
      %v980 = vunpack.c.h.b16 %v268
      %v981 = vunpack.c.l.b16 %v269
      %v982 = vunpack.c.l.b16 %v270
      %v983 = vunpack.c.h.b16 %v270
      %v984 = vunpack.c.l.b16 %v271
      %v985 = vunpack.c.h.b16 %v271
      %v986 = vunpack.c.l.b16 %v272
      %v987 = vunpack.c.h.b16 %v272
      %v988 = vunpack.c.l.b16 %v273
      %v989 = vunpack.c.h.b16 %v273
      %v990 = vunpack.c.l.b16 %v274
      %v991 = vunpack.c.h.b16 %v274
      %v992 = vunpack.c.l.b16 %v275
      %v993 = vunpack.c.h.b16 %v275
      %v994 = vunpack.c.l.b16 %v276
      %v995 = vunpack.c.l.b16 %v277
      %v996 = vunpack.c.h.b16 %v277
      %v997 = vunpack.c.l.b16 %v278
      %v998 = vunpack.c.h.b16 %v278
      %v999 = vunpack.c.l.b16 %v279
      %v1000 = vunpack.c.h.b16 %v279
      %v1001 = vunpack.c.l.b16 %v280
      %v1002 = vunpack.c.h.b16 %v280
      %v1003 = vunpack.c.l.b16 %v281
      %v1004 = vunpack.c.h.b16 %v281
      %v1005 = vunpack.c.l.b16 %v282
      %v1006 = vunpack.c.h.b16 %v282
      %v1007 = vunpack.c.l.b16 %v283
      %v1008 = vpack.c.b16 %v813, %v800
      %v1009 = vpack.c.b16 %v814, %v801
      %v1010 = vpack.c.b16 %v815, %v802
      %v1011 = vpack.c.b16 %v816, %v803
      %v1012 = vpack.c.b16 %v817, %v804
      %v1013 = vpack.c.b16 %v818, %v805
      %v1014 = vpack.c.b16 %v819, %v806
      %v1015 = vpack.c.b16 %v820, %v807
      %v1016 = vpack.c.b16 %v821, %v808
      %v1017 = vpack.c.b16 %v822, %v809
      %v1018 = vpack.c.b16 %v823, %v810
      %v1019 = vpack.c.b16 %v824, %v811
      %v1020 = vpack.c.b16 %v825, %v812
      %v1021 = vpack.c.b16 %v839, %v826
      %v1022 = vpack.c.b16 %v840, %v827
      %v1023 = vpack.c.b16 %v841, %v828
      %v1024 = vpack.c.b16 %v842, %v829
      %v1025 = vpack.c.b16 %v843, %v830
      %v1026 = vpack.c.b16 %v844, %v831
      %v1027 = vpack.c.b16 %v845, %v832
      %v1028 = vpack.c.b16 %v846, %v833
      %v1029 = vpack.c.b16 %v847, %v834
      %v1030 = vpack.c.b16 %v848, %v835
      %v1031 = vpack.c.b16 %v849, %v836
      %v1032 = vpack.c.b16 %v850, %v837
      %v1033 = vpack.c.b16 %v851, %v838
      %v1034 = vpack.c.b16 %v865, %v852
      %v1035 = vpack.c.b16 %v866, %v853
      %v1036 = vpack.c.b16 %v867, %v854
      %v1037 = vpack.c.b16 %v868, %v855
      %v1038 = vpack.c.b16 %v869, %v856
      %v1039 = vpack.c.b16 %v870, %v857
      %v1040 = vpack.c.b16 %v871, %v858
      %v1041 = vpack.c.b16 %v872, %v859
      %v1042 = vpack.c.b16 %v873, %v860
      %v1043 = vpack.c.b16 %v874, %v861
      %v1044 = vpack.c.b16 %v875, %v862
      %v1045 = vpack.c.b16 %v876, %v863
      %v1046 = vpack.c.b16 %v877, %v864
      %v1047 = vpack.c.b16 %v891, %v878
      %v1048 = vpack.c.b16 %v892, %v879
      %v1049 = vpack.c.b16 %v893, %v880
      %v1050 = vpack.c.b16 %v894, %v881
      %v1051 = vpack.c.b16 %v895, %v882
      %v1052 = vpack.c.b16 %v896, %v883
      %v1053 = vpack.c.b16 %v897, %v884
      %v1054 = vpack.c.b16 %v898, %v885
      %v1055 = vpack.c.b16 %v899, %v886
      %v1056 = vpack.c.b16 %v900, %v887
      %v1057 = vpack.c.b16 %v901, %v888
      %v1058 = vpack.c.b16 %v902, %v889
      %v1059 = vpack.c.b16 %v903, %v890
      %v1060 = vpack.c.b16 %v917, %v904
      %v1061 = vpack.c.b16 %v918, %v905
      %v1062 = vpack.c.b16 %v919, %v906
      %v1063 = vpack.c.b16 %v920, %v907
      %v1064 = vpack.c.b16 %v921, %v908
      %v1065 = vpack.c.b16 %v922, %v909
      %v1066 = vpack.c.b16 %v923, %v910
      %v1067 = vpack.c.b16 %v924, %v911
      %v1068 = vpack.c.b16 %v925, %v912
      %v1069 = vpack.c.b16 %v926, %v913
      %v1070 = vpack.c.b16 %v927, %v914
      %v1071 = vpack.c.b16 %v928, %v915
      %v1072 = vpack.c.b16 %v929, %v916
      %v1073 = vpack.c.b16 %v943, %v930
      %v1074 = vpack.c.b16 %v944, %v931
      %v1075 = vpack.c.b16 %v945, %v932
      %v1076 = vpack.c.b16 %v946, %v933
      %v1077 = vpack.c.b16 %v947, %v934
      %v1078 = vpack.c.b16 %v948, %v935
      %v1079 = vpack.c.b16 %v949, %v936
      %v1080 = vpack.c.b16 %v950, %v937
      %v1081 = vpack.c.b16 %v951, %v938
      %v1082 = vpack.c.b16 %v952, %v939
      %v1083 = vpack.c.b16 %v953, %v940
      %v1084 = vpack.c.b16 %v954, %v941
      %v1085 = vpack.c.b16 %v955, %v942
      %v1086 = vpack.c.b16 %v969, %v956
      %v1087 = vpack.c.b16 %v970, %v957
      %v1088 = vpack.c.b16 %v971, %v958
      %v1089 = vpack.c.b16 %v972, %v959
      %v1090 = vpack.c.b16 %v973, %v960
      %v1091 = vpack.c.b16 %v974, %v961
      %v1092 = vpack.c.b16 %v975, %v962
      %v1093 = vpack.c.b16 %v976, %v963
      %v1094 = vpack.c.b16 %v977, %v964
      %v1095 = vpack.c.b16 %v978, %v965
      %v1096 = vpack.c.b16 %v979, %v966
      %v1097 = vpack.c.b16 %v980, %v967
      %v1098 = vpack.c.b16 %v981, %v968
      %v1099 = vpack.c.b16 %v995, %v982
      %v1100 = vpack.c.b16 %v996, %v983
      %v1101 = vpack.c.b16 %v997, %v984
      %v1102 = vpack.c.b16 %v998, %v985
      %v1103 = vpack.c.b16 %v999, %v986
      %v1104 = vpack.c.b16 %v1000, %v987
      %v1105 = vpack.c.b16 %v1001, %v988
      %v1106 = vpack.c.b16 %v1002, %v989
      %v1107 = vpack.c.b16 %v1003, %v990
      %v1108 = vpack.c.b16 %v1004, %v991
      %v1109 = vpack.c.b16 %v1005, %v992
      %v1110 = vpack.c.b16 %v1006, %v993
      %v1111 = vpack.c.b16 %v1007, %v994
      %v1608 = vunpack.c.l.b16 %v288
      %v1609 = vunpack.c.h.b16 %v288
      %v1610 = vunpack.c.l.b16 %v289
      %v1611 = vunpack.c.l.b16 %v290
      %v1612 = vunpack.c.h.b16 %v290
      %v1613 = vunpack.c.l.b16 %v291
      %v1614 = vunpack.c.l.b16 %v292
      %v1615 = vunpack.c.h.b16 %v292
      %v1616 = vunpack.c.l.b16 %v293
      %v1617 = vunpack.c.l.b16 %v294
      %v1618 = vunpack.c.h.b16 %v294
      %v1619 = vunpack.c.l.b16 %v295
      %v1620 = vunpack.c.l.b16 %v296
      %v1621 = vunpack.c.h.b16 %v296
      %v1622 = vunpack.c.l.b16 %v297
      %v1623 = vunpack.c.l.b16 %v298
      %v1624 = vunpack.c.h.b16 %v298
      %v1625 = vunpack.c.l.b16 %v299
      %v1626 = vunpack.c.l.b16 %v300
      %v1627 = vunpack.c.h.b16 %v300
      %v1628 = vunpack.c.l.b16 %v301
      %v1629 = vunpack.c.l.b16 %v302
      %v1630 = vunpack.c.h.b16 %v302
      %v1631 = vunpack.c.l.b16 %v303
      %v1632 = vunpack.c.l.b16 %v304
      %v1633 = vunpack.c.h.b16 %v304
      %v1634 = vunpack.c.l.b16 %v305
      %v1635 = vunpack.c.l.b16 %v306
      %v1636 = vunpack.c.h.b16 %v306
      %v1637 = vunpack.c.l.b16 %v307
      %v1638 = vunpack.c.l.b16 %v308
      %v1639 = vunpack.c.h.b16 %v308
      %v1640 = vunpack.c.l.b16 %v309
      %v1641 = vunpack.c.l.b16 %v310
      %v1642 = vunpack.c.h.b16 %v310
      %v1643 = vunpack.c.l.b16 %v311
      %v1644 = vunpack.c.l.b16 %v312
      %v1645 = vunpack.c.h.b16 %v312
      %v1646 = vunpack.c.l.b16 %v313
      %v1647 = vunpack.c.l.b16 %v314
      %v1648 = vunpack.c.h.b16 %v314
      %v1649 = vunpack.c.l.b16 %v315
      %v1650 = vunpack.c.l.b16 %v316
      %v1651 = vunpack.c.h.b16 %v316
      %v1652 = vunpack.c.l.b16 %v317
      %v1653 = vunpack.c.l.b16 %v318
      %v1654 = vunpack.c.h.b16 %v318
      %v1655 = vunpack.c.l.b16 %v319
      %v1656 = vunpack.c.l.b16 %v320
      %v1657 = vunpack.c.h.b16 %v320
      %v1658 = vunpack.c.l.b16 %v321
      %v1659 = vunpack.c.l.b16 %v322
      %v1660 = vunpack.c.h.b16 %v322
      %v1661 = vunpack.c.l.b16 %v323
      %v1662 = vunpack.c.l.b16 %v324
      %v1663 = vunpack.c.h.b16 %v324
      %v1664 = vunpack.c.l.b16 %v325
      %v1665 = vunpack.c.l.b16 %v326
      %v1666 = vunpack.c.h.b16 %v326
      %v1667 = vunpack.c.l.b16 %v327
      %v1668 = vunpack.c.l.b16 %v328
      %v1669 = vunpack.c.h.b16 %v328
      %v1670 = vunpack.c.l.b16 %v329
      %v1671 = vunpack.c.l.b16 %v330
      %v1672 = vunpack.c.h.b16 %v330
      %v1673 = vunpack.c.l.b16 %v331
      %v1674 = vunpack.c.l.b16 %v332
      %v1675 = vunpack.c.h.b16 %v332
      %v1676 = vunpack.c.l.b16 %v333
      %v1677 = vunpack.c.l.b16 %v334
      %v1678 = vunpack.c.h.b16 %v334
      %v1679 = vunpack.c.l.b16 %v335
      %v1680 = vunpack.c.l.b16 %v336
      %v1681 = vunpack.c.h.b16 %v336
      %v1682 = vunpack.c.l.b16 %v337
      %v1683 = vunpack.c.l.b16 %v338
      %v1684 = vunpack.c.h.b16 %v338
      %v1685 = vunpack.c.l.b16 %v339
      %v1686 = vunpack.c.l.b16 %v340
      %v1687 = vunpack.c.h.b16 %v340
      %v1688 = vunpack.c.l.b16 %v341
      %v1689 = vunpack.c.l.b16 %v342
      %v1690 = vunpack.c.h.b16 %v342
      %v1691 = vunpack.c.l.b16 %v343
      %v1692 = vunpack.c.l.b16 %v344
      %v1693 = vunpack.c.h.b16 %v344
      %v1694 = vunpack.c.l.b16 %v345
      %v1695 = vunpack.c.l.b16 %v346
      %v1696 = vunpack.c.h.b16 %v346
      %v1697 = vunpack.c.l.b16 %v347
      %v1698 = vunpack.c.l.b16 %v348
      %v1699 = vunpack.c.h.b16 %v348
      %v1700 = vunpack.c.l.b16 %v349
      %v1701 = vunpack.c.l.b16 %v350
      %v1702 = vunpack.c.h.b16 %v350
      %v1703 = vunpack.c.l.b16 %v351
      %v1704 = vunpack.c.l.b16 %v352
      %v1705 = vunpack.c.h.b16 %v352
      %v1706 = vunpack.c.l.b16 %v353
      %v1707 = vunpack.c.l.b16 %v354
      %v1708 = vunpack.c.h.b16 %v354
      %v1709 = vunpack.c.l.b16 %v355
      %v1710 = vunpack.c.l.b16 %v356
      %v1711 = vunpack.c.h.b16 %v356
      %v1712 = vunpack.c.l.b16 %v357
      %v1713 = vunpack.c.l.b16 %v358
      %v1714 = vunpack.c.h.b16 %v358
      %v1715 = vunpack.c.l.b16 %v359
      %v1716 = vunpack.c.l.b16 %v360
      %v1717 = vunpack.c.h.b16 %v360
      %v1718 = vunpack.c.l.b16 %v361
      %v1719 = vunpack.c.l.b16 %v362
      %v1720 = vunpack.c.h.b16 %v362
      %v1721 = vunpack.c.l.b16 %v363
      %v1722 = vunpack.c.l.b16 %v364
      %v1723 = vunpack.c.h.b16 %v364
      %v1724 = vunpack.c.l.b16 %v365
      %v1725 = vunpack.c.l.b16 %v366
      %v1726 = vunpack.c.h.b16 %v366
      %v1727 = vunpack.c.l.b16 %v367
      %v1728 = vunpack.c.l.b16 %v368
      %v1729 = vunpack.c.h.b16 %v368
      %v1730 = vunpack.c.l.b16 %v369
      %v1731 = vunpack.c.l.b16 %v370
      %v1732 = vunpack.c.h.b16 %v370
      %v1733 = vunpack.c.l.b16 %v371
      %v1734 = vunpack.c.l.b16 %v372
      %v1735 = vunpack.c.h.b16 %v372
      %v1736 = vunpack.c.l.b16 %v373
      %v1737 = vunpack.c.l.b16 %v374
      %v1738 = vunpack.c.h.b16 %v374
      %v1739 = vunpack.c.l.b16 %v375
      %v1740 = vunpack.c.l.b16 %v376
      %v1741 = vunpack.c.h.b16 %v376
      %v1742 = vunpack.c.l.b16 %v377
      %v1743 = vunpack.c.l.b16 %v378
      %v1744 = vunpack.c.h.b16 %v378
      %v1745 = vunpack.c.l.b16 %v379
      %v1746 = vunpack.c.l.b16 %v380
      %v1747 = vunpack.c.h.b16 %v380
      %v1748 = vunpack.c.l.b16 %v381
      %v1749 = vunpack.c.l.b16 %v382
      %v1750 = vunpack.c.h.b16 %v382
      %v1751 = vunpack.c.l.b16 %v383
      %v1752 = vunpack.c.l.b16 %v384
      %v1753 = vunpack.c.h.b16 %v384
      %v1754 = vunpack.c.l.b16 %v385
      %v1755 = vunpack.c.l.b16 %v386
      %v1756 = vunpack.c.h.b16 %v386
      %v1757 = vunpack.c.l.b16 %v387
      %v1758 = vunpack.c.l.b16 %v388
      %v1759 = vunpack.c.h.b16 %v388
      %v1760 = vunpack.c.l.b16 %v389
      %v1761 = vunpack.c.l.b16 %v390
      %v1762 = vunpack.c.h.b16 %v390
      %v1763 = vunpack.c.l.b16 %v391
      %v1764 = vunpack.c.l.b16 %v392
      %v1765 = vunpack.c.h.b16 %v392
      %v1766 = vunpack.c.l.b16 %v393
      %v1767 = vunpack.c.l.b16 %v394
      %v1768 = vunpack.c.h.b16 %v394
      %v1769 = vunpack.c.l.b16 %v395
      %v1770 = vunpack.c.l.b16 %v396
      %v1771 = vunpack.c.h.b16 %v396
      %v1772 = vunpack.c.l.b16 %v397
      %v1773 = vunpack.c.l.b16 %v398
      %v1774 = vunpack.c.h.b16 %v398
      %v1775 = vunpack.c.l.b16 %v399
      %v1776 = vunpack.c.l.b16 %v400
      %v1777 = vunpack.c.h.b16 %v400
      %v1778 = vunpack.c.l.b16 %v401
      %v1779 = vunpack.c.l.b16 %v402
      %v1780 = vunpack.c.h.b16 %v402
      %v1781 = vunpack.c.l.b16 %v403
      %v1782 = vunpack.c.l.b16 %v404
      %v1783 = vunpack.c.h.b16 %v404
      %v1784 = vunpack.c.l.b16 %v405
      %v1785 = vunpack.c.l.b16 %v406
      %v1786 = vunpack.c.h.b16 %v406
      %v1787 = vunpack.c.l.b16 %v407
      %v1788 = vunpack.c.l.b16 %v408
      %v1789 = vunpack.c.h.b16 %v408
      %v1790 = vunpack.c.l.b16 %v409
      %v1791 = vunpack.c.l.b16 %v410
      %v1792 = vunpack.c.h.b16 %v410
      %v1793 = vunpack.c.l.b16 %v411
      %v1794 = vunpack.c.l.b16 %v412
      %v1795 = vunpack.c.h.b16 %v412
      %v1796 = vunpack.c.l.b16 %v413
      %v1797 = vunpack.c.l.b16 %v414
      %v1798 = vunpack.c.h.b16 %v414
      %v1799 = vunpack.c.l.b16 %v415
      %v1800 = vunpack.c.l.b16 %v416
      %v1801 = vunpack.c.h.b16 %v416
      %v1802 = vunpack.c.l.b16 %v417
      %v1803 = vunpack.c.l.b16 %v418
      %v1804 = vunpack.c.h.b16 %v418
      %v1805 = vunpack.c.l.b16 %v419
      %v1806 = vunpack.c.l.b16 %v420
      %v1807 = vunpack.c.h.b16 %v420
      %v1808 = vunpack.c.l.b16 %v421
      %v1809 = vunpack.c.l.b16 %v422
      %v1810 = vunpack.c.h.b16 %v422
      %v1811 = vunpack.c.l.b16 %v423
      %v1812 = vunpack.c.l.b16 %v424
      %v1813 = vunpack.c.h.b16 %v424
      %v1814 = vunpack.c.l.b16 %v425
      %v1815 = vunpack.c.l.b16 %v426
      %v1816 = vunpack.c.h.b16 %v426
      %v1817 = vunpack.c.l.b16 %v427
      %v1818 = vunpack.c.l.b16 %v428
      %v1819 = vunpack.c.h.b16 %v428
      %v1820 = vunpack.c.l.b16 %v429
      %v1821 = vunpack.c.l.b16 %v430
      %v1822 = vunpack.c.h.b16 %v430
      %v1823 = vunpack.c.l.b16 %v431
      %v1824 = vunpack.c.l.b16 %v432
      %v1825 = vunpack.c.h.b16 %v432
      %v1826 = vunpack.c.l.b16 %v433
      %v1827 = vunpack.c.l.b16 %v434
      %v1828 = vunpack.c.h.b16 %v434
      %v1829 = vunpack.c.l.b16 %v435
      %v1830 = vunpack.c.l.b16 %v436
      %v1831 = vunpack.c.h.b16 %v436
      %v1832 = vunpack.c.l.b16 %v437
      %v1833 = vunpack.c.l.b16 %v438
      %v1834 = vunpack.c.h.b16 %v438
      %v1835 = vunpack.c.l.b16 %v439
      %v1836 = vunpack.c.l.b16 %v440
      %v1837 = vunpack.c.h.b16 %v440
      %v1838 = vunpack.c.l.b16 %v441
      %v1839 = vunpack.c.l.b16 %v442
      %v1840 = vunpack.c.h.b16 %v442
      %v1841 = vunpack.c.l.b16 %v443
      %v1842 = vunpack.c.l.b16 %v444
      %v1843 = vunpack.c.h.b16 %v444
      %v1844 = vunpack.c.l.b16 %v445
      %v1845 = vunpack.c.l.b16 %v446
      %v1846 = vunpack.c.h.b16 %v446
      %v1847 = vunpack.c.l.b16 %v447
      %v1848 = vunpack.c.l.b16 %v448
      %v1849 = vunpack.c.h.b16 %v448
      %v1850 = vunpack.c.l.b16 %v449
      %v1851 = vunpack.c.l.b16 %v450
      %v1852 = vunpack.c.h.b16 %v450
      %v1853 = vunpack.c.l.b16 %v451
      %v1854 = vunpack.c.l.b16 %v452
      %v1855 = vunpack.c.h.b16 %v452
      %v1856 = vunpack.c.l.b16 %v453
      %v1857 = vunpack.c.l.b16 %v454
      %v1858 = vunpack.c.h.b16 %v454
      %v1859 = vunpack.c.l.b16 %v455
      %v1860 = vunpack.c.l.b16 %v456
      %v1861 = vunpack.c.h.b16 %v456
      %v1862 = vunpack.c.l.b16 %v457
      %v1863 = vunpack.c.l.b16 %v458
      %v1864 = vunpack.c.h.b16 %v458
      %v1865 = vunpack.c.l.b16 %v459
      %v1866 = vunpack.c.l.b16 %v460
      %v1867 = vunpack.c.h.b16 %v460
      %v1868 = vunpack.c.l.b16 %v461
      %v1869 = vunpack.c.l.b16 %v462
      %v1870 = vunpack.c.h.b16 %v462
      %v1871 = vunpack.c.l.b16 %v463
      %v1872 = vunpack.c.l.b16 %v464
      %v1873 = vunpack.c.h.b16 %v464
      %v1874 = vunpack.c.l.b16 %v465
      %v1875 = vunpack.c.l.b16 %v466
      %v1876 = vunpack.c.h.b16 %v466
      %v1877 = vunpack.c.l.b16 %v467
      %v1878 = vunpack.c.l.b16 %v468
      %v1879 = vunpack.c.h.b16 %v468
      %v1880 = vunpack.c.l.b16 %v469
      %v1881 = vunpack.c.l.b16 %v470
      %v1882 = vunpack.c.h.b16 %v470
      %v1883 = vunpack.c.l.b16 %v471
      %v1884 = vunpack.c.l.b16 %v472
      %v1885 = vunpack.c.h.b16 %v472
      %v1886 = vunpack.c.l.b16 %v473
      %v1887 = vunpack.c.l.b16 %v474
      %v1888 = vunpack.c.h.b16 %v474
      %v1889 = vunpack.c.l.b16 %v475
      %v1890 = vunpack.c.l.b16 %v476
      %v1891 = vunpack.c.h.b16 %v476
      %v1892 = vunpack.c.l.b16 %v477
      %v1893 = vunpack.c.l.b16 %v478
      %v1894 = vunpack.c.h.b16 %v478
      %v1895 = vunpack.c.l.b16 %v479
      %v1896 = vunpack.c.l.b16 %v480
      %v1897 = vunpack.c.h.b16 %v480
      %v1898 = vunpack.c.l.b16 %v481
      %v1899 = vunpack.c.l.b16 %v482
      %v1900 = vunpack.c.h.b16 %v482
      %v1901 = vunpack.c.l.b16 %v483
      %v1902 = vunpack.c.l.b16 %v484
      %v1903 = vunpack.c.h.b16 %v484
      %v1904 = vunpack.c.l.b16 %v485
      %v1905 = vunpack.c.l.b16 %v486
      %v1906 = vunpack.c.h.b16 %v486
      %v1907 = vunpack.c.l.b16 %v487
      %v1908 = vunpack.c.l.b16 %v488
      %v1909 = vunpack.c.h.b16 %v488
      %v1910 = vunpack.c.l.b16 %v489
      %v1911 = vunpack.c.l.b16 %v490
      %v1912 = vunpack.c.h.b16 %v490
      %v1913 = vunpack.c.l.b16 %v491
      %v1914 = vunpack.c.l.b16 %v492
      %v1915 = vunpack.c.h.b16 %v492
      %v1916 = vunpack.c.l.b16 %v493
      %v1917 = vunpack.c.l.b16 %v494
      %v1918 = vunpack.c.h.b16 %v494
      %v1919 = vunpack.c.l.b16 %v495
      %v1920 = vunpack.c.l.b16 %v496
      %v1921 = vunpack.c.h.b16 %v496
      %v1922 = vunpack.c.l.b16 %v497
      %v1923 = vunpack.c.l.b16 %v498
      %v1924 = vunpack.c.h.b16 %v498
      %v1925 = vunpack.c.l.b16 %v499
      %v1926 = vunpack.c.l.b16 %v500
      %v1927 = vunpack.c.h.b16 %v500
      %v1928 = vunpack.c.l.b16 %v501
      %v1929 = vunpack.c.l.b16 %v502
      %v1930 = vunpack.c.h.b16 %v502
      %v1931 = vunpack.c.l.b16 %v503
      %v1932 = vunpack.c.l.b16 %v504
      %v1933 = vunpack.c.h.b16 %v504
      %v1934 = vunpack.c.l.b16 %v505
      %v1935 = vunpack.c.l.b16 %v506
      %v1936 = vunpack.c.h.b16 %v506
      %v1937 = vunpack.c.l.b16 %v507
      %v1938 = vunpack.c.l.b16 %v508
      %v1939 = vunpack.c.h.b16 %v508
      %v1940 = vunpack.c.l.b16 %v509
      %v1941 = vunpack.c.l.b16 %v510
      %v1942 = vunpack.c.h.b16 %v510
      %v1943 = vunpack.c.l.b16 %v511
      %v1944 = vunpack.c.l.b16 %v512
      %v1945 = vunpack.c.h.b16 %v512
      %v1946 = vunpack.c.l.b16 %v513
      %v1947 = vunpack.c.l.b16 %v514
      %v1948 = vunpack.c.h.b16 %v514
      %v1949 = vunpack.c.l.b16 %v515
      %v1950 = vunpack.c.l.b16 %v516
      %v1951 = vunpack.c.h.b16 %v516
      %v1952 = vunpack.c.l.b16 %v517
      %v1953 = vunpack.c.l.b16 %v518
      %v1954 = vunpack.c.h.b16 %v518
      %v1955 = vunpack.c.l.b16 %v519
      %v1956 = vunpack.c.l.b16 %v520
      %v1957 = vunpack.c.h.b16 %v520
      %v1958 = vunpack.c.l.b16 %v521
      %v1959 = vunpack.c.l.b16 %v522
      %v1960 = vunpack.c.h.b16 %v522
      %v1961 = vunpack.c.l.b16 %v523
      %v1962 = vunpack.c.l.b16 %v524
      %v1963 = vunpack.c.h.b16 %v524
      %v1964 = vunpack.c.l.b16 %v525
      %v1965 = vunpack.c.l.b16 %v526
      %v1966 = vunpack.c.h.b16 %v526
      %v1967 = vunpack.c.l.b16 %v527
      %v1968 = vunpack.c.l.b16 %v528
      %v1969 = vunpack.c.h.b16 %v528
      %v1970 = vunpack.c.l.b16 %v529
      %v1971 = vunpack.c.l.b16 %v530
      %v1972 = vunpack.c.h.b16 %v530
      %v1973 = vunpack.c.l.b16 %v531
      %v1974 = vunpack.c.l.b16 %v532
      %v1975 = vunpack.c.h.b16 %v532
      %v1976 = vunpack.c.l.b16 %v533
      %v1977 = vunpack.c.l.b16 %v534
      %v1978 = vunpack.c.h.b16 %v534
      %v1979 = vunpack.c.l.b16 %v535
      %v1980 = vunpack.c.l.b16 %v536
      %v1981 = vunpack.c.h.b16 %v536
      %v1982 = vunpack.c.l.b16 %v537
      %v1983 = vunpack.c.l.b16 %v538
      %v1984 = vunpack.c.h.b16 %v538
      %v1985 = vunpack.c.l.b16 %v539
      %v1986 = vunpack.c.l.b16 %v540
      %v1987 = vunpack.c.h.b16 %v540
      %v1988 = vunpack.c.l.b16 %v541
      %v1989 = vunpack.c.l.b16 %v542
      %v1990 = vunpack.c.h.b16 %v542
      %v1991 = vunpack.c.l.b16 %v543
      %v1992 = vunpack.c.l.b16 %v544
      %v1993 = vunpack.c.h.b16 %v544
      %v1994 = vunpack.c.l.b16 %v545
      %v1995 = vunpack.c.l.b16 %v546
      %v1996 = vunpack.c.h.b16 %v546
      %v1997 = vunpack.c.l.b16 %v547
      %v1998 = vunpack.c.l.b16 %v548
      %v1999 = vunpack.c.h.b16 %v548
      %v2000 = vunpack.c.l.b16 %v549
      %v2001 = vunpack.c.l.b16 %v550
      %v2002 = vunpack.c.h.b16 %v550
      %v2003 = vunpack.c.l.b16 %v551
      %v2004 = vunpack.c.l.b16 %v552
      %v2005 = vunpack.c.h.b16 %v552
      %v2006 = vunpack.c.l.b16 %v553
      %v2007 = vunpack.c.l.b16 %v554
      %v2008 = vunpack.c.h.b16 %v554
      %v2009 = vunpack.c.l.b16 %v555
      %v2010 = vunpack.c.l.b16 %v556
      %v2011 = vunpack.c.h.b16 %v556
      %v2012 = vunpack.c.l.b16 %v557
      %v2013 = vunpack.c.l.b16 %v558
      %v2014 = vunpack.c.h.b16 %v558
      %v2015 = vunpack.c.l.b16 %v559
      %v2016 = vunpack.c.l.b16 %v560
      %v2017 = vunpack.c.h.b16 %v560
      %v2018 = vunpack.c.l.b16 %v561
      %v2019 = vunpack.c.l.b16 %v562
      %v2020 = vunpack.c.h.b16 %v562
      %v2021 = vunpack.c.l.b16 %v563
      %v2022 = vunpack.c.l.b16 %v564
      %v2023 = vunpack.c.h.b16 %v564
      %v2024 = vunpack.c.l.b16 %v565
      %v2025 = vunpack.c.l.b16 %v566
      %v2026 = vunpack.c.h.b16 %v566
      %v2027 = vunpack.c.l.b16 %v567
      %v2028 = vunpack.c.l.b16 %v568
      %v2029 = vunpack.c.h.b16 %v568
      %v2030 = vunpack.c.l.b16 %v569
      %v2031 = vunpack.c.l.b16 %v570
      %v2032 = vunpack.c.h.b16 %v570
      %v2033 = vunpack.c.l.b16 %v571
      %v2034 = vunpack.c.l.b16 %v572
      %v2035 = vunpack.c.h.b16 %v572
      %v2036 = vunpack.c.l.b16 %v573
      %v2037 = vunpack.c.l.b16 %v574
      %v2038 = vunpack.c.h.b16 %v574
      %v2039 = vunpack.c.l.b16 %v575
      %v2040 = vunpack.c.l.b16 %v576
      %v2041 = vunpack.c.h.b16 %v576
      %v2042 = vunpack.c.l.b16 %v577
      %v2043 = vunpack.c.l.b16 %v578
      %v2044 = vunpack.c.h.b16 %v578
      %v2045 = vunpack.c.l.b16 %v579
      %v2046 = vunpack.c.l.b16 %v580
      %v2047 = vunpack.c.h.b16 %v580
      %v2048 = vunpack.c.l.b16 %v581
      %v2049 = vunpack.c.l.b16 %v582
      %v2050 = vunpack.c.h.b16 %v582
      %v2051 = vunpack.c.l.b16 %v583
      %v2052 = vunpack.c.l.b16 %v584
      %v2053 = vunpack.c.h.b16 %v584
      %v2054 = vunpack.c.l.b16 %v585
      %v2055 = vunpack.c.l.b16 %v586
      %v2056 = vunpack.c.h.b16 %v586
      %v2057 = vunpack.c.l.b16 %v587
      %v2058 = vunpack.c.l.b16 %v588
      %v2059 = vunpack.c.h.b16 %v588
      %v2060 = vunpack.c.l.b16 %v589
      %v2061 = vunpack.c.l.b16 %v590
      %v2062 = vunpack.c.h.b16 %v590
      %v2063 = vunpack.c.l.b16 %v591
      %v2064 = vunpack.c.l.b16 %v592
      %v2065 = vunpack.c.h.b16 %v592
      %v2066 = vunpack.c.l.b16 %v593
      %v2067 = vunpack.c.l.b16 %v594
      %v2068 = vunpack.c.h.b16 %v594
      %v2069 = vunpack.c.l.b16 %v595
      %v2070 = vunpack.c.l.b16 %v596
      %v2071 = vunpack.c.h.b16 %v596
      %v2072 = vunpack.c.l.b16 %v597
      %v2073 = vunpack.c.l.b16 %v598
      %v2074 = vunpack.c.h.b16 %v598
      %v2075 = vunpack.c.l.b16 %v599
      %v2076 = vunpack.c.l.b16 %v600
      %v2077 = vunpack.c.h.b16 %v600
      %v2078 = vunpack.c.l.b16 %v601
      %v2079 = vunpack.c.l.b16 %v602
      %v2080 = vunpack.c.h.b16 %v602
      %v2081 = vunpack.c.l.b16 %v603
      %v2082 = vunpack.c.l.b16 %v604
      %v2083 = vunpack.c.h.b16 %v604
      %v2084 = vunpack.c.l.b16 %v605
      %v2085 = vunpack.c.l.b16 %v606
      %v2086 = vunpack.c.h.b16 %v606
      %v2087 = vunpack.c.l.b16 %v607
      %v2088 = vunpack.c.l.b16 %v608
      %v2089 = vunpack.c.h.b16 %v608
      %v2090 = vunpack.c.l.b16 %v609
      %v2091 = vunpack.c.l.b16 %v610
      %v2092 = vunpack.c.h.b16 %v610
      %v2093 = vunpack.c.l.b16 %v611
      %v2094 = vunpack.c.l.b16 %v612
      %v2095 = vunpack.c.h.b16 %v612
      %v2096 = vunpack.c.l.b16 %v613
      %v2097 = vunpack.c.l.b16 %v614
      %v2098 = vunpack.c.h.b16 %v614
      %v2099 = vunpack.c.l.b16 %v615
      %v2100 = vunpack.c.l.b16 %v616
      %v2101 = vunpack.c.h.b16 %v616
      %v2102 = vunpack.c.l.b16 %v617
      %v2103 = vunpack.c.l.b16 %v618
      %v2104 = vunpack.c.h.b16 %v618
      %v2105 = vunpack.c.l.b16 %v619
      %v2106 = vunpack.c.l.b16 %v620
      %v2107 = vunpack.c.h.b16 %v620
      %v2108 = vunpack.c.l.b16 %v621
      %v2109 = vunpack.c.l.b16 %v622
      %v2110 = vunpack.c.h.b16 %v622
      %v2111 = vunpack.c.l.b16 %v623
      %v2112 = vunpack.c.l.b16 %v624
      %v2113 = vunpack.c.h.b16 %v624
      %v2114 = vunpack.c.l.b16 %v625
      %v2115 = vunpack.c.l.b16 %v626
      %v2116 = vunpack.c.h.b16 %v626
      %v2117 = vunpack.c.l.b16 %v627
      %v2118 = vunpack.c.l.b16 %v628
      %v2119 = vunpack.c.h.b16 %v628
      %v2120 = vunpack.c.l.b16 %v629
      %v2121 = vunpack.c.l.b16 %v630
      %v2122 = vunpack.c.h.b16 %v630
      %v2123 = vunpack.c.l.b16 %v631
      %v2124 = vunpack.c.l.b16 %v632
      %v2125 = vunpack.c.h.b16 %v632
      %v2126 = vunpack.c.l.b16 %v633
      %v2127 = vunpack.c.l.b16 %v634
      %v2128 = vunpack.c.h.b16 %v634
      %v2129 = vunpack.c.l.b16 %v635
      %v2130 = vunpack.c.l.b16 %v636
      %v2131 = vunpack.c.h.b16 %v636
      %v2132 = vunpack.c.l.b16 %v637
      %v2133 = vunpack.c.l.b16 %v638
      %v2134 = vunpack.c.h.b16 %v638
      %v2135 = vunpack.c.l.b16 %v639
      %v2136 = vunpack.c.l.b16 %v640
      %v2137 = vunpack.c.h.b16 %v640
      %v2138 = vunpack.c.l.b16 %v641
      %v2139 = vunpack.c.l.b16 %v642
      %v2140 = vunpack.c.h.b16 %v642
      %v2141 = vunpack.c.l.b16 %v643
      %v2142 = vunpack.c.l.b16 %v644
      %v2143 = vunpack.c.h.b16 %v644
      %v2144 = vunpack.c.l.b16 %v645
      %v2145 = vunpack.c.l.b16 %v646
      %v2146 = vunpack.c.h.b16 %v646
      %v2147 = vunpack.c.l.b16 %v647
      %v2148 = vunpack.c.l.b16 %v648
      %v2149 = vunpack.c.h.b16 %v648
      %v2150 = vunpack.c.l.b16 %v649
      %v2151 = vunpack.c.l.b16 %v650
      %v2152 = vunpack.c.h.b16 %v650
      %v2153 = vunpack.c.l.b16 %v651
      %v2154 = vunpack.c.l.b16 %v652
      %v2155 = vunpack.c.h.b16 %v652
      %v2156 = vunpack.c.l.b16 %v653
      %v2157 = vunpack.c.l.b16 %v654
      %v2158 = vunpack.c.h.b16 %v654
      %v2159 = vunpack.c.l.b16 %v655
      %v2160 = vunpack.c.l.b16 %v656
      %v2161 = vunpack.c.h.b16 %v656
      %v2162 = vunpack.c.l.b16 %v657
      %v2163 = vunpack.c.l.b16 %v658
      %v2164 = vunpack.c.h.b16 %v658
      %v2165 = vunpack.c.l.b16 %v659
      %v2166 = vunpack.c.l.b16 %v660
      %v2167 = vunpack.c.h.b16 %v660
      %v2168 = vunpack.c.l.b16 %v661
      %v2169 = vunpack.c.l.b16 %v662
      %v2170 = vunpack.c.h.b16 %v662
      %v2171 = vunpack.c.l.b16 %v663
      %v2172 = vunpack.c.l.b16 %v664
      %v2173 = vunpack.c.h.b16 %v664
      %v2174 = vunpack.c.l.b16 %v665
      %v2175 = vunpack.c.l.b16 %v666
      %v2176 = vunpack.c.h.b16 %v666
      %v2177 = vunpack.c.l.b16 %v667
      %v2178 = vunpack.c.l.b16 %v668
      %v2179 = vunpack.c.h.b16 %v668
      %v2180 = vunpack.c.l.b16 %v669
      %v2181 = vunpack.c.l.b16 %v670
      %v2182 = vunpack.c.h.b16 %v670
      %v2183 = vunpack.c.l.b16 %v671
      %v2184 = vunpack.c.l.b16 %v672
      %v2185 = vunpack.c.h.b16 %v672
      %v2186 = vunpack.c.l.b16 %v673
      %v2187 = vunpack.c.l.b16 %v674
      %v2188 = vunpack.c.h.b16 %v674
      %v2189 = vunpack.c.l.b16 %v675
      %v2190 = vunpack.c.l.b16 %v676
      %v2191 = vunpack.c.h.b16 %v676
      %v2192 = vunpack.c.l.b16 %v677
      %v2193 = vunpack.c.l.b16 %v678
      %v2194 = vunpack.c.h.b16 %v678
      %v2195 = vunpack.c.l.b16 %v679
      %v2196 = vunpack.c.l.b16 %v680
      %v2197 = vunpack.c.h.b16 %v680
      %v2198 = vunpack.c.l.b16 %v681
      %v2199 = vunpack.c.l.b16 %v682
      %v2200 = vunpack.c.h.b16 %v682
      %v2201 = vunpack.c.l.b16 %v683
      %v2202 = vunpack.c.l.b16 %v684
      %v2203 = vunpack.c.h.b16 %v684
      %v2204 = vunpack.c.l.b16 %v685
      %v2205 = vunpack.c.l.b16 %v686
      %v2206 = vunpack.c.h.b16 %v686
      %v2207 = vunpack.c.l.b16 %v687
      %v2208 = vpack.c.b16 %v1611, %v1608
      %v2209 = vpack.c.b16 %v1612, %v1609
      %v2210 = vpack.c.b16 %v1613, %v1610
      %v2211 = vpack.c.b16 %v1617, %v1614
      %v2212 = vpack.c.b16 %v1618, %v1615
      %v2213 = vpack.c.b16 %v1619, %v1616
      %v2214 = vpack.c.b16 %v1623, %v1620
      %v2215 = vpack.c.b16 %v1624, %v1621
      %v2216 = vpack.c.b16 %v1625, %v1622
      %v2217 = vpack.c.b16 %v1629, %v1626
      %v2218 = vpack.c.b16 %v1630, %v1627
      %v2219 = vpack.c.b16 %v1631, %v1628
      %v2220 = vpack.c.b16 %v1635, %v1632
      %v2221 = vpack.c.b16 %v1636, %v1633
      %v2222 = vpack.c.b16 %v1637, %v1634
      %v2223 = vpack.c.b16 %v1641, %v1638
      %v2224 = vpack.c.b16 %v1642, %v1639
      %v2225 = vpack.c.b16 %v1643, %v1640
      %v2226 = vpack.c.b16 %v1647, %v1644
      %v2227 = vpack.c.b16 %v1648, %v1645
      %v2228 = vpack.c.b16 %v1649, %v1646
      %v2229 = vpack.c.b16 %v1653, %v1650
      %v2230 = vpack.c.b16 %v1654, %v1651
      %v2231 = vpack.c.b16 %v1655, %v1652
      %v2232 = vpack.c.b16 %v1659, %v1656
      %v2233 = vpack.c.b16 %v1660, %v1657
      %v2234 = vpack.c.b16 %v1661, %v1658
      %v2235 = vpack.c.b16 %v1665, %v1662
      %v2236 = vpack.c.b16 %v1666, %v1663
      %v2237 = vpack.c.b16 %v1667, %v1664
      %v2238 = vpack.c.b16 %v1671, %v1668
      %v2239 = vpack.c.b16 %v1672, %v1669
      %v2240 = vpack.c.b16 %v1673, %v1670
      %v2241 = vpack.c.b16 %v1677, %v1674
      %v2242 = vpack.c.b16 %v1678, %v1675
      %v2243 = vpack.c.b16 %v1679, %v1676
      %v2244 = vpack.c.b16 %v1683, %v1680
      %v2245 = vpack.c.b16 %v1684, %v1681
      %v2246 = vpack.c.b16 %v1685, %v1682
      %v2247 = vpack.c.b16 %v1689, %v1686
      %v2248 = vpack.c.b16 %v1690, %v1687
      %v2249 = vpack.c.b16 %v1691, %v1688
      %v2250 = vpack.c.b16 %v1695, %v1692
      %v2251 = vpack.c.b16 %v1696, %v1693
      %v2252 = vpack.c.b16 %v1697, %v1694
      %v2253 = vpack.c.b16 %v1701, %v1698
      %v2254 = vpack.c.b16 %v1702, %v1699
      %v2255 = vpack.c.b16 %v1703, %v1700
      %v2256 = vpack.c.b16 %v1707, %v1704
      %v2257 = vpack.c.b16 %v1708, %v1705
      %v2258 = vpack.c.b16 %v1709, %v1706
      %v2259 = vpack.c.b16 %v1713, %v1710
      %v2260 = vpack.c.b16 %v1714, %v1711
      %v2261 = vpack.c.b16 %v1715, %v1712
      %v2262 = vpack.c.b16 %v1719, %v1716
      %v2263 = vpack.c.b16 %v1720, %v1717
      %v2264 = vpack.c.b16 %v1721, %v1718
      %v2265 = vpack.c.b16 %v1725, %v1722
      %v2266 = vpack.c.b16 %v1726, %v1723
      %v2267 = vpack.c.b16 %v1727, %v1724
      %v2268 = vpack.c.b16 %v1731, %v1728
      %v2269 = vpack.c.b16 %v1732, %v1729
      %v2270 = vpack.c.b16 %v1733, %v1730
      %v2271 = vpack.c.b16 %v1737, %v1734
      %v2272 = vpack.c.b16 %v1738, %v1735
      %v2273 = vpack.c.b16 %v1739, %v1736
      %v2274 = vpack.c.b16 %v1743, %v1740
      %v2275 = vpack.c.b16 %v1744, %v1741
      %v2276 = vpack.c.b16 %v1745, %v1742
      %v2277 = vpack.c.b16 %v1749, %v1746
      %v2278 = vpack.c.b16 %v1750, %v1747
      %v2279 = vpack.c.b16 %v1751, %v1748
      %v2280 = vpack.c.b16 %v1755, %v1752
      %v2281 = vpack.c.b16 %v1756, %v1753
      %v2282 = vpack.c.b16 %v1757, %v1754
      %v2283 = vpack.c.b16 %v1761, %v1758
      %v2284 = vpack.c.b16 %v1762, %v1759
      %v2285 = vpack.c.b16 %v1763, %v1760
      %v2286 = vpack.c.b16 %v1767, %v1764
      %v2287 = vpack.c.b16 %v1768, %v1765
      %v2288 = vpack.c.b16 %v1769, %v1766
      %v2289 = vpack.c.b16 %v1773, %v1770
      %v2290 = vpack.c.b16 %v1774, %v1771
      %v2291 = vpack.c.b16 %v1775, %v1772
      %v2292 = vpack.c.b16 %v1779, %v1776
      %v2293 = vpack.c.b16 %v1780, %v1777
      %v2294 = vpack.c.b16 %v1781, %v1778
      %v2295 = vpack.c.b16 %v1785, %v1782
      %v2296 = vpack.c.b16 %v1786, %v1783
      %v2297 = vpack.c.b16 %v1787, %v1784
      %v2298 = vpack.c.b16 %v1791, %v1788
      %v2299 = vpack.c.b16 %v1792, %v1789
      %v2300 = vpack.c.b16 %v1793, %v1790
      %v2301 = vpack.c.b16 %v1797, %v1794
      %v2302 = vpack.c.b16 %v1798, %v1795
      %v2303 = vpack.c.b16 %v1799, %v1796
      %v2304 = vpack.c.b16 %v1803, %v1800
      %v2305 = vpack.c.b16 %v1804, %v1801
      %v2306 = vpack.c.b16 %v1805, %v1802
      %v2307 = vpack.c.b16 %v1809, %v1806
      %v2308 = vpack.c.b16 %v1810, %v1807
      %v2309 = vpack.c.b16 %v1811, %v1808
      %v2310 = vpack.c.b16 %v1815, %v1812
      %v2311 = vpack.c.b16 %v1816, %v1813
      %v2312 = vpack.c.b16 %v1817, %v1814
      %v2313 = vpack.c.b16 %v1821, %v1818
      %v2314 = vpack.c.b16 %v1822, %v1819
      %v2315 = vpack.c.b16 %v1823, %v1820
      %v2316 = vpack.c.b16 %v1827, %v1824
      %v2317 = vpack.c.b16 %v1828, %v1825
      %v2318 = vpack.c.b16 %v1829, %v1826
      %v2319 = vpack.c.b16 %v1833, %v1830
      %v2320 = vpack.c.b16 %v1834, %v1831
      %v2321 = vpack.c.b16 %v1835, %v1832
      %v2322 = vpack.c.b16 %v1839, %v1836
      %v2323 = vpack.c.b16 %v1840, %v1837
      %v2324 = vpack.c.b16 %v1841, %v1838
      %v2325 = vpack.c.b16 %v1845, %v1842
      %v2326 = vpack.c.b16 %v1846, %v1843
      %v2327 = vpack.c.b16 %v1847, %v1844
      %v2328 = vpack.c.b16 %v1851, %v1848
      %v2329 = vpack.c.b16 %v1852, %v1849
      %v2330 = vpack.c.b16 %v1853, %v1850
      %v2331 = vpack.c.b16 %v1857, %v1854
      %v2332 = vpack.c.b16 %v1858, %v1855
      %v2333 = vpack.c.b16 %v1859, %v1856
      %v2334 = vpack.c.b16 %v1863, %v1860
      %v2335 = vpack.c.b16 %v1864, %v1861
      %v2336 = vpack.c.b16 %v1865, %v1862
      %v2337 = vpack.c.b16 %v1869, %v1866
      %v2338 = vpack.c.b16 %v1870, %v1867
      %v2339 = vpack.c.b16 %v1871, %v1868
      %v2340 = vpack.c.b16 %v1875, %v1872
      %v2341 = vpack.c.b16 %v1876, %v1873
      %v2342 = vpack.c.b16 %v1877, %v1874
      %v2343 = vpack.c.b16 %v1881, %v1878
      %v2344 = vpack.c.b16 %v1882, %v1879
      %v2345 = vpack.c.b16 %v1883, %v1880
      %v2346 = vpack.c.b16 %v1887, %v1884
      %v2347 = vpack.c.b16 %v1888, %v1885
      %v2348 = vpack.c.b16 %v1889, %v1886
      %v2349 = vpack.c.b16 %v1893, %v1890
      %v2350 = vpack.c.b16 %v1894, %v1891
      %v2351 = vpack.c.b16 %v1895, %v1892
      %v2352 = vpack.c.b16 %v1899, %v1896
      %v2353 = vpack.c.b16 %v1900, %v1897
      %v2354 = vpack.c.b16 %v1901, %v1898
      %v2355 = vpack.c.b16 %v1905, %v1902
      %v2356 = vpack.c.b16 %v1906, %v1903
      %v2357 = vpack.c.b16 %v1907, %v1904
      %v2358 = vpack.c.b16 %v1911, %v1908
      %v2359 = vpack.c.b16 %v1912, %v1909
      %v2360 = vpack.c.b16 %v1913, %v1910
      %v2361 = vpack.c.b16 %v1917, %v1914
      %v2362 = vpack.c.b16 %v1918, %v1915
      %v2363 = vpack.c.b16 %v1919, %v1916
      %v2364 = vpack.c.b16 %v1923, %v1920
      %v2365 = vpack.c.b16 %v1924, %v1921
      %v2366 = vpack.c.b16 %v1925, %v1922
      %v2367 = vpack.c.b16 %v1929, %v1926
      %v2368 = vpack.c.b16 %v1930, %v1927
      %v2369 = vpack.c.b16 %v1931, %v1928
      %v2370 = vpack.c.b16 %v1935, %v1932
      %v2371 = vpack.c.b16 %v1936, %v1933
      %v2372 = vpack.c.b16 %v1937, %v1934
      %v2373 = vpack.c.b16 %v1941, %v1938
      %v2374 = vpack.c.b16 %v1942, %v1939
      %v2375 = vpack.c.b16 %v1943, %v1940
      %v2376 = vpack.c.b16 %v1947, %v1944
      %v2377 = vpack.c.b16 %v1948, %v1945
      %v2378 = vpack.c.b16 %v1949, %v1946
      %v2379 = vpack.c.b16 %v1953, %v1950
      %v2380 = vpack.c.b16 %v1954, %v1951
      %v2381 = vpack.c.b16 %v1955, %v1952
      %v2382 = vpack.c.b16 %v1959, %v1956
      %v2383 = vpack.c.b16 %v1960, %v1957
      %v2384 = vpack.c.b16 %v1961, %v1958
      %v2385 = vpack.c.b16 %v1965, %v1962
      %v2386 = vpack.c.b16 %v1966, %v1963
      %v2387 = vpack.c.b16 %v1967, %v1964
      %v2388 = vpack.c.b16 %v1971, %v1968
      %v2389 = vpack.c.b16 %v1972, %v1969
      %v2390 = vpack.c.b16 %v1973, %v1970
      %v2391 = vpack.c.b16 %v1977, %v1974
      %v2392 = vpack.c.b16 %v1978, %v1975
      %v2393 = vpack.c.b16 %v1979, %v1976
      %v2394 = vpack.c.b16 %v1983, %v1980
      %v2395 = vpack.c.b16 %v1984, %v1981
      %v2396 = vpack.c.b16 %v1985, %v1982
      %v2397 = vpack.c.b16 %v1989, %v1986
      %v2398 = vpack.c.b16 %v1990, %v1987
      %v2399 = vpack.c.b16 %v1991, %v1988
      %v2400 = vpack.c.b16 %v1995, %v1992
      %v2401 = vpack.c.b16 %v1996, %v1993
      %v2402 = vpack.c.b16 %v1997, %v1994
      %v2403 = vpack.c.b16 %v2001, %v1998
      %v2404 = vpack.c.b16 %v2002, %v1999
      %v2405 = vpack.c.b16 %v2003, %v2000
      %v2406 = vpack.c.b16 %v2007, %v2004
      %v2407 = vpack.c.b16 %v2008, %v2005
      %v2408 = vpack.c.b16 %v2009, %v2006
      %v2409 = vpack.c.b16 %v2013, %v2010
      %v2410 = vpack.c.b16 %v2014, %v2011
      %v2411 = vpack.c.b16 %v2015, %v2012
      %v2412 = vpack.c.b16 %v2019, %v2016
      %v2413 = vpack.c.b16 %v2020, %v2017
      %v2414 = vpack.c.b16 %v2021, %v2018
      %v2415 = vpack.c.b16 %v2025, %v2022
      %v2416 = vpack.c.b16 %v2026, %v2023
      %v2417 = vpack.c.b16 %v2027, %v2024
      %v2418 = vpack.c.b16 %v2031, %v2028
      %v2419 = vpack.c.b16 %v2032, %v2029
      %v2420 = vpack.c.b16 %v2033, %v2030
      %v2421 = vpack.c.b16 %v2037, %v2034
      %v2422 = vpack.c.b16 %v2038, %v2035
      %v2423 = vpack.c.b16 %v2039, %v2036
      %v2424 = vpack.c.b16 %v2043, %v2040
      %v2425 = vpack.c.b16 %v2044, %v2041
      %v2426 = vpack.c.b16 %v2045, %v2042
      %v2427 = vpack.c.b16 %v2049, %v2046
      %v2428 = vpack.c.b16 %v2050, %v2047
      %v2429 = vpack.c.b16 %v2051, %v2048
      %v2430 = vpack.c.b16 %v2055, %v2052
      %v2431 = vpack.c.b16 %v2056, %v2053
      %v2432 = vpack.c.b16 %v2057, %v2054
      %v2433 = vpack.c.b16 %v2061, %v2058
      %v2434 = vpack.c.b16 %v2062, %v2059
      %v2435 = vpack.c.b16 %v2063, %v2060
      %v2436 = vpack.c.b16 %v2067, %v2064
      %v2437 = vpack.c.b16 %v2068, %v2065
      %v2438 = vpack.c.b16 %v2069, %v2066
      %v2439 = vpack.c.b16 %v2073, %v2070
      %v2440 = vpack.c.b16 %v2074, %v2071
      %v2441 = vpack.c.b16 %v2075, %v2072
      %v2442 = vpack.c.b16 %v2079, %v2076
      %v2443 = vpack.c.b16 %v2080, %v2077
      %v2444 = vpack.c.b16 %v2081, %v2078
      %v2445 = vpack.c.b16 %v2085, %v2082
      %v2446 = vpack.c.b16 %v2086, %v2083
      %v2447 = vpack.c.b16 %v2087, %v2084
      %v2448 = vpack.c.b16 %v2091, %v2088
      %v2449 = vpack.c.b16 %v2092, %v2089
      %v2450 = vpack.c.b16 %v2093, %v2090
      %v2451 = vpack.c.b16 %v2097, %v2094
      %v2452 = vpack.c.b16 %v2098, %v2095
      %v2453 = vpack.c.b16 %v2099, %v2096
      %v2454 = vpack.c.b16 %v2103, %v2100
      %v2455 = vpack.c.b16 %v2104, %v2101
      %v2456 = vpack.c.b16 %v2105, %v2102
      %v2457 = vpack.c.b16 %v2109, %v2106
      %v2458 = vpack.c.b16 %v2110, %v2107
      %v2459 = vpack.c.b16 %v2111, %v2108
      %v2460 = vpack.c.b16 %v2115, %v2112
      %v2461 = vpack.c.b16 %v2116, %v2113
      %v2462 = vpack.c.b16 %v2117, %v2114
      %v2463 = vpack.c.b16 %v2121, %v2118
      %v2464 = vpack.c.b16 %v2122, %v2119
      %v2465 = vpack.c.b16 %v2123, %v2120
      %v2466 = vpack.c.b16 %v2127, %v2124
      %v2467 = vpack.c.b16 %v2128, %v2125
      %v2468 = vpack.c.b16 %v2129, %v2126
      %v2469 = vpack.c.b16 %v2133, %v2130
      %v2470 = vpack.c.b16 %v2134, %v2131
      %v2471 = vpack.c.b16 %v2135, %v2132
      %v2472 = vpack.c.b16 %v2139, %v2136
      %v2473 = vpack.c.b16 %v2140, %v2137
      %v2474 = vpack.c.b16 %v2141, %v2138
      %v2475 = vpack.c.b16 %v2145, %v2142
      %v2476 = vpack.c.b16 %v2146, %v2143
      %v2477 = vpack.c.b16 %v2147, %v2144
      %v2478 = vpack.c.b16 %v2151, %v2148
      %v2479 = vpack.c.b16 %v2152, %v2149
      %v2480 = vpack.c.b16 %v2153, %v2150
      %v2481 = vpack.c.b16 %v2157, %v2154
      %v2482 = vpack.c.b16 %v2158, %v2155
      %v2483 = vpack.c.b16 %v2159, %v2156
      %v2484 = vpack.c.b16 %v2163, %v2160
      %v2485 = vpack.c.b16 %v2164, %v2161
      %v2486 = vpack.c.b16 %v2165, %v2162
      %v2487 = vpack.c.b16 %v2169, %v2166
      %v2488 = vpack.c.b16 %v2170, %v2167
      %v2489 = vpack.c.b16 %v2171, %v2168
      %v2490 = vpack.c.b16 %v2175, %v2172
      %v2491 = vpack.c.b16 %v2176, %v2173
      %v2492 = vpack.c.b16 %v2177, %v2174
      %v2493 = vpack.c.b16 %v2181, %v2178
      %v2494 = vpack.c.b16 %v2182, %v2179
      %v2495 = vpack.c.b16 %v2183, %v2180
      %v2496 = vpack.c.b16 %v2187, %v2184
      %v2497 = vpack.c.b16 %v2188, %v2185
      %v2498 = vpack.c.b16 %v2189, %v2186
      %v2499 = vpack.c.b16 %v2193, %v2190
      %v2500 = vpack.c.b16 %v2194, %v2191
      %v2501 = vpack.c.b16 %v2195, %v2192
      %v2502 = vpack.c.b16 %v2199, %v2196
      %v2503 = vpack.c.b16 %v2200, %v2197
      %v2504 = vpack.c.b16 %v2201, %v2198
      %v2505 = vpack.c.b16 %v2205, %v2202
      %v2506 = vpack.c.b16 %v2206, %v2203
      %v2507 = vpack.c.b16 %v2207, %v2204
      %vm2808 = vcmask 523264
      %v2810 = vsel %vm2808, %v1020, 0
      %v2813 = vsel %vm2808, %v1033, 0
      %v2816 = vsel %vm2808, %v1046, 0
      %v2819 = vsel %vm2808, %v1059, 0
      %v2822 = vsel %vm2808, %v1072, 0
      %v2825 = vsel %vm2808, %v1085, 0
      %v2828 = vsel %vm2808, %v1098, 0
      %v2831 = vsel %vm2808, %v1111, 0
      %2833 = vmatprep.subr.bf16.mxu0 %v2209
      %2834 = vmatpush1.bf16.msra.mxu0 %v2208
      %2835 = vmatprep.subr.bf16.mxu0 %v2212
      %2836 = vmatpush1.bf16.msra.mxu0 %v2211
      %2837 = vmatprep.subr.bf16.mxu0 %v2215
      %2838 = vmatpush1.bf16.msra.mxu0 %v2214
      %2839 = vmatprep.subr.bf16.mxu0 %v2218
      %2840 = vmatpush1.bf16.msra.mxu0 %v2217
      %2841 = vmatprep.subr.bf16.mxu0 %v2221
      %2842 = vmatpush1.bf16.msra.mxu0 %v2220
      %2843 = vmatprep.subr.bf16.mxu0 %v2224
      %2844 = vmatpush1.bf16.msra.mxu0 %v2223
      %2845 = vmatprep.subr.bf16.mxu0 %v2227
      %2846 = vmatpush1.bf16.msra.mxu0 %v2226
      %2847 = vmatprep.subr.bf16.mxu0 %v2230
      %2848 = vmatpush1.bf16.msra.mxu0 %v2229
      %2849 = vmatprep.subr.bf16.mxu0 %v2233
      %2850 = vmatpush1.bf16.msra.mxu0 %v2232
      %2851 = vmatprep.subr.bf16.mxu0 %v2236
      %2852 = vmatpush1.bf16.msra.mxu0 %v2235
      %2853 = vmatprep.subr.bf16.mxu0 %v2239
      %2854 = vmatpush1.bf16.msra.mxu0 %v2238
      %2855 = vmatprep.subr.bf16.mxu0 %v2242
      %2856 = vmatpush1.bf16.msra.mxu0 %v2241
      %2857 = vmatprep.subr.bf16.mxu0 %v2245
      %2858 = vmatpush1.bf16.msra.mxu0 %v2244
      %2859 = vmatprep.subr.bf16.mxu0 %v2248
      %2860 = vmatpush1.bf16.msra.mxu0 %v2247
      %2861 = vmatprep.subr.bf16.mxu0 %v2251
      %2862 = vmatpush1.bf16.msra.mxu0 %v2250
      %2863 = vmatprep.subr.bf16.mxu0 %v2254
      %2864 = vmatpush1.bf16.msra.mxu0 %v2253
      %2865 = vmatprep.mubr.bf16.mxu0 %v1009
      %2866 = vmatmul.mubr.bf16.gmra.mrb[0].mxu0 %v1008
      %v2867 = vpop.f32.mrb[0].mxu0
      %v2868 = vadd.f32 0.0, %v2867
      %v2869 = vpop.f32.mrb[0].mxu0
      %v2870 = vadd.f32 0.0, %v2869
      %v2871 = vpop.f32.mrb[0].mxu0
      %v2872 = vadd.f32 0.0, %v2871
      %v2873 = vpop.f32.mrb[0].mxu0
      %v2874 = vadd.f32 0.0, %v2873
      %2875 = vmatprep.mubr.bf16.mxu0 %v1022
      %2876 = vmatmul.mubr.bf16.gmra.mrb[0].mxu0 %v1021
      %v2877 = vpop.f32.mrb[0].mxu0
      %v2878 = vadd.f32 0.0, %v2877
      %v2879 = vpop.f32.mrb[0].mxu0
      %v2880 = vadd.f32 0.0, %v2879
      %v2881 = vpop.f32.mrb[0].mxu0
      %v2882 = vadd.f32 0.0, %v2881
      %v2883 = vpop.f32.mrb[0].mxu0
      %v2884 = vadd.f32 0.0, %v2883
      %2885 = vmatprep.mubr.bf16.mxu0 %v1035
      %2886 = vmatmul.mubr.bf16.gmra.mrb[0].mxu0 %v1034
      %v2887 = vpop.f32.mrb[0].mxu0
      %v2888 = vadd.f32 0.0, %v2887
      %v2889 = vpop.f32.mrb[0].mxu0
      %v2890 = vadd.f32 0.0, %v2889
      %v2891 = vpop.f32.mrb[0].mxu0
      %v2892 = vadd.f32 0.0, %v2891
      %v2893 = vpop.f32.mrb[0].mxu0
      %v2894 = vadd.f32 0.0, %v2893
      %2895 = vmatprep.mubr.bf16.mxu0 %v1048
      %2896 = vmatmul.mubr.bf16.gmra.mrb[0].mxu0 %v1047
      %v2897 = vpop.f32.mrb[0].mxu0
      %v2898 = vadd.f32 0.0, %v2897
      %v2899 = vpop.f32.mrb[0].mxu0
      %v2900 = vadd.f32 0.0, %v2899
      %v2901 = vpop.f32.mrb[0].mxu0
      %v2902 = vadd.f32 0.0, %v2901
      %v2903 = vpop.f32.mrb[0].mxu0
      %v2904 = vadd.f32 0.0, %v2903
      %2905 = vmatprep.mubr.bf16.mxu0 %v1061
      %2906 = vmatmul.mubr.bf16.gmra.mrb[0].mxu0 %v1060
      %v2907 = vpop.f32.mrb[0].mxu0
      %v2908 = vadd.f32 0.0, %v2907
      %v2909 = vpop.f32.mrb[0].mxu0
      %v2910 = vadd.f32 0.0, %v2909
      %v2911 = vpop.f32.mrb[0].mxu0
      %v2912 = vadd.f32 0.0, %v2911
      %v2913 = vpop.f32.mrb[0].mxu0
      %v2914 = vadd.f32 0.0, %v2913
      %2915 = vmatprep.mubr.bf16.mxu0 %v1074
      %2916 = vmatmul.mubr.bf16.gmra.mrb[0].mxu0 %v1073
      %v2917 = vpop.f32.mrb[0].mxu0
      %v2918 = vadd.f32 0.0, %v2917
      %v2919 = vpop.f32.mrb[0].mxu0
      %v2920 = vadd.f32 0.0, %v2919
      %v2921 = vpop.f32.mrb[0].mxu0
      %v2922 = vadd.f32 0.0, %v2921
      %v2923 = vpop.f32.mrb[0].mxu0
      %v2924 = vadd.f32 0.0, %v2923
      %2925 = vmatprep.mubr.bf16.mxu0 %v1087
      %2926 = vmatmul.mubr.bf16.gmra.mrb[0].mxu0 %v1086
      %v2927 = vpop.f32.mrb[0].mxu0
      %v2928 = vadd.f32 0.0, %v2927
      %v2929 = vpop.f32.mrb[0].mxu0
      %v2930 = vadd.f32 0.0, %v2929
      %v2931 = vpop.f32.mrb[0].mxu0
      %v2932 = vadd.f32 0.0, %v2931
      %v2933 = vpop.f32.mrb[0].mxu0
      %v2934 = vadd.f32 0.0, %v2933
      %2935 = vmatprep.mubr.bf16.mxu0 %v1100
      %2936 = vmatmul.mubr.bf16.gmra.mrb[0].mxu0 %v1099
      %v2937 = vpop.f32.mrb[0].mxu0
      %v2938 = vadd.f32 0.0, %v2937
      %v2939 = vpop.f32.mrb[0].mxu0
      %v2940 = vadd.f32 0.0, %v2939
      %v2941 = vpop.f32.mrb[0].mxu0
      %v2942 = vadd.f32 0.0, %v2941
      %v2943 = vpop.f32.mrb[0].mxu0
      %v2944 = vadd.f32 0.0, %v2943
      %2945 = vdwg.mxu0
      %2946 = vmatprep.subr.bf16.mxu0 %v2257
      %2947 = vmatpush1.bf16.msra.mxu0 %v2256
      %2948 = vmatprep.subr.bf16.mxu0 %v2260
      %2949 = vmatpush1.bf16.msra.mxu0 %v2259
      %2950 = vmatprep.subr.bf16.mxu0 %v2263
      %2951 = vmatpush1.bf16.msra.mxu0 %v2262
      %2952 = vmatprep.subr.bf16.mxu0 %v2266
      %2953 = vmatpush1.bf16.msra.mxu0 %v2265
      %2954 = vmatprep.subr.bf16.mxu0 %v2269
      %2955 = vmatpush1.bf16.msra.mxu0 %v2268
      %2956 = vmatprep.subr.bf16.mxu0 %v2272
      %2957 = vmatpush1.bf16.msra.mxu0 %v2271
      %2958 = vmatprep.subr.bf16.mxu0 %v2275
      %2959 = vmatpush1.bf16.msra.mxu0 %v2274
      %2960 = vmatprep.subr.bf16.mxu0 %v2278
      %2961 = vmatpush1.bf16.msra.mxu0 %v2277
      %2962 = vmatprep.subr.bf16.mxu0 %v2281
      %2963 = vmatpush1.bf16.msra.mxu0 %v2280
      %2964 = vmatprep.subr.bf16.mxu0 %v2284
      %2965 = vmatpush1.bf16.msra.mxu0 %v2283
      %2966 = vmatprep.subr.bf16.mxu0 %v2287
      %2967 = vmatpush1.bf16.msra.mxu0 %v2286
      %2968 = vmatprep.subr.bf16.mxu0 %v2290
      %2969 = vmatpush1.bf16.msra.mxu0 %v2289
      %2970 = vmatprep.subr.bf16.mxu0 %v2293
      %2971 = vmatpush1.bf16.msra.mxu0 %v2292
      %2972 = vmatprep.subr.bf16.mxu0 %v2296
      %2973 = vmatpush1.bf16.msra.mxu0 %v2295
      %2974 = vmatprep.subr.bf16.mxu0 %v2299
      %2975 = vmatpush1.bf16.msra.mxu0 %v2298
      %2976 = vmatprep.subr.bf16.mxu0 %v2302
      %2977 = vmatpush1.bf16.msra.mxu0 %v2301
      %2978 = vmatprep.mubr.bf16.mxu0 %v1011
      %2979 = vmatmul.mubr.bf16.gmra.mrb[0].mxu0 %v1010
      %v2980 = vpop.f32.mrb[0].mxu0
      %v2981 = vadd.f32 %v2868, %v2980
      %v2982 = vpop.f32.mrb[0].mxu0
      %v2983 = vadd.f32 %v2870, %v2982
      %v2984 = vpop.f32.mrb[0].mxu0
      %v2985 = vadd.f32 %v2872, %v2984
      %v2986 = vpop.f32.mrb[0].mxu0
      %v2987 = vadd.f32 %v2874, %v2986
      %2988 = vmatprep.mubr.bf16.mxu0 %v1024
      %2989 = vmatmul.mubr.bf16.gmra.mrb[0].mxu0 %v1023
      %v2990 = vpop.f32.mrb[0].mxu0
      %v2991 = vadd.f32 %v2878, %v2990
      %v2992 = vpop.f32.mrb[0].mxu0
      %v2993 = vadd.f32 %v2880, %v2992
      %v2994 = vpop.f32.mrb[0].mxu0
      %v2995 = vadd.f32 %v2882, %v2994
      %v2996 = vpop.f32.mrb[0].mxu0
      %v2997 = vadd.f32 %v2884, %v2996
      %2998 = vmatprep.mubr.bf16.mxu0 %v1037
      %2999 = vmatmul.mubr.bf16.gmra.mrb[0].mxu0 %v1036
      %v3000 = vpop.f32.mrb[0].mxu0
      %v3001 = vadd.f32 %v2888, %v3000
      %v3002 = vpop.f32.mrb[0].mxu0
      %v3003 = vadd.f32 %v2890, %v3002
      %v3004 = vpop.f32.mrb[0].mxu0
      %v3005 = vadd.f32 %v2892, %v3004
      %v3006 = vpop.f32.mrb[0].mxu0
      %v3007 = vadd.f32 %v2894, %v3006
      %3008 = vmatprep.mubr.bf16.mxu0 %v1050
      %3009 = vmatmul.mubr.bf16.gmra.mrb[0].mxu0 %v1049
      %v3010 = vpop.f32.mrb[0].mxu0
      %v3011 = vadd.f32 %v2898, %v3010
      %v3012 = vpop.f32.mrb[0].mxu0
      %v3013 = vadd.f32 %v2900, %v3012
      %v3014 = vpop.f32.mrb[0].mxu0
      %v3015 = vadd.f32 %v2902, %v3014
      %v3016 = vpop.f32.mrb[0].mxu0
      %v3017 = vadd.f32 %v2904, %v3016
      %3018 = vmatprep.mubr.bf16.mxu0 %v1063
      %3019 = vmatmul.mubr.bf16.gmra.mrb[0].mxu0 %v1062
      %v3020 = vpop.f32.mrb[0].mxu0
      %v3021 = vadd.f32 %v2908, %v3020
      %v3022 = vpop.f32.mrb[0].mxu0
      %v3023 = vadd.f32 %v2910, %v3022
      %v3024 = vpop.f32.mrb[0].mxu0
      %v3025 = vadd.f32 %v2912, %v3024
      %v3026 = vpop.f32.mrb[0].mxu0
      %v3027 = vadd.f32 %v2914, %v3026
      %3028 = vmatprep.mubr.bf16.mxu0 %v1076
      %3029 = vmatmul.mubr.bf16.gmra.mrb[0].mxu0 %v1075
      %v3030 = vpop.f32.mrb[0].mxu0
      %v3031 = vadd.f32 %v2918, %v3030
      %v3032 = vpop.f32.mrb[0].mxu0
      %v3033 = vadd.f32 %v2920, %v3032
      %v3034 = vpop.f32.mrb[0].mxu0
      %v3035 = vadd.f32 %v2922, %v3034
      %v3036 = vpop.f32.mrb[0].mxu0
      %v3037 = vadd.f32 %v2924, %v3036
      %3038 = vmatprep.mubr.bf16.mxu0 %v1089
      %3039 = vmatmul.mubr.bf16.gmra.mrb[0].mxu0 %v1088
      %v3040 = vpop.f32.mrb[0].mxu0
      %v3041 = vadd.f32 %v2928, %v3040
      %v3042 = vpop.f32.mrb[0].mxu0
      %v3043 = vadd.f32 %v2930, %v3042
      %v3044 = vpop.f32.mrb[0].mxu0
      %v3045 = vadd.f32 %v2932, %v3044
      %v3046 = vpop.f32.mrb[0].mxu0
      %v3047 = vadd.f32 %v2934, %v3046
      %3048 = vmatprep.mubr.bf16.mxu0 %v1102
      %3049 = vmatmul.mubr.bf16.gmra.mrb[0].mxu0 %v1101
      %v3050 = vpop.f32.mrb[0].mxu0
      %v3051 = vadd.f32 %v2938, %v3050
      %v3052 = vpop.f32.mrb[0].mxu0
      %v3053 = vadd.f32 %v2940, %v3052
      %v3054 = vpop.f32.mrb[0].mxu0
      %v3055 = vadd.f32 %v2942, %v3054
      %v3056 = vpop.f32.mrb[0].mxu0
      %v3057 = vadd.f32 %v2944, %v3056
      %3058 = vdwg.mxu0
      %3059 = vmatprep.subr.bf16.mxu0 %v2305
      %3060 = vmatpush1.bf16.msra.mxu0 %v2304
      %3061 = vmatprep.subr.bf16.mxu0 %v2308
      %3062 = vmatpush1.bf16.msra.mxu0 %v2307
      %3063 = vmatprep.subr.bf16.mxu0 %v2311
      %3064 = vmatpush1.bf16.msra.mxu0 %v2310
      %3065 = vmatprep.subr.bf16.mxu0 %v2314
      %3066 = vmatpush1.bf16.msra.mxu0 %v2313
      %3067 = vmatprep.subr.bf16.mxu0 %v2317
      %3068 = vmatpush1.bf16.msra.mxu0 %v2316
      %3069 = vmatprep.subr.bf16.mxu0 %v2320
      %3070 = vmatpush1.bf16.msra.mxu0 %v2319
      %3071 = vmatprep.subr.bf16.mxu0 %v2323
      %3072 = vmatpush1.bf16.msra.mxu0 %v2322
      %3073 = vmatprep.subr.bf16.mxu0 %v2326
      %3074 = vmatpush1.bf16.msra.mxu0 %v2325
      %3075 = vmatprep.subr.bf16.mxu0 %v2329
      %3076 = vmatpush1.bf16.msra.mxu0 %v2328
      %3077 = vmatprep.subr.bf16.mxu0 %v2332
      %3078 = vmatpush1.bf16.msra.mxu0 %v2331
      %3079 = vmatprep.subr.bf16.mxu0 %v2335
      %3080 = vmatpush1.bf16.msra.mxu0 %v2334
      %3081 = vmatprep.subr.bf16.mxu0 %v2338
      %3082 = vmatpush1.bf16.msra.mxu0 %v2337
      %3083 = vmatprep.subr.bf16.mxu0 %v2341
      %3084 = vmatpush1.bf16.msra.mxu0 %v2340
      %3085 = vmatprep.subr.bf16.mxu0 %v2344
      %3086 = vmatpush1.bf16.msra.mxu0 %v2343
      %3087 = vmatprep.subr.bf16.mxu0 %v2347
      %3088 = vmatpush1.bf16.msra.mxu0 %v2346
      %3089 = vmatprep.subr.bf16.mxu0 %v2350
      %3090 = vmatpush1.bf16.msra.mxu0 %v2349
      %3091 = vmatprep.mubr.bf16.mxu0 %v1013
      %3092 = vmatmul.mubr.bf16.gmra.mrb[0].mxu0 %v1012
      %v3093 = vpop.f32.mrb[0].mxu0
      %v3094 = vadd.f32 %v2981, %v3093
      %v3095 = vpop.f32.mrb[0].mxu0
      %v3096 = vadd.f32 %v2983, %v3095
      %v3097 = vpop.f32.mrb[0].mxu0
      %v3098 = vadd.f32 %v2985, %v3097
      %v3099 = vpop.f32.mrb[0].mxu0
      %v3100 = vadd.f32 %v2987, %v3099
      %3101 = vmatprep.mubr.bf16.mxu0 %v1026
      %3102 = vmatmul.mubr.bf16.gmra.mrb[0].mxu0 %v1025
      %v3103 = vpop.f32.mrb[0].mxu0
      %v3104 = vadd.f32 %v2991, %v3103
      %v3105 = vpop.f32.mrb[0].mxu0
      %v3106 = vadd.f32 %v2993, %v3105
      %v3107 = vpop.f32.mrb[0].mxu0
      %v3108 = vadd.f32 %v2995, %v3107
      %v3109 = vpop.f32.mrb[0].mxu0
      %v3110 = vadd.f32 %v2997, %v3109
      %3111 = vmatprep.mubr.bf16.mxu0 %v1039
      %3112 = vmatmul.mubr.bf16.gmra.mrb[0].mxu0 %v1038
      %v3113 = vpop.f32.mrb[0].mxu0
      %v3114 = vadd.f32 %v3001, %v3113
      %v3115 = vpop.f32.mrb[0].mxu0
      %v3116 = vadd.f32 %v3003, %v3115
      %v3117 = vpop.f32.mrb[0].mxu0
      %v3118 = vadd.f32 %v3005, %v3117
      %v3119 = vpop.f32.mrb[0].mxu0
      %v3120 = vadd.f32 %v3007, %v3119
      %3121 = vmatprep.mubr.bf16.mxu0 %v1052
      %3122 = vmatmul.mubr.bf16.gmra.mrb[0].mxu0 %v1051
      %v3123 = vpop.f32.mrb[0].mxu0
      %v3124 = vadd.f32 %v3011, %v3123
      %v3125 = vpop.f32.mrb[0].mxu0
      %v3126 = vadd.f32 %v3013, %v3125
      %v3127 = vpop.f32.mrb[0].mxu0
      %v3128 = vadd.f32 %v3015, %v3127
      %v3129 = vpop.f32.mrb[0].mxu0
      %v3130 = vadd.f32 %v3017, %v3129
      %3131 = vmatprep.mubr.bf16.mxu0 %v1065
      %3132 = vmatmul.mubr.bf16.gmra.mrb[0].mxu0 %v1064
      %v3133 = vpop.f32.mrb[0].mxu0
      %v3134 = vadd.f32 %v3021, %v3133
      %v3135 = vpop.f32.mrb[0].mxu0
      %v3136 = vadd.f32 %v3023, %v3135
      %v3137 = vpop.f32.mrb[0].mxu0
      %v3138 = vadd.f32 %v3025, %v3137
      %v3139 = vpop.f32.mrb[0].mxu0
      %v3140 = vadd.f32 %v3027, %v3139
      %3141 = vmatprep.mubr.bf16.mxu0 %v1078
      %3142 = vmatmul.mubr.bf16.gmra.mrb[0].mxu0 %v1077
      %v3143 = vpop.f32.mrb[0].mxu0
      %v3144 = vadd.f32 %v3031, %v3143
      %v3145 = vpop.f32.mrb[0].mxu0
      %v3146 = vadd.f32 %v3033, %v3145
      %v3147 = vpop.f32.mrb[0].mxu0
      %v3148 = vadd.f32 %v3035, %v3147
      %v3149 = vpop.f32.mrb[0].mxu0
      %v3150 = vadd.f32 %v3037, %v3149
      %3151 = vmatprep.mubr.bf16.mxu0 %v1091
      %3152 = vmatmul.mubr.bf16.gmra.mrb[0].mxu0 %v1090
      %v3153 = vpop.f32.mrb[0].mxu0
      %v3154 = vadd.f32 %v3041, %v3153
      %v3155 = vpop.f32.mrb[0].mxu0
      %v3156 = vadd.f32 %v3043, %v3155
      %v3157 = vpop.f32.mrb[0].mxu0
      %v3158 = vadd.f32 %v3045, %v3157
      %v3159 = vpop.f32.mrb[0].mxu0
      %v3160 = vadd.f32 %v3047, %v3159
      %3161 = vmatprep.mubr.bf16.mxu0 %v1104
      %3162 = vmatmul.mubr.bf16.gmra.mrb[0].mxu0 %v1103
      %v3163 = vpop.f32.mrb[0].mxu0
      %v3164 = vadd.f32 %v3051, %v3163
      %v3165 = vpop.f32.mrb[0].mxu0
      %v3166 = vadd.f32 %v3053, %v3165
      %v3167 = vpop.f32.mrb[0].mxu0
      %v3168 = vadd.f32 %v3055, %v3167
      %v3169 = vpop.f32.mrb[0].mxu0
      %v3170 = vadd.f32 %v3057, %v3169
      %3171 = vdwg.mxu0
      %3172 = vmatprep.subr.bf16.mxu0 %v2353
      %3173 = vmatpush1.bf16.msra.mxu0 %v2352
      %3174 = vmatprep.subr.bf16.mxu0 %v2356
      %3175 = vmatpush1.bf16.msra.mxu0 %v2355
      %3176 = vmatprep.subr.bf16.mxu0 %v2359
      %3177 = vmatpush1.bf16.msra.mxu0 %v2358
      %3178 = vmatprep.subr.bf16.mxu0 %v2362
      %3179 = vmatpush1.bf16.msra.mxu0 %v2361
      %3180 = vmatprep.subr.bf16.mxu0 %v2365
      %3181 = vmatpush1.bf16.msra.mxu0 %v2364
      %3182 = vmatprep.subr.bf16.mxu0 %v2368
      %3183 = vmatpush1.bf16.msra.mxu0 %v2367
      %3184 = vmatprep.subr.bf16.mxu0 %v2371
      %3185 = vmatpush1.bf16.msra.mxu0 %v2370
      %3186 = vmatprep.subr.bf16.mxu0 %v2374
      %3187 = vmatpush1.bf16.msra.mxu0 %v2373
      %3188 = vmatprep.subr.bf16.mxu0 %v2377
      %3189 = vmatpush1.bf16.msra.mxu0 %v2376
      %3190 = vmatprep.subr.bf16.mxu0 %v2380
      %3191 = vmatpush1.bf16.msra.mxu0 %v2379
      %3192 = vmatprep.subr.bf16.mxu0 %v2383
      %3193 = vmatpush1.bf16.msra.mxu0 %v2382
      %3194 = vmatprep.subr.bf16.mxu0 %v2386
      %3195 = vmatpush1.bf16.msra.mxu0 %v2385
      %3196 = vmatprep.subr.bf16.mxu0 %v2389
      %3197 = vmatpush1.bf16.msra.mxu0 %v2388
      %3198 = vmatprep.subr.bf16.mxu0 %v2392
      %3199 = vmatpush1.bf16.msra.mxu0 %v2391
      %3200 = vmatprep.subr.bf16.mxu0 %v2395
      %3201 = vmatpush1.bf16.msra.mxu0 %v2394
      %3202 = vmatprep.subr.bf16.mxu0 %v2398
      %3203 = vmatpush1.bf16.msra.mxu0 %v2397
      %3204 = vmatprep.mubr.bf16.mxu0 %v1015
      %3205 = vmatmul.mubr.bf16.gmra.mrb[0].mxu0 %v1014
      %v3206 = vpop.f32.mrb[0].mxu0
      %v3207 = vadd.f32 %v3094, %v3206
      %v3208 = vpop.f32.mrb[0].mxu0
      %v3209 = vadd.f32 %v3096, %v3208
      %v3210 = vpop.f32.mrb[0].mxu0
      %v3211 = vadd.f32 %v3098, %v3210
      %v3212 = vpop.f32.mrb[0].mxu0
      %v3213 = vadd.f32 %v3100, %v3212
      %3214 = vmatprep.mubr.bf16.mxu0 %v1028
      %3215 = vmatmul.mubr.bf16.gmra.mrb[0].mxu0 %v1027
      %v3216 = vpop.f32.mrb[0].mxu0
      %v3217 = vadd.f32 %v3104, %v3216
      %v3218 = vpop.f32.mrb[0].mxu0
      %v3219 = vadd.f32 %v3106, %v3218
      %v3220 = vpop.f32.mrb[0].mxu0
      %v3221 = vadd.f32 %v3108, %v3220
      %v3222 = vpop.f32.mrb[0].mxu0
      %v3223 = vadd.f32 %v3110, %v3222
      %3224 = vmatprep.mubr.bf16.mxu0 %v1041
      %3225 = vmatmul.mubr.bf16.gmra.mrb[0].mxu0 %v1040
      %v3226 = vpop.f32.mrb[0].mxu0
      %v3227 = vadd.f32 %v3114, %v3226
      %v3228 = vpop.f32.mrb[0].mxu0
      %v3229 = vadd.f32 %v3116, %v3228
      %v3230 = vpop.f32.mrb[0].mxu0
      %v3231 = vadd.f32 %v3118, %v3230
      %v3232 = vpop.f32.mrb[0].mxu0
      %v3233 = vadd.f32 %v3120, %v3232
      %3234 = vmatprep.mubr.bf16.mxu0 %v1054
      %3235 = vmatmul.mubr.bf16.gmra.mrb[0].mxu0 %v1053
      %v3236 = vpop.f32.mrb[0].mxu0
      %v3237 = vadd.f32 %v3124, %v3236
      %v3238 = vpop.f32.mrb[0].mxu0
      %v3239 = vadd.f32 %v3126, %v3238
      %v3240 = vpop.f32.mrb[0].mxu0
      %v3241 = vadd.f32 %v3128, %v3240
      %v3242 = vpop.f32.mrb[0].mxu0
      %v3243 = vadd.f32 %v3130, %v3242
      %3244 = vmatprep.mubr.bf16.mxu0 %v1067
      %3245 = vmatmul.mubr.bf16.gmra.mrb[0].mxu0 %v1066
      %v3246 = vpop.f32.mrb[0].mxu0
      %v3247 = vadd.f32 %v3134, %v3246
      %v3248 = vpop.f32.mrb[0].mxu0
      %v3249 = vadd.f32 %v3136, %v3248
      %v3250 = vpop.f32.mrb[0].mxu0
      %v3251 = vadd.f32 %v3138, %v3250
      %v3252 = vpop.f32.mrb[0].mxu0
      %v3253 = vadd.f32 %v3140, %v3252
      %3254 = vmatprep.mubr.bf16.mxu0 %v1080
      %3255 = vmatmul.mubr.bf16.gmra.mrb[0].mxu0 %v1079
      %v3256 = vpop.f32.mrb[0].mxu0
      %v3257 = vadd.f32 %v3144, %v3256
      %v3258 = vpop.f32.mrb[0].mxu0
      %v3259 = vadd.f32 %v3146, %v3258
      %v3260 = vpop.f32.mrb[0].mxu0
      %v3261 = vadd.f32 %v3148, %v3260
      %v3262 = vpop.f32.mrb[0].mxu0
      %v3263 = vadd.f32 %v3150, %v3262
      %3264 = vmatprep.mubr.bf16.mxu0 %v1093
      %3265 = vmatmul.mubr.bf16.gmra.mrb[0].mxu0 %v1092
      %v3266 = vpop.f32.mrb[0].mxu0
      %v3267 = vadd.f32 %v3154, %v3266
      %v3268 = vpop.f32.mrb[0].mxu0
      %v3269 = vadd.f32 %v3156, %v3268
      %v3270 = vpop.f32.mrb[0].mxu0
      %v3271 = vadd.f32 %v3158, %v3270
      %v3272 = vpop.f32.mrb[0].mxu0
      %v3273 = vadd.f32 %v3160, %v3272
      %3274 = vmatprep.mubr.bf16.mxu0 %v1106
      %3275 = vmatmul.mubr.bf16.gmra.mrb[0].mxu0 %v1105
      %v3276 = vpop.f32.mrb[0].mxu0
      %v3277 = vadd.f32 %v3164, %v3276
      %v3278 = vpop.f32.mrb[0].mxu0
      %v3279 = vadd.f32 %v3166, %v3278
      %v3280 = vpop.f32.mrb[0].mxu0
      %v3281 = vadd.f32 %v3168, %v3280
      %v3282 = vpop.f32.mrb[0].mxu0
      %v3283 = vadd.f32 %v3170, %v3282
      %3284 = vdwg.mxu0
      %3285 = vmatprep.subr.bf16.mxu0 %v2401
      %3286 = vmatpush1.bf16.msra.mxu0 %v2400
      %3287 = vmatprep.subr.bf16.mxu0 %v2404
      %3288 = vmatpush1.bf16.msra.mxu0 %v2403
      %3289 = vmatprep.subr.bf16.mxu0 %v2407
      %3290 = vmatpush1.bf16.msra.mxu0 %v2406
      %3291 = vmatprep.subr.bf16.mxu0 %v2410
      %3292 = vmatpush1.bf16.msra.mxu0 %v2409
      %3293 = vmatprep.subr.bf16.mxu0 %v2413
      %3294 = vmatpush1.bf16.msra.mxu0 %v2412
      %3295 = vmatprep.subr.bf16.mxu0 %v2416
      %3296 = vmatpush1.bf16.msra.mxu0 %v2415
      %3297 = vmatprep.subr.bf16.mxu0 %v2419
      %3298 = vmatpush1.bf16.msra.mxu0 %v2418
      %3299 = vmatprep.subr.bf16.mxu0 %v2422
      %3300 = vmatpush1.bf16.msra.mxu0 %v2421
      %3301 = vmatprep.subr.bf16.mxu0 %v2425
      %3302 = vmatpush1.bf16.msra.mxu0 %v2424
      %3303 = vmatprep.subr.bf16.mxu0 %v2428
      %3304 = vmatpush1.bf16.msra.mxu0 %v2427
      %3305 = vmatprep.subr.bf16.mxu0 %v2431
      %3306 = vmatpush1.bf16.msra.mxu0 %v2430
      %3307 = vmatprep.subr.bf16.mxu0 %v2434
      %3308 = vmatpush1.bf16.msra.mxu0 %v2433
      %3309 = vmatprep.subr.bf16.mxu0 %v2437
      %3310 = vmatpush1.bf16.msra.mxu0 %v2436
      %3311 = vmatprep.subr.bf16.mxu0 %v2440
      %3312 = vmatpush1.bf16.msra.mxu0 %v2439
      %3313 = vmatprep.subr.bf16.mxu0 %v2443
      %3314 = vmatpush1.bf16.msra.mxu0 %v2442
      %3315 = vmatprep.subr.bf16.mxu0 %v2446
      %3316 = vmatpush1.bf16.msra.mxu0 %v2445
      %3317 = vmatprep.mubr.bf16.mxu0 %v1017
      %3318 = vmatmul.mubr.bf16.gmra.mrb[0].mxu0 %v1016
      %v3319 = vpop.f32.mrb[0].mxu0
      %v3320 = vadd.f32 %v3207, %v3319
      %v3321 = vpop.f32.mrb[0].mxu0
      %v3322 = vadd.f32 %v3209, %v3321
      %v3323 = vpop.f32.mrb[0].mxu0
      %v3324 = vadd.f32 %v3211, %v3323
      %v3325 = vpop.f32.mrb[0].mxu0
      %v3326 = vadd.f32 %v3213, %v3325
      %3327 = vmatprep.mubr.bf16.mxu0 %v1030
      %3328 = vmatmul.mubr.bf16.gmra.mrb[0].mxu0 %v1029
      %v3329 = vpop.f32.mrb[0].mxu0
      %v3330 = vadd.f32 %v3217, %v3329
      %v3331 = vpop.f32.mrb[0].mxu0
      %v3332 = vadd.f32 %v3219, %v3331
      %v3333 = vpop.f32.mrb[0].mxu0
      %v3334 = vadd.f32 %v3221, %v3333
      %v3335 = vpop.f32.mrb[0].mxu0
      %v3336 = vadd.f32 %v3223, %v3335
      %3337 = vmatprep.mubr.bf16.mxu0 %v1043
      %3338 = vmatmul.mubr.bf16.gmra.mrb[0].mxu0 %v1042
      %v3339 = vpop.f32.mrb[0].mxu0
      %v3340 = vadd.f32 %v3227, %v3339
      %v3341 = vpop.f32.mrb[0].mxu0
      %v3342 = vadd.f32 %v3229, %v3341
      %v3343 = vpop.f32.mrb[0].mxu0
      %v3344 = vadd.f32 %v3231, %v3343
      %v3345 = vpop.f32.mrb[0].mxu0
      %v3346 = vadd.f32 %v3233, %v3345
      %3347 = vmatprep.mubr.bf16.mxu0 %v1056
      %3348 = vmatmul.mubr.bf16.gmra.mrb[0].mxu0 %v1055
      %v3349 = vpop.f32.mrb[0].mxu0
      %v3350 = vadd.f32 %v3237, %v3349
      %v3351 = vpop.f32.mrb[0].mxu0
      %v3352 = vadd.f32 %v3239, %v3351
      %v3353 = vpop.f32.mrb[0].mxu0
      %v3354 = vadd.f32 %v3241, %v3353
      %v3355 = vpop.f32.mrb[0].mxu0
      %v3356 = vadd.f32 %v3243, %v3355
      %3357 = vmatprep.mubr.bf16.mxu0 %v1069
      %3358 = vmatmul.mubr.bf16.gmra.mrb[0].mxu0 %v1068
      %v3359 = vpop.f32.mrb[0].mxu0
      %v3360 = vadd.f32 %v3247, %v3359
      %v3361 = vpop.f32.mrb[0].mxu0
      %v3362 = vadd.f32 %v3249, %v3361
      %v3363 = vpop.f32.mrb[0].mxu0
      %v3364 = vadd.f32 %v3251, %v3363
      %v3365 = vpop.f32.mrb[0].mxu0
      %v3366 = vadd.f32 %v3253, %v3365
      %3367 = vmatprep.mubr.bf16.mxu0 %v1082
      %3368 = vmatmul.mubr.bf16.gmra.mrb[0].mxu0 %v1081
      %v3369 = vpop.f32.mrb[0].mxu0
      %v3370 = vadd.f32 %v3257, %v3369
      %v3371 = vpop.f32.mrb[0].mxu0
      %v3372 = vadd.f32 %v3259, %v3371
      %v3373 = vpop.f32.mrb[0].mxu0
      %v3374 = vadd.f32 %v3261, %v3373
      %v3375 = vpop.f32.mrb[0].mxu0
      %v3376 = vadd.f32 %v3263, %v3375
      %3377 = vmatprep.mubr.bf16.mxu0 %v1095
      %3378 = vmatmul.mubr.bf16.gmra.mrb[0].mxu0 %v1094
      %v3379 = vpop.f32.mrb[0].mxu0
      %v3380 = vadd.f32 %v3267, %v3379
      %v3381 = vpop.f32.mrb[0].mxu0
      %v3382 = vadd.f32 %v3269, %v3381
      %v3383 = vpop.f32.mrb[0].mxu0
      %v3384 = vadd.f32 %v3271, %v3383
      %v3385 = vpop.f32.mrb[0].mxu0
      %v3386 = vadd.f32 %v3273, %v3385
      %3387 = vmatprep.mubr.bf16.mxu0 %v1108
      %3388 = vmatmul.mubr.bf16.gmra.mrb[0].mxu0 %v1107
      %v3389 = vpop.f32.mrb[0].mxu0
      %v3390 = vadd.f32 %v3277, %v3389
      %v3391 = vpop.f32.mrb[0].mxu0
      %v3392 = vadd.f32 %v3279, %v3391
      %v3393 = vpop.f32.mrb[0].mxu0
      %v3394 = vadd.f32 %v3281, %v3393
      %v3395 = vpop.f32.mrb[0].mxu0
      %v3396 = vadd.f32 %v3283, %v3395
      %3397 = vdwg.mxu0
      %3398 = vmatprep.subr.bf16.mxu0 %v2449
      %3399 = vmatpush1.bf16.msra.mxu0 %v2448
      %3400 = vmatprep.subr.bf16.mxu0 %v2452
      %3401 = vmatpush1.bf16.msra.mxu0 %v2451
      %3402 = vmatprep.subr.bf16.mxu0 %v2455
      %3403 = vmatpush1.bf16.msra.mxu0 %v2454
      %3404 = vmatprep.subr.bf16.mxu0 %v2458
      %3405 = vmatpush1.bf16.msra.mxu0 %v2457
      %3406 = vmatprep.subr.bf16.mxu0 %v2461
      %3407 = vmatpush1.bf16.msra.mxu0 %v2460
      %3408 = vmatprep.subr.bf16.mxu0 %v2464
      %3409 = vmatpush1.bf16.msra.mxu0 %v2463
      %3410 = vmatprep.subr.bf16.mxu0 %v2467
      %3411 = vmatpush1.bf16.msra.mxu0 %v2466
      %3412 = vmatprep.subr.bf16.mxu0 %v2470
      %3413 = vmatpush1.bf16.msra.mxu0 %v2469
      %3414 = vmatprep.subr.bf16.mxu0 %v2473
      %3415 = vmatpush1.bf16.msra.mxu0 %v2472
      %3416 = vmatprep.subr.bf16.mxu0 %v2476
      %3417 = vmatpush1.bf16.msra.mxu0 %v2475
      %3418 = vmatprep.subr.bf16.mxu0 %v2479
      %3419 = vmatpush1.bf16.msra.mxu0 %v2478
      %3420 = vmatprep.subr.bf16.mxu0 %v2482
      %3421 = vmatpush1.bf16.msra.mxu0 %v2481
      %3422 = vmatprep.subr.bf16.mxu0 %v2485
      %3423 = vmatpush1.bf16.msra.mxu0 %v2484
      %3424 = vmatprep.subr.bf16.mxu0 %v2488
      %3425 = vmatpush1.bf16.msra.mxu0 %v2487
      %3426 = vmatprep.subr.bf16.mxu0 %v2491
      %3427 = vmatpush1.bf16.msra.mxu0 %v2490
      %3428 = vmatprep.subr.bf16.mxu0 %v2494
      %3429 = vmatpush1.bf16.msra.mxu0 %v2493
      %3430 = vmatprep.mubr.bf16.mxu0 %v1019
      %3431 = vmatmul.mubr.bf16.gmra.mrb[0].mxu0 %v1018
      %v3432 = vpop.f32.mrb[0].mxu0
      %v3433 = vadd.f32 %v3320, %v3432
      %v3434 = vpop.f32.mrb[0].mxu0
      %v3435 = vadd.f32 %v3322, %v3434
      %v3436 = vpop.f32.mrb[0].mxu0
      %v3437 = vadd.f32 %v3324, %v3436
      %v3438 = vpop.f32.mrb[0].mxu0
      %v3439 = vadd.f32 %v3326, %v3438
      %3440 = vmatprep.mubr.bf16.mxu0 %v1032
      %3441 = vmatmul.mubr.bf16.gmra.mrb[0].mxu0 %v1031
      %v3442 = vpop.f32.mrb[0].mxu0
      %v3443 = vadd.f32 %v3330, %v3442
      %v3444 = vpop.f32.mrb[0].mxu0
      %v3445 = vadd.f32 %v3332, %v3444
      %v3446 = vpop.f32.mrb[0].mxu0
      %v3447 = vadd.f32 %v3334, %v3446
      %v3448 = vpop.f32.mrb[0].mxu0
      %v3449 = vadd.f32 %v3336, %v3448
      %3450 = vmatprep.mubr.bf16.mxu0 %v1045
      %3451 = vmatmul.mubr.bf16.gmra.mrb[0].mxu0 %v1044
      %v3452 = vpop.f32.mrb[0].mxu0
      %v3453 = vadd.f32 %v3340, %v3452
      %v3454 = vpop.f32.mrb[0].mxu0
      %v3455 = vadd.f32 %v3342, %v3454
      %v3456 = vpop.f32.mrb[0].mxu0
      %v3457 = vadd.f32 %v3344, %v3456
      %v3458 = vpop.f32.mrb[0].mxu0
      %v3459 = vadd.f32 %v3346, %v3458
      %3460 = vmatprep.mubr.bf16.mxu0 %v1058
      %3461 = vmatmul.mubr.bf16.gmra.mrb[0].mxu0 %v1057
      %v3462 = vpop.f32.mrb[0].mxu0
      %v3463 = vadd.f32 %v3350, %v3462
      %v3464 = vpop.f32.mrb[0].mxu0
      %v3465 = vadd.f32 %v3352, %v3464
      %v3466 = vpop.f32.mrb[0].mxu0
      %v3467 = vadd.f32 %v3354, %v3466
      %v3468 = vpop.f32.mrb[0].mxu0
      %v3469 = vadd.f32 %v3356, %v3468
      %3470 = vmatprep.mubr.bf16.mxu0 %v1071
      %3471 = vmatmul.mubr.bf16.gmra.mrb[0].mxu0 %v1070
      %v3472 = vpop.f32.mrb[0].mxu0
      %v3473 = vadd.f32 %v3360, %v3472
      %v3474 = vpop.f32.mrb[0].mxu0
      %v3475 = vadd.f32 %v3362, %v3474
      %v3476 = vpop.f32.mrb[0].mxu0
      %v3477 = vadd.f32 %v3364, %v3476
      %v3478 = vpop.f32.mrb[0].mxu0
      %v3479 = vadd.f32 %v3366, %v3478
      %3480 = vmatprep.mubr.bf16.mxu0 %v1084
      %3481 = vmatmul.mubr.bf16.gmra.mrb[0].mxu0 %v1083
      %v3482 = vpop.f32.mrb[0].mxu0
      %v3483 = vadd.f32 %v3370, %v3482
      %v3484 = vpop.f32.mrb[0].mxu0
      %v3485 = vadd.f32 %v3372, %v3484
      %v3486 = vpop.f32.mrb[0].mxu0
      %v3487 = vadd.f32 %v3374, %v3486
      %v3488 = vpop.f32.mrb[0].mxu0
      %v3489 = vadd.f32 %v3376, %v3488
      %3490 = vmatprep.mubr.bf16.mxu0 %v1097
      %3491 = vmatmul.mubr.bf16.gmra.mrb[0].mxu0 %v1096
      %v3492 = vpop.f32.mrb[0].mxu0
      %v3493 = vadd.f32 %v3380, %v3492
      %v3494 = vpop.f32.mrb[0].mxu0
      %v3495 = vadd.f32 %v3382, %v3494
      %v3496 = vpop.f32.mrb[0].mxu0
      %v3497 = vadd.f32 %v3384, %v3496
      %v3498 = vpop.f32.mrb[0].mxu0
      %v3499 = vadd.f32 %v3386, %v3498
      %3500 = vmatprep.mubr.bf16.mxu0 %v1110
      %3501 = vmatmul.mubr.bf16.gmra.mrb[0].mxu0 %v1109
      %v3502 = vpop.f32.mrb[0].mxu0
      %v3503 = vadd.f32 %v3390, %v3502
      %v3504 = vpop.f32.mrb[0].mxu0
      %v3505 = vadd.f32 %v3392, %v3504
      %v3506 = vpop.f32.mrb[0].mxu0
      %v3507 = vadd.f32 %v3394, %v3506
      %v3508 = vpop.f32.mrb[0].mxu0
      %v3509 = vadd.f32 %v3396, %v3508
      %3510 = vdwg.mxu0
      %3511 = vmatprep.subr.bf16.mxu0 %v2497
      %3512 = vmatpush1.bf16.msra.mxu0 %v2496
      %3513 = vmatprep.subr.bf16.mxu0 %v2500
      %3514 = vmatpush1.bf16.msra.mxu0 %v2499
      %3515 = vmatprep.subr.bf16.mxu0 %v2503
      %3516 = vmatpush1.bf16.msra.mxu0 %v2502
      %3517 = vmatprep.subr.bf16.mxu0 %v2506
      %3518 = vmatpush1.bf16.msra.mxu0 %v2505
      %3519 = vmatprep.subr.bf16.mxu0 0
      %3520 = vmatpush1.bf16.msra.mxu0 0
      %3521 = vmatprep.subr.bf16.mxu0 0
      %3522 = vmatpush1.bf16.msra.mxu0 0
      %3523 = vmatprep.subr.bf16.mxu0 0
      %3524 = vmatpush1.bf16.msra.mxu0 0
      %3525 = vmatprep.subr.bf16.mxu0 0
      %3526 = vmatpush1.bf16.msra.mxu0 0
      %3527 = vmatprep.subr.bf16.mxu0 0
      %3528 = vmatpush1.bf16.msra.mxu0 0
      %3529 = vmatprep.subr.bf16.mxu0 0
      %3530 = vmatpush1.bf16.msra.mxu0 0
      %3531 = vmatprep.subr.bf16.mxu0 0
      %3532 = vmatpush1.bf16.msra.mxu0 0
      %3533 = vmatprep.subr.bf16.mxu0 0
      %3534 = vmatpush1.bf16.msra.mxu0 0
      %3535 = vmatprep.subr.bf16.mxu0 0
      %3536 = vmatpush1.bf16.msra.mxu0 0
      %3537 = vmatprep.subr.bf16.mxu0 0
      %3538 = vmatpush1.bf16.msra.mxu0 0
      %3539 = vmatprep.subr.bf16.mxu0 0
      %3540 = vmatpush1.bf16.msra.mxu0 0
      %3541 = vmatprep.subr.bf16.mxu0 0
      %3542 = vmatpush1.bf16.msra.mxu0 0
      %3543 = vmatprep.mubr.bf16.mxu0 0
      %3544 = vmatmul.mubr.bf16.gmra.mrb[0].mxu0 %v2810
      %v3545 = vpop.f32.mrb[0].mxu0
      %v3546 = vadd.f32 %v3433, %v3545
      %v3547 = vpop.f32.mrb[0].mxu0
      %v3548 = vadd.f32 %v3435, %v3547
      %v3549 = vpop.f32.mrb[0].mxu0
      %v3550 = vadd.f32 %v3437, %v3549
      %v3551 = vpop.f32.mrb[0].mxu0
      %v3552 = vadd.f32 %v3439, %v3551
      %3553 = vmatprep.mubr.bf16.mxu0 0
      %3554 = vmatmul.mubr.bf16.gmra.mrb[0].mxu0 %v2813
      %v3555 = vpop.f32.mrb[0].mxu0
      %v3556 = vadd.f32 %v3443, %v3555
      %v3557 = vpop.f32.mrb[0].mxu0
      %v3558 = vadd.f32 %v3445, %v3557
      %v3559 = vpop.f32.mrb[0].mxu0
      %v3560 = vadd.f32 %v3447, %v3559
      %v3561 = vpop.f32.mrb[0].mxu0
      %v3562 = vadd.f32 %v3449, %v3561
      %3563 = vmatprep.mubr.bf16.mxu0 0
      %3564 = vmatmul.mubr.bf16.gmra.mrb[0].mxu0 %v2816
      %v3565 = vpop.f32.mrb[0].mxu0
      %v3566 = vadd.f32 %v3453, %v3565
      %v3567 = vpop.f32.mrb[0].mxu0
      %v3568 = vadd.f32 %v3455, %v3567
      %v3569 = vpop.f32.mrb[0].mxu0
      %v3570 = vadd.f32 %v3457, %v3569
      %v3571 = vpop.f32.mrb[0].mxu0
      %v3572 = vadd.f32 %v3459, %v3571
      %3573 = vmatprep.mubr.bf16.mxu0 0
      %3574 = vmatmul.mubr.bf16.gmra.mrb[0].mxu0 %v2819
      %v3575 = vpop.f32.mrb[0].mxu0
      %v3576 = vadd.f32 %v3463, %v3575
      %v3577 = vpop.f32.mrb[0].mxu0
      %v3578 = vadd.f32 %v3465, %v3577
      %v3579 = vpop.f32.mrb[0].mxu0
      %v3580 = vadd.f32 %v3467, %v3579
      %v3581 = vpop.f32.mrb[0].mxu0
      %v3582 = vadd.f32 %v3469, %v3581
      %3583 = vmatprep.mubr.bf16.mxu0 0
      %3584 = vmatmul.mubr.bf16.gmra.mrb[0].mxu0 %v2822
      %v3585 = vpop.f32.mrb[0].mxu0
      %v3586 = vadd.f32 %v3473, %v3585
      %v3587 = vpop.f32.mrb[0].mxu0
      %v3588 = vadd.f32 %v3475, %v3587
      %v3589 = vpop.f32.mrb[0].mxu0
      %v3590 = vadd.f32 %v3477, %v3589
      %v3591 = vpop.f32.mrb[0].mxu0
      %v3592 = vadd.f32 %v3479, %v3591
      %3593 = vmatprep.mubr.bf16.mxu0 0
      %3594 = vmatmul.mubr.bf16.gmra.mrb[0].mxu0 %v2825
      %v3595 = vpop.f32.mrb[0].mxu0
      %v3596 = vadd.f32 %v3483, %v3595
      %v3597 = vpop.f32.mrb[0].mxu0
      %v3598 = vadd.f32 %v3485, %v3597
      %v3599 = vpop.f32.mrb[0].mxu0
      %v3600 = vadd.f32 %v3487, %v3599
      %v3601 = vpop.f32.mrb[0].mxu0
      %v3602 = vadd.f32 %v3489, %v3601
      %3603 = vmatprep.mubr.bf16.mxu0 0
      %3604 = vmatmul.mubr.bf16.gmra.mrb[0].mxu0 %v2828
      %v3605 = vpop.f32.mrb[0].mxu0
      %v3606 = vadd.f32 %v3493, %v3605
      %v3607 = vpop.f32.mrb[0].mxu0
      %v3608 = vadd.f32 %v3495, %v3607
      %v3609 = vpop.f32.mrb[0].mxu0
      %v3610 = vadd.f32 %v3497, %v3609
      %v3611 = vpop.f32.mrb[0].mxu0
      %v3612 = vadd.f32 %v3499, %v3611
      %3613 = vmatprep.mubr.bf16.mxu0 0
      %3614 = vmatmul.mubr.bf16.gmra.mrb[0].mxu0 %v2831
      %v3615 = vpop.f32.mrb[0].mxu0
      %v3616 = vadd.f32 %v3503, %v3615
      %v3617 = vpop.f32.mrb[0].mxu0
      %v3618 = vadd.f32 %v3505, %v3617
      %v3619 = vpop.f32.mrb[0].mxu0
      %v3620 = vadd.f32 %v3507, %v3619
      %v3621 = vpop.f32.mrb[0].mxu0
      %v3622 = vadd.f32 %v3509, %v3621
      %3623 = vdwg.mxu0
      %3624 = vmatprep.subr.bf16.mxu0 0
      %3625 = vmatpush1.bf16.msra.mxu0 %v2210
      %3626 = vmatprep.subr.bf16.mxu0 0
      %3627 = vmatpush1.bf16.msra.mxu0 %v2213
      %3628 = vmatprep.subr.bf16.mxu0 0
      %3629 = vmatpush1.bf16.msra.mxu0 %v2216
      %3630 = vmatprep.subr.bf16.mxu0 0
      %3631 = vmatpush1.bf16.msra.mxu0 %v2219
      %3632 = vmatprep.subr.bf16.mxu0 0
      %3633 = vmatpush1.bf16.msra.mxu0 %v2222
      %3634 = vmatprep.subr.bf16.mxu0 0
      %3635 = vmatpush1.bf16.msra.mxu0 %v2225
      %3636 = vmatprep.subr.bf16.mxu0 0
      %3637 = vmatpush1.bf16.msra.mxu0 %v2228
      %3638 = vmatprep.subr.bf16.mxu0 0
      %3639 = vmatpush1.bf16.msra.mxu0 %v2231
      %3640 = vmatprep.subr.bf16.mxu0 0
      %3641 = vmatpush1.bf16.msra.mxu0 %v2234
      %3642 = vmatprep.subr.bf16.mxu0 0
      %3643 = vmatpush1.bf16.msra.mxu0 %v2237
      %3644 = vmatprep.subr.bf16.mxu0 0
      %3645 = vmatpush1.bf16.msra.mxu0 %v2240
      %3646 = vmatprep.subr.bf16.mxu0 0
      %3647 = vmatpush1.bf16.msra.mxu0 %v2243
      %3648 = vmatprep.subr.bf16.mxu0 0
      %3649 = vmatpush1.bf16.msra.mxu0 %v2246
      %3650 = vmatprep.subr.bf16.mxu0 0
      %3651 = vmatpush1.bf16.msra.mxu0 %v2249
      %3652 = vmatprep.subr.bf16.mxu0 0
      %3653 = vmatpush1.bf16.msra.mxu0 %v2252
      %3654 = vmatprep.subr.bf16.mxu0 0
      %3655 = vmatpush1.bf16.msra.mxu0 %v2255
      %3656 = vmatprep.mubr.bf16.mxu0 %v1009
      %3657 = vmatmul.mubr.bf16.gmra.mrb[0].mxu0 %v1008
      %v3658 = vpop.f32.mrb[0].mxu0
      %v3659 = vadd.f32 0.0, %v3658
      %v3660 = vpop.f32.mrb[0].mxu0
      %v3661 = vpop.f32.mrb[0].mxu0
      %v3662 = vadd.f32 0.0, %v3661
      %v3663 = vpop.f32.mrb[0].mxu0
      %3664 = vmatprep.mubr.bf16.mxu0 %v1022
      %3665 = vmatmul.mubr.bf16.gmra.mrb[0].mxu0 %v1021
      %v3666 = vpop.f32.mrb[0].mxu0
      %v3667 = vadd.f32 0.0, %v3666
      %v3668 = vpop.f32.mrb[0].mxu0
      %v3669 = vpop.f32.mrb[0].mxu0
      %v3670 = vadd.f32 0.0, %v3669
      %v3671 = vpop.f32.mrb[0].mxu0
      %3672 = vmatprep.mubr.bf16.mxu0 %v1035
      %3673 = vmatmul.mubr.bf16.gmra.mrb[0].mxu0 %v1034
      %v3674 = vpop.f32.mrb[0].mxu0
      %v3675 = vadd.f32 0.0, %v3674
      %v3676 = vpop.f32.mrb[0].mxu0
      %v3677 = vpop.f32.mrb[0].mxu0
      %v3678 = vadd.f32 0.0, %v3677
      %v3679 = vpop.f32.mrb[0].mxu0
      %3680 = vmatprep.mubr.bf16.mxu0 %v1048
      %3681 = vmatmul.mubr.bf16.gmra.mrb[0].mxu0 %v1047
      %v3682 = vpop.f32.mrb[0].mxu0
      %v3683 = vadd.f32 0.0, %v3682
      %v3684 = vpop.f32.mrb[0].mxu0
      %v3685 = vpop.f32.mrb[0].mxu0
      %v3686 = vadd.f32 0.0, %v3685
      %v3687 = vpop.f32.mrb[0].mxu0
      %3688 = vmatprep.mubr.bf16.mxu0 %v1061
      %3689 = vmatmul.mubr.bf16.gmra.mrb[0].mxu0 %v1060
      %v3690 = vpop.f32.mrb[0].mxu0
      %v3691 = vadd.f32 0.0, %v3690
      %v3692 = vpop.f32.mrb[0].mxu0
      %v3693 = vpop.f32.mrb[0].mxu0
      %v3694 = vadd.f32 0.0, %v3693
      %v3695 = vpop.f32.mrb[0].mxu0
      %3696 = vmatprep.mubr.bf16.mxu0 %v1074
      %3697 = vmatmul.mubr.bf16.gmra.mrb[0].mxu0 %v1073
      %v3698 = vpop.f32.mrb[0].mxu0
      %v3699 = vadd.f32 0.0, %v3698
      %v3700 = vpop.f32.mrb[0].mxu0
      %v3701 = vpop.f32.mrb[0].mxu0
      %v3702 = vadd.f32 0.0, %v3701
      %v3703 = vpop.f32.mrb[0].mxu0
      %3704 = vmatprep.mubr.bf16.mxu0 %v1087
      %3705 = vmatmul.mubr.bf16.gmra.mrb[0].mxu0 %v1086
      %v3706 = vpop.f32.mrb[0].mxu0
      %v3707 = vadd.f32 0.0, %v3706
      %v3708 = vpop.f32.mrb[0].mxu0
      %v3709 = vpop.f32.mrb[0].mxu0
      %v3710 = vadd.f32 0.0, %v3709
      %v3711 = vpop.f32.mrb[0].mxu0
      %3712 = vmatprep.mubr.bf16.mxu0 %v1100
      %3713 = vmatmul.mubr.bf16.gmra.mrb[0].mxu0 %v1099
      %v3714 = vpop.f32.mrb[0].mxu0
      %v3715 = vadd.f32 0.0, %v3714
      %v3716 = vpop.f32.mrb[0].mxu0
      %v3717 = vpop.f32.mrb[0].mxu0
      %v3718 = vadd.f32 0.0, %v3717
      %v3719 = vpop.f32.mrb[0].mxu0
      %3720 = vdwg.mxu0
      %3721 = vmatprep.subr.bf16.mxu0 0
      %3722 = vmatpush1.bf16.msra.mxu0 %v2258
      %3723 = vmatprep.subr.bf16.mxu0 0
      %3724 = vmatpush1.bf16.msra.mxu0 %v2261
      %3725 = vmatprep.subr.bf16.mxu0 0
      %3726 = vmatpush1.bf16.msra.mxu0 %v2264
      %3727 = vmatprep.subr.bf16.mxu0 0
      %3728 = vmatpush1.bf16.msra.mxu0 %v2267
      %3729 = vmatprep.subr.bf16.mxu0 0
      %3730 = vmatpush1.bf16.msra.mxu0 %v2270
      %3731 = vmatprep.subr.bf16.mxu0 0
      %3732 = vmatpush1.bf16.msra.mxu0 %v2273
      %3733 = vmatprep.subr.bf16.mxu0 0
      %3734 = vmatpush1.bf16.msra.mxu0 %v2276
      %3735 = vmatprep.subr.bf16.mxu0 0
      %3736 = vmatpush1.bf16.msra.mxu0 %v2279
      %3737 = vmatprep.subr.bf16.mxu0 0
      %3738 = vmatpush1.bf16.msra.mxu0 %v2282
      %3739 = vmatprep.subr.bf16.mxu0 0
      %3740 = vmatpush1.bf16.msra.mxu0 %v2285
      %3741 = vmatprep.subr.bf16.mxu0 0
      %3742 = vmatpush1.bf16.msra.mxu0 %v2288
      %3743 = vmatprep.subr.bf16.mxu0 0
      %3744 = vmatpush1.bf16.msra.mxu0 %v2291
      %3745 = vmatprep.subr.bf16.mxu0 0
      %3746 = vmatpush1.bf16.msra.mxu0 %v2294
      %3747 = vmatprep.subr.bf16.mxu0 0
      %3748 = vmatpush1.bf16.msra.mxu0 %v2297
      %3749 = vmatprep.subr.bf16.mxu0 0
      %3750 = vmatpush1.bf16.msra.mxu0 %v2300
      %3751 = vmatprep.subr.bf16.mxu0 0
      %3752 = vmatpush1.bf16.msra.mxu0 %v2303
      %3753 = vmatprep.mubr.bf16.mxu0 %v1011
      %3754 = vmatmul.mubr.bf16.gmra.mrb[0].mxu0 %v1010
      %v3755 = vpop.f32.mrb[0].mxu0
      %v3756 = vadd.f32 %v3659, %v3755
      %v3757 = vpop.f32.mrb[0].mxu0
      %v3758 = vpop.f32.mrb[0].mxu0
      %v3759 = vadd.f32 %v3662, %v3758
      %v3760 = vpop.f32.mrb[0].mxu0
      %3761 = vmatprep.mubr.bf16.mxu0 %v1024
      %3762 = vmatmul.mubr.bf16.gmra.mrb[0].mxu0 %v1023
      %v3763 = vpop.f32.mrb[0].mxu0
      %v3764 = vadd.f32 %v3667, %v3763
      %v3765 = vpop.f32.mrb[0].mxu0
      %v3766 = vpop.f32.mrb[0].mxu0
      %v3767 = vadd.f32 %v3670, %v3766
      %v3768 = vpop.f32.mrb[0].mxu0
      %3769 = vmatprep.mubr.bf16.mxu0 %v1037
      %3770 = vmatmul.mubr.bf16.gmra.mrb[0].mxu0 %v1036
      %v3771 = vpop.f32.mrb[0].mxu0
      %v3772 = vadd.f32 %v3675, %v3771
      %v3773 = vpop.f32.mrb[0].mxu0
      %v3774 = vpop.f32.mrb[0].mxu0
      %v3775 = vadd.f32 %v3678, %v3774
      %v3776 = vpop.f32.mrb[0].mxu0
      %3777 = vmatprep.mubr.bf16.mxu0 %v1050
      %3778 = vmatmul.mubr.bf16.gmra.mrb[0].mxu0 %v1049
      %v3779 = vpop.f32.mrb[0].mxu0
      %v3780 = vadd.f32 %v3683, %v3779
      %v3781 = vpop.f32.mrb[0].mxu0
      %v3782 = vpop.f32.mrb[0].mxu0
      %v3783 = vadd.f32 %v3686, %v3782
      %v3784 = vpop.f32.mrb[0].mxu0
      %3785 = vmatprep.mubr.bf16.mxu0 %v1063
      %3786 = vmatmul.mubr.bf16.gmra.mrb[0].mxu0 %v1062
      %v3787 = vpop.f32.mrb[0].mxu0
      %v3788 = vadd.f32 %v3691, %v3787
      %v3789 = vpop.f32.mrb[0].mxu0
      %v3790 = vpop.f32.mrb[0].mxu0
      %v3791 = vadd.f32 %v3694, %v3790
      %v3792 = vpop.f32.mrb[0].mxu0
      %3793 = vmatprep.mubr.bf16.mxu0 %v1076
      %3794 = vmatmul.mubr.bf16.gmra.mrb[0].mxu0 %v1075
      %v3795 = vpop.f32.mrb[0].mxu0
      %v3796 = vadd.f32 %v3699, %v3795
      %v3797 = vpop.f32.mrb[0].mxu0
      %v3798 = vpop.f32.mrb[0].mxu0
      %v3799 = vadd.f32 %v3702, %v3798
      %v3800 = vpop.f32.mrb[0].mxu0
      %3801 = vmatprep.mubr.bf16.mxu0 %v1089
      %3802 = vmatmul.mubr.bf16.gmra.mrb[0].mxu0 %v1088
      %v3803 = vpop.f32.mrb[0].mxu0
      %v3804 = vadd.f32 %v3707, %v3803
      %v3805 = vpop.f32.mrb[0].mxu0
      %v3806 = vpop.f32.mrb[0].mxu0
      %v3807 = vadd.f32 %v3710, %v3806
      %v3808 = vpop.f32.mrb[0].mxu0
      %3809 = vmatprep.mubr.bf16.mxu0 %v1102
      %3810 = vmatmul.mubr.bf16.gmra.mrb[0].mxu0 %v1101
      %v3811 = vpop.f32.mrb[0].mxu0
      %v3812 = vadd.f32 %v3715, %v3811
      %v3813 = vpop.f32.mrb[0].mxu0
      %v3814 = vpop.f32.mrb[0].mxu0
      %v3815 = vadd.f32 %v3718, %v3814
      %v3816 = vpop.f32.mrb[0].mxu0
      %3817 = vdwg.mxu0
      %3818 = vmatprep.subr.bf16.mxu0 0
      %3819 = vmatpush1.bf16.msra.mxu0 %v2306
      %3820 = vmatprep.subr.bf16.mxu0 0
      %3821 = vmatpush1.bf16.msra.mxu0 %v2309
      %3822 = vmatprep.subr.bf16.mxu0 0
      %3823 = vmatpush1.bf16.msra.mxu0 %v2312
      %3824 = vmatprep.subr.bf16.mxu0 0
      %3825 = vmatpush1.bf16.msra.mxu0 %v2315
      %3826 = vmatprep.subr.bf16.mxu0 0
      %3827 = vmatpush1.bf16.msra.mxu0 %v2318
      %3828 = vmatprep.subr.bf16.mxu0 0
      %3829 = vmatpush1.bf16.msra.mxu0 %v2321
      %3830 = vmatprep.subr.bf16.mxu0 0
      %3831 = vmatpush1.bf16.msra.mxu0 %v2324
      %3832 = vmatprep.subr.bf16.mxu0 0
      %3833 = vmatpush1.bf16.msra.mxu0 %v2327
      %3834 = vmatprep.subr.bf16.mxu0 0
      %3835 = vmatpush1.bf16.msra.mxu0 %v2330
      %3836 = vmatprep.subr.bf16.mxu0 0
      %3837 = vmatpush1.bf16.msra.mxu0 %v2333
      %3838 = vmatprep.subr.bf16.mxu0 0
      %3839 = vmatpush1.bf16.msra.mxu0 %v2336
      %3840 = vmatprep.subr.bf16.mxu0 0
      %3841 = vmatpush1.bf16.msra.mxu0 %v2339
      %3842 = vmatprep.subr.bf16.mxu0 0
      %3843 = vmatpush1.bf16.msra.mxu0 %v2342
      %3844 = vmatprep.subr.bf16.mxu0 0
      %3845 = vmatpush1.bf16.msra.mxu0 %v2345
      %3846 = vmatprep.subr.bf16.mxu0 0
      %3847 = vmatpush1.bf16.msra.mxu0 %v2348
      %3848 = vmatprep.subr.bf16.mxu0 0
      %3849 = vmatpush1.bf16.msra.mxu0 %v2351
      %3850 = vmatprep.mubr.bf16.mxu0 %v1013
      %3851 = vmatmul.mubr.bf16.gmra.mrb[0].mxu0 %v1012
      %v3852 = vpop.f32.mrb[0].mxu0
      %v3853 = vadd.f32 %v3756, %v3852
      %v3854 = vpop.f32.mrb[0].mxu0
      %v3855 = vpop.f32.mrb[0].mxu0
      %v3856 = vadd.f32 %v3759, %v3855
      %v3857 = vpop.f32.mrb[0].mxu0
      %3858 = vmatprep.mubr.bf16.mxu0 %v1026
      %3859 = vmatmul.mubr.bf16.gmra.mrb[0].mxu0 %v1025
      %v3860 = vpop.f32.mrb[0].mxu0
      %v3861 = vadd.f32 %v3764, %v3860
      %v3862 = vpop.f32.mrb[0].mxu0
      %v3863 = vpop.f32.mrb[0].mxu0
      %v3864 = vadd.f32 %v3767, %v3863
      %v3865 = vpop.f32.mrb[0].mxu0
      %3866 = vmatprep.mubr.bf16.mxu0 %v1039
      %3867 = vmatmul.mubr.bf16.gmra.mrb[0].mxu0 %v1038
      %v3868 = vpop.f32.mrb[0].mxu0
      %v3869 = vadd.f32 %v3772, %v3868
      %v3870 = vpop.f32.mrb[0].mxu0
      %v3871 = vpop.f32.mrb[0].mxu0
      %v3872 = vadd.f32 %v3775, %v3871
      %v3873 = vpop.f32.mrb[0].mxu0
      %3874 = vmatprep.mubr.bf16.mxu0 %v1052
      %3875 = vmatmul.mubr.bf16.gmra.mrb[0].mxu0 %v1051
      %v3876 = vpop.f32.mrb[0].mxu0
      %v3877 = vadd.f32 %v3780, %v3876
      %v3878 = vpop.f32.mrb[0].mxu0
      %v3879 = vpop.f32.mrb[0].mxu0
      %v3880 = vadd.f32 %v3783, %v3879
      %v3881 = vpop.f32.mrb[0].mxu0
      %3882 = vmatprep.mubr.bf16.mxu0 %v1065
      %3883 = vmatmul.mubr.bf16.gmra.mrb[0].mxu0 %v1064
      %v3884 = vpop.f32.mrb[0].mxu0
      %v3885 = vadd.f32 %v3788, %v3884
      %v3886 = vpop.f32.mrb[0].mxu0
      %v3887 = vpop.f32.mrb[0].mxu0
      %v3888 = vadd.f32 %v3791, %v3887
      %v3889 = vpop.f32.mrb[0].mxu0
      %3890 = vmatprep.mubr.bf16.mxu0 %v1078
      %3891 = vmatmul.mubr.bf16.gmra.mrb[0].mxu0 %v1077
      %v3892 = vpop.f32.mrb[0].mxu0
      %v3893 = vadd.f32 %v3796, %v3892
      %v3894 = vpop.f32.mrb[0].mxu0
      %v3895 = vpop.f32.mrb[0].mxu0
      %v3896 = vadd.f32 %v3799, %v3895
      %v3897 = vpop.f32.mrb[0].mxu0
      %3898 = vmatprep.mubr.bf16.mxu0 %v1091
      %3899 = vmatmul.mubr.bf16.gmra.mrb[0].mxu0 %v1090
      %v3900 = vpop.f32.mrb[0].mxu0
      %v3901 = vadd.f32 %v3804, %v3900
      %v3902 = vpop.f32.mrb[0].mxu0
      %v3903 = vpop.f32.mrb[0].mxu0
      %v3904 = vadd.f32 %v3807, %v3903
      %v3905 = vpop.f32.mrb[0].mxu0
      %3906 = vmatprep.mubr.bf16.mxu0 %v1104
      %3907 = vmatmul.mubr.bf16.gmra.mrb[0].mxu0 %v1103
      %v3908 = vpop.f32.mrb[0].mxu0
      %v3909 = vadd.f32 %v3812, %v3908
      %v3910 = vpop.f32.mrb[0].mxu0
      %v3911 = vpop.f32.mrb[0].mxu0
      %v3912 = vadd.f32 %v3815, %v3911
      %v3913 = vpop.f32.mrb[0].mxu0
      %3914 = vdwg.mxu0
      %3915 = vmatprep.subr.bf16.mxu0 0
      %3916 = vmatpush1.bf16.msra.mxu0 %v2354
      %3917 = vmatprep.subr.bf16.mxu0 0
      %3918 = vmatpush1.bf16.msra.mxu0 %v2357
      %3919 = vmatprep.subr.bf16.mxu0 0
      %3920 = vmatpush1.bf16.msra.mxu0 %v2360
      %3921 = vmatprep.subr.bf16.mxu0 0
      %3922 = vmatpush1.bf16.msra.mxu0 %v2363
      %3923 = vmatprep.subr.bf16.mxu0 0
      %3924 = vmatpush1.bf16.msra.mxu0 %v2366
      %3925 = vmatprep.subr.bf16.mxu0 0
      %3926 = vmatpush1.bf16.msra.mxu0 %v2369
      %3927 = vmatprep.subr.bf16.mxu0 0
      %3928 = vmatpush1.bf16.msra.mxu0 %v2372
      %3929 = vmatprep.subr.bf16.mxu0 0
      %3930 = vmatpush1.bf16.msra.mxu0 %v2375
      %3931 = vmatprep.subr.bf16.mxu0 0
      %3932 = vmatpush1.bf16.msra.mxu0 %v2378
      %3933 = vmatprep.subr.bf16.mxu0 0
      %3934 = vmatpush1.bf16.msra.mxu0 %v2381
      %3935 = vmatprep.subr.bf16.mxu0 0
      %3936 = vmatpush1.bf16.msra.mxu0 %v2384
      %3937 = vmatprep.subr.bf16.mxu0 0
      %3938 = vmatpush1.bf16.msra.mxu0 %v2387
      %3939 = vmatprep.subr.bf16.mxu0 0
      %3940 = vmatpush1.bf16.msra.mxu0 %v2390
      %3941 = vmatprep.subr.bf16.mxu0 0
      %3942 = vmatpush1.bf16.msra.mxu0 %v2393
      %3943 = vmatprep.subr.bf16.mxu0 0
      %3944 = vmatpush1.bf16.msra.mxu0 %v2396
      %3945 = vmatprep.subr.bf16.mxu0 0
      %3946 = vmatpush1.bf16.msra.mxu0 %v2399
      %3947 = vmatprep.mubr.bf16.mxu0 %v1015
      %3948 = vmatmul.mubr.bf16.gmra.mrb[0].mxu0 %v1014
      %v3949 = vpop.f32.mrb[0].mxu0
      %v3950 = vadd.f32 %v3853, %v3949
      %v3951 = vpop.f32.mrb[0].mxu0
      %v3952 = vpop.f32.mrb[0].mxu0
      %v3953 = vadd.f32 %v3856, %v3952
      %v3954 = vpop.f32.mrb[0].mxu0
      %3955 = vmatprep.mubr.bf16.mxu0 %v1028
      %3956 = vmatmul.mubr.bf16.gmra.mrb[0].mxu0 %v1027
      %v3957 = vpop.f32.mrb[0].mxu0
      %v3958 = vadd.f32 %v3861, %v3957
      %v3959 = vpop.f32.mrb[0].mxu0
      %v3960 = vpop.f32.mrb[0].mxu0
      %v3961 = vadd.f32 %v3864, %v3960
      %v3962 = vpop.f32.mrb[0].mxu0
      %3963 = vmatprep.mubr.bf16.mxu0 %v1041
      %3964 = vmatmul.mubr.bf16.gmra.mrb[0].mxu0 %v1040
      %v3965 = vpop.f32.mrb[0].mxu0
      %v3966 = vadd.f32 %v3869, %v3965
      %v3967 = vpop.f32.mrb[0].mxu0
      %v3968 = vpop.f32.mrb[0].mxu0
      %v3969 = vadd.f32 %v3872, %v3968
      %v3970 = vpop.f32.mrb[0].mxu0
      %3971 = vmatprep.mubr.bf16.mxu0 %v1054
      %3972 = vmatmul.mubr.bf16.gmra.mrb[0].mxu0 %v1053
      %v3973 = vpop.f32.mrb[0].mxu0
      %v3974 = vadd.f32 %v3877, %v3973
      %v3975 = vpop.f32.mrb[0].mxu0
      %v3976 = vpop.f32.mrb[0].mxu0
      %v3977 = vadd.f32 %v3880, %v3976
      %v3978 = vpop.f32.mrb[0].mxu0
      %3979 = vmatprep.mubr.bf16.mxu0 %v1067
      %3980 = vmatmul.mubr.bf16.gmra.mrb[0].mxu0 %v1066
      %v3981 = vpop.f32.mrb[0].mxu0
      %v3982 = vadd.f32 %v3885, %v3981
      %v3983 = vpop.f32.mrb[0].mxu0
      %v3984 = vpop.f32.mrb[0].mxu0
      %v3985 = vadd.f32 %v3888, %v3984
      %v3986 = vpop.f32.mrb[0].mxu0
      %3987 = vmatprep.mubr.bf16.mxu0 %v1080
      %3988 = vmatmul.mubr.bf16.gmra.mrb[0].mxu0 %v1079
      %v3989 = vpop.f32.mrb[0].mxu0
      %v3990 = vadd.f32 %v3893, %v3989
      %v3991 = vpop.f32.mrb[0].mxu0
      %v3992 = vpop.f32.mrb[0].mxu0
      %v3993 = vadd.f32 %v3896, %v3992
      %v3994 = vpop.f32.mrb[0].mxu0
      %3995 = vmatprep.mubr.bf16.mxu0 %v1093
      %3996 = vmatmul.mubr.bf16.gmra.mrb[0].mxu0 %v1092
      %v3997 = vpop.f32.mrb[0].mxu0
      %v3998 = vadd.f32 %v3901, %v3997
      %v3999 = vpop.f32.mrb[0].mxu0
      %v4000 = vpop.f32.mrb[0].mxu0
      %v4001 = vadd.f32 %v3904, %v4000
      %v4002 = vpop.f32.mrb[0].mxu0
      %4003 = vmatprep.mubr.bf16.mxu0 %v1106
      %4004 = vmatmul.mubr.bf16.gmra.mrb[0].mxu0 %v1105
      %v4005 = vpop.f32.mrb[0].mxu0
      %v4006 = vadd.f32 %v3909, %v4005
      %v4007 = vpop.f32.mrb[0].mxu0
      %v4008 = vpop.f32.mrb[0].mxu0
      %v4009 = vadd.f32 %v3912, %v4008
      %v4010 = vpop.f32.mrb[0].mxu0
      %4011 = vdwg.mxu0
      %4012 = vmatprep.subr.bf16.mxu0 0
      %4013 = vmatpush1.bf16.msra.mxu0 %v2402
      %4014 = vmatprep.subr.bf16.mxu0 0
      %4015 = vmatpush1.bf16.msra.mxu0 %v2405
      %4016 = vmatprep.subr.bf16.mxu0 0
      %4017 = vmatpush1.bf16.msra.mxu0 %v2408
      %4018 = vmatprep.subr.bf16.mxu0 0
      %4019 = vmatpush1.bf16.msra.mxu0 %v2411
      %4020 = vmatprep.subr.bf16.mxu0 0
      %4021 = vmatpush1.bf16.msra.mxu0 %v2414
      %4022 = vmatprep.subr.bf16.mxu0 0
      %4023 = vmatpush1.bf16.msra.mxu0 %v2417
      %4024 = vmatprep.subr.bf16.mxu0 0
      %4025 = vmatpush1.bf16.msra.mxu0 %v2420
      %4026 = vmatprep.subr.bf16.mxu0 0
      %4027 = vmatpush1.bf16.msra.mxu0 %v2423
      %4028 = vmatprep.subr.bf16.mxu0 0
      %4029 = vmatpush1.bf16.msra.mxu0 %v2426
      %4030 = vmatprep.subr.bf16.mxu0 0
      %4031 = vmatpush1.bf16.msra.mxu0 %v2429
      %4032 = vmatprep.subr.bf16.mxu0 0
      %4033 = vmatpush1.bf16.msra.mxu0 %v2432
      %4034 = vmatprep.subr.bf16.mxu0 0
      %4035 = vmatpush1.bf16.msra.mxu0 %v2435
      %4036 = vmatprep.subr.bf16.mxu0 0
      %4037 = vmatpush1.bf16.msra.mxu0 %v2438
      %4038 = vmatprep.subr.bf16.mxu0 0
      %4039 = vmatpush1.bf16.msra.mxu0 %v2441
      %4040 = vmatprep.subr.bf16.mxu0 0
      %4041 = vmatpush1.bf16.msra.mxu0 %v2444
      %4042 = vmatprep.subr.bf16.mxu0 0
      %4043 = vmatpush1.bf16.msra.mxu0 %v2447
      %4044 = vmatprep.mubr.bf16.mxu0 %v1017
      %4045 = vmatmul.mubr.bf16.gmra.mrb[0].mxu0 %v1016
      %v4046 = vpop.f32.mrb[0].mxu0
      %v4047 = vadd.f32 %v3950, %v4046
      %v4048 = vpop.f32.mrb[0].mxu0
      %v4049 = vpop.f32.mrb[0].mxu0
      %v4050 = vadd.f32 %v3953, %v4049
      %v4051 = vpop.f32.mrb[0].mxu0
      %4052 = vmatprep.mubr.bf16.mxu0 %v1030
      %4053 = vmatmul.mubr.bf16.gmra.mrb[0].mxu0 %v1029
      %v4054 = vpop.f32.mrb[0].mxu0
      %v4055 = vadd.f32 %v3958, %v4054
      %v4056 = vpop.f32.mrb[0].mxu0
      %v4057 = vpop.f32.mrb[0].mxu0
      %v4058 = vadd.f32 %v3961, %v4057
      %v4059 = vpop.f32.mrb[0].mxu0
      %4060 = vmatprep.mubr.bf16.mxu0 %v1043
      %4061 = vmatmul.mubr.bf16.gmra.mrb[0].mxu0 %v1042
      %v4062 = vpop.f32.mrb[0].mxu0
      %v4063 = vadd.f32 %v3966, %v4062
      %v4064 = vpop.f32.mrb[0].mxu0
      %v4065 = vpop.f32.mrb[0].mxu0
      %v4066 = vadd.f32 %v3969, %v4065
      %v4067 = vpop.f32.mrb[0].mxu0
      %4068 = vmatprep.mubr.bf16.mxu0 %v1056
      %4069 = vmatmul.mubr.bf16.gmra.mrb[0].mxu0 %v1055
      %v4070 = vpop.f32.mrb[0].mxu0
      %v4071 = vadd.f32 %v3974, %v4070
      %v4072 = vpop.f32.mrb[0].mxu0
      %v4073 = vpop.f32.mrb[0].mxu0
      %v4074 = vadd.f32 %v3977, %v4073
      %v4075 = vpop.f32.mrb[0].mxu0
      %4076 = vmatprep.mubr.bf16.mxu0 %v1069
      %4077 = vmatmul.mubr.bf16.gmra.mrb[0].mxu0 %v1068
      %v4078 = vpop.f32.mrb[0].mxu0
      %v4079 = vadd.f32 %v3982, %v4078
      %v4080 = vpop.f32.mrb[0].mxu0
      %v4081 = vpop.f32.mrb[0].mxu0
      %v4082 = vadd.f32 %v3985, %v4081
      %v4083 = vpop.f32.mrb[0].mxu0
      %4084 = vmatprep.mubr.bf16.mxu0 %v1082
      %4085 = vmatmul.mubr.bf16.gmra.mrb[0].mxu0 %v1081
      %v4086 = vpop.f32.mrb[0].mxu0
      %v4087 = vadd.f32 %v3990, %v4086
      %v4088 = vpop.f32.mrb[0].mxu0
      %v4089 = vpop.f32.mrb[0].mxu0
      %v4090 = vadd.f32 %v3993, %v4089
      %v4091 = vpop.f32.mrb[0].mxu0
      %4092 = vmatprep.mubr.bf16.mxu0 %v1095
      %4093 = vmatmul.mubr.bf16.gmra.mrb[0].mxu0 %v1094
      %v4094 = vpop.f32.mrb[0].mxu0
      %v4095 = vadd.f32 %v3998, %v4094
      %v4096 = vpop.f32.mrb[0].mxu0
      %v4097 = vpop.f32.mrb[0].mxu0
      %v4098 = vadd.f32 %v4001, %v4097
      %v4099 = vpop.f32.mrb[0].mxu0
      %4100 = vmatprep.mubr.bf16.mxu0 %v1108
      %4101 = vmatmul.mubr.bf16.gmra.mrb[0].mxu0 %v1107
      %v4102 = vpop.f32.mrb[0].mxu0
      %v4103 = vadd.f32 %v4006, %v4102
      %v4104 = vpop.f32.mrb[0].mxu0
      %v4105 = vpop.f32.mrb[0].mxu0
      %v4106 = vadd.f32 %v4009, %v4105
      %v4107 = vpop.f32.mrb[0].mxu0
      %4108 = vdwg.mxu0
      %4109 = vmatprep.subr.bf16.mxu0 0
      %4110 = vmatpush1.bf16.msra.mxu0 %v2450
      %4111 = vmatprep.subr.bf16.mxu0 0
      %4112 = vmatpush1.bf16.msra.mxu0 %v2453
      %4113 = vmatprep.subr.bf16.mxu0 0
      %4114 = vmatpush1.bf16.msra.mxu0 %v2456
      %4115 = vmatprep.subr.bf16.mxu0 0
      %4116 = vmatpush1.bf16.msra.mxu0 %v2459
      %4117 = vmatprep.subr.bf16.mxu0 0
      %4118 = vmatpush1.bf16.msra.mxu0 %v2462
      %4119 = vmatprep.subr.bf16.mxu0 0
      %4120 = vmatpush1.bf16.msra.mxu0 %v2465
      %4121 = vmatprep.subr.bf16.mxu0 0
      %4122 = vmatpush1.bf16.msra.mxu0 %v2468
      %4123 = vmatprep.subr.bf16.mxu0 0
      %4124 = vmatpush1.bf16.msra.mxu0 %v2471
      %4125 = vmatprep.subr.bf16.mxu0 0
      %4126 = vmatpush1.bf16.msra.mxu0 %v2474
      %4127 = vmatprep.subr.bf16.mxu0 0
      %4128 = vmatpush1.bf16.msra.mxu0 %v2477
      %4129 = vmatprep.subr.bf16.mxu0 0
      %4130 = vmatpush1.bf16.msra.mxu0 %v2480
      %4131 = vmatprep.subr.bf16.mxu0 0
      %4132 = vmatpush1.bf16.msra.mxu0 %v2483
      %4133 = vmatprep.subr.bf16.mxu0 0
      %4134 = vmatpush1.bf16.msra.mxu0 %v2486
      %4135 = vmatprep.subr.bf16.mxu0 0
      %4136 = vmatpush1.bf16.msra.mxu0 %v2489
      %4137 = vmatprep.subr.bf16.mxu0 0
      %4138 = vmatpush1.bf16.msra.mxu0 %v2492
      %4139 = vmatprep.subr.bf16.mxu0 0
      %4140 = vmatpush1.bf16.msra.mxu0 %v2495
      %4141 = vmatprep.mubr.bf16.mxu0 %v1019
      %4142 = vmatmul.mubr.bf16.gmra.mrb[0].mxu0 %v1018
      %v4143 = vpop.f32.mrb[0].mxu0
      %v4144 = vadd.f32 %v4047, %v4143
      %v4145 = vpop.f32.mrb[0].mxu0
      %v4146 = vpop.f32.mrb[0].mxu0
      %v4147 = vadd.f32 %v4050, %v4146
      %v4148 = vpop.f32.mrb[0].mxu0
      %4149 = vmatprep.mubr.bf16.mxu0 %v1032
      %4150 = vmatmul.mubr.bf16.gmra.mrb[0].mxu0 %v1031
      %v4151 = vpop.f32.mrb[0].mxu0
      %v4152 = vadd.f32 %v4055, %v4151
      %v4153 = vpop.f32.mrb[0].mxu0
      %v4154 = vpop.f32.mrb[0].mxu0
      %v4155 = vadd.f32 %v4058, %v4154
      %v4156 = vpop.f32.mrb[0].mxu0
      %4157 = vmatprep.mubr.bf16.mxu0 %v1045
      %4158 = vmatmul.mubr.bf16.gmra.mrb[0].mxu0 %v1044
      %v4159 = vpop.f32.mrb[0].mxu0
      %v4160 = vadd.f32 %v4063, %v4159
      %v4161 = vpop.f32.mrb[0].mxu0
      %v4162 = vpop.f32.mrb[0].mxu0
      %v4163 = vadd.f32 %v4066, %v4162
      %v4164 = vpop.f32.mrb[0].mxu0
      %4165 = vmatprep.mubr.bf16.mxu0 %v1058
      %4166 = vmatmul.mubr.bf16.gmra.mrb[0].mxu0 %v1057
      %v4167 = vpop.f32.mrb[0].mxu0
      %v4168 = vadd.f32 %v4071, %v4167
      %v4169 = vpop.f32.mrb[0].mxu0
      %v4170 = vpop.f32.mrb[0].mxu0
      %v4171 = vadd.f32 %v4074, %v4170
      %v4172 = vpop.f32.mrb[0].mxu0
      %4173 = vmatprep.mubr.bf16.mxu0 %v1071
      %4174 = vmatmul.mubr.bf16.gmra.mrb[0].mxu0 %v1070
      %v4175 = vpop.f32.mrb[0].mxu0
      %v4176 = vadd.f32 %v4079, %v4175
      %v4177 = vpop.f32.mrb[0].mxu0
      %v4178 = vpop.f32.mrb[0].mxu0
      %v4179 = vadd.f32 %v4082, %v4178
      %v4180 = vpop.f32.mrb[0].mxu0
      %4181 = vmatprep.mubr.bf16.mxu0 %v1084
      %4182 = vmatmul.mubr.bf16.gmra.mrb[0].mxu0 %v1083
      %v4183 = vpop.f32.mrb[0].mxu0
      %v4184 = vadd.f32 %v4087, %v4183
      %v4185 = vpop.f32.mrb[0].mxu0
      %v4186 = vpop.f32.mrb[0].mxu0
      %v4187 = vadd.f32 %v4090, %v4186
      %v4188 = vpop.f32.mrb[0].mxu0
      %4189 = vmatprep.mubr.bf16.mxu0 %v1097
      %4190 = vmatmul.mubr.bf16.gmra.mrb[0].mxu0 %v1096
      %v4191 = vpop.f32.mrb[0].mxu0
      %v4192 = vadd.f32 %v4095, %v4191
      %v4193 = vpop.f32.mrb[0].mxu0
      %v4194 = vpop.f32.mrb[0].mxu0
      %v4195 = vadd.f32 %v4098, %v4194
      %v4196 = vpop.f32.mrb[0].mxu0
      %4197 = vmatprep.mubr.bf16.mxu0 %v1110
      %4198 = vmatmul.mubr.bf16.gmra.mrb[0].mxu0 %v1109
      %v4199 = vpop.f32.mrb[0].mxu0
      %v4200 = vadd.f32 %v4103, %v4199
      %v4201 = vpop.f32.mrb[0].mxu0
      %v4202 = vpop.f32.mrb[0].mxu0
      %v4203 = vadd.f32 %v4106, %v4202
      %v4204 = vpop.f32.mrb[0].mxu0
      %4205 = vdwg.mxu0
      %4206 = vmatprep.subr.bf16.mxu0 0
      %4207 = vmatpush1.bf16.msra.mxu0 %v2498
      %4208 = vmatprep.subr.bf16.mxu0 0
      %4209 = vmatpush1.bf16.msra.mxu0 %v2501
      %4210 = vmatprep.subr.bf16.mxu0 0
      %4211 = vmatpush1.bf16.msra.mxu0 %v2504
      %4212 = vmatprep.subr.bf16.mxu0 0
      %4213 = vmatpush1.bf16.msra.mxu0 %v2507
      %4214 = vmatprep.subr.bf16.mxu0 0
      %4215 = vmatpush1.bf16.msra.mxu0 0
      %4216 = vmatprep.subr.bf16.mxu0 0
      %4217 = vmatpush1.bf16.msra.mxu0 0
      %4218 = vmatprep.subr.bf16.mxu0 0
      %4219 = vmatpush1.bf16.msra.mxu0 0
      %4220 = vmatprep.subr.bf16.mxu0 0
      %4221 = vmatpush1.bf16.msra.mxu0 0
      %4222 = vmatprep.subr.bf16.mxu0 0
      %4223 = vmatpush1.bf16.msra.mxu0 0
      %4224 = vmatprep.subr.bf16.mxu0 0
      %4225 = vmatpush1.bf16.msra.mxu0 0
      %4226 = vmatprep.subr.bf16.mxu0 0
      %4227 = vmatpush1.bf16.msra.mxu0 0
      %4228 = vmatprep.subr.bf16.mxu0 0
      %4229 = vmatpush1.bf16.msra.mxu0 0
      %4230 = vmatprep.subr.bf16.mxu0 0
      %4231 = vmatpush1.bf16.msra.mxu0 0
      %4232 = vmatprep.subr.bf16.mxu0 0
      %4233 = vmatpush1.bf16.msra.mxu0 0
      %4234 = vmatprep.subr.bf16.mxu0 0
      %4235 = vmatpush1.bf16.msra.mxu0 0
      %4236 = vmatprep.subr.bf16.mxu0 0
      %4237 = vmatpush1.bf16.msra.mxu0 0
      %4238 = vmatprep.mubr.bf16.mxu0 0
      %4239 = vmatmul.mubr.bf16.gmra.mrb[0].mxu0 %v2810
      %v4240 = vpop.f32.mrb[0].mxu0
      %v4241 = vadd.f32 %v4144, %v4240
      %v4242 = vpop.f32.mrb[0].mxu0
      %v4243 = vpop.f32.mrb[0].mxu0
      %v4244 = vadd.f32 %v4147, %v4243
      %v4245 = vpop.f32.mrb[0].mxu0
      %4246 = vmatprep.mubr.bf16.mxu0 0
      %4247 = vmatmul.mubr.bf16.gmra.mrb[0].mxu0 %v2813
      %v4248 = vpop.f32.mrb[0].mxu0
      %v4249 = vadd.f32 %v4152, %v4248
      %v4250 = vpop.f32.mrb[0].mxu0
      %v4251 = vpop.f32.mrb[0].mxu0
      %v4252 = vadd.f32 %v4155, %v4251
      %v4253 = vpop.f32.mrb[0].mxu0
      %4254 = vmatprep.mubr.bf16.mxu0 0
      %4255 = vmatmul.mubr.bf16.gmra.mrb[0].mxu0 %v2816
      %v4256 = vpop.f32.mrb[0].mxu0
      %v4257 = vadd.f32 %v4160, %v4256
      %v4258 = vpop.f32.mrb[0].mxu0
      %v4259 = vpop.f32.mrb[0].mxu0
      %v4260 = vadd.f32 %v4163, %v4259
      %v4261 = vpop.f32.mrb[0].mxu0
      %4262 = vmatprep.mubr.bf16.mxu0 0
      %4263 = vmatmul.mubr.bf16.gmra.mrb[0].mxu0 %v2819
      %v4264 = vpop.f32.mrb[0].mxu0
      %v4265 = vadd.f32 %v4168, %v4264
      %v4266 = vpop.f32.mrb[0].mxu0
      %v4267 = vpop.f32.mrb[0].mxu0
      %v4268 = vadd.f32 %v4171, %v4267
      %v4269 = vpop.f32.mrb[0].mxu0
      %4270 = vmatprep.mubr.bf16.mxu0 0
      %4271 = vmatmul.mubr.bf16.gmra.mrb[0].mxu0 %v2822
      %v4272 = vpop.f32.mrb[0].mxu0
      %v4273 = vadd.f32 %v4176, %v4272
      %v4274 = vpop.f32.mrb[0].mxu0
      %v4275 = vpop.f32.mrb[0].mxu0
      %v4276 = vadd.f32 %v4179, %v4275
      %v4277 = vpop.f32.mrb[0].mxu0
      %4278 = vmatprep.mubr.bf16.mxu0 0
      %4279 = vmatmul.mubr.bf16.gmra.mrb[0].mxu0 %v2825
      %v4280 = vpop.f32.mrb[0].mxu0
      %v4281 = vadd.f32 %v4184, %v4280
      %v4282 = vpop.f32.mrb[0].mxu0
      %v4283 = vpop.f32.mrb[0].mxu0
      %v4284 = vadd.f32 %v4187, %v4283
      %v4285 = vpop.f32.mrb[0].mxu0
      %4286 = vmatprep.mubr.bf16.mxu0 0
      %4287 = vmatmul.mubr.bf16.gmra.mrb[0].mxu0 %v2828
      %v4288 = vpop.f32.mrb[0].mxu0
      %v4289 = vadd.f32 %v4192, %v4288
      %v4290 = vpop.f32.mrb[0].mxu0
      %v4291 = vpop.f32.mrb[0].mxu0
      %v4292 = vadd.f32 %v4195, %v4291
      %v4293 = vpop.f32.mrb[0].mxu0
      %4294 = vmatprep.mubr.bf16.mxu0 0
      %4295 = vmatmul.mubr.bf16.gmra.mrb[0].mxu0 %v2831
      %v4296 = vpop.f32.mrb[0].mxu0
      %v4297 = vadd.f32 %v4200, %v4296
      %v4298 = vpop.f32.mrb[0].mxu0
      %v4299 = vpop.f32.mrb[0].mxu0
      %v4300 = vadd.f32 %v4203, %v4299
      %v4301 = vpop.f32.mrb[0].mxu0
      %4302 = vdwg.mxu0
      %v4303 = vmax.f32 %v3546, %v3566
      %v4304 = vmax.f32 %v3548, %v3568
      %v4305 = vmax.f32 %v4241, %v4257
      %v4306 = vmax.f32 %v3550, %v3570
      %v4307 = vmax.f32 %v3552, %v3572
      %v4308 = vmax.f32 %v4244, %v4260
      %v4309 = vmax.f32 %v3556, %v3576
      %v4310 = vmax.f32 %v3558, %v3578
      %v4311 = vmax.f32 %v4249, %v4265
      %v4312 = vmax.f32 %v3560, %v3580
      %v4313 = vmax.f32 %v3562, %v3582
      %v4314 = vmax.f32 %v4252, %v4268
      %v4315 = vmax.f32 %v3586, %v3606
      %v4316 = vmax.f32 %v3588, %v3608
      %v4317 = vmax.f32 %v4273, %v4289
      %v4318 = vmax.f32 %v3590, %v3610
      %v4319 = vmax.f32 %v3592, %v3612
      %v4320 = vmax.f32 %v4276, %v4292
      %v4321 = vmax.f32 %v3596, %v3616
      %v4322 = vmax.f32 %v3598, %v3618
      %v4323 = vmax.f32 %v4281, %v4297
      %v4324 = vmax.f32 %v3600, %v3620
      %v4325 = vmax.f32 %v3602, %v3622
      %v4326 = vmax.f32 %v4284, %v4300
      %v4327 = vmax.f32 %v4303, %v4315
      %v4328 = vmax.f32 %v4304, %v4316
      %v4329 = vmax.f32 %v4305, %v4317
      %v4330 = vmax.f32 %v4306, %v4318
      %v4331 = vmax.f32 %v4307, %v4319
      %v4332 = vmax.f32 %v4308, %v4320
      %v4333 = vmax.f32 %v4309, %v4321
      %v4334 = vmax.f32 %v4310, %v4322
      %v4335 = vmax.f32 %v4311, %v4323
      %v4336 = vmax.f32 %v4312, %v4324
      %v4337 = vmax.f32 %v4313, %v4325
      %v4338 = vmax.f32 %v4314, %v4326
      %4340 = vset.pattern.permute.xlu0 0
      %4341 = vperm.xlu0 %4340, %v284
      %v4342 = vpop.permute.xlu0 %4341
      %4345 = vset.pattern.permute.xlu0 0
      %4346 = vperm.xlu0 %4345, %v285
      %v4347 = vpop.permute.xlu0 %4346
      %4350 = vset.pattern.permute.xlu0 0
      %4351 = vperm.xlu0 %4350, %v286
      %v4352 = vpop.permute.xlu0 %4351
      %4355 = vset.pattern.permute.xlu0 0
      %4356 = vperm.xlu0 %4355, %v287
      %v4357 = vpop.permute.xlu0 %4356
      %v4359 = vadd.f32 %v4327, %v4342
      %v4360 = vadd.f32 %v4328, %v4342
      %v4361 = vadd.f32 %v4329, %v4342
      %v4362 = vadd.f32 %v4330, %v4347
      %v4363 = vadd.f32 %v4331, %v4347
      %v4364 = vadd.f32 %v4332, %v4347
      %v4365 = vadd.f32 %v4333, %v4352
      %v4366 = vadd.f32 %v4334, %v4352
      %v4367 = vadd.f32 %v4335, %v4352
      %v4368 = vadd.f32 %v4336, %v4357
      %v4369 = vadd.f32 %v4337, %v4357
      %v4370 = vadd.f32 %v4338, %v4357
      %v4371 = vmax.f32 %v4359, 0.0
      %v4372 = vmax.f32 %v4360, 0.0
      %v4373 = vmax.f32 %v4361, 0.0
      %v4374 = vmax.f32 %v4362, 0.0
      %v4375 = vmax.f32 %v4363, 0.0
      %v4376 = vmax.f32 %v4364, 0.0
      %v4377 = vmax.f32 %v4365, 0.0
      %v4378 = vmax.f32 %v4366, 0.0
      %v4379 = vmax.f32 %v4367, 0.0
      %v4380 = vmax.f32 %v4368, 0.0
      %v4381 = vmax.f32 %v4369, 0.0
      %v4382 = vmax.f32 %v4370, 0.0
      %v4383 = vpack.c.bf16 %v4374, %v4371
      %v4384 = vpack.c.bf16 %v4375, %v4372
      %v4385 = vpack.c.bf16 %v4376, %v4373
      %v4386 = vpack.c.bf16 %v4380, %v4377
      %v4387 = vpack.c.bf16 %v4381, %v4378
      %v4388 = vpack.c.bf16 %v4382, %v4379
      %v4395 = vunpack.c.l.b16 %v4383
      %v4396 = vunpack.c.l.b16 %v4384
      %v4397 = vunpack.c.l.b16 %v4385
      %v4398 = vunpack.c.h.b16 %v4383
      %v4399 = vunpack.c.h.b16 %v4384
      %v4400 = vunpack.c.h.b16 %v4385
      %v4401 = vunpack.c.l.b16 %v4386
      %v4402 = vunpack.c.l.b16 %v4387
      %v4403 = vunpack.c.l.b16 %v4388
      %v4404 = vunpack.c.h.b16 %v4386
      %v4405 = vunpack.c.h.b16 %v4387
      %v4406 = vunpack.c.h.b16 %v4388
      %v4407 = vpack.c.b16 %v4396, %v4395
      %v4408 = vpack.c.b16 %v4397, %v4397
      %v4409 = vpack.c.b16 %v4399, %v4398
      %v4410 = vpack.c.b16 %v4400, %v4400
      %v4411 = vpack.c.b16 %v4402, %v4401
      %v4412 = vpack.c.b16 %v4403, %v4403
      %v4413 = vpack.c.b16 %v4405, %v4404
      %v4414 = vpack.c.b16 %v4406, %v4406
      %4423 = vst [vmem:[%s170] sm:$0xff] %v4407
      %vm4424 = vcmask 355328
      %4425 = vst.msk [vmem:[%s170 + $0x8] sm:$0xf] %vm4424, %v4408
      %4426 = vst [vmem:[%s170 + $0xc] sm:$0xff] %v4409
      %4427 = vst.msk [vmem:[%s170 + $0x14] sm:$0xf] %vm4424, %v4410
      %4428 = vst [vmem:[%s170 + $0x18] sm:$0xff] %v4411
      %4429 = vst.msk [vmem:[%s170 + $0x20] sm:$0xf] %vm4424, %v4412
      %4430 = vst [vmem:[%s170 + $0x24] sm:$0xff] %v4413
      %4431 = vst.msk [vmem:[%s170 + $0x2c] sm:$0xf] %vm4424, %v4414
      %p4432 = scmp.lt.s32.totalorder %s14, 1
      %s4433 = scalar_select %p4432, %s14, 1
      %s4434 = smul.addr %s4433, 12
      %s4435 = smul.addr %s4434, 4
      %s4436 = scalar_lea.vmem %s3, %s4435
      // Predicated region
      $region33: #{convnet_forward.4} parent=31 // pred_check
        %p4437 = pneg %p100
      $region34: #{convnet_forward.4} parent=31 // pred_check_branch
        %4439 = sbr.rel (%p4437) target = $region36
      $region35: #{convnet_forward.4} parent=31 // pred_region
        _
      $region36: #{convnet_forward.4} parent=31 // pred_fallthru
        _
    $region32: #{convnet_forward.4} parent=5 // pred_fallthru
      _
    %p4440 = scmp.le.s32.totalorder 2, %s9
    // Predicated region
    $region37: #{convnet_forward.4} parent=5 // pred_check
      %p4441 = pneg %p4440
    $region38: #{convnet_forward.4} parent=5 // pred_check_branch
      %4443 = sbr.rel (%p4441) target = $region40
    $region39: #{convnet_forward.4} parent=5 // pred_region
      %s4444 = ssub.s32 %s9, 2
      // Predicated region
      $region41: #{convnet_forward.4} parent=39 // pred_check
        %p4445 = pneg %p106
      $region42: #{convnet_forward.4} parent=39 // pred_check_branch
        %4447 = sbr.rel (%p4445) target = $region44
      $region43: #{convnet_forward.4} parent=39 // pred_region
        %p4448 = scmp.lt.s32.totalorder %s15, 1
        %s4449 = scalar_select %p4448, %s15, 1
        %s4450 = smul.addr %s4449, 12
        %s4451 = smul.addr %s4450, 4
        %s4452 = scalar_lea.vmem %s3, %s4451
      $region44: #{convnet_forward.4} parent=39 // pred_fallthru
        _
    $region40: #{convnet_forward.4} parent=5 // pred_fallthru
      _
  $region6: #{convnet_forward.4} parent=0 // loop_footer
    %s13 = sadd.s32 1, %s9
  $region7: #{convnet_forward.4} parent=0 // loop_footer_branch
    %8 = sbr.rel target = $region3
  $region8: #{convnet_forward.4} parent=0 // loop_exit
    _

// kernel: convnet_forward.5
$region0: #{convnet_forward.5}
  #allocation0 [shape = 'u32[]', space=smem, size = 0x4, offset = 0x4, fixed_abs, tag = 'smem constant byte address 0x4 - core index']
  #allocation1 [shape = 'u32[144,128]{1,0:T(1,128)}', space=vmem, size = 0x12000, scoped, tag = 'internal scratch']
  %s0 = inlined_call_operand.vmem [shape: bf16[2,9600], index: 0, kind: input, shape index: {}]
  %s1 = inlined_call_operand.vmem [shape: f32[2,1], index: 1, kind: input, shape index: {}]
  %s2 = inlined_call_operand.vmem [shape: bf16[9600,32], index: 2, kind: input, shape index: {}]
  %s3 = inlined_call_operand.vmem [shape: f32[1,32], index: 3, kind: input, shape index: {}]
  %s4 = inlined_call_operand.vmem [shape: f32[1,32], index: 4, kind: input, shape index: {}]
  %s5 = inlined_call_operand.vmem [shape: bf16[32,32], index: 5, kind: input, shape index: {}]
  %s6 = inlined_call_operand.vmem [shape: f32[1,32], index: 6, kind: input, shape index: {}]
  %s7 = inlined_call_operand.vmem [shape: bf16[32,2], index: 7, kind: input, shape index: {}]
  %s8 = inlined_call_operand.vmem [shape: f32[1,2], index: 8, kind: input, shape index: {}]
  %s9 = inlined_call_operand.hbm [shape: f32[2,2], index: 9, kind: output, shape index: {}]
  %s10 = sld [smem:[#allocation0]]
  $region46: #{convnet_forward.5} parent=0
    _
  %s12 = ssub.s32 1, %s10
  %s13 = scalar_select 0, %s12, %s10
  $region1: #{convnet_forward.5} parent=0
    #allocation2 [shape = 'u8[1024]{0}', space=vmem, size = 0x400, scoped, tag = 'output window, operand 0, single buffered']
    #allocation3 [shape = 's32[1]{0}', space=sflag, size = 0x4, scoped, tag = 'scoped memory for convnet_forward.5']
    %14 = vsyncpa [#allocation3], 0
    // Predicated region
    $region2: #{convnet_forward.5} parent=1 // pred_check
      _
    $region3: #{convnet_forward.5} parent=1 // pred_check_branch
      %16 = sbr.rel (0) target = $region5
    $region4: #{convnet_forward.5} parent=1 // pred_region
      _
    $region5: #{convnet_forward.5} parent=1 // pred_fallthru
      _
    // Predicated region
    $region6: #{convnet_forward.5} parent=1 // pred_check
      _
    $region7: #{convnet_forward.5} parent=1 // pred_check_branch
      %18 = sbr.rel (0) target = $region9
    $region8: #{convnet_forward.5} parent=1 // pred_region
      _
    $region9: #{convnet_forward.5} parent=1 // pred_fallthru
      _
    // Predicated region
    $region10: #{convnet_forward.5} parent=1 // pred_check
      _
    $region11: #{convnet_forward.5} parent=1 // pred_check_branch
      %20 = sbr.rel (0) target = $region13
    $region12: #{convnet_forward.5} parent=1 // pred_region
      _
    $region13: #{convnet_forward.5} parent=1 // pred_fallthru
      _
    // Predicated region
    $region14: #{convnet_forward.5} parent=1 // pred_check
      _
    $region15: #{convnet_forward.5} parent=1 // pred_check_branch
      %22 = sbr.rel (0) target = $region17
    $region16: #{convnet_forward.5} parent=1 // pred_region
      _
    $region17: #{convnet_forward.5} parent=1 // pred_fallthru
      _
    // Predicated region
    $region18: #{convnet_forward.5} parent=1 // pred_check
      _
    $region19: #{convnet_forward.5} parent=1 // pred_check_branch
      %24 = sbr.rel (0) target = $region21
    $region20: #{convnet_forward.5} parent=1 // pred_region
      _
    $region21: #{convnet_forward.5} parent=1 // pred_fallthru
      _
    // Predicated region
    $region22: #{convnet_forward.5} parent=1 // pred_check
      _
    $region23: #{convnet_forward.5} parent=1 // pred_check_branch
      %26 = sbr.rel (0) target = $region25
    $region24: #{convnet_forward.5} parent=1 // pred_region
      _
    $region25: #{convnet_forward.5} parent=1 // pred_fallthru
      _
    // Predicated region
    $region26: #{convnet_forward.5} parent=1 // pred_check
      _
    $region27: #{convnet_forward.5} parent=1 // pred_check_branch
      %28 = sbr.rel (0) target = $region29
    $region28: #{convnet_forward.5} parent=1 // pred_region
      _
    $region29: #{convnet_forward.5} parent=1 // pred_fallthru
      _
    // Predicated region
    $region30: #{convnet_forward.5} parent=1 // pred_check
      _
    $region31: #{convnet_forward.5} parent=1 // pred_check_branch
      %30 = sbr.rel (0) target = $region33
    $region32: #{convnet_forward.5} parent=1 // pred_region
      _
    $region33: #{convnet_forward.5} parent=1 // pred_fallthru
      _
    // Predicated region
    $region34: #{convnet_forward.5} parent=1 // pred_check
      _
    $region35: #{convnet_forward.5} parent=1 // pred_check_branch
      %32 = sbr.rel (0) target = $region37
    $region36: #{convnet_forward.5} parent=1 // pred_region
      _
    $region37: #{convnet_forward.5} parent=1 // pred_fallthru
      _
    %v34 = vld [vmem:[%s0] sm:$0xff]
    %v35 = vld [vmem:[%s0 + $0x8] sm:$0xff]
    %v36 = vld [vmem:[%s0 + $0x10] sm:$0xff]
    %v37 = vld [vmem:[%s0 + $0x18] sm:$0xff]
    %v38 = vld [vmem:[%s0 + $0x20] sm:$0xff]
    %v39 = vld [vmem:[%s0 + $0x28] sm:$0xff]
    %v40 = vld [vmem:[%s0 + $0x30] sm:$0xff]
    %v41 = vld [vmem:[%s0 + $0x38] sm:$0xff]
    %v42 = vld [vmem:[%s0 + $0x40] sm:$0xff]
    %v43 = vld [vmem:[%s0 + $0x48] sm:$0x7]
    %v44 = vld [vmem:[%s2] sm:$0xf]
    %v45 = vld [vmem:[%s2 + $0x4] sm:$0xf]
    %v46 = vld [vmem:[%s2 + $0x8] sm:$0xf]
    %v47 = vld [vmem:[%s2 + $0xc] sm:$0xf]
    %v48 = vld [vmem:[%s2 + $0x10] sm:$0xf]
    %v49 = vld [vmem:[%s2 + $0x14] sm:$0xf]
    %v50 = vld [vmem:[%s2 + $0x18] sm:$0xf]
    %v51 = vld [vmem:[%s2 + $0x1c] sm:$0xf]
    %v52 = vld [vmem:[%s2 + $0x20] sm:$0xf]
    %v53 = vld [vmem:[%s2 + $0x24] sm:$0xf]
    %v54 = vld [vmem:[%s2 + $0x28] sm:$0xf]
    %v55 = vld [vmem:[%s2 + $0x2c] sm:$0xf]
    %v56 = vld [vmem:[%s2 + $0x30] sm:$0xf]
    %v57 = vld [vmem:[%s2 + $0x34] sm:$0xf]
    %v58 = vld [vmem:[%s2 + $0x38] sm:$0xf]
    %v59 = vld [vmem:[%s2 + $0x3c] sm:$0xf]
    %v60 = vld [vmem:[%s2 + $0x40] sm:$0xf]
    %v61 = vld [vmem:[%s2 + $0x44] sm:$0xf]
    %v62 = vld [vmem:[%s2 + $0x48] sm:$0xf]
    %v63 = vld [vmem:[%s2 + $0x4c] sm:$0xf]
    %v64 = vld [vmem:[%s2 + $0x50] sm:$0xf]
    %v65 = vld [vmem:[%s2 + $0x54] sm:$0xf]
    %v66 = vld [vmem:[%s2 + $0x58] sm:$0xf]
    %v67 = vld [vmem:[%s2 + $0x5c] sm:$0xf]
    %v68 = vld [vmem:[%s2 + $0x60] sm:$0xf]
    %v69 = vld [vmem:[%s2 + $0x64] sm:$0xf]
    %v70 = vld [vmem:[%s2 + $0x68] sm:$0xf]
    %v71 = vld [vmem:[%s2 + $0x6c] sm:$0xf]
    %v72 = vld [vmem:[%s2 + $0x70] sm:$0xf]
    %v73 = vld [vmem:[%s2 + $0x74] sm:$0xf]
    %v74 = vld [vmem:[%s2 + $0x78] sm:$0xf]
    %v75 = vld [vmem:[%s2 + $0x7c] sm:$0xf]
    %v76 = vld [vmem:[%s2 + $0x80] sm:$0xf]
    %v77 = vld [vmem:[%s2 + $0x84] sm:$0xf]
    %v78 = vld [vmem:[%s2 + $0x88] sm:$0xf]
    %v79 = vld [vmem:[%s2 + $0x8c] sm:$0xf]
    %v80 = vld [vmem:[%s2 + $0x90] sm:$0xf]
    %v81 = vld [vmem:[%s2 + $0x94] sm:$0xf]
    %v82 = vld [vmem:[%s2 + $0x98] sm:$0xf]
    %v83 = vld [vmem:[%s2 + $0x9c] sm:$0xf]
    %v84 = vld [vmem:[%s2 + $0xa0] sm:$0xf]
    %v85 = vld [vmem:[%s2 + $0xa4] sm:$0xf]
    %v86 = vld [vmem:[%s2 + $0xa8] sm:$0xf]
    %v87 = vld [vmem:[%s2 + $0xac] sm:$0xf]
    %v88 = vld [vmem:[%s2 + $0xb0] sm:$0xf]
    %v89 = vld [vmem:[%s2 + $0xb4] sm:$0xf]
    %v90 = vld [vmem:[%s2 + $0xb8] sm:$0xf]
    %v91 = vld [vmem:[%s2 + $0xbc] sm:$0xf]
    %v92 = vld [vmem:[%s2 + $0xc0] sm:$0xf]
    %v93 = vld [vmem:[%s2 + $0xc4] sm:$0xf]
    %v94 = vld [vmem:[%s2 + $0xc8] sm:$0xf]
    %v95 = vld [vmem:[%s2 + $0xcc] sm:$0xf]
    %v96 = vld [vmem:[%s2 + $0xd0] sm:$0xf]
    %v97 = vld [vmem:[%s2 + $0xd4] sm:$0xf]
    %v98 = vld [vmem:[%s2 + $0xd8] sm:$0xf]
    %v99 = vld [vmem:[%s2 + $0xdc] sm:$0xf]
    %v100 = vld [vmem:[%s2 + $0xe0] sm:$0xf]
    %v101 = vld [vmem:[%s2 + $0xe4] sm:$0xf]
    %v102 = vld [vmem:[%s2 + $0xe8] sm:$0xf]
    %v103 = vld [vmem:[%s2 + $0xec] sm:$0xf]
    %v104 = vld [vmem:[%s2 + $0xf0] sm:$0xf]
    %v105 = vld [vmem:[%s2 + $0xf4] sm:$0xf]
    %v106 = vld [vmem:[%s2 + $0xf8] sm:$0xf]
    %v107 = vld [vmem:[%s2 + $0xfc] sm:$0xf]
    %v108 = vld [vmem:[%s2 + $0x100] sm:$0xf]
    %v109 = vld [vmem:[%s2 + $0x104] sm:$0xf]
    %v110 = vld [vmem:[%s2 + $0x108] sm:$0xf]
    %v111 = vld [vmem:[%s2 + $0x10c] sm:$0xf]
    %v112 = vld [vmem:[%s2 + $0x110] sm:$0xf]
    %v113 = vld [vmem:[%s2 + $0x114] sm:$0xf]
    %v114 = vld [vmem:[%s2 + $0x118] sm:$0xf]
    %v115 = vld [vmem:[%s2 + $0x11c] sm:$0xf]
    %v116 = vld [vmem:[%s2 + $0x120] sm:$0xf]
    %v117 = vld [vmem:[%s2 + $0x124] sm:$0xf]
    %v118 = vld [vmem:[%s2 + $0x128] sm:$0xf]
    %v119 = vld [vmem:[%s2 + $0x12c] sm:$0xf]
    %v120 = vld [vmem:[%s2 + $0x130] sm:$0xf]
    %v121 = vld [vmem:[%s2 + $0x134] sm:$0xf]
    %v122 = vld [vmem:[%s2 + $0x138] sm:$0xf]
    %v123 = vld [vmem:[%s2 + $0x13c] sm:$0xf]
    %v124 = vld [vmem:[%s2 + $0x140] sm:$0xf]
    %v125 = vld [vmem:[%s2 + $0x144] sm:$0xf]
    %v126 = vld [vmem:[%s2 + $0x148] sm:$0xf]
    %v127 = vld [vmem:[%s2 + $0x14c] sm:$0xf]
    %v128 = vld [vmem:[%s2 + $0x150] sm:$0xf]
    %v129 = vld [vmem:[%s2 + $0x154] sm:$0xf]
    %v130 = vld [vmem:[%s2 + $0x158] sm:$0xf]
    %v131 = vld [vmem:[%s2 + $0x15c] sm:$0xf]
    %v132 = vld [vmem:[%s2 + $0x160] sm:$0xf]
    %v133 = vld [vmem:[%s2 + $0x164] sm:$0xf]
    %v134 = vld [vmem:[%s2 + $0x168] sm:$0xf]
    %v135 = vld [vmem:[%s2 + $0x16c] sm:$0xf]
    %v136 = vld [vmem:[%s2 + $0x170] sm:$0xf]
    %v137 = vld [vmem:[%s2 + $0x174] sm:$0xf]
    %v138 = vld [vmem:[%s2 + $0x178] sm:$0xf]
    %v139 = vld [vmem:[%s2 + $0x17c] sm:$0xf]
    %v140 = vld [vmem:[%s2 + $0x180] sm:$0xf]
    %v141 = vld [vmem:[%s2 + $0x184] sm:$0xf]
    %v142 = vld [vmem:[%s2 + $0x188] sm:$0xf]
    %v143 = vld [vmem:[%s2 + $0x18c] sm:$0xf]
    %v144 = vld [vmem:[%s2 + $0x190] sm:$0xf]
    %v145 = vld [vmem:[%s2 + $0x194] sm:$0xf]
    %v146 = vld [vmem:[%s2 + $0x198] sm:$0xf]
    %v147 = vld [vmem:[%s2 + $0x19c] sm:$0xf]
    %v148 = vld [vmem:[%s2 + $0x1a0] sm:$0xf]
    %v149 = vld [vmem:[%s2 + $0x1a4] sm:$0xf]
    %v150 = vld [vmem:[%s2 + $0x1a8] sm:$0xf]
    %v151 = vld [vmem:[%s2 + $0x1ac] sm:$0xf]
    %v152 = vld [vmem:[%s2 + $0x1b0] sm:$0xf]
    %v153 = vld [vmem:[%s2 + $0x1b4] sm:$0xf]
    %v154 = vld [vmem:[%s2 + $0x1b8] sm:$0xf]
    %v155 = vld [vmem:[%s2 + $0x1bc] sm:$0xf]
    %v156 = vld [vmem:[%s2 + $0x1c0] sm:$0xf]
    %v157 = vld [vmem:[%s2 + $0x1c4] sm:$0xf]
    %v158 = vld [vmem:[%s2 + $0x1c8] sm:$0xf]
    %v159 = vld [vmem:[%s2 + $0x1cc] sm:$0xf]
    %v160 = vld [vmem:[%s2 + $0x1d0] sm:$0xf]
    %v161 = vld [vmem:[%s2 + $0x1d4] sm:$0xf]
    %v162 = vld [vmem:[%s2 + $0x1d8] sm:$0xf]
    %v163 = vld [vmem:[%s2 + $0x1dc] sm:$0xf]
    %v164 = vld [vmem:[%s2 + $0x1e0] sm:$0xf]
    %v165 = vld [vmem:[%s2 + $0x1e4] sm:$0xf]
    %v166 = vld [vmem:[%s2 + $0x1e8] sm:$0xf]
    %v167 = vld [vmem:[%s2 + $0x1ec] sm:$0xf]
    %v168 = vld [vmem:[%s2 + $0x1f0] sm:$0xf]
    %v169 = vld [vmem:[%s2 + $0x1f4] sm:$0xf]
    %v170 = vld [vmem:[%s2 + $0x1f8] sm:$0xf]
    %v171 = vld [vmem:[%s2 + $0x1fc] sm:$0xf]
    %v172 = vld [vmem:[%s2 + $0x200] sm:$0xf]
    %v173 = vld [vmem:[%s2 + $0x204] sm:$0xf]
    %v174 = vld [vmem:[%s2 + $0x208] sm:$0xf]
    %v175 = vld [vmem:[%s2 + $0x20c] sm:$0xf]
    %v176 = vld [vmem:[%s2 + $0x210] sm:$0xf]
    %v177 = vld [vmem:[%s2 + $0x214] sm:$0xf]
    %v178 = vld [vmem:[%s2 + $0x218] sm:$0xf]
    %v179 = vld [vmem:[%s2 + $0x21c] sm:$0xf]
    %v180 = vld [vmem:[%s2 + $0x220] sm:$0xf]
    %v181 = vld [vmem:[%s2 + $0x224] sm:$0xf]
    %v182 = vld [vmem:[%s2 + $0x228] sm:$0xf]
    %v183 = vld [vmem:[%s2 + $0x22c] sm:$0xf]
    %v184 = vld [vmem:[%s2 + $0x230] sm:$0xf]
    %v185 = vld [vmem:[%s2 + $0x234] sm:$0xf]
    %v186 = vld [vmem:[%s2 + $0x238] sm:$0xf]
    %v187 = vld [vmem:[%s2 + $0x23c] sm:$0xf]
    %v188 = vld [vmem:[%s2 + $0x240] sm:$0xf]
    %v189 = vld [vmem:[%s2 + $0x244] sm:$0xf]
    %v190 = vld [vmem:[%s2 + $0x248] sm:$0xf]
    %v191 = vld [vmem:[%s2 + $0x24c] sm:$0xf]
    %v192 = vld [vmem:[%s2 + $0x250] sm:$0xf]
    %v193 = vld [vmem:[%s2 + $0x254] sm:$0xf]
    %v194 = vld [vmem:[%s2 + $0x258] sm:$0xf]
    %v195 = vld [vmem:[%s2 + $0x25c] sm:$0xf]
    %v196 = vld [vmem:[%s2 + $0x260] sm:$0xf]
    %v197 = vld [vmem:[%s2 + $0x264] sm:$0xf]
    %v198 = vld [vmem:[%s2 + $0x268] sm:$0xf]
    %v199 = vld [vmem:[%s2 + $0x26c] sm:$0xf]
    %v200 = vld [vmem:[%s2 + $0x270] sm:$0xf]
    %v201 = vld [vmem:[%s2 + $0x274] sm:$0xf]
    %v202 = vld [vmem:[%s2 + $0x278] sm:$0xf]
    %v203 = vld [vmem:[%s2 + $0x27c] sm:$0xf]
    %v204 = vld [vmem:[%s2 + $0x280] sm:$0xf]
    %v205 = vld [vmem:[%s2 + $0x284] sm:$0xf]
    %v206 = vld [vmem:[%s2 + $0x288] sm:$0xf]
    %v207 = vld [vmem:[%s2 + $0x28c] sm:$0xf]
    %v208 = vld [vmem:[%s2 + $0x290] sm:$0xf]
    %v209 = vld [vmem:[%s2 + $0x294] sm:$0xf]
    %v210 = vld [vmem:[%s2 + $0x298] sm:$0xf]
    %v211 = vld [vmem:[%s2 + $0x29c] sm:$0xf]
    %v212 = vld [vmem:[%s2 + $0x2a0] sm:$0xf]
    %v213 = vld [vmem:[%s2 + $0x2a4] sm:$0xf]
    %v214 = vld [vmem:[%s2 + $0x2a8] sm:$0xf]
    %v215 = vld [vmem:[%s2 + $0x2ac] sm:$0xf]
    %v216 = vld [vmem:[%s2 + $0x2b0] sm:$0xf]
    %v217 = vld [vmem:[%s2 + $0x2b4] sm:$0xf]
    %v218 = vld [vmem:[%s2 + $0x2b8] sm:$0xf]
    %v219 = vld [vmem:[%s2 + $0x2bc] sm:$0xf]
    %v220 = vld [vmem:[%s2 + $0x2c0] sm:$0xf]
    %v221 = vld [vmem:[%s2 + $0x2c4] sm:$0xf]
    %v222 = vld [vmem:[%s2 + $0x2c8] sm:$0xf]
    %v223 = vld [vmem:[%s2 + $0x2cc] sm:$0xf]
    %v224 = vld [vmem:[%s2 + $0x2d0] sm:$0xf]
    %v225 = vld [vmem:[%s2 + $0x2d4] sm:$0xf]
    %v226 = vld [vmem:[%s2 + $0x2d8] sm:$0xf]
    %v227 = vld [vmem:[%s2 + $0x2dc] sm:$0xf]
    %v228 = vld [vmem:[%s2 + $0x2e0] sm:$0xf]
    %v229 = vld [vmem:[%s2 + $0x2e4] sm:$0xf]
    %v230 = vld [vmem:[%s2 + $0x2e8] sm:$0xf]
    %v231 = vld [vmem:[%s2 + $0x2ec] sm:$0xf]
    %v232 = vld [vmem:[%s2 + $0x2f0] sm:$0xf]
    %v233 = vld [vmem:[%s2 + $0x2f4] sm:$0xf]
    %v234 = vld [vmem:[%s2 + $0x2f8] sm:$0xf]
    %v235 = vld [vmem:[%s2 + $0x2fc] sm:$0xf]
    %v236 = vld [vmem:[%s2 + $0x300] sm:$0xf]
    %v237 = vld [vmem:[%s2 + $0x304] sm:$0xf]
    %v238 = vld [vmem:[%s2 + $0x308] sm:$0xf]
    %v239 = vld [vmem:[%s2 + $0x30c] sm:$0xf]
    %v240 = vld [vmem:[%s2 + $0x310] sm:$0xf]
    %v241 = vld [vmem:[%s2 + $0x314] sm:$0xf]
    %v242 = vld [vmem:[%s2 + $0x318] sm:$0xf]
    %v243 = vld [vmem:[%s2 + $0x31c] sm:$0xf]
    %v244 = vld [vmem:[%s2 + $0x320] sm:$0xf]
    %v245 = vld [vmem:[%s2 + $0x324] sm:$0xf]
    %v246 = vld [vmem:[%s2 + $0x328] sm:$0xf]
    %v247 = vld [vmem:[%s2 + $0x32c] sm:$0xf]
    %v248 = vld [vmem:[%s2 + $0x330] sm:$0xf]
    %v249 = vld [vmem:[%s2 + $0x334] sm:$0xf]
    %v250 = vld [vmem:[%s2 + $0x338] sm:$0xf]
    %v251 = vld [vmem:[%s2 + $0x33c] sm:$0xf]
    %v252 = vld [vmem:[%s2 + $0x340] sm:$0xf]
    %v253 = vld [vmem:[%s2 + $0x344] sm:$0xf]
    %v254 = vld [vmem:[%s2 + $0x348] sm:$0xf]
    %v255 = vld [vmem:[%s2 + $0x34c] sm:$0xf]
    %v256 = vld [vmem:[%s2 + $0x350] sm:$0xf]
    %v257 = vld [vmem:[%s2 + $0x354] sm:$0xf]
    %v258 = vld [vmem:[%s2 + $0x358] sm:$0xf]
    %v259 = vld [vmem:[%s2 + $0x35c] sm:$0xf]
    %v260 = vld [vmem:[%s2 + $0x360] sm:$0xf]
    %v261 = vld [vmem:[%s2 + $0x364] sm:$0xf]
    %v262 = vld [vmem:[%s2 + $0x368] sm:$0xf]
    %v263 = vld [vmem:[%s2 + $0x36c] sm:$0xf]
    %v264 = vld [vmem:[%s2 + $0x370] sm:$0xf]
    %v265 = vld [vmem:[%s2 + $0x374] sm:$0xf]
    %v266 = vld [vmem:[%s2 + $0x378] sm:$0xf]
    %v267 = vld [vmem:[%s2 + $0x37c] sm:$0xf]
    %v268 = vld [vmem:[%s2 + $0x380] sm:$0xf]
    %v269 = vld [vmem:[%s2 + $0x384] sm:$0xf]
    %v270 = vld [vmem:[%s2 + $0x388] sm:$0xf]
    %v271 = vld [vmem:[%s2 + $0x38c] sm:$0xf]
    %v272 = vld [vmem:[%s2 + $0x390] sm:$0xf]
    %v273 = vld [vmem:[%s2 + $0x394] sm:$0xf]
    %v274 = vld [vmem:[%s2 + $0x398] sm:$0xf]
    %v275 = vld [vmem:[%s2 + $0x39c] sm:$0xf]
    %v276 = vld [vmem:[%s2 + $0x3a0] sm:$0xf]
    %v277 = vld [vmem:[%s2 + $0x3a4] sm:$0xf]
    %v278 = vld [vmem:[%s2 + $0x3a8] sm:$0xf]
    %v279 = vld [vmem:[%s2 + $0x3ac] sm:$0xf]
    %v280 = vld [vmem:[%s2 + $0x3b0] sm:$0xf]
    %v281 = vld [vmem:[%s2 + $0x3b4] sm:$0xf]
    %v282 = vld [vmem:[%s2 + $0x3b8] sm:$0xf]
    %v283 = vld [vmem:[%s2 + $0x3bc] sm:$0xf]
    %v284 = vld [vmem:[%s2 + $0x3c0] sm:$0xf]
    %v285 = vld [vmem:[%s2 + $0x3c4] sm:$0xf]
    %v286 = vld [vmem:[%s2 + $0x3c8] sm:$0xf]
    %v287 = vld [vmem:[%s2 + $0x3cc] sm:$0xf]
    %v288 = vld [vmem:[%s2 + $0x3d0] sm:$0xf]
    %v289 = vld [vmem:[%s2 + $0x3d4] sm:$0xf]
    %v290 = vld [vmem:[%s2 + $0x3d8] sm:$0xf]
    %v291 = vld [vmem:[%s2 + $0x3dc] sm:$0xf]
    %v292 = vld [vmem:[%s2 + $0x3e0] sm:$0xf]
    %v293 = vld [vmem:[%s2 + $0x3e4] sm:$0xf]
    %v294 = vld [vmem:[%s2 + $0x3e8] sm:$0xf]
    %v295 = vld [vmem:[%s2 + $0x3ec] sm:$0xf]
    %v296 = vld [vmem:[%s2 + $0x3f0] sm:$0xf]
    %v297 = vld [vmem:[%s2 + $0x3f4] sm:$0xf]
    %v298 = vld [vmem:[%s2 + $0x3f8] sm:$0xf]
    %v299 = vld [vmem:[%s2 + $0x3fc] sm:$0xf]
    %v300 = vld [vmem:[%s2 + $0x400] sm:$0xf]
    %v301 = vld [vmem:[%s2 + $0x404] sm:$0xf]
    %v302 = vld [vmem:[%s2 + $0x408] sm:$0xf]
    %v303 = vld [vmem:[%s2 + $0x40c] sm:$0xf]
    %v304 = vld [vmem:[%s2 + $0x410] sm:$0xf]
    %v305 = vld [vmem:[%s2 + $0x414] sm:$0xf]
    %v306 = vld [vmem:[%s2 + $0x418] sm:$0xf]
    %v307 = vld [vmem:[%s2 + $0x41c] sm:$0xf]
    %v308 = vld [vmem:[%s2 + $0x420] sm:$0xf]
    %v309 = vld [vmem:[%s2 + $0x424] sm:$0xf]
    %v310 = vld [vmem:[%s2 + $0x428] sm:$0xf]
    %v311 = vld [vmem:[%s2 + $0x42c] sm:$0xf]
    %v312 = vld [vmem:[%s2 + $0x430] sm:$0xf]
    %v313 = vld [vmem:[%s2 + $0x434] sm:$0xf]
    %v314 = vld [vmem:[%s2 + $0x438] sm:$0xf]
    %v315 = vld [vmem:[%s2 + $0x43c] sm:$0xf]
    %v316 = vld [vmem:[%s2 + $0x440] sm:$0xf]
    %v317 = vld [vmem:[%s2 + $0x444] sm:$0xf]
    %v318 = vld [vmem:[%s2 + $0x448] sm:$0xf]
    %v319 = vld [vmem:[%s2 + $0x44c] sm:$0xf]
    %v320 = vld [vmem:[%s2 + $0x450] sm:$0xf]
    %v321 = vld [vmem:[%s2 + $0x454] sm:$0xf]
    %v322 = vld [vmem:[%s2 + $0x458] sm:$0xf]
    %v323 = vld [vmem:[%s2 + $0x45c] sm:$0xf]
    %v324 = vld [vmem:[%s2 + $0x460] sm:$0xf]
    %v325 = vld [vmem:[%s2 + $0x464] sm:$0xf]
    %v326 = vld [vmem:[%s2 + $0x468] sm:$0xf]
    %v327 = vld [vmem:[%s2 + $0x46c] sm:$0xf]
    %v328 = vld [vmem:[%s2 + $0x470] sm:$0xf]
    %v329 = vld [vmem:[%s2 + $0x474] sm:$0xf]
    %v330 = vld [vmem:[%s2 + $0x478] sm:$0xf]
    %v331 = vld [vmem:[%s2 + $0x47c] sm:$0xf]
    %v332 = vld [vmem:[%s2 + $0x480] sm:$0xf]
    %v333 = vld [vmem:[%s2 + $0x484] sm:$0xf]
    %v334 = vld [vmem:[%s2 + $0x488] sm:$0xf]
    %v335 = vld [vmem:[%s2 + $0x48c] sm:$0xf]
    %v336 = vld [vmem:[%s2 + $0x490] sm:$0xf]
    %v337 = vld [vmem:[%s2 + $0x494] sm:$0xf]
    %v338 = vld [vmem:[%s2 + $0x498] sm:$0xf]
    %v339 = vld [vmem:[%s2 + $0x49c] sm:$0xf]
    %v340 = vld [vmem:[%s2 + $0x4a0] sm:$0xf]
    %v341 = vld [vmem:[%s2 + $0x4a4] sm:$0xf]
    %v342 = vld [vmem:[%s2 + $0x4a8] sm:$0xf]
    %v343 = vld [vmem:[%s2 + $0x4ac] sm:$0xf]
    %v344 = vld [vmem:[%s2 + $0x4b0] sm:$0xf]
    %v345 = vld [vmem:[%s2 + $0x4b4] sm:$0xf]
    %v346 = vld [vmem:[%s2 + $0x4b8] sm:$0xf]
    %v347 = vld [vmem:[%s2 + $0x4bc] sm:$0xf]
    %v348 = vld [vmem:[%s2 + $0x4c0] sm:$0xf]
    %v349 = vld [vmem:[%s2 + $0x4c4] sm:$0xf]
    %v350 = vld [vmem:[%s2 + $0x4c8] sm:$0xf]
    %v351 = vld [vmem:[%s2 + $0x4cc] sm:$0xf]
    %v352 = vld [vmem:[%s2 + $0x4d0] sm:$0xf]
    %v353 = vld [vmem:[%s2 + $0x4d4] sm:$0xf]
    %v354 = vld [vmem:[%s2 + $0x4d8] sm:$0xf]
    %v355 = vld [vmem:[%s2 + $0x4dc] sm:$0xf]
    %v356 = vld [vmem:[%s2 + $0x4e0] sm:$0xf]
    %v357 = vld [vmem:[%s2 + $0x4e4] sm:$0xf]
    %v358 = vld [vmem:[%s2 + $0x4e8] sm:$0xf]
    %v359 = vld [vmem:[%s2 + $0x4ec] sm:$0xf]
    %v360 = vld [vmem:[%s2 + $0x4f0] sm:$0xf]
    %v361 = vld [vmem:[%s2 + $0x4f4] sm:$0xf]
    %v362 = vld [vmem:[%s2 + $0x4f8] sm:$0xf]
    %v363 = vld [vmem:[%s2 + $0x4fc] sm:$0xf]
    %v364 = vld [vmem:[%s2 + $0x500] sm:$0xf]
    %v365 = vld [vmem:[%s2 + $0x504] sm:$0xf]
    %v366 = vld [vmem:[%s2 + $0x508] sm:$0xf]
    %v367 = vld [vmem:[%s2 + $0x50c] sm:$0xf]
    %v368 = vld [vmem:[%s2 + $0x510] sm:$0xf]
    %v369 = vld [vmem:[%s2 + $0x514] sm:$0xf]
    %v370 = vld [vmem:[%s2 + $0x518] sm:$0xf]
    %v371 = vld [vmem:[%s2 + $0x51c] sm:$0xf]
    %v372 = vld [vmem:[%s2 + $0x520] sm:$0xf]
    %v373 = vld [vmem:[%s2 + $0x524] sm:$0xf]
    %v374 = vld [vmem:[%s2 + $0x528] sm:$0xf]
    %v375 = vld [vmem:[%s2 + $0x52c] sm:$0xf]
    %v376 = vld [vmem:[%s2 + $0x530] sm:$0xf]
    %v377 = vld [vmem:[%s2 + $0x534] sm:$0xf]
    %v378 = vld [vmem:[%s2 + $0x538] sm:$0xf]
    %v379 = vld [vmem:[%s2 + $0x53c] sm:$0xf]
    %v380 = vld [vmem:[%s2 + $0x540] sm:$0xf]
    %v381 = vld [vmem:[%s2 + $0x544] sm:$0xf]
    %v382 = vld [vmem:[%s2 + $0x548] sm:$0xf]
    %v383 = vld [vmem:[%s2 + $0x54c] sm:$0xf]
    %v384 = vld [vmem:[%s2 + $0x550] sm:$0xf]
    %v385 = vld [vmem:[%s2 + $0x554] sm:$0xf]
    %v386 = vld [vmem:[%s2 + $0x558] sm:$0xf]
    %v387 = vld [vmem:[%s2 + $0x55c] sm:$0xf]
    %v388 = vld [vmem:[%s2 + $0x560] sm:$0xf]
    %v389 = vld [vmem:[%s2 + $0x564] sm:$0xf]
    %v390 = vld [vmem:[%s2 + $0x568] sm:$0xf]
    %v391 = vld [vmem:[%s2 + $0x56c] sm:$0xf]
    %v392 = vld [vmem:[%s2 + $0x570] sm:$0xf]
    %v393 = vld [vmem:[%s2 + $0x574] sm:$0xf]
    %v394 = vld [vmem:[%s2 + $0x578] sm:$0xf]
    %v395 = vld [vmem:[%s2 + $0x57c] sm:$0xf]
    %v396 = vld [vmem:[%s2 + $0x580] sm:$0xf]
    %v397 = vld [vmem:[%s2 + $0x584] sm:$0xf]
    %v398 = vld [vmem:[%s2 + $0x588] sm:$0xf]
    %v399 = vld [vmem:[%s2 + $0x58c] sm:$0xf]
    %v400 = vld [vmem:[%s2 + $0x590] sm:$0xf]
    %v401 = vld [vmem:[%s2 + $0x594] sm:$0xf]
    %v402 = vld [vmem:[%s2 + $0x598] sm:$0xf]
    %v403 = vld [vmem:[%s2 + $0x59c] sm:$0xf]
    %v404 = vld [vmem:[%s2 + $0x5a0] sm:$0xf]
    %v405 = vld [vmem:[%s2 + $0x5a4] sm:$0xf]
    %v406 = vld [vmem:[%s2 + $0x5a8] sm:$0xf]
    %v407 = vld [vmem:[%s2 + $0x5ac] sm:$0xf]
    %v408 = vld [vmem:[%s2 + $0x5b0] sm:$0xf]
    %v409 = vld [vmem:[%s2 + $0x5b4] sm:$0xf]
    %v410 = vld [vmem:[%s2 + $0x5b8] sm:$0xf]
    %v411 = vld [vmem:[%s2 + $0x5bc] sm:$0xf]
    %v412 = vld [vmem:[%s2 + $0x5c0] sm:$0xf]
    %v413 = vld [vmem:[%s2 + $0x5c4] sm:$0xf]
    %v414 = vld [vmem:[%s2 + $0x5c8] sm:$0xf]
    %v415 = vld [vmem:[%s2 + $0x5cc] sm:$0xf]
    %v416 = vld [vmem:[%s2 + $0x5d0] sm:$0xf]
    %v417 = vld [vmem:[%s2 + $0x5d4] sm:$0xf]
    %v418 = vld [vmem:[%s2 + $0x5d8] sm:$0xf]
    %v419 = vld [vmem:[%s2 + $0x5dc] sm:$0xf]
    %v420 = vld [vmem:[%s2 + $0x5e0] sm:$0xf]
    %v421 = vld [vmem:[%s2 + $0x5e4] sm:$0xf]
    %v422 = vld [vmem:[%s2 + $0x5e8] sm:$0xf]
    %v423 = vld [vmem:[%s2 + $0x5ec] sm:$0xf]
    %v424 = vld [vmem:[%s2 + $0x5f0] sm:$0xf]
    %v425 = vld [vmem:[%s2 + $0x5f4] sm:$0xf]
    %v426 = vld [vmem:[%s2 + $0x5f8] sm:$0xf]
    %v427 = vld [vmem:[%s2 + $0x5fc] sm:$0xf]
    %v428 = vld [vmem:[%s2 + $0x600] sm:$0xf]
    %v429 = vld [vmem:[%s2 + $0x604] sm:$0xf]
    %v430 = vld [vmem:[%s2 + $0x608] sm:$0xf]
    %v431 = vld [vmem:[%s2 + $0x60c] sm:$0xf]
    %v432 = vld [vmem:[%s2 + $0x610] sm:$0xf]
    %v433 = vld [vmem:[%s2 + $0x614] sm:$0xf]
    %v434 = vld [vmem:[%s2 + $0x618] sm:$0xf]
    %v435 = vld [vmem:[%s2 + $0x61c] sm:$0xf]
    %v436 = vld [vmem:[%s2 + $0x620] sm:$0xf]
    %v437 = vld [vmem:[%s2 + $0x624] sm:$0xf]
    %v438 = vld [vmem:[%s2 + $0x628] sm:$0xf]
    %v439 = vld [vmem:[%s2 + $0x62c] sm:$0xf]
    %v440 = vld [vmem:[%s2 + $0x630] sm:$0xf]
    %v441 = vld [vmem:[%s2 + $0x634] sm:$0xf]
    %v442 = vld [vmem:[%s2 + $0x638] sm:$0xf]
    %v443 = vld [vmem:[%s2 + $0x63c] sm:$0xf]
    %v444 = vld [vmem:[%s2 + $0x640] sm:$0xf]
    %v445 = vld [vmem:[%s2 + $0x644] sm:$0xf]
    %v446 = vld [vmem:[%s2 + $0x648] sm:$0xf]
    %v447 = vld [vmem:[%s2 + $0x64c] sm:$0xf]
    %v448 = vld [vmem:[%s2 + $0x650] sm:$0xf]
    %v449 = vld [vmem:[%s2 + $0x654] sm:$0xf]
    %v450 = vld [vmem:[%s2 + $0x658] sm:$0xf]
    %v451 = vld [vmem:[%s2 + $0x65c] sm:$0xf]
    %v452 = vld [vmem:[%s2 + $0x660] sm:$0xf]
    %v453 = vld [vmem:[%s2 + $0x664] sm:$0xf]
    %v454 = vld [vmem:[%s2 + $0x668] sm:$0xf]
    %v455 = vld [vmem:[%s2 + $0x66c] sm:$0xf]
    %v456 = vld [vmem:[%s2 + $0x670] sm:$0xf]
    %v457 = vld [vmem:[%s2 + $0x674] sm:$0xf]
    %v458 = vld [vmem:[%s2 + $0x678] sm:$0xf]
    %v459 = vld [vmem:[%s2 + $0x67c] sm:$0xf]
    %v460 = vld [vmem:[%s2 + $0x680] sm:$0xf]
    %v461 = vld [vmem:[%s2 + $0x684] sm:$0xf]
    %v462 = vld [vmem:[%s2 + $0x688] sm:$0xf]
    %v463 = vld [vmem:[%s2 + $0x68c] sm:$0xf]
    %v464 = vld [vmem:[%s2 + $0x690] sm:$0xf]
    %v465 = vld [vmem:[%s2 + $0x694] sm:$0xf]
    %v466 = vld [vmem:[%s2 + $0x698] sm:$0xf]
    %v467 = vld [vmem:[%s2 + $0x69c] sm:$0xf]
    %v468 = vld [vmem:[%s2 + $0x6a0] sm:$0xf]
    %v469 = vld [vmem:[%s2 + $0x6a4] sm:$0xf]
    %v470 = vld [vmem:[%s2 + $0x6a8] sm:$0xf]
    %v471 = vld [vmem:[%s2 + $0x6ac] sm:$0xf]
    %v472 = vld [vmem:[%s2 + $0x6b0] sm:$0xf]
    %v473 = vld [vmem:[%s2 + $0x6b4] sm:$0xf]
    %v474 = vld [vmem:[%s2 + $0x6b8] sm:$0xf]
    %v475 = vld [vmem:[%s2 + $0x6bc] sm:$0xf]
    %v476 = vld [vmem:[%s2 + $0x6c0] sm:$0xf]
    %v477 = vld [vmem:[%s2 + $0x6c4] sm:$0xf]
    %v478 = vld [vmem:[%s2 + $0x6c8] sm:$0xf]
    %v479 = vld [vmem:[%s2 + $0x6cc] sm:$0xf]
    %v480 = vld [vmem:[%s2 + $0x6d0] sm:$0xf]
    %v481 = vld [vmem:[%s2 + $0x6d4] sm:$0xf]
    %v482 = vld [vmem:[%s2 + $0x6d8] sm:$0xf]
    %v483 = vld [vmem:[%s2 + $0x6dc] sm:$0xf]
    %v484 = vld [vmem:[%s2 + $0x6e0] sm:$0xf]
    %v485 = vld [vmem:[%s2 + $0x6e4] sm:$0xf]
    %v486 = vld [vmem:[%s2 + $0x6e8] sm:$0xf]
    %v487 = vld [vmem:[%s2 + $0x6ec] sm:$0xf]
    %v488 = vld [vmem:[%s2 + $0x6f0] sm:$0xf]
    %v489 = vld [vmem:[%s2 + $0x6f4] sm:$0xf]
    %v490 = vld [vmem:[%s2 + $0x6f8] sm:$0xf]
    %v491 = vld [vmem:[%s2 + $0x6fc] sm:$0xf]
    %v492 = vld [vmem:[%s2 + $0x700] sm:$0xf]
    %v493 = vld [vmem:[%s2 + $0x704] sm:$0xf]
    %v494 = vld [vmem:[%s2 + $0x708] sm:$0xf]
    %v495 = vld [vmem:[%s2 + $0x70c] sm:$0xf]
    %v496 = vld [vmem:[%s2 + $0x710] sm:$0xf]
    %v497 = vld [vmem:[%s2 + $0x714] sm:$0xf]
    %v498 = vld [vmem:[%s2 + $0x718] sm:$0xf]
    %v499 = vld [vmem:[%s2 + $0x71c] sm:$0xf]
    %v500 = vld [vmem:[%s2 + $0x720] sm:$0xf]
    %v501 = vld [vmem:[%s2 + $0x724] sm:$0xf]
    %v502 = vld [vmem:[%s2 + $0x728] sm:$0xf]
    %v503 = vld [vmem:[%s2 + $0x72c] sm:$0xf]
    %v504 = vld [vmem:[%s2 + $0x730] sm:$0xf]
    %v505 = vld [vmem:[%s2 + $0x734] sm:$0xf]
    %v506 = vld [vmem:[%s2 + $0x738] sm:$0xf]
    %v507 = vld [vmem:[%s2 + $0x73c] sm:$0xf]
    %v508 = vld [vmem:[%s2 + $0x740] sm:$0xf]
    %v509 = vld [vmem:[%s2 + $0x744] sm:$0xf]
    %v510 = vld [vmem:[%s2 + $0x748] sm:$0xf]
    %v511 = vld [vmem:[%s2 + $0x74c] sm:$0xf]
    %v512 = vld [vmem:[%s2 + $0x750] sm:$0xf]
    %v513 = vld [vmem:[%s2 + $0x754] sm:$0xf]
    %v514 = vld [vmem:[%s2 + $0x758] sm:$0xf]
    %v515 = vld [vmem:[%s2 + $0x75c] sm:$0xf]
    %v516 = vld [vmem:[%s2 + $0x760] sm:$0xf]
    %v517 = vld [vmem:[%s2 + $0x764] sm:$0xf]
    %v518 = vld [vmem:[%s2 + $0x768] sm:$0xf]
    %v519 = vld [vmem:[%s2 + $0x76c] sm:$0xf]
    %v520 = vld [vmem:[%s2 + $0x770] sm:$0xf]
    %v521 = vld [vmem:[%s2 + $0x774] sm:$0xf]
    %v522 = vld [vmem:[%s2 + $0x778] sm:$0xf]
    %v523 = vld [vmem:[%s2 + $0x77c] sm:$0xf]
    %v524 = vld [vmem:[%s2 + $0x780] sm:$0xf]
    %v525 = vld [vmem:[%s2 + $0x784] sm:$0xf]
    %v526 = vld [vmem:[%s2 + $0x788] sm:$0xf]
    %v527 = vld [vmem:[%s2 + $0x78c] sm:$0xf]
    %v528 = vld [vmem:[%s2 + $0x790] sm:$0xf]
    %v529 = vld [vmem:[%s2 + $0x794] sm:$0xf]
    %v530 = vld [vmem:[%s2 + $0x798] sm:$0xf]
    %v531 = vld [vmem:[%s2 + $0x79c] sm:$0xf]
    %v532 = vld [vmem:[%s2 + $0x7a0] sm:$0xf]
    %v533 = vld [vmem:[%s2 + $0x7a4] sm:$0xf]
    %v534 = vld [vmem:[%s2 + $0x7a8] sm:$0xf]
    %v535 = vld [vmem:[%s2 + $0x7ac] sm:$0xf]
    %v536 = vld [vmem:[%s2 + $0x7b0] sm:$0xf]
    %v537 = vld [vmem:[%s2 + $0x7b4] sm:$0xf]
    %v538 = vld [vmem:[%s2 + $0x7b8] sm:$0xf]
    %v539 = vld [vmem:[%s2 + $0x7bc] sm:$0xf]
    %v540 = vld [vmem:[%s2 + $0x7c0] sm:$0xf]
    %v541 = vld [vmem:[%s2 + $0x7c4] sm:$0xf]
    %v542 = vld [vmem:[%s2 + $0x7c8] sm:$0xf]
    %v543 = vld [vmem:[%s2 + $0x7cc] sm:$0xf]
    %v544 = vld [vmem:[%s2 + $0x7d0] sm:$0xf]
    %v545 = vld [vmem:[%s2 + $0x7d4] sm:$0xf]
    %v546 = vld [vmem:[%s2 + $0x7d8] sm:$0xf]
    %v547 = vld [vmem:[%s2 + $0x7dc] sm:$0xf]
    %v548 = vld [vmem:[%s2 + $0x7e0] sm:$0xf]
    %v549 = vld [vmem:[%s2 + $0x7e4] sm:$0xf]
    %v550 = vld [vmem:[%s2 + $0x7e8] sm:$0xf]
    %v551 = vld [vmem:[%s2 + $0x7ec] sm:$0xf]
    %v552 = vld [vmem:[%s2 + $0x7f0] sm:$0xf]
    %v553 = vld [vmem:[%s2 + $0x7f4] sm:$0xf]
    %v554 = vld [vmem:[%s2 + $0x7f8] sm:$0xf]
    %v555 = vld [vmem:[%s2 + $0x7fc] sm:$0xf]
    %v556 = vld [vmem:[%s2 + $0x800] sm:$0xf]
    %v557 = vld [vmem:[%s2 + $0x804] sm:$0xf]
    %v558 = vld [vmem:[%s2 + $0x808] sm:$0xf]
    %v559 = vld [vmem:[%s2 + $0x80c] sm:$0xf]
    %v560 = vld [vmem:[%s2 + $0x810] sm:$0xf]
    %v561 = vld [vmem:[%s2 + $0x814] sm:$0xf]
    %v562 = vld [vmem:[%s2 + $0x818] sm:$0xf]
    %v563 = vld [vmem:[%s2 + $0x81c] sm:$0xf]
    %v564 = vld [vmem:[%s2 + $0x820] sm:$0xf]
    %v565 = vld [vmem:[%s2 + $0x824] sm:$0xf]
    %v566 = vld [vmem:[%s2 + $0x828] sm:$0xf]
    %v567 = vld [vmem:[%s2 + $0x82c] sm:$0xf]
    %v568 = vld [vmem:[%s2 + $0x830] sm:$0xf]
    %v569 = vld [vmem:[%s2 + $0x834] sm:$0xf]
    %v570 = vld [vmem:[%s2 + $0x838] sm:$0xf]
    %v571 = vld [vmem:[%s2 + $0x83c] sm:$0xf]
    %v572 = vld [vmem:[%s2 + $0x840] sm:$0xf]
    %v573 = vld [vmem:[%s2 + $0x844] sm:$0xf]
    %v574 = vld [vmem:[%s2 + $0x848] sm:$0xf]
    %v575 = vld [vmem:[%s2 + $0x84c] sm:$0xf]
    %v576 = vld [vmem:[%s2 + $0x850] sm:$0xf]
    %v577 = vld [vmem:[%s2 + $0x854] sm:$0xf]
    %v578 = vld [vmem:[%s2 + $0x858] sm:$0xf]
    %v579 = vld [vmem:[%s2 + $0x85c] sm:$0xf]
    %v580 = vld [vmem:[%s2 + $0x860] sm:$0xf]
    %v581 = vld [vmem:[%s2 + $0x864] sm:$0xf]
    %v582 = vld [vmem:[%s2 + $0x868] sm:$0xf]
    %v583 = vld [vmem:[%s2 + $0x86c] sm:$0xf]
    %v584 = vld [vmem:[%s2 + $0x870] sm:$0xf]
    %v585 = vld [vmem:[%s2 + $0x874] sm:$0xf]
    %v586 = vld [vmem:[%s2 + $0x878] sm:$0xf]
    %v587 = vld [vmem:[%s2 + $0x87c] sm:$0xf]
    %v588 = vld [vmem:[%s2 + $0x880] sm:$0xf]
    %v589 = vld [vmem:[%s2 + $0x884] sm:$0xf]
    %v590 = vld [vmem:[%s2 + $0x888] sm:$0xf]
    %v591 = vld [vmem:[%s2 + $0x88c] sm:$0xf]
    %v592 = vld [vmem:[%s2 + $0x890] sm:$0xf]
    %v593 = vld [vmem:[%s2 + $0x894] sm:$0xf]
    %v594 = vld [vmem:[%s2 + $0x898] sm:$0xf]
    %v595 = vld [vmem:[%s2 + $0x89c] sm:$0xf]
    %v596 = vld [vmem:[%s2 + $0x8a0] sm:$0xf]
    %v597 = vld [vmem:[%s2 + $0x8a4] sm:$0xf]
    %v598 = vld [vmem:[%s2 + $0x8a8] sm:$0xf]
    %v599 = vld [vmem:[%s2 + $0x8ac] sm:$0xf]
    %v600 = vld [vmem:[%s2 + $0x8b0] sm:$0xf]
    %v601 = vld [vmem:[%s2 + $0x8b4] sm:$0xf]
    %v602 = vld [vmem:[%s2 + $0x8b8] sm:$0xf]
    %v603 = vld [vmem:[%s2 + $0x8bc] sm:$0xf]
    %v604 = vld [vmem:[%s2 + $0x8c0] sm:$0xf]
    %v605 = vld [vmem:[%s2 + $0x8c4] sm:$0xf]
    %v606 = vld [vmem:[%s2 + $0x8c8] sm:$0xf]
    %v607 = vld [vmem:[%s2 + $0x8cc] sm:$0xf]
    %v608 = vld [vmem:[%s2 + $0x8d0] sm:$0xf]
    %v609 = vld [vmem:[%s2 + $0x8d4] sm:$0xf]
    %v610 = vld [vmem:[%s2 + $0x8d8] sm:$0xf]
    %v611 = vld [vmem:[%s2 + $0x8dc] sm:$0xf]
    %v612 = vld [vmem:[%s2 + $0x8e0] sm:$0xf]
    %v613 = vld [vmem:[%s2 + $0x8e4] sm:$0xf]
    %v614 = vld [vmem:[%s2 + $0x8e8] sm:$0xf]
    %v615 = vld [vmem:[%s2 + $0x8ec] sm:$0xf]
    %v616 = vld [vmem:[%s2 + $0x8f0] sm:$0xf]
    %v617 = vld [vmem:[%s2 + $0x8f4] sm:$0xf]
    %v618 = vld [vmem:[%s2 + $0x8f8] sm:$0xf]
    %v619 = vld [vmem:[%s2 + $0x8fc] sm:$0xf]
    %v620 = vld [vmem:[%s2 + $0x900] sm:$0xf]
    %v621 = vld [vmem:[%s2 + $0x904] sm:$0xf]
    %v622 = vld [vmem:[%s2 + $0x908] sm:$0xf]
    %v623 = vld [vmem:[%s2 + $0x90c] sm:$0xf]
    %v624 = vld [vmem:[%s2 + $0x910] sm:$0xf]
    %v625 = vld [vmem:[%s2 + $0x914] sm:$0xf]
    %v626 = vld [vmem:[%s2 + $0x918] sm:$0xf]
    %v627 = vld [vmem:[%s2 + $0x91c] sm:$0xf]
    %v628 = vld [vmem:[%s2 + $0x920] sm:$0xf]
    %v629 = vld [vmem:[%s2 + $0x924] sm:$0xf]
    %v630 = vld [vmem:[%s2 + $0x928] sm:$0xf]
    %v631 = vld [vmem:[%s2 + $0x92c] sm:$0xf]
    %v632 = vld [vmem:[%s2 + $0x930] sm:$0xf]
    %v633 = vld [vmem:[%s2 + $0x934] sm:$0xf]
    %v634 = vld [vmem:[%s2 + $0x938] sm:$0xf]
    %v635 = vld [vmem:[%s2 + $0x93c] sm:$0xf]
    %v636 = vld [vmem:[%s2 + $0x940] sm:$0xf]
    %v637 = vld [vmem:[%s2 + $0x944] sm:$0xf]
    %v638 = vld [vmem:[%s2 + $0x948] sm:$0xf]
    %v639 = vld [vmem:[%s2 + $0x94c] sm:$0xf]
    %v640 = vld [vmem:[%s2 + $0x950] sm:$0xf]
    %v641 = vld [vmem:[%s2 + $0x954] sm:$0xf]
    %v642 = vld [vmem:[%s2 + $0x958] sm:$0xf]
    %v643 = vld [vmem:[%s2 + $0x95c] sm:$0xf]
    %v644 = vld [vmem:[%s2 + $0x960] sm:$0xf]
    %v645 = vld [vmem:[%s2 + $0x964] sm:$0xf]
    %v646 = vld [vmem:[%s2 + $0x968] sm:$0xf]
    %v647 = vld [vmem:[%s2 + $0x96c] sm:$0xf]
    %v648 = vld [vmem:[%s2 + $0x970] sm:$0xf]
    %v649 = vld [vmem:[%s2 + $0x974] sm:$0xf]
    %v650 = vld [vmem:[%s2 + $0x978] sm:$0xf]
    %v651 = vld [vmem:[%s2 + $0x97c] sm:$0xf]
    %v652 = vld [vmem:[%s2 + $0x980] sm:$0xf]
    %v653 = vld [vmem:[%s2 + $0x984] sm:$0xf]
    %v654 = vld [vmem:[%s2 + $0x988] sm:$0xf]
    %v655 = vld [vmem:[%s2 + $0x98c] sm:$0xf]
    %v656 = vld [vmem:[%s2 + $0x990] sm:$0xf]
    %v657 = vld [vmem:[%s2 + $0x994] sm:$0xf]
    %v658 = vld [vmem:[%s2 + $0x998] sm:$0xf]
    %v659 = vld [vmem:[%s2 + $0x99c] sm:$0xf]
    %v660 = vld [vmem:[%s2 + $0x9a0] sm:$0xf]
    %v661 = vld [vmem:[%s2 + $0x9a4] sm:$0xf]
    %v662 = vld [vmem:[%s2 + $0x9a8] sm:$0xf]
    %v663 = vld [vmem:[%s2 + $0x9ac] sm:$0xf]
    %v664 = vld [vmem:[%s2 + $0x9b0] sm:$0xf]
    %v665 = vld [vmem:[%s2 + $0x9b4] sm:$0xf]
    %v666 = vld [vmem:[%s2 + $0x9b8] sm:$0xf]
    %v667 = vld [vmem:[%s2 + $0x9bc] sm:$0xf]
    %v668 = vld [vmem:[%s2 + $0x9c0] sm:$0xf]
    %v669 = vld [vmem:[%s2 + $0x9c4] sm:$0xf]
    %v670 = vld [vmem:[%s2 + $0x9c8] sm:$0xf]
    %v671 = vld [vmem:[%s2 + $0x9cc] sm:$0xf]
    %v672 = vld [vmem:[%s2 + $0x9d0] sm:$0xf]
    %v673 = vld [vmem:[%s2 + $0x9d4] sm:$0xf]
    %v674 = vld [vmem:[%s2 + $0x9d8] sm:$0xf]
    %v675 = vld [vmem:[%s2 + $0x9dc] sm:$0xf]
    %v676 = vld [vmem:[%s2 + $0x9e0] sm:$0xf]
    %v677 = vld [vmem:[%s2 + $0x9e4] sm:$0xf]
    %v678 = vld [vmem:[%s2 + $0x9e8] sm:$0xf]
    %v679 = vld [vmem:[%s2 + $0x9ec] sm:$0xf]
    %v680 = vld [vmem:[%s2 + $0x9f0] sm:$0xf]
    %v681 = vld [vmem:[%s2 + $0x9f4] sm:$0xf]
    %v682 = vld [vmem:[%s2 + $0x9f8] sm:$0xf]
    %v683 = vld [vmem:[%s2 + $0x9fc] sm:$0xf]
    %v684 = vld [vmem:[%s2 + $0xa00] sm:$0xf]
    %v685 = vld [vmem:[%s2 + $0xa04] sm:$0xf]
    %v686 = vld [vmem:[%s2 + $0xa08] sm:$0xf]
    %v687 = vld [vmem:[%s2 + $0xa0c] sm:$0xf]
    %v688 = vld [vmem:[%s2 + $0xa10] sm:$0xf]
    %v689 = vld [vmem:[%s2 + $0xa14] sm:$0xf]
    %v690 = vld [vmem:[%s2 + $0xa18] sm:$0xf]
    %v691 = vld [vmem:[%s2 + $0xa1c] sm:$0xf]
    %v692 = vld [vmem:[%s2 + $0xa20] sm:$0xf]
    %v693 = vld [vmem:[%s2 + $0xa24] sm:$0xf]
    %v694 = vld [vmem:[%s2 + $0xa28] sm:$0xf]
    %v695 = vld [vmem:[%s2 + $0xa2c] sm:$0xf]
    %v696 = vld [vmem:[%s2 + $0xa30] sm:$0xf]
    %v697 = vld [vmem:[%s2 + $0xa34] sm:$0xf]
    %v698 = vld [vmem:[%s2 + $0xa38] sm:$0xf]
    %v699 = vld [vmem:[%s2 + $0xa3c] sm:$0xf]
    %v700 = vld [vmem:[%s2 + $0xa40] sm:$0xf]
    %v701 = vld [vmem:[%s2 + $0xa44] sm:$0xf]
    %v702 = vld [vmem:[%s2 + $0xa48] sm:$0xf]
    %v703 = vld [vmem:[%s2 + $0xa4c] sm:$0xf]
    %v704 = vld [vmem:[%s2 + $0xa50] sm:$0xf]
    %v705 = vld [vmem:[%s2 + $0xa54] sm:$0xf]
    %v706 = vld [vmem:[%s2 + $0xa58] sm:$0xf]
    %v707 = vld [vmem:[%s2 + $0xa5c] sm:$0xf]
    %v708 = vld [vmem:[%s2 + $0xa60] sm:$0xf]
    %v709 = vld [vmem:[%s2 + $0xa64] sm:$0xf]
    %v710 = vld [vmem:[%s2 + $0xa68] sm:$0xf]
    %v711 = vld [vmem:[%s2 + $0xa6c] sm:$0xf]
    %v712 = vld [vmem:[%s2 + $0xa70] sm:$0xf]
    %v713 = vld [vmem:[%s2 + $0xa74] sm:$0xf]
    %v714 = vld [vmem:[%s2 + $0xa78] sm:$0xf]
    %v715 = vld [vmem:[%s2 + $0xa7c] sm:$0xf]
    %v716 = vld [vmem:[%s2 + $0xa80] sm:$0xf]
    %v717 = vld [vmem:[%s2 + $0xa84] sm:$0xf]
    %v718 = vld [vmem:[%s2 + $0xa88] sm:$0xf]
    %v719 = vld [vmem:[%s2 + $0xa8c] sm:$0xf]
    %v720 = vld [vmem:[%s2 + $0xa90] sm:$0xf]
    %v721 = vld [vmem:[%s2 + $0xa94] sm:$0xf]
    %v722 = vld [vmem:[%s2 + $0xa98] sm:$0xf]
    %v723 = vld [vmem:[%s2 + $0xa9c] sm:$0xf]
    %v724 = vld [vmem:[%s2 + $0xaa0] sm:$0xf]
    %v725 = vld [vmem:[%s2 + $0xaa4] sm:$0xf]
    %v726 = vld [vmem:[%s2 + $0xaa8] sm:$0xf]
    %v727 = vld [vmem:[%s2 + $0xaac] sm:$0xf]
    %v728 = vld [vmem:[%s2 + $0xab0] sm:$0xf]
    %v729 = vld [vmem:[%s2 + $0xab4] sm:$0xf]
    %v730 = vld [vmem:[%s2 + $0xab8] sm:$0xf]
    %v731 = vld [vmem:[%s2 + $0xabc] sm:$0xf]
    %v732 = vld [vmem:[%s2 + $0xac0] sm:$0xf]
    %v733 = vld [vmem:[%s2 + $0xac4] sm:$0xf]
    %v734 = vld [vmem:[%s2 + $0xac8] sm:$0xf]
    %v735 = vld [vmem:[%s2 + $0xacc] sm:$0xf]
    %v736 = vld [vmem:[%s2 + $0xad0] sm:$0xf]
    %v737 = vld [vmem:[%s2 + $0xad4] sm:$0xf]
    %v738 = vld [vmem:[%s2 + $0xad8] sm:$0xf]
    %v739 = vld [vmem:[%s2 + $0xadc] sm:$0xf]
    %v740 = vld [vmem:[%s2 + $0xae0] sm:$0xf]
    %v741 = vld [vmem:[%s2 + $0xae4] sm:$0xf]
    %v742 = vld [vmem:[%s2 + $0xae8] sm:$0xf]
    %v743 = vld [vmem:[%s2 + $0xaec] sm:$0xf]
    %v744 = vld [vmem:[%s2 + $0xaf0] sm:$0xf]
    %v745 = vld [vmem:[%s2 + $0xaf4] sm:$0xf]
    %v746 = vld [vmem:[%s2 + $0xaf8] sm:$0xf]
    %v747 = vld [vmem:[%s2 + $0xafc] sm:$0xf]
    %v748 = vld [vmem:[%s2 + $0xb00] sm:$0xf]
    %v749 = vld [vmem:[%s2 + $0xb04] sm:$0xf]
    %v750 = vld [vmem:[%s2 + $0xb08] sm:$0xf]
    %v751 = vld [vmem:[%s2 + $0xb0c] sm:$0xf]
    %v752 = vld [vmem:[%s2 + $0xb10] sm:$0xf]
    %v753 = vld [vmem:[%s2 + $0xb14] sm:$0xf]
    %v754 = vld [vmem:[%s2 + $0xb18] sm:$0xf]
    %v755 = vld [vmem:[%s2 + $0xb1c] sm:$0xf]
    %v756 = vld [vmem:[%s2 + $0xb20] sm:$0xf]
    %v757 = vld [vmem:[%s2 + $0xb24] sm:$0xf]
    %v758 = vld [vmem:[%s2 + $0xb28] sm:$0xf]
    %v759 = vld [vmem:[%s2 + $0xb2c] sm:$0xf]
    %v760 = vld [vmem:[%s2 + $0xb30] sm:$0xf]
    %v761 = vld [vmem:[%s2 + $0xb34] sm:$0xf]
    %v762 = vld [vmem:[%s2 + $0xb38] sm:$0xf]
    %v763 = vld [vmem:[%s2 + $0xb3c] sm:$0xf]
    %v764 = vld [vmem:[%s2 + $0xb40] sm:$0xf]
    %v765 = vld [vmem:[%s2 + $0xb44] sm:$0xf]
    %v766 = vld [vmem:[%s2 + $0xb48] sm:$0xf]
    %v767 = vld [vmem:[%s2 + $0xb4c] sm:$0xf]
    %v768 = vld [vmem:[%s2 + $0xb50] sm:$0xf]
    %v769 = vld [vmem:[%s2 + $0xb54] sm:$0xf]
    %v770 = vld [vmem:[%s2 + $0xb58] sm:$0xf]
    %v771 = vld [vmem:[%s2 + $0xb5c] sm:$0xf]
    %v772 = vld [vmem:[%s2 + $0xb60] sm:$0xf]
    %v773 = vld [vmem:[%s2 + $0xb64] sm:$0xf]
    %v774 = vld [vmem:[%s2 + $0xb68] sm:$0xf]
    %v775 = vld [vmem:[%s2 + $0xb6c] sm:$0xf]
    %v776 = vld [vmem:[%s2 + $0xb70] sm:$0xf]
    %v777 = vld [vmem:[%s2 + $0xb74] sm:$0xf]
    %v778 = vld [vmem:[%s2 + $0xb78] sm:$0xf]
    %v779 = vld [vmem:[%s2 + $0xb7c] sm:$0xf]
    %v780 = vld [vmem:[%s2 + $0xb80] sm:$0xf]
    %v781 = vld [vmem:[%s2 + $0xb84] sm:$0xf]
    %v782 = vld [vmem:[%s2 + $0xb88] sm:$0xf]
    %v783 = vld [vmem:[%s2 + $0xb8c] sm:$0xf]
    %v784 = vld [vmem:[%s2 + $0xb90] sm:$0xf]
    %v785 = vld [vmem:[%s2 + $0xb94] sm:$0xf]
    %v786 = vld [vmem:[%s2 + $0xb98] sm:$0xf]
    %v787 = vld [vmem:[%s2 + $0xb9c] sm:$0xf]
    %v788 = vld [vmem:[%s2 + $0xba0] sm:$0xf]
    %v789 = vld [vmem:[%s2 + $0xba4] sm:$0xf]
    %v790 = vld [vmem:[%s2 + $0xba8] sm:$0xf]
    %v791 = vld [vmem:[%s2 + $0xbac] sm:$0xf]
    %v792 = vld [vmem:[%s2 + $0xbb0] sm:$0xf]
    %v793 = vld [vmem:[%s2 + $0xbb4] sm:$0xf]
    %v794 = vld [vmem:[%s2 + $0xbb8] sm:$0xf]
    %v795 = vld [vmem:[%s2 + $0xbbc] sm:$0xf]
    %v796 = vld [vmem:[%s2 + $0xbc0] sm:$0xf]
    %v797 = vld [vmem:[%s2 + $0xbc4] sm:$0xf]
    %v798 = vld [vmem:[%s2 + $0xbc8] sm:$0xf]
    %v799 = vld [vmem:[%s2 + $0xbcc] sm:$0xf]
    %v800 = vld [vmem:[%s2 + $0xbd0] sm:$0xf]
    %v801 = vld [vmem:[%s2 + $0xbd4] sm:$0xf]
    %v802 = vld [vmem:[%s2 + $0xbd8] sm:$0xf]
    %v803 = vld [vmem:[%s2 + $0xbdc] sm:$0xf]
    %v804 = vld [vmem:[%s2 + $0xbe0] sm:$0xf]
    %v805 = vld [vmem:[%s2 + $0xbe4] sm:$0xf]
    %v806 = vld [vmem:[%s2 + $0xbe8] sm:$0xf]
    %v807 = vld [vmem:[%s2 + $0xbec] sm:$0xf]
    %v808 = vld [vmem:[%s2 + $0xbf0] sm:$0xf]
    %v809 = vld [vmem:[%s2 + $0xbf4] sm:$0xf]
    %v810 = vld [vmem:[%s2 + $0xbf8] sm:$0xf]
    %v811 = vld [vmem:[%s2 + $0xbfc] sm:$0xf]
    %v812 = vld [vmem:[%s2 + $0xc00] sm:$0xf]
    %v813 = vld [vmem:[%s2 + $0xc04] sm:$0xf]
    %v814 = vld [vmem:[%s2 + $0xc08] sm:$0xf]
    %v815 = vld [vmem:[%s2 + $0xc0c] sm:$0xf]
    %v816 = vld [vmem:[%s2 + $0xc10] sm:$0xf]
    %v817 = vld [vmem:[%s2 + $0xc14] sm:$0xf]
    %v818 = vld [vmem:[%s2 + $0xc18] sm:$0xf]
    %v819 = vld [vmem:[%s2 + $0xc1c] sm:$0xf]
    %v820 = vld [vmem:[%s2 + $0xc20] sm:$0xf]
    %v821 = vld [vmem:[%s2 + $0xc24] sm:$0xf]
    %v822 = vld [vmem:[%s2 + $0xc28] sm:$0xf]
    %v823 = vld [vmem:[%s2 + $0xc2c] sm:$0xf]
    %v824 = vld [vmem:[%s2 + $0xc30] sm:$0xf]
    %v825 = vld [vmem:[%s2 + $0xc34] sm:$0xf]
    %v826 = vld [vmem:[%s2 + $0xc38] sm:$0xf]
    %v827 = vld [vmem:[%s2 + $0xc3c] sm:$0xf]
    %v828 = vld [vmem:[%s2 + $0xc40] sm:$0xf]
    %v829 = vld [vmem:[%s2 + $0xc44] sm:$0xf]
    %v830 = vld [vmem:[%s2 + $0xc48] sm:$0xf]
    %v831 = vld [vmem:[%s2 + $0xc4c] sm:$0xf]
    %v832 = vld [vmem:[%s2 + $0xc50] sm:$0xf]
    %v833 = vld [vmem:[%s2 + $0xc54] sm:$0xf]
    %v834 = vld [vmem:[%s2 + $0xc58] sm:$0xf]
    %v835 = vld [vmem:[%s2 + $0xc5c] sm:$0xf]
    %v836 = vld [vmem:[%s2 + $0xc60] sm:$0xf]
    %v837 = vld [vmem:[%s2 + $0xc64] sm:$0xf]
    %v838 = vld [vmem:[%s2 + $0xc68] sm:$0xf]
    %v839 = vld [vmem:[%s2 + $0xc6c] sm:$0xf]
    %v840 = vld [vmem:[%s2 + $0xc70] sm:$0xf]
    %v841 = vld [vmem:[%s2 + $0xc74] sm:$0xf]
    %v842 = vld [vmem:[%s2 + $0xc78] sm:$0xf]
    %v843 = vld [vmem:[%s2 + $0xc7c] sm:$0xf]
    %v844 = vld [vmem:[%s2 + $0xc80] sm:$0xf]
    %v845 = vld [vmem:[%s2 + $0xc84] sm:$0xf]
    %v846 = vld [vmem:[%s2 + $0xc88] sm:$0xf]
    %v847 = vld [vmem:[%s2 + $0xc8c] sm:$0xf]
    %v848 = vld [vmem:[%s2 + $0xc90] sm:$0xf]
    %v849 = vld [vmem:[%s2 + $0xc94] sm:$0xf]
    %v850 = vld [vmem:[%s2 + $0xc98] sm:$0xf]
    %v851 = vld [vmem:[%s2 + $0xc9c] sm:$0xf]
    %v852 = vld [vmem:[%s2 + $0xca0] sm:$0xf]
    %v853 = vld [vmem:[%s2 + $0xca4] sm:$0xf]
    %v854 = vld [vmem:[%s2 + $0xca8] sm:$0xf]
    %v855 = vld [vmem:[%s2 + $0xcac] sm:$0xf]
    %v856 = vld [vmem:[%s2 + $0xcb0] sm:$0xf]
    %v857 = vld [vmem:[%s2 + $0xcb4] sm:$0xf]
    %v858 = vld [vmem:[%s2 + $0xcb8] sm:$0xf]
    %v859 = vld [vmem:[%s2 + $0xcbc] sm:$0xf]
    %v860 = vld [vmem:[%s2 + $0xcc0] sm:$0xf]
    %v861 = vld [vmem:[%s2 + $0xcc4] sm:$0xf]
    %v862 = vld [vmem:[%s2 + $0xcc8] sm:$0xf]
    %v863 = vld [vmem:[%s2 + $0xccc] sm:$0xf]
    %v864 = vld [vmem:[%s2 + $0xcd0] sm:$0xf]
    %v865 = vld [vmem:[%s2 + $0xcd4] sm:$0xf]
    %v866 = vld [vmem:[%s2 + $0xcd8] sm:$0xf]
    %v867 = vld [vmem:[%s2 + $0xcdc] sm:$0xf]
    %v868 = vld [vmem:[%s2 + $0xce0] sm:$0xf]
    %v869 = vld [vmem:[%s2 + $0xce4] sm:$0xf]
    %v870 = vld [vmem:[%s2 + $0xce8] sm:$0xf]
    %v871 = vld [vmem:[%s2 + $0xcec] sm:$0xf]
    %v872 = vld [vmem:[%s2 + $0xcf0] sm:$0xf]
    %v873 = vld [vmem:[%s2 + $0xcf4] sm:$0xf]
    %v874 = vld [vmem:[%s2 + $0xcf8] sm:$0xf]
    %v875 = vld [vmem:[%s2 + $0xcfc] sm:$0xf]
    %v876 = vld [vmem:[%s2 + $0xd00] sm:$0xf]
    %v877 = vld [vmem:[%s2 + $0xd04] sm:$0xf]
    %v878 = vld [vmem:[%s2 + $0xd08] sm:$0xf]
    %v879 = vld [vmem:[%s2 + $0xd0c] sm:$0xf]
    %v880 = vld [vmem:[%s2 + $0xd10] sm:$0xf]
    %v881 = vld [vmem:[%s2 + $0xd14] sm:$0xf]
    %v882 = vld [vmem:[%s2 + $0xd18] sm:$0xf]
    %v883 = vld [vmem:[%s2 + $0xd1c] sm:$0xf]
    %v884 = vld [vmem:[%s2 + $0xd20] sm:$0xf]
    %v885 = vld [vmem:[%s2 + $0xd24] sm:$0xf]
    %v886 = vld [vmem:[%s2 + $0xd28] sm:$0xf]
    %v887 = vld [vmem:[%s2 + $0xd2c] sm:$0xf]
    %v888 = vld [vmem:[%s2 + $0xd30] sm:$0xf]
    %v889 = vld [vmem:[%s2 + $0xd34] sm:$0xf]
    %v890 = vld [vmem:[%s2 + $0xd38] sm:$0xf]
    %v891 = vld [vmem:[%s2 + $0xd3c] sm:$0xf]
    %v892 = vld [vmem:[%s2 + $0xd40] sm:$0xf]
    %v893 = vld [vmem:[%s2 + $0xd44] sm:$0xf]
    %v894 = vld [vmem:[%s2 + $0xd48] sm:$0xf]
    %v895 = vld [vmem:[%s2 + $0xd4c] sm:$0xf]
    %v896 = vld [vmem:[%s2 + $0xd50] sm:$0xf]
    %v897 = vld [vmem:[%s2 + $0xd54] sm:$0xf]
    %v898 = vld [vmem:[%s2 + $0xd58] sm:$0xf]
    %v899 = vld [vmem:[%s2 + $0xd5c] sm:$0xf]
    %v900 = vld [vmem:[%s2 + $0xd60] sm:$0xf]
    %v901 = vld [vmem:[%s2 + $0xd64] sm:$0xf]
    %v902 = vld [vmem:[%s2 + $0xd68] sm:$0xf]
    %v903 = vld [vmem:[%s2 + $0xd6c] sm:$0xf]
    %v904 = vld [vmem:[%s2 + $0xd70] sm:$0xf]
    %v905 = vld [vmem:[%s2 + $0xd74] sm:$0xf]
    %v906 = vld [vmem:[%s2 + $0xd78] sm:$0xf]
    %v907 = vld [vmem:[%s2 + $0xd7c] sm:$0xf]
    %v908 = vld [vmem:[%s2 + $0xd80] sm:$0xf]
    %v909 = vld [vmem:[%s2 + $0xd84] sm:$0xf]
    %v910 = vld [vmem:[%s2 + $0xd88] sm:$0xf]
    %v911 = vld [vmem:[%s2 + $0xd8c] sm:$0xf]
    %v912 = vld [vmem:[%s2 + $0xd90] sm:$0xf]
    %v913 = vld [vmem:[%s2 + $0xd94] sm:$0xf]
    %v914 = vld [vmem:[%s2 + $0xd98] sm:$0xf]
    %v915 = vld [vmem:[%s2 + $0xd9c] sm:$0xf]
    %v916 = vld [vmem:[%s2 + $0xda0] sm:$0xf]
    %v917 = vld [vmem:[%s2 + $0xda4] sm:$0xf]
    %v918 = vld [vmem:[%s2 + $0xda8] sm:$0xf]
    %v919 = vld [vmem:[%s2 + $0xdac] sm:$0xf]
    %v920 = vld [vmem:[%s2 + $0xdb0] sm:$0xf]
    %v921 = vld [vmem:[%s2 + $0xdb4] sm:$0xf]
    %v922 = vld [vmem:[%s2 + $0xdb8] sm:$0xf]
    %v923 = vld [vmem:[%s2 + $0xdbc] sm:$0xf]
    %v924 = vld [vmem:[%s2 + $0xdc0] sm:$0xf]
    %v925 = vld [vmem:[%s2 + $0xdc4] sm:$0xf]
    %v926 = vld [vmem:[%s2 + $0xdc8] sm:$0xf]
    %v927 = vld [vmem:[%s2 + $0xdcc] sm:$0xf]
    %v928 = vld [vmem:[%s2 + $0xdd0] sm:$0xf]
    %v929 = vld [vmem:[%s2 + $0xdd4] sm:$0xf]
    %v930 = vld [vmem:[%s2 + $0xdd8] sm:$0xf]
    %v931 = vld [vmem:[%s2 + $0xddc] sm:$0xf]
    %v932 = vld [vmem:[%s2 + $0xde0] sm:$0xf]
    %v933 = vld [vmem:[%s2 + $0xde4] sm:$0xf]
    %v934 = vld [vmem:[%s2 + $0xde8] sm:$0xf]
    %v935 = vld [vmem:[%s2 + $0xdec] sm:$0xf]
    %v936 = vld [vmem:[%s2 + $0xdf0] sm:$0xf]
    %v937 = vld [vmem:[%s2 + $0xdf4] sm:$0xf]
    %v938 = vld [vmem:[%s2 + $0xdf8] sm:$0xf]
    %v939 = vld [vmem:[%s2 + $0xdfc] sm:$0xf]
    %v940 = vld [vmem:[%s2 + $0xe00] sm:$0xf]
    %v941 = vld [vmem:[%s2 + $0xe04] sm:$0xf]
    %v942 = vld [vmem:[%s2 + $0xe08] sm:$0xf]
    %v943 = vld [vmem:[%s2 + $0xe0c] sm:$0xf]
    %v944 = vld [vmem:[%s2 + $0xe10] sm:$0xf]
    %v945 = vld [vmem:[%s2 + $0xe14] sm:$0xf]
    %v946 = vld [vmem:[%s2 + $0xe18] sm:$0xf]
    %v947 = vld [vmem:[%s2 + $0xe1c] sm:$0xf]
    %v948 = vld [vmem:[%s2 + $0xe20] sm:$0xf]
    %v949 = vld [vmem:[%s2 + $0xe24] sm:$0xf]
    %v950 = vld [vmem:[%s2 + $0xe28] sm:$0xf]
    %v951 = vld [vmem:[%s2 + $0xe2c] sm:$0xf]
    %v952 = vld [vmem:[%s2 + $0xe30] sm:$0xf]
    %v953 = vld [vmem:[%s2 + $0xe34] sm:$0xf]
    %v954 = vld [vmem:[%s2 + $0xe38] sm:$0xf]
    %v955 = vld [vmem:[%s2 + $0xe3c] sm:$0xf]
    %v956 = vld [vmem:[%s2 + $0xe40] sm:$0xf]
    %v957 = vld [vmem:[%s2 + $0xe44] sm:$0xf]
    %v958 = vld [vmem:[%s2 + $0xe48] sm:$0xf]
    %v959 = vld [vmem:[%s2 + $0xe4c] sm:$0xf]
    %v960 = vld [vmem:[%s2 + $0xe50] sm:$0xf]
    %v961 = vld [vmem:[%s2 + $0xe54] sm:$0xf]
    %v962 = vld [vmem:[%s2 + $0xe58] sm:$0xf]
    %v963 = vld [vmem:[%s2 + $0xe5c] sm:$0xf]
    %v964 = vld [vmem:[%s2 + $0xe60] sm:$0xf]
    %v965 = vld [vmem:[%s2 + $0xe64] sm:$0xf]
    %v966 = vld [vmem:[%s2 + $0xe68] sm:$0xf]
    %v967 = vld [vmem:[%s2 + $0xe6c] sm:$0xf]
    %v968 = vld [vmem:[%s2 + $0xe70] sm:$0xf]
    %v969 = vld [vmem:[%s2 + $0xe74] sm:$0xf]
    %v970 = vld [vmem:[%s2 + $0xe78] sm:$0xf]
    %v971 = vld [vmem:[%s2 + $0xe7c] sm:$0xf]
    %v972 = vld [vmem:[%s2 + $0xe80] sm:$0xf]
    %v973 = vld [vmem:[%s2 + $0xe84] sm:$0xf]
    %v974 = vld [vmem:[%s2 + $0xe88] sm:$0xf]
    %v975 = vld [vmem:[%s2 + $0xe8c] sm:$0xf]
    %v976 = vld [vmem:[%s2 + $0xe90] sm:$0xf]
    %v977 = vld [vmem:[%s2 + $0xe94] sm:$0xf]
    %v978 = vld [vmem:[%s2 + $0xe98] sm:$0xf]
    %v979 = vld [vmem:[%s2 + $0xe9c] sm:$0xf]
    %v980 = vld [vmem:[%s2 + $0xea0] sm:$0xf]
    %v981 = vld [vmem:[%s2 + $0xea4] sm:$0xf]
    %v982 = vld [vmem:[%s2 + $0xea8] sm:$0xf]
    %v983 = vld [vmem:[%s2 + $0xeac] sm:$0xf]
    %v984 = vld [vmem:[%s2 + $0xeb0] sm:$0xf]
    %v985 = vld [vmem:[%s2 + $0xeb4] sm:$0xf]
    %v986 = vld [vmem:[%s2 + $0xeb8] sm:$0xf]
    %v987 = vld [vmem:[%s2 + $0xebc] sm:$0xf]
    %v988 = vld [vmem:[%s2 + $0xec0] sm:$0xf]
    %v989 = vld [vmem:[%s2 + $0xec4] sm:$0xf]
    %v990 = vld [vmem:[%s2 + $0xec8] sm:$0xf]
    %v991 = vld [vmem:[%s2 + $0xecc] sm:$0xf]
    %v992 = vld [vmem:[%s2 + $0xed0] sm:$0xf]
    %v993 = vld [vmem:[%s2 + $0xed4] sm:$0xf]
    %v994 = vld [vmem:[%s2 + $0xed8] sm:$0xf]
    %v995 = vld [vmem:[%s2 + $0xedc] sm:$0xf]
    %v996 = vld [vmem:[%s2 + $0xee0] sm:$0xf]
    %v997 = vld [vmem:[%s2 + $0xee4] sm:$0xf]
    %v998 = vld [vmem:[%s2 + $0xee8] sm:$0xf]
    %v999 = vld [vmem:[%s2 + $0xeec] sm:$0xf]
    %v1000 = vld [vmem:[%s2 + $0xef0] sm:$0xf]
    %v1001 = vld [vmem:[%s2 + $0xef4] sm:$0xf]
    %v1002 = vld [vmem:[%s2 + $0xef8] sm:$0xf]
    %v1003 = vld [vmem:[%s2 + $0xefc] sm:$0xf]
    %v1004 = vld [vmem:[%s2 + $0xf00] sm:$0xf]
    %v1005 = vld [vmem:[%s2 + $0xf04] sm:$0xf]
    %v1006 = vld [vmem:[%s2 + $0xf08] sm:$0xf]
    %v1007 = vld [vmem:[%s2 + $0xf0c] sm:$0xf]
    %v1008 = vld [vmem:[%s2 + $0xf10] sm:$0xf]
    %v1009 = vld [vmem:[%s2 + $0xf14] sm:$0xf]
    %v1010 = vld [vmem:[%s2 + $0xf18] sm:$0xf]
    %v1011 = vld [vmem:[%s2 + $0xf1c] sm:$0xf]
    %v1012 = vld [vmem:[%s2 + $0xf20] sm:$0xf]
    %v1013 = vld [vmem:[%s2 + $0xf24] sm:$0xf]
    %v1014 = vld [vmem:[%s2 + $0xf28] sm:$0xf]
    %v1015 = vld [vmem:[%s2 + $0xf2c] sm:$0xf]
    %v1016 = vld [vmem:[%s2 + $0xf30] sm:$0xf]
    %v1017 = vld [vmem:[%s2 + $0xf34] sm:$0xf]
    %v1018 = vld [vmem:[%s2 + $0xf38] sm:$0xf]
    %v1019 = vld [vmem:[%s2 + $0xf3c] sm:$0xf]
    %v1020 = vld [vmem:[%s2 + $0xf40] sm:$0xf]
    %v1021 = vld [vmem:[%s2 + $0xf44] sm:$0xf]
    %v1022 = vld [vmem:[%s2 + $0xf48] sm:$0xf]
    %v1023 = vld [vmem:[%s2 + $0xf4c] sm:$0xf]
    %v1024 = vld [vmem:[%s2 + $0xf50] sm:$0xf]
    %v1025 = vld [vmem:[%s2 + $0xf54] sm:$0xf]
    %v1026 = vld [vmem:[%s2 + $0xf58] sm:$0xf]
    %v1027 = vld [vmem:[%s2 + $0xf5c] sm:$0xf]
    %v1028 = vld [vmem:[%s2 + $0xf60] sm:$0xf]
    %v1029 = vld [vmem:[%s2 + $0xf64] sm:$0xf]
    %v1030 = vld [vmem:[%s2 + $0xf68] sm:$0xf]
    %v1031 = vld [vmem:[%s2 + $0xf6c] sm:$0xf]
    %v1032 = vld [vmem:[%s2 + $0xf70] sm:$0xf]
    %v1033 = vld [vmem:[%s2 + $0xf74] sm:$0xf]
    %v1034 = vld [vmem:[%s2 + $0xf78] sm:$0xf]
    %v1035 = vld [vmem:[%s2 + $0xf7c] sm:$0xf]
    %v1036 = vld [vmem:[%s2 + $0xf80] sm:$0xf]
    %v1037 = vld [vmem:[%s2 + $0xf84] sm:$0xf]
    %v1038 = vld [vmem:[%s2 + $0xf88] sm:$0xf]
    %v1039 = vld [vmem:[%s2 + $0xf8c] sm:$0xf]
    %v1040 = vld [vmem:[%s2 + $0xf90] sm:$0xf]
    %v1041 = vld [vmem:[%s2 + $0xf94] sm:$0xf]
    %v1042 = vld [vmem:[%s2 + $0xf98] sm:$0xf]
    %v1043 = vld [vmem:[%s2 + $0xf9c] sm:$0xf]
    %v1044 = vld [vmem:[%s2 + $0xfa0] sm:$0xf]
    %v1045 = vld [vmem:[%s2 + $0xfa4] sm:$0xf]
    %v1046 = vld [vmem:[%s2 + $0xfa8] sm:$0xf]
    %v1047 = vld [vmem:[%s2 + $0xfac] sm:$0xf]
    %v1048 = vld [vmem:[%s2 + $0xfb0] sm:$0xf]
    %v1049 = vld [vmem:[%s2 + $0xfb4] sm:$0xf]
    %v1050 = vld [vmem:[%s2 + $0xfb8] sm:$0xf]
    %v1051 = vld [vmem:[%s2 + $0xfbc] sm:$0xf]
    %v1052 = vld [vmem:[%s2 + $0xfc0] sm:$0xf]
    %v1053 = vld [vmem:[%s2 + $0xfc4] sm:$0xf]
    %v1054 = vld [vmem:[%s2 + $0xfc8] sm:$0xf]
    %v1055 = vld [vmem:[%s2 + $0xfcc] sm:$0xf]
    %v1056 = vld [vmem:[%s2 + $0xfd0] sm:$0xf]
    %v1057 = vld [vmem:[%s2 + $0xfd4] sm:$0xf]
    %v1058 = vld [vmem:[%s2 + $0xfd8] sm:$0xf]
    %v1059 = vld [vmem:[%s2 + $0xfdc] sm:$0xf]
    %v1060 = vld [vmem:[%s2 + $0xfe0] sm:$0xf]
    %v1061 = vld [vmem:[%s2 + $0xfe4] sm:$0xf]
    %v1062 = vld [vmem:[%s2 + $0xfe8] sm:$0xf]
    %v1063 = vld [vmem:[%s2 + $0xfec] sm:$0xf]
    %v1064 = vld [vmem:[%s2 + $0xff0] sm:$0xf]
    %v1065 = vld [vmem:[%s2 + $0xff4] sm:$0xf]
    %v1066 = vld [vmem:[%s2 + $0xff8] sm:$0xf]
    %v1067 = vld [vmem:[%s2 + $0xffc] sm:$0xf]
    %v1068 = vld [vmem:[%s2 + $0x1000] sm:$0xf]
    %v1069 = vld [vmem:[%s2 + $0x1004] sm:$0xf]
    %v1070 = vld [vmem:[%s2 + $0x1008] sm:$0xf]
    %v1071 = vld [vmem:[%s2 + $0x100c] sm:$0xf]
    %v1072 = vld [vmem:[%s2 + $0x1010] sm:$0xf]
    %v1073 = vld [vmem:[%s2 + $0x1014] sm:$0xf]
    %v1074 = vld [vmem:[%s2 + $0x1018] sm:$0xf]
    %v1075 = vld [vmem:[%s2 + $0x101c] sm:$0xf]
    %v1076 = vld [vmem:[%s2 + $0x1020] sm:$0xf]
    %v1077 = vld [vmem:[%s2 + $0x1024] sm:$0xf]
    %v1078 = vld [vmem:[%s2 + $0x1028] sm:$0xf]
    %v1079 = vld [vmem:[%s2 + $0x102c] sm:$0xf]
    %v1080 = vld [vmem:[%s2 + $0x1030] sm:$0xf]
    %v1081 = vld [vmem:[%s2 + $0x1034] sm:$0xf]
    %v1082 = vld [vmem:[%s2 + $0x1038] sm:$0xf]
    %v1083 = vld [vmem:[%s2 + $0x103c] sm:$0xf]
    %v1084 = vld [vmem:[%s2 + $0x1040] sm:$0xf]
    %v1085 = vld [vmem:[%s2 + $0x1044] sm:$0xf]
    %v1086 = vld [vmem:[%s2 + $0x1048] sm:$0xf]
    %v1087 = vld [vmem:[%s2 + $0x104c] sm:$0xf]
    %v1088 = vld [vmem:[%s2 + $0x1050] sm:$0xf]
    %v1089 = vld [vmem:[%s2 + $0x1054] sm:$0xf]
    %v1090 = vld [vmem:[%s2 + $0x1058] sm:$0xf]
    %v1091 = vld [vmem:[%s2 + $0x105c] sm:$0xf]
    %v1092 = vld [vmem:[%s2 + $0x1060] sm:$0xf]
    %v1093 = vld [vmem:[%s2 + $0x1064] sm:$0xf]
    %v1094 = vld [vmem:[%s2 + $0x1068] sm:$0xf]
    %v1095 = vld [vmem:[%s2 + $0x106c] sm:$0xf]
    %v1096 = vld [vmem:[%s2 + $0x1070] sm:$0xf]
    %v1097 = vld [vmem:[%s2 + $0x1074] sm:$0xf]
    %v1098 = vld [vmem:[%s2 + $0x1078] sm:$0xf]
    %v1099 = vld [vmem:[%s2 + $0x107c] sm:$0xf]
    %v1100 = vld [vmem:[%s2 + $0x1080] sm:$0xf]
    %v1101 = vld [vmem:[%s2 + $0x1084] sm:$0xf]
    %v1102 = vld [vmem:[%s2 + $0x1088] sm:$0xf]
    %v1103 = vld [vmem:[%s2 + $0x108c] sm:$0xf]
    %v1104 = vld [vmem:[%s2 + $0x1090] sm:$0xf]
    %v1105 = vld [vmem:[%s2 + $0x1094] sm:$0xf]
    %v1106 = vld [vmem:[%s2 + $0x1098] sm:$0xf]
    %v1107 = vld [vmem:[%s2 + $0x109c] sm:$0xf]
    %v1108 = vld [vmem:[%s2 + $0x10a0] sm:$0xf]
    %v1109 = vld [vmem:[%s2 + $0x10a4] sm:$0xf]
    %v1110 = vld [vmem:[%s2 + $0x10a8] sm:$0xf]
    %v1111 = vld [vmem:[%s2 + $0x10ac] sm:$0xf]
    %v1112 = vld [vmem:[%s2 + $0x10b0] sm:$0xf]
    %v1113 = vld [vmem:[%s2 + $0x10b4] sm:$0xf]
    %v1114 = vld [vmem:[%s2 + $0x10b8] sm:$0xf]
    %v1115 = vld [vmem:[%s2 + $0x10bc] sm:$0xf]
    %v1116 = vld [vmem:[%s2 + $0x10c0] sm:$0xf]
    %v1117 = vld [vmem:[%s2 + $0x10c4] sm:$0xf]
    %v1118 = vld [vmem:[%s2 + $0x10c8] sm:$0xf]
    %v1119 = vld [vmem:[%s2 + $0x10cc] sm:$0xf]
    %v1120 = vld [vmem:[%s2 + $0x10d0] sm:$0xf]
    %v1121 = vld [vmem:[%s2 + $0x10d4] sm:$0xf]
    %v1122 = vld [vmem:[%s2 + $0x10d8] sm:$0xf]
    %v1123 = vld [vmem:[%s2 + $0x10dc] sm:$0xf]
    %v1124 = vld [vmem:[%s2 + $0x10e0] sm:$0xf]
    %v1125 = vld [vmem:[%s2 + $0x10e4] sm:$0xf]
    %v1126 = vld [vmem:[%s2 + $0x10e8] sm:$0xf]
    %v1127 = vld [vmem:[%s2 + $0x10ec] sm:$0xf]
    %v1128 = vld [vmem:[%s2 + $0x10f0] sm:$0xf]
    %v1129 = vld [vmem:[%s2 + $0x10f4] sm:$0xf]
    %v1130 = vld [vmem:[%s2 + $0x10f8] sm:$0xf]
    %v1131 = vld [vmem:[%s2 + $0x10fc] sm:$0xf]
    %v1132 = vld [vmem:[%s2 + $0x1100] sm:$0xf]
    %v1133 = vld [vmem:[%s2 + $0x1104] sm:$0xf]
    %v1134 = vld [vmem:[%s2 + $0x1108] sm:$0xf]
    %v1135 = vld [vmem:[%s2 + $0x110c] sm:$0xf]
    %v1136 = vld [vmem:[%s2 + $0x1110] sm:$0xf]
    %v1137 = vld [vmem:[%s2 + $0x1114] sm:$0xf]
    %v1138 = vld [vmem:[%s2 + $0x1118] sm:$0xf]
    %v1139 = vld [vmem:[%s2 + $0x111c] sm:$0xf]
    %v1140 = vld [vmem:[%s2 + $0x1120] sm:$0xf]
    %v1141 = vld [vmem:[%s2 + $0x1124] sm:$0xf]
    %v1142 = vld [vmem:[%s2 + $0x1128] sm:$0xf]
    %v1143 = vld [vmem:[%s2 + $0x112c] sm:$0xf]
    %v1144 = vld [vmem:[%s2 + $0x1130] sm:$0xf]
    %v1145 = vld [vmem:[%s2 + $0x1134] sm:$0xf]
    %v1146 = vld [vmem:[%s2 + $0x1138] sm:$0xf]
    %v1147 = vld [vmem:[%s2 + $0x113c] sm:$0xf]
    %v1148 = vld [vmem:[%s2 + $0x1140] sm:$0xf]
    %v1149 = vld [vmem:[%s2 + $0x1144] sm:$0xf]
    %v1150 = vld [vmem:[%s2 + $0x1148] sm:$0xf]
    %v1151 = vld [vmem:[%s2 + $0x114c] sm:$0xf]
    %v1152 = vld [vmem:[%s2 + $0x1150] sm:$0xf]
    %v1153 = vld [vmem:[%s2 + $0x1154] sm:$0xf]
    %v1154 = vld [vmem:[%s2 + $0x1158] sm:$0xf]
    %v1155 = vld [vmem:[%s2 + $0x115c] sm:$0xf]
    %v1156 = vld [vmem:[%s2 + $0x1160] sm:$0xf]
    %v1157 = vld [vmem:[%s2 + $0x1164] sm:$0xf]
    %v1158 = vld [vmem:[%s2 + $0x1168] sm:$0xf]
    %v1159 = vld [vmem:[%s2 + $0x116c] sm:$0xf]
    %v1160 = vld [vmem:[%s2 + $0x1170] sm:$0xf]
    %v1161 = vld [vmem:[%s2 + $0x1174] sm:$0xf]
    %v1162 = vld [vmem:[%s2 + $0x1178] sm:$0xf]
    %v1163 = vld [vmem:[%s2 + $0x117c] sm:$0xf]
    %v1164 = vld [vmem:[%s2 + $0x1180] sm:$0xf]
    %v1165 = vld [vmem:[%s2 + $0x1184] sm:$0xf]
    %v1166 = vld [vmem:[%s2 + $0x1188] sm:$0xf]
    %v1167 = vld [vmem:[%s2 + $0x118c] sm:$0xf]
    %v1168 = vld [vmem:[%s2 + $0x1190] sm:$0xf]
    %v1169 = vld [vmem:[%s2 + $0x1194] sm:$0xf]
    %v1170 = vld [vmem:[%s2 + $0x1198] sm:$0xf]
    %v1171 = vld [vmem:[%s2 + $0x119c] sm:$0xf]
    %v1172 = vld [vmem:[%s2 + $0x11a0] sm:$0xf]
    %v1173 = vld [vmem:[%s2 + $0x11a4] sm:$0xf]
    %v1174 = vld [vmem:[%s2 + $0x11a8] sm:$0xf]
    %v1175 = vld [vmem:[%s2 + $0x11ac] sm:$0xf]
    %v1176 = vld [vmem:[%s2 + $0x11b0] sm:$0xf]
    %v1177 = vld [vmem:[%s2 + $0x11b4] sm:$0xf]
    %v1178 = vld [vmem:[%s2 + $0x11b8] sm:$0xf]
    %v1179 = vld [vmem:[%s2 + $0x11bc] sm:$0xf]
    %v1180 = vld [vmem:[%s2 + $0x11c0] sm:$0xf]
    %v1181 = vld [vmem:[%s2 + $0x11c4] sm:$0xf]
    %v1182 = vld [vmem:[%s2 + $0x11c8] sm:$0xf]
    %v1183 = vld [vmem:[%s2 + $0x11cc] sm:$0xf]
    %v1184 = vld [vmem:[%s2 + $0x11d0] sm:$0xf]
    %v1185 = vld [vmem:[%s2 + $0x11d4] sm:$0xf]
    %v1186 = vld [vmem:[%s2 + $0x11d8] sm:$0xf]
    %v1187 = vld [vmem:[%s2 + $0x11dc] sm:$0xf]
    %v1188 = vld [vmem:[%s2 + $0x11e0] sm:$0xf]
    %v1189 = vld [vmem:[%s2 + $0x11e4] sm:$0xf]
    %v1190 = vld [vmem:[%s2 + $0x11e8] sm:$0xf]
    %v1191 = vld [vmem:[%s2 + $0x11ec] sm:$0xf]
    %v1192 = vld [vmem:[%s2 + $0x11f0] sm:$0xf]
    %v1193 = vld [vmem:[%s2 + $0x11f4] sm:$0xf]
    %v1194 = vld [vmem:[%s2 + $0x11f8] sm:$0xf]
    %v1195 = vld [vmem:[%s2 + $0x11fc] sm:$0xf]
    %v1196 = vld [vmem:[%s2 + $0x1200] sm:$0xf]
    %v1197 = vld [vmem:[%s2 + $0x1204] sm:$0xf]
    %v1198 = vld [vmem:[%s2 + $0x1208] sm:$0xf]
    %v1199 = vld [vmem:[%s2 + $0x120c] sm:$0xf]
    %v1200 = vld [vmem:[%s2 + $0x1210] sm:$0xf]
    %v1201 = vld [vmem:[%s2 + $0x1214] sm:$0xf]
    %v1202 = vld [vmem:[%s2 + $0x1218] sm:$0xf]
    %v1203 = vld [vmem:[%s2 + $0x121c] sm:$0xf]
    %v1204 = vld [vmem:[%s2 + $0x1220] sm:$0xf]
    %v1205 = vld [vmem:[%s2 + $0x1224] sm:$0xf]
    %v1206 = vld [vmem:[%s2 + $0x1228] sm:$0xf]
    %v1207 = vld [vmem:[%s2 + $0x122c] sm:$0xf]
    %v1208 = vld [vmem:[%s2 + $0x1230] sm:$0xf]
    %v1209 = vld [vmem:[%s2 + $0x1234] sm:$0xf]
    %v1210 = vld [vmem:[%s2 + $0x1238] sm:$0xf]
    %v1211 = vld [vmem:[%s2 + $0x123c] sm:$0xf]
    %v1212 = vld [vmem:[%s2 + $0x1240] sm:$0xf]
    %v1213 = vld [vmem:[%s2 + $0x1244] sm:$0xf]
    %v1214 = vld [vmem:[%s2 + $0x1248] sm:$0xf]
    %v1215 = vld [vmem:[%s2 + $0x124c] sm:$0xf]
    %v1216 = vld [vmem:[%s2 + $0x1250] sm:$0xf]
    %v1217 = vld [vmem:[%s2 + $0x1254] sm:$0xf]
    %v1218 = vld [vmem:[%s2 + $0x1258] sm:$0xf]
    %v1219 = vld [vmem:[%s2 + $0x125c] sm:$0xf]
    %v1220 = vld [vmem:[%s2 + $0x1260] sm:$0xf]
    %v1221 = vld [vmem:[%s2 + $0x1264] sm:$0xf]
    %v1222 = vld [vmem:[%s2 + $0x1268] sm:$0xf]
    %v1223 = vld [vmem:[%s2 + $0x126c] sm:$0xf]
    %v1224 = vld [vmem:[%s2 + $0x1270] sm:$0xf]
    %v1225 = vld [vmem:[%s2 + $0x1274] sm:$0xf]
    %v1226 = vld [vmem:[%s2 + $0x1278] sm:$0xf]
    %v1227 = vld [vmem:[%s2 + $0x127c] sm:$0xf]
    %v1228 = vld [vmem:[%s2 + $0x1280] sm:$0xf]
    %v1229 = vld [vmem:[%s2 + $0x1284] sm:$0xf]
    %v1230 = vld [vmem:[%s2 + $0x1288] sm:$0xf]
    %v1231 = vld [vmem:[%s2 + $0x128c] sm:$0xf]
    %v1232 = vld [vmem:[%s2 + $0x1290] sm:$0xf]
    %v1233 = vld [vmem:[%s2 + $0x1294] sm:$0xf]
    %v1234 = vld [vmem:[%s2 + $0x1298] sm:$0xf]
    %v1235 = vld [vmem:[%s2 + $0x129c] sm:$0xf]
    %v1236 = vld [vmem:[%s2 + $0x12a0] sm:$0xf]
    %v1237 = vld [vmem:[%s2 + $0x12a4] sm:$0xf]
    %v1238 = vld [vmem:[%s2 + $0x12a8] sm:$0xf]
    %v1239 = vld [vmem:[%s2 + $0x12ac] sm:$0xf]
    %v1240 = vld [vmem:[%s2 + $0x12b0] sm:$0xf]
    %v1241 = vld [vmem:[%s2 + $0x12b4] sm:$0xf]
    %v1242 = vld [vmem:[%s2 + $0x12b8] sm:$0xf]
    %v1243 = vld [vmem:[%s2 + $0x12bc] sm:$0xf]
    %v1244 = vld [vmem:[%s1] sm:$0x3]
    %v1245 = vld [vmem:[%s3] sm:$0x1]
    %1247 = vset.pattern.permute.xlu0 0
    %1248 = vperm.xlu0 %1247, %v1244
    %v1249 = vpop.permute.xlu0 %1248
    %v1252 = vlaneseq
    %v1253 = vshrl.u32 %v1252, 7
    %v1254 = vsub.s32 0, %v1253
    %v1255 = vrot.slane %v1245, %v1254
    %v1257 = vmul.f32 %v1249, %v1255
    %v1268 = vcombine.high %v34, %v34
    %v1270 = vunpack.c.l.s4 1966171168
    %v1271 = vunpack.c.0.s8 %v1270
    %v1272 = vlaneseq
    %v1273 = vshrl.u32 %v1272, 7
    %v1274 = vsub.s32 %v1271, %v1273
    %v1275 = vrot.slane %v34, %v1274
    %v1277 = vunpack.c.l.s4 1966171168
    %v1278 = vunpack.c.0.s8 %v1277
    %v1279 = vlaneseq
    %v1280 = vshrl.u32 %v1279, 7
    %v1281 = vsub.s32 %v1278, %v1280
    %v1282 = vrot.slane %v1268, %v1281
    %v1283 = vcombine.high %v1275, %v1275
    %v1284 = vcombine.high %v1282, %v1282
    %v1286 = vunpack.c.l.s4 1966171168
    %v1287 = vunpack.c.0.s8 %v1286
    %v1288 = vlaneseq
    %v1289 = vshrl.u32 %v1288, 7
    %v1290 = vsub.s32 %v1287, %v1289
    %v1291 = vrot.slane %v1275, %v1290
    %v1293 = vunpack.c.l.s4 1966171168
    %v1294 = vunpack.c.0.s8 %v1293
    %v1295 = vlaneseq
    %v1296 = vshrl.u32 %v1295, 7
    %v1297 = vsub.s32 %v1294, %v1296
    %v1298 = vrot.slane %v1282, %v1297
    %v1300 = vunpack.c.l.s4 1966171168
    %v1301 = vunpack.c.0.s8 %v1300
    %v1302 = vlaneseq
    %v1303 = vshrl.u32 %v1302, 7
    %v1304 = vsub.s32 %v1301, %v1303
    %v1305 = vrot.slane %v1283, %v1304
    %v1307 = vunpack.c.l.s4 1966171168
    %v1308 = vunpack.c.0.s8 %v1307
    %v1309 = vlaneseq
    %v1310 = vshrl.u32 %v1309, 7
    %v1311 = vsub.s32 %v1308, %v1310
    %v1312 = vrot.slane %v1284, %v1311
    %v1313 = vcombine.high %v1291, %v1291
    %v1314 = vcombine.high %v1298, %v1298
    %v1315 = vcombine.high %v1305, %v1305
    %v1316 = vcombine.high %v1312, %v1312
    %v1317 = vcombine.high %v35, %v35
    %v1319 = vunpack.c.l.s4 1966171168
    %v1320 = vunpack.c.0.s8 %v1319
    %v1321 = vlaneseq
    %v1322 = vshrl.u32 %v1321, 7
    %v1323 = vsub.s32 %v1320, %v1322
    %v1324 = vrot.slane %v35, %v1323
    %v1326 = vunpack.c.l.s4 1966171168
    %v1327 = vunpack.c.0.s8 %v1326
    %v1328 = vlaneseq
    %v1329 = vshrl.u32 %v1328, 7
    %v1330 = vsub.s32 %v1327, %v1329
    %v1331 = vrot.slane %v1317, %v1330
    %v1332 = vcombine.high %v1324, %v1324
    %v1333 = vcombine.high %v1331, %v1331
    %v1335 = vunpack.c.l.s4 1966171168
    %v1336 = vunpack.c.0.s8 %v1335
    %v1337 = vlaneseq
    %v1338 = vshrl.u32 %v1337, 7
    %v1339 = vsub.s32 %v1336, %v1338
    %v1340 = vrot.slane %v1324, %v1339
    %v1342 = vunpack.c.l.s4 1966171168
    %v1343 = vunpack.c.0.s8 %v1342
    %v1344 = vlaneseq
    %v1345 = vshrl.u32 %v1344, 7
    %v1346 = vsub.s32 %v1343, %v1345
    %v1347 = vrot.slane %v1331, %v1346
    %v1349 = vunpack.c.l.s4 1966171168
    %v1350 = vunpack.c.0.s8 %v1349
    %v1351 = vlaneseq
    %v1352 = vshrl.u32 %v1351, 7
    %v1353 = vsub.s32 %v1350, %v1352
    %v1354 = vrot.slane %v1332, %v1353
    %v1356 = vunpack.c.l.s4 1966171168
    %v1357 = vunpack.c.0.s8 %v1356
    %v1358 = vlaneseq
    %v1359 = vshrl.u32 %v1358, 7
    %v1360 = vsub.s32 %v1357, %v1359
    %v1361 = vrot.slane %v1333, %v1360
    %v1362 = vcombine.high %v1340, %v1340
    %v1363 = vcombine.high %v1347, %v1347
    %v1364 = vcombine.high %v1354, %v1354
    %v1365 = vcombine.high %v1361, %v1361
    %v1366 = vcombine.high %v36, %v36
    %v1368 = vunpack.c.l.s4 1966171168
    %v1369 = vunpack.c.0.s8 %v1368
    %v1370 = vlaneseq
    %v1371 = vshrl.u32 %v1370, 7
    %v1372 = vsub.s32 %v1369, %v1371
    %v1373 = vrot.slane %v36, %v1372
    %v1375 = vunpack.c.l.s4 1966171168
    %v1376 = vunpack.c.0.s8 %v1375
    %v1377 = vlaneseq
    %v1378 = vshrl.u32 %v1377, 7
    %v1379 = vsub.s32 %v1376, %v1378
    %v1380 = vrot.slane %v1366, %v1379
    %v1381 = vcombine.high %v1373, %v1373
    %v1382 = vcombine.high %v1380, %v1380
    %v1384 = vunpack.c.l.s4 1966171168
    %v1385 = vunpack.c.0.s8 %v1384
    %v1386 = vlaneseq
    %v1387 = vshrl.u32 %v1386, 7
    %v1388 = vsub.s32 %v1385, %v1387
    %v1389 = vrot.slane %v1373, %v1388
    %v1391 = vunpack.c.l.s4 1966171168
    %v1392 = vunpack.c.0.s8 %v1391
    %v1393 = vlaneseq
    %v1394 = vshrl.u32 %v1393, 7
    %v1395 = vsub.s32 %v1392, %v1394
    %v1396 = vrot.slane %v1380, %v1395
    %v1398 = vunpack.c.l.s4 1966171168
    %v1399 = vunpack.c.0.s8 %v1398
    %v1400 = vlaneseq
    %v1401 = vshrl.u32 %v1400, 7
    %v1402 = vsub.s32 %v1399, %v1401
    %v1403 = vrot.slane %v1381, %v1402
    %v1405 = vunpack.c.l.s4 1966171168
    %v1406 = vunpack.c.0.s8 %v1405
    %v1407 = vlaneseq
    %v1408 = vshrl.u32 %v1407, 7
    %v1409 = vsub.s32 %v1406, %v1408
    %v1410 = vrot.slane %v1382, %v1409
    %v1411 = vcombine.high %v1389, %v1389
    %v1412 = vcombine.high %v1396, %v1396
    %v1413 = vcombine.high %v1403, %v1403
    %v1414 = vcombine.high %v1410, %v1410
    %v1415 = vcombine.high %v37, %v37
    %v1417 = vunpack.c.l.s4 1966171168
    %v1418 = vunpack.c.0.s8 %v1417
    %v1419 = vlaneseq
    %v1420 = vshrl.u32 %v1419, 7
    %v1421 = vsub.s32 %v1418, %v1420
    %v1422 = vrot.slane %v37, %v1421
    %v1424 = vunpack.c.l.s4 1966171168
    %v1425 = vunpack.c.0.s8 %v1424
    %v1426 = vlaneseq
    %v1427 = vshrl.u32 %v1426, 7
    %v1428 = vsub.s32 %v1425, %v1427
    %v1429 = vrot.slane %v1415, %v1428
    %v1430 = vcombine.high %v1422, %v1422
    %v1431 = vcombine.high %v1429, %v1429
    %v1433 = vunpack.c.l.s4 1966171168
    %v1434 = vunpack.c.0.s8 %v1433
    %v1435 = vlaneseq
    %v1436 = vshrl.u32 %v1435, 7
    %v1437 = vsub.s32 %v1434, %v1436
    %v1438 = vrot.slane %v1422, %v1437
    %v1440 = vunpack.c.l.s4 1966171168
    %v1441 = vunpack.c.0.s8 %v1440
    %v1442 = vlaneseq
    %v1443 = vshrl.u32 %v1442, 7
    %v1444 = vsub.s32 %v1441, %v1443
    %v1445 = vrot.slane %v1429, %v1444
    %v1447 = vunpack.c.l.s4 1966171168
    %v1448 = vunpack.c.0.s8 %v1447
    %v1449 = vlaneseq
    %v1450 = vshrl.u32 %v1449, 7
    %v1451 = vsub.s32 %v1448, %v1450
    %v1452 = vrot.slane %v1430, %v1451
    %v1454 = vunpack.c.l.s4 1966171168
    %v1455 = vunpack.c.0.s8 %v1454
    %v1456 = vlaneseq
    %v1457 = vshrl.u32 %v1456, 7
    %v1458 = vsub.s32 %v1455, %v1457
    %v1459 = vrot.slane %v1431, %v1458
    %v1460 = vcombine.high %v1438, %v1438
    %v1461 = vcombine.high %v1445, %v1445
    %v1462 = vcombine.high %v1452, %v1452
    %v1463 = vcombine.high %v1459, %v1459
    %v1464 = vcombine.high %v38, %v38
    %v1466 = vunpack.c.l.s4 1966171168
    %v1467 = vunpack.c.0.s8 %v1466
    %v1468 = vlaneseq
    %v1469 = vshrl.u32 %v1468, 7
    %v1470 = vsub.s32 %v1467, %v1469
    %v1471 = vrot.slane %v38, %v1470
    %v1473 = vunpack.c.l.s4 1966171168
    %v1474 = vunpack.c.0.s8 %v1473
    %v1475 = vlaneseq
    %v1476 = vshrl.u32 %v1475, 7
    %v1477 = vsub.s32 %v1474, %v1476
    %v1478 = vrot.slane %v1464, %v1477
    %v1479 = vcombine.high %v1471, %v1471
    %v1480 = vcombine.high %v1478, %v1478
    %v1482 = vunpack.c.l.s4 1966171168
    %v1483 = vunpack.c.0.s8 %v1482
    %v1484 = vlaneseq
    %v1485 = vshrl.u32 %v1484, 7
    %v1486 = vsub.s32 %v1483, %v1485
    %v1487 = vrot.slane %v1471, %v1486
    %v1489 = vunpack.c.l.s4 1966171168
    %v1490 = vunpack.c.0.s8 %v1489
    %v1491 = vlaneseq
    %v1492 = vshrl.u32 %v1491, 7
    %v1493 = vsub.s32 %v1490, %v1492
    %v1494 = vrot.slane %v1478, %v1493
    %v1496 = vunpack.c.l.s4 1966171168
    %v1497 = vunpack.c.0.s8 %v1496
    %v1498 = vlaneseq
    %v1499 = vshrl.u32 %v1498, 7
    %v1500 = vsub.s32 %v1497, %v1499
    %v1501 = vrot.slane %v1479, %v1500
    %v1503 = vunpack.c.l.s4 1966171168
    %v1504 = vunpack.c.0.s8 %v1503
    %v1505 = vlaneseq
    %v1506 = vshrl.u32 %v1505, 7
    %v1507 = vsub.s32 %v1504, %v1506
    %v1508 = vrot.slane %v1480, %v1507
    %v1509 = vcombine.high %v1487, %v1487
    %v1510 = vcombine.high %v1494, %v1494
    %v1511 = vcombine.high %v1501, %v1501
    %v1512 = vcombine.high %v1508, %v1508
    %v1513 = vcombine.high %v39, %v39
    %v1515 = vunpack.c.l.s4 1966171168
    %v1516 = vunpack.c.0.s8 %v1515
    %v1517 = vlaneseq
    %v1518 = vshrl.u32 %v1517, 7
    %v1519 = vsub.s32 %v1516, %v1518
    %v1520 = vrot.slane %v39, %v1519
    %v1522 = vunpack.c.l.s4 1966171168
    %v1523 = vunpack.c.0.s8 %v1522
    %v1524 = vlaneseq
    %v1525 = vshrl.u32 %v1524, 7
    %v1526 = vsub.s32 %v1523, %v1525
    %v1527 = vrot.slane %v1513, %v1526
    %v1528 = vcombine.high %v1520, %v1520
    %v1529 = vcombine.high %v1527, %v1527
    %v1531 = vunpack.c.l.s4 1966171168
    %v1532 = vunpack.c.0.s8 %v1531
    %v1533 = vlaneseq
    %v1534 = vshrl.u32 %v1533, 7
    %v1535 = vsub.s32 %v1532, %v1534
    %v1536 = vrot.slane %v1520, %v1535
    %v1538 = vunpack.c.l.s4 1966171168
    %v1539 = vunpack.c.0.s8 %v1538
    %v1540 = vlaneseq
    %v1541 = vshrl.u32 %v1540, 7
    %v1542 = vsub.s32 %v1539, %v1541
    %v1543 = vrot.slane %v1527, %v1542
    %v1545 = vunpack.c.l.s4 1966171168
    %v1546 = vunpack.c.0.s8 %v1545
    %v1547 = vlaneseq
    %v1548 = vshrl.u32 %v1547, 7
    %v1549 = vsub.s32 %v1546, %v1548
    %v1550 = vrot.slane %v1528, %v1549
    %v1552 = vunpack.c.l.s4 1966171168
    %v1553 = vunpack.c.0.s8 %v1552
    %v1554 = vlaneseq
    %v1555 = vshrl.u32 %v1554, 7
    %v1556 = vsub.s32 %v1553, %v1555
    %v1557 = vrot.slane %v1529, %v1556
    %v1558 = vcombine.high %v1536, %v1536
    %v1559 = vcombine.high %v1543, %v1543
    %v1560 = vcombine.high %v1550, %v1550
    %v1561 = vcombine.high %v1557, %v1557
    %v1562 = vcombine.high %v40, %v40
    %v1564 = vunpack.c.l.s4 1966171168
    %v1565 = vunpack.c.0.s8 %v1564
    %v1566 = vlaneseq
    %v1567 = vshrl.u32 %v1566, 7
    %v1568 = vsub.s32 %v1565, %v1567
    %v1569 = vrot.slane %v40, %v1568
    %v1571 = vunpack.c.l.s4 1966171168
    %v1572 = vunpack.c.0.s8 %v1571
    %v1573 = vlaneseq
    %v1574 = vshrl.u32 %v1573, 7
    %v1575 = vsub.s32 %v1572, %v1574
    %v1576 = vrot.slane %v1562, %v1575
    %v1577 = vcombine.high %v1569, %v1569
    %v1578 = vcombine.high %v1576, %v1576
    %v1580 = vunpack.c.l.s4 1966171168
    %v1581 = vunpack.c.0.s8 %v1580
    %v1582 = vlaneseq
    %v1583 = vshrl.u32 %v1582, 7
    %v1584 = vsub.s32 %v1581, %v1583
    %v1585 = vrot.slane %v1569, %v1584
    %v1587 = vunpack.c.l.s4 1966171168
    %v1588 = vunpack.c.0.s8 %v1587
    %v1589 = vlaneseq
    %v1590 = vshrl.u32 %v1589, 7
    %v1591 = vsub.s32 %v1588, %v1590
    %v1592 = vrot.slane %v1576, %v1591
    %v1594 = vunpack.c.l.s4 1966171168
    %v1595 = vunpack.c.0.s8 %v1594
    %v1596 = vlaneseq
    %v1597 = vshrl.u32 %v1596, 7
    %v1598 = vsub.s32 %v1595, %v1597
    %v1599 = vrot.slane %v1577, %v1598
    %v1601 = vunpack.c.l.s4 1966171168
    %v1602 = vunpack.c.0.s8 %v1601
    %v1603 = vlaneseq
    %v1604 = vshrl.u32 %v1603, 7
    %v1605 = vsub.s32 %v1602, %v1604
    %v1606 = vrot.slane %v1578, %v1605
    %v1607 = vcombine.high %v1585, %v1585
    %v1608 = vcombine.high %v1592, %v1592
    %v1609 = vcombine.high %v1599, %v1599
    %v1610 = vcombine.high %v1606, %v1606
    %v1611 = vcombine.high %v41, %v41
    %v1613 = vunpack.c.l.s4 1966171168
    %v1614 = vunpack.c.0.s8 %v1613
    %v1615 = vlaneseq
    %v1616 = vshrl.u32 %v1615, 7
    %v1617 = vsub.s32 %v1614, %v1616
    %v1618 = vrot.slane %v41, %v1617
    %v1620 = vunpack.c.l.s4 1966171168
    %v1621 = vunpack.c.0.s8 %v1620
    %v1622 = vlaneseq
    %v1623 = vshrl.u32 %v1622, 7
    %v1624 = vsub.s32 %v1621, %v1623
    %v1625 = vrot.slane %v1611, %v1624
    %v1626 = vcombine.high %v1618, %v1618
    %v1627 = vcombine.high %v1625, %v1625
    %v1629 = vunpack.c.l.s4 1966171168
    %v1630 = vunpack.c.0.s8 %v1629
    %v1631 = vlaneseq
    %v1632 = vshrl.u32 %v1631, 7
    %v1633 = vsub.s32 %v1630, %v1632
    %v1634 = vrot.slane %v1618, %v1633
    %v1636 = vunpack.c.l.s4 1966171168
    %v1637 = vunpack.c.0.s8 %v1636
    %v1638 = vlaneseq
    %v1639 = vshrl.u32 %v1638, 7
    %v1640 = vsub.s32 %v1637, %v1639
    %v1641 = vrot.slane %v1625, %v1640
    %v1643 = vunpack.c.l.s4 1966171168
    %v1644 = vunpack.c.0.s8 %v1643
    %v1645 = vlaneseq
    %v1646 = vshrl.u32 %v1645, 7
    %v1647 = vsub.s32 %v1644, %v1646
    %v1648 = vrot.slane %v1626, %v1647
    %v1650 = vunpack.c.l.s4 1966171168
    %v1651 = vunpack.c.0.s8 %v1650
    %v1652 = vlaneseq
    %v1653 = vshrl.u32 %v1652, 7
    %v1654 = vsub.s32 %v1651, %v1653
    %v1655 = vrot.slane %v1627, %v1654
    %v1656 = vcombine.high %v1634, %v1634
    %v1657 = vcombine.high %v1641, %v1641
    %v1658 = vcombine.high %v1648, %v1648
    %v1659 = vcombine.high %v1655, %v1655
    %v1660 = vcombine.high %v42, %v42
    %v1662 = vunpack.c.l.s4 1966171168
    %v1663 = vunpack.c.0.s8 %v1662
    %v1664 = vlaneseq
    %v1665 = vshrl.u32 %v1664, 7
    %v1666 = vsub.s32 %v1663, %v1665
    %v1667 = vrot.slane %v42, %v1666
    %v1669 = vunpack.c.l.s4 1966171168
    %v1670 = vunpack.c.0.s8 %v1669
    %v1671 = vlaneseq
    %v1672 = vshrl.u32 %v1671, 7
    %v1673 = vsub.s32 %v1670, %v1672
    %v1674 = vrot.slane %v1660, %v1673
    %v1675 = vcombine.high %v1667, %v1667
    %v1676 = vcombine.high %v1674, %v1674
    %v1678 = vunpack.c.l.s4 1966171168
    %v1679 = vunpack.c.0.s8 %v1678
    %v1680 = vlaneseq
    %v1681 = vshrl.u32 %v1680, 7
    %v1682 = vsub.s32 %v1679, %v1681
    %v1683 = vrot.slane %v1667, %v1682
    %v1685 = vunpack.c.l.s4 1966171168
    %v1686 = vunpack.c.0.s8 %v1685
    %v1687 = vlaneseq
    %v1688 = vshrl.u32 %v1687, 7
    %v1689 = vsub.s32 %v1686, %v1688
    %v1690 = vrot.slane %v1674, %v1689
    %v1692 = vunpack.c.l.s4 1966171168
    %v1693 = vunpack.c.0.s8 %v1692
    %v1694 = vlaneseq
    %v1695 = vshrl.u32 %v1694, 7
    %v1696 = vsub.s32 %v1693, %v1695
    %v1697 = vrot.slane %v1675, %v1696
    %v1699 = vunpack.c.l.s4 1966171168
    %v1700 = vunpack.c.0.s8 %v1699
    %v1701 = vlaneseq
    %v1702 = vshrl.u32 %v1701, 7
    %v1703 = vsub.s32 %v1700, %v1702
    %v1704 = vrot.slane %v1676, %v1703
    %v1705 = vcombine.high %v1683, %v1683
    %v1706 = vcombine.high %v1690, %v1690
    %v1707 = vcombine.high %v1697, %v1697
    %v1708 = vcombine.high %v1704, %v1704
    %v1710 = vunpack.c.l.s4 1966171168
    %v1711 = vunpack.c.0.s8 %v1710
    %v1712 = vlaneseq
    %v1713 = vshrl.u32 %v1712, 7
    %v1714 = vsub.s32 %v1711, %v1713
    %v1715 = vrot.slane %v43, %v1714
    %v1716 = vcombine.high %v1715, %v1715
    %v1718 = vunpack.c.l.s4 1966171168
    %v1719 = vunpack.c.0.s8 %v1718
    %v1720 = vlaneseq
    %v1721 = vshrl.u32 %v1720, 7
    %v1722 = vsub.s32 %v1719, %v1721
    %v1723 = vrot.slane %v1715, %v1722
    %v1725 = vunpack.c.l.s4 1966171168
    %v1726 = vunpack.c.0.s8 %v1725
    %v1727 = vlaneseq
    %v1728 = vshrl.u32 %v1727, 7
    %v1729 = vsub.s32 %v1726, %v1728
    %v1730 = vrot.slane %v1716, %v1729
    %v1731 = vcombine.high %v1723, %v1723
    %v3007 = vunpack.c.l.b16 %v44
    %v3008 = vunpack.c.l.b16 %v45
    %v3009 = vunpack.c.l.b16 %v46
    %v3010 = vunpack.c.l.b16 %v47
    %v3011 = vunpack.c.l.b16 %v48
    %v3012 = vunpack.c.l.b16 %v49
    %v3013 = vunpack.c.l.b16 %v50
    %v3014 = vunpack.c.l.b16 %v51
    %v3015 = vunpack.c.l.b16 %v52
    %v3016 = vunpack.c.l.b16 %v53
    %v3017 = vunpack.c.l.b16 %v54
    %v3018 = vunpack.c.l.b16 %v55
    %v3019 = vunpack.c.l.b16 %v56
    %v3020 = vunpack.c.l.b16 %v57
    %v3021 = vunpack.c.l.b16 %v58
    %v3022 = vunpack.c.l.b16 %v59
    %v3023 = vunpack.c.l.b16 %v60
    %v3024 = vunpack.c.l.b16 %v61
    %v3025 = vunpack.c.l.b16 %v62
    %v3026 = vunpack.c.l.b16 %v63
    %v3027 = vunpack.c.l.b16 %v64
    %v3028 = vunpack.c.l.b16 %v65
    %v3029 = vunpack.c.l.b16 %v66
    %v3030 = vunpack.c.l.b16 %v67
    %v3031 = vunpack.c.l.b16 %v68
    %v3032 = vunpack.c.l.b16 %v69
    %v3033 = vunpack.c.l.b16 %v70
    %v3034 = vunpack.c.l.b16 %v71
    %v3035 = vunpack.c.l.b16 %v72
    %v3036 = vunpack.c.l.b16 %v73
    %v3037 = vunpack.c.l.b16 %v74
    %v3038 = vunpack.c.l.b16 %v75
    %v3039 = vunpack.c.l.b16 %v76
    %v3040 = vunpack.c.l.b16 %v77
    %v3041 = vunpack.c.l.b16 %v78
    %v3042 = vunpack.c.l.b16 %v79
    %v3043 = vunpack.c.l.b16 %v80
    %v3044 = vunpack.c.l.b16 %v81
    %v3045 = vunpack.c.l.b16 %v82
    %v3046 = vunpack.c.l.b16 %v83
    %v3047 = vunpack.c.l.b16 %v84
    %v3048 = vunpack.c.l.b16 %v85
    %v3049 = vunpack.c.l.b16 %v86
    %v3050 = vunpack.c.l.b16 %v87
    %v3051 = vunpack.c.l.b16 %v88
    %v3052 = vunpack.c.l.b16 %v89
    %v3053 = vunpack.c.l.b16 %v90
    %v3054 = vunpack.c.l.b16 %v91
    %v3055 = vunpack.c.l.b16 %v92
    %v3056 = vunpack.c.l.b16 %v93
    %v3057 = vunpack.c.l.b16 %v94
    %v3058 = vunpack.c.l.b16 %v95
    %v3059 = vunpack.c.l.b16 %v96
    %v3060 = vunpack.c.l.b16 %v97
    %v3061 = vunpack.c.l.b16 %v98
    %v3062 = vunpack.c.l.b16 %v99
    %v3063 = vunpack.c.l.b16 %v100
    %v3064 = vunpack.c.l.b16 %v101
    %v3065 = vunpack.c.l.b16 %v102
    %v3066 = vunpack.c.l.b16 %v103
    %v3067 = vunpack.c.l.b16 %v104
    %v3068 = vunpack.c.l.b16 %v105
    %v3069 = vunpack.c.l.b16 %v106
    %v3070 = vunpack.c.l.b16 %v107
    %v3071 = vunpack.c.l.b16 %v108
    %v3072 = vunpack.c.l.b16 %v109
    %v3073 = vunpack.c.l.b16 %v110
    %v3074 = vunpack.c.l.b16 %v111
    %v3075 = vunpack.c.l.b16 %v112
    %v3076 = vunpack.c.l.b16 %v113
    %v3077 = vunpack.c.l.b16 %v114
    %v3078 = vunpack.c.l.b16 %v115
    %v3079 = vunpack.c.l.b16 %v116
    %v3080 = vunpack.c.l.b16 %v117
    %v3081 = vunpack.c.l.b16 %v118
    %v3082 = vunpack.c.l.b16 %v119
    %v3083 = vunpack.c.l.b16 %v120
    %v3084 = vunpack.c.l.b16 %v121
    %v3085 = vunpack.c.l.b16 %v122
    %v3086 = vunpack.c.l.b16 %v123
    %v3087 = vunpack.c.l.b16 %v124
    %v3088 = vunpack.c.l.b16 %v125
    %v3089 = vunpack.c.l.b16 %v126
    %v3090 = vunpack.c.l.b16 %v127
    %v3091 = vunpack.c.l.b16 %v128
    %v3092 = vunpack.c.l.b16 %v129
    %v3093 = vunpack.c.l.b16 %v130
    %v3094 = vunpack.c.l.b16 %v131
    %v3095 = vunpack.c.l.b16 %v132
    %v3096 = vunpack.c.l.b16 %v133
    %v3097 = vunpack.c.l.b16 %v134
    %v3098 = vunpack.c.l.b16 %v135
    %v3099 = vunpack.c.l.b16 %v136
    %v3100 = vunpack.c.l.b16 %v137
    %v3101 = vunpack.c.l.b16 %v138
    %v3102 = vunpack.c.l.b16 %v139
    %v3103 = vunpack.c.l.b16 %v140
    %v3104 = vunpack.c.l.b16 %v141
    %v3105 = vunpack.c.l.b16 %v142
    %v3106 = vunpack.c.l.b16 %v143
    %v3107 = vunpack.c.l.b16 %v144
    %v3108 = vunpack.c.l.b16 %v145
    %v3109 = vunpack.c.l.b16 %v146
    %v3110 = vunpack.c.l.b16 %v147
    %v3111 = vunpack.c.l.b16 %v148
    %v3112 = vunpack.c.l.b16 %v149
    %v3113 = vunpack.c.l.b16 %v150
    %v3114 = vunpack.c.l.b16 %v151
    %v3115 = vunpack.c.l.b16 %v152
    %v3116 = vunpack.c.l.b16 %v153
    %v3117 = vunpack.c.l.b16 %v154
    %v3118 = vunpack.c.l.b16 %v155
    %v3119 = vunpack.c.l.b16 %v156
    %v3120 = vunpack.c.l.b16 %v157
    %v3121 = vunpack.c.l.b16 %v158
    %v3122 = vunpack.c.l.b16 %v159
    %v3123 = vunpack.c.l.b16 %v160
    %v3124 = vunpack.c.l.b16 %v161
    %v3125 = vunpack.c.l.b16 %v162
    %v3126 = vunpack.c.l.b16 %v163
    %v3127 = vunpack.c.l.b16 %v164
    %v3128 = vunpack.c.l.b16 %v165
    %v3129 = vunpack.c.l.b16 %v166
    %v3130 = vunpack.c.l.b16 %v167
    %v3131 = vunpack.c.l.b16 %v168
    %v3132 = vunpack.c.l.b16 %v169
    %v3133 = vunpack.c.l.b16 %v170
    %v3134 = vunpack.c.l.b16 %v171
    %v3135 = vunpack.c.l.b16 %v172
    %v3136 = vunpack.c.l.b16 %v173
    %v3137 = vunpack.c.l.b16 %v174
    %v3138 = vunpack.c.l.b16 %v175
    %v3139 = vunpack.c.l.b16 %v176
    %v3140 = vunpack.c.l.b16 %v177
    %v3141 = vunpack.c.l.b16 %v178
    %v3142 = vunpack.c.l.b16 %v179
    %v3143 = vunpack.c.l.b16 %v180
    %v3144 = vunpack.c.l.b16 %v181
    %v3145 = vunpack.c.l.b16 %v182
    %v3146 = vunpack.c.l.b16 %v183
    %v3147 = vunpack.c.l.b16 %v184
    %v3148 = vunpack.c.l.b16 %v185
    %v3149 = vunpack.c.l.b16 %v186
    %v3150 = vunpack.c.l.b16 %v187
    %v3151 = vunpack.c.l.b16 %v188
    %v3152 = vunpack.c.l.b16 %v189
    %v3153 = vunpack.c.l.b16 %v190
    %v3154 = vunpack.c.l.b16 %v191
    %v3155 = vunpack.c.l.b16 %v192
    %v3156 = vunpack.c.l.b16 %v193
    %v3157 = vunpack.c.l.b16 %v194
    %v3158 = vunpack.c.l.b16 %v195
    %v3159 = vunpack.c.l.b16 %v196
    %v3160 = vunpack.c.l.b16 %v197
    %v3161 = vunpack.c.l.b16 %v198
    %v3162 = vunpack.c.l.b16 %v199
    %v3163 = vunpack.c.l.b16 %v200
    %v3164 = vunpack.c.l.b16 %v201
    %v3165 = vunpack.c.l.b16 %v202
    %v3166 = vunpack.c.l.b16 %v203
    %v3167 = vunpack.c.l.b16 %v204
    %v3168 = vunpack.c.l.b16 %v205
    %v3169 = vunpack.c.l.b16 %v206
    %v3170 = vunpack.c.l.b16 %v207
    %v3171 = vunpack.c.l.b16 %v208
    %v3172 = vunpack.c.l.b16 %v209
    %v3173 = vunpack.c.l.b16 %v210
    %v3174 = vunpack.c.l.b16 %v211
    %v3175 = vunpack.c.l.b16 %v212
    %v3176 = vunpack.c.l.b16 %v213
    %v3177 = vunpack.c.l.b16 %v214
    %v3178 = vunpack.c.l.b16 %v215
    %v3179 = vunpack.c.l.b16 %v216
    %v3180 = vunpack.c.l.b16 %v217
    %v3181 = vunpack.c.l.b16 %v218
    %v3182 = vunpack.c.l.b16 %v219
    %v3183 = vunpack.c.l.b16 %v220
    %v3184 = vunpack.c.l.b16 %v221
    %v3185 = vunpack.c.l.b16 %v222
    %v3186 = vunpack.c.l.b16 %v223
    %v3187 = vunpack.c.l.b16 %v224
    %v3188 = vunpack.c.l.b16 %v225
    %v3189 = vunpack.c.l.b16 %v226
    %v3190 = vunpack.c.l.b16 %v227
    %v3191 = vunpack.c.l.b16 %v228
    %v3192 = vunpack.c.l.b16 %v229
    %v3193 = vunpack.c.l.b16 %v230
    %v3194 = vunpack.c.l.b16 %v231
    %v3195 = vunpack.c.l.b16 %v232
    %v3196 = vunpack.c.l.b16 %v233
    %v3197 = vunpack.c.l.b16 %v234
    %v3198 = vunpack.c.l.b16 %v235
    %v3199 = vunpack.c.l.b16 %v236
    %v3200 = vunpack.c.l.b16 %v237
    %v3201 = vunpack.c.l.b16 %v238
    %v3202 = vunpack.c.l.b16 %v239
    %v3203 = vunpack.c.l.b16 %v240
    %v3204 = vunpack.c.l.b16 %v241
    %v3205 = vunpack.c.l.b16 %v242
    %v3206 = vunpack.c.l.b16 %v243
    %v3207 = vunpack.c.l.b16 %v244
    %v3208 = vunpack.c.l.b16 %v245
    %v3209 = vunpack.c.l.b16 %v246
    %v3210 = vunpack.c.l.b16 %v247
    %v3211 = vunpack.c.l.b16 %v248
    %v3212 = vunpack.c.l.b16 %v249
    %v3213 = vunpack.c.l.b16 %v250
    %v3214 = vunpack.c.l.b16 %v251
    %v3215 = vunpack.c.l.b16 %v252
    %v3216 = vunpack.c.l.b16 %v253
    %v3217 = vunpack.c.l.b16 %v254
    %v3218 = vunpack.c.l.b16 %v255
    %v3219 = vunpack.c.l.b16 %v256
    %v3220 = vunpack.c.l.b16 %v257
    %v3221 = vunpack.c.l.b16 %v258
    %v3222 = vunpack.c.l.b16 %v259
    %v3223 = vunpack.c.l.b16 %v260
    %v3224 = vunpack.c.l.b16 %v261
    %v3225 = vunpack.c.l.b16 %v262
    %v3226 = vunpack.c.l.b16 %v263
    %v3227 = vunpack.c.l.b16 %v264
    %v3228 = vunpack.c.l.b16 %v265
    %v3229 = vunpack.c.l.b16 %v266
    %v3230 = vunpack.c.l.b16 %v267
    %v3231 = vunpack.c.l.b16 %v268
    %v3232 = vunpack.c.l.b16 %v269
    %v3233 = vunpack.c.l.b16 %v270
    %v3234 = vunpack.c.l.b16 %v271
    %v3235 = vunpack.c.l.b16 %v272
    %v3236 = vunpack.c.l.b16 %v273
    %v3237 = vunpack.c.l.b16 %v274
    %v3238 = vunpack.c.l.b16 %v275
    %v3239 = vunpack.c.l.b16 %v276
    %v3240 = vunpack.c.l.b16 %v277
    %v3241 = vunpack.c.l.b16 %v278
    %v3242 = vunpack.c.l.b16 %v279
    %v3243 = vunpack.c.l.b16 %v280
    %v3244 = vunpack.c.l.b16 %v281
    %v3245 = vunpack.c.l.b16 %v282
    %v3246 = vunpack.c.l.b16 %v283
    %v3247 = vunpack.c.l.b16 %v284
    %v3248 = vunpack.c.l.b16 %v285
    %v3249 = vunpack.c.l.b16 %v286
    %v3250 = vunpack.c.l.b16 %v287
    %v3251 = vunpack.c.l.b16 %v288
    %v3252 = vunpack.c.l.b16 %v289
    %v3253 = vunpack.c.l.b16 %v290
    %v3254 = vunpack.c.l.b16 %v291
    %v3255 = vunpack.c.l.b16 %v292
    %v3256 = vunpack.c.l.b16 %v293
    %v3257 = vunpack.c.l.b16 %v294
    %v3258 = vunpack.c.l.b16 %v295
    %v3259 = vunpack.c.l.b16 %v296
    %v3260 = vunpack.c.l.b16 %v297
    %v3261 = vunpack.c.l.b16 %v298
    %v3262 = vunpack.c.l.b16 %v299
    %v3263 = vunpack.c.l.b16 %v300
    %v3264 = vunpack.c.l.b16 %v301
    %v3265 = vunpack.c.l.b16 %v302
    %v3266 = vunpack.c.l.b16 %v303
    %v3267 = vunpack.c.l.b16 %v304
    %v3268 = vunpack.c.l.b16 %v305
    %v3269 = vunpack.c.l.b16 %v306
    %v3270 = vunpack.c.l.b16 %v307
    %v3271 = vunpack.c.l.b16 %v308
    %v3272 = vunpack.c.l.b16 %v309
    %v3273 = vunpack.c.l.b16 %v310
    %v3274 = vunpack.c.l.b16 %v311
    %v3275 = vunpack.c.l.b16 %v312
    %v3276 = vunpack.c.l.b16 %v313
    %v3277 = vunpack.c.l.b16 %v314
    %v3278 = vunpack.c.l.b16 %v315
    %v3279 = vunpack.c.l.b16 %v316
    %v3280 = vunpack.c.l.b16 %v317
    %v3281 = vunpack.c.l.b16 %v318
    %v3282 = vunpack.c.l.b16 %v319
    %v3283 = vunpack.c.l.b16 %v320
    %v3284 = vunpack.c.l.b16 %v321
    %v3285 = vunpack.c.l.b16 %v322
    %v3286 = vunpack.c.l.b16 %v323
    %v3287 = vunpack.c.l.b16 %v324
    %v3288 = vunpack.c.l.b16 %v325
    %v3289 = vunpack.c.l.b16 %v326
    %v3290 = vunpack.c.l.b16 %v327
    %v3291 = vunpack.c.l.b16 %v328
    %v3292 = vunpack.c.l.b16 %v329
    %v3293 = vunpack.c.l.b16 %v330
    %v3294 = vunpack.c.l.b16 %v331
    %v3295 = vunpack.c.l.b16 %v332
    %v3296 = vunpack.c.l.b16 %v333
    %v3297 = vunpack.c.l.b16 %v334
    %v3298 = vunpack.c.l.b16 %v335
    %v3299 = vunpack.c.l.b16 %v336
    %v3300 = vunpack.c.l.b16 %v337
    %v3301 = vunpack.c.l.b16 %v338
    %v3302 = vunpack.c.l.b16 %v339
    %v3303 = vunpack.c.l.b16 %v340
    %v3304 = vunpack.c.l.b16 %v341
    %v3305 = vunpack.c.l.b16 %v342
    %v3306 = vunpack.c.l.b16 %v343
    %v3307 = vunpack.c.l.b16 %v344
    %v3308 = vunpack.c.l.b16 %v345
    %v3309 = vunpack.c.l.b16 %v346
    %v3310 = vunpack.c.l.b16 %v347
    %v3311 = vunpack.c.l.b16 %v348
    %v3312 = vunpack.c.l.b16 %v349
    %v3313 = vunpack.c.l.b16 %v350
    %v3314 = vunpack.c.l.b16 %v351
    %v3315 = vunpack.c.l.b16 %v352
    %v3316 = vunpack.c.l.b16 %v353
    %v3317 = vunpack.c.l.b16 %v354
    %v3318 = vunpack.c.l.b16 %v355
    %v3319 = vunpack.c.l.b16 %v356
    %v3320 = vunpack.c.l.b16 %v357
    %v3321 = vunpack.c.l.b16 %v358
    %v3322 = vunpack.c.l.b16 %v359
    %v3323 = vunpack.c.l.b16 %v360
    %v3324 = vunpack.c.l.b16 %v361
    %v3325 = vunpack.c.l.b16 %v362
    %v3326 = vunpack.c.l.b16 %v363
    %v3327 = vunpack.c.l.b16 %v364
    %v3328 = vunpack.c.l.b16 %v365
    %v3329 = vunpack.c.l.b16 %v366
    %v3330 = vunpack.c.l.b16 %v367
    %v3331 = vunpack.c.l.b16 %v368
    %v3332 = vunpack.c.l.b16 %v369
    %v3333 = vunpack.c.l.b16 %v370
    %v3334 = vunpack.c.l.b16 %v371
    %v3335 = vunpack.c.l.b16 %v372
    %v3336 = vunpack.c.l.b16 %v373
    %v3337 = vunpack.c.l.b16 %v374
    %v3338 = vunpack.c.l.b16 %v375
    %v3339 = vunpack.c.l.b16 %v376
    %v3340 = vunpack.c.l.b16 %v377
    %v3341 = vunpack.c.l.b16 %v378
    %v3342 = vunpack.c.l.b16 %v379
    %v3343 = vunpack.c.l.b16 %v380
    %v3344 = vunpack.c.l.b16 %v381
    %v3345 = vunpack.c.l.b16 %v382
    %v3346 = vunpack.c.l.b16 %v383
    %v3347 = vunpack.c.l.b16 %v384
    %v3348 = vunpack.c.l.b16 %v385
    %v3349 = vunpack.c.l.b16 %v386
    %v3350 = vunpack.c.l.b16 %v387
    %v3351 = vunpack.c.l.b16 %v388
    %v3352 = vunpack.c.l.b16 %v389
    %v3353 = vunpack.c.l.b16 %v390
    %v3354 = vunpack.c.l.b16 %v391
    %v3355 = vunpack.c.l.b16 %v392
    %v3356 = vunpack.c.l.b16 %v393
    %v3357 = vunpack.c.l.b16 %v394
    %v3358 = vunpack.c.l.b16 %v395
    %v3359 = vunpack.c.l.b16 %v396
    %v3360 = vunpack.c.l.b16 %v397
    %v3361 = vunpack.c.l.b16 %v398
    %v3362 = vunpack.c.l.b16 %v399
    %v3363 = vunpack.c.l.b16 %v400
    %v3364 = vunpack.c.l.b16 %v401
    %v3365 = vunpack.c.l.b16 %v402
    %v3366 = vunpack.c.l.b16 %v403
    %v3367 = vunpack.c.l.b16 %v404
    %v3368 = vunpack.c.l.b16 %v405
    %v3369 = vunpack.c.l.b16 %v406
    %v3370 = vunpack.c.l.b16 %v407
    %v3371 = vunpack.c.l.b16 %v408
    %v3372 = vunpack.c.l.b16 %v409
    %v3373 = vunpack.c.l.b16 %v410
    %v3374 = vunpack.c.l.b16 %v411
    %v3375 = vunpack.c.l.b16 %v412
    %v3376 = vunpack.c.l.b16 %v413
    %v3377 = vunpack.c.l.b16 %v414
    %v3378 = vunpack.c.l.b16 %v415
    %v3379 = vunpack.c.l.b16 %v416
    %v3380 = vunpack.c.l.b16 %v417
    %v3381 = vunpack.c.l.b16 %v418
    %v3382 = vunpack.c.l.b16 %v419
    %v3383 = vunpack.c.l.b16 %v420
    %v3384 = vunpack.c.l.b16 %v421
    %v3385 = vunpack.c.l.b16 %v422
    %v3386 = vunpack.c.l.b16 %v423
    %v3387 = vunpack.c.l.b16 %v424
    %v3388 = vunpack.c.l.b16 %v425
    %v3389 = vunpack.c.l.b16 %v426
    %v3390 = vunpack.c.l.b16 %v427
    %v3391 = vunpack.c.l.b16 %v428
    %v3392 = vunpack.c.l.b16 %v429
    %v3393 = vunpack.c.l.b16 %v430
    %v3394 = vunpack.c.l.b16 %v431
    %v3395 = vunpack.c.l.b16 %v432
    %v3396 = vunpack.c.l.b16 %v433
    %v3397 = vunpack.c.l.b16 %v434
    %v3398 = vunpack.c.l.b16 %v435
    %v3399 = vunpack.c.l.b16 %v436
    %v3400 = vunpack.c.l.b16 %v437
    %v3401 = vunpack.c.l.b16 %v438
    %v3402 = vunpack.c.l.b16 %v439
    %v3403 = vunpack.c.l.b16 %v440
    %v3404 = vunpack.c.l.b16 %v441
    %v3405 = vunpack.c.l.b16 %v442
    %v3406 = vunpack.c.l.b16 %v443
    %v3407 = vunpack.c.l.b16 %v444
    %v3408 = vunpack.c.l.b16 %v445
    %v3409 = vunpack.c.l.b16 %v446
    %v3410 = vunpack.c.l.b16 %v447
    %v3411 = vunpack.c.l.b16 %v448
    %v3412 = vunpack.c.l.b16 %v449
    %v3413 = vunpack.c.l.b16 %v450
    %v3414 = vunpack.c.l.b16 %v451
    %v3415 = vunpack.c.l.b16 %v452
    %v3416 = vunpack.c.l.b16 %v453
    %v3417 = vunpack.c.l.b16 %v454
    %v3418 = vunpack.c.l.b16 %v455
    %v3419 = vunpack.c.l.b16 %v456
    %v3420 = vunpack.c.l.b16 %v457
    %v3421 = vunpack.c.l.b16 %v458
    %v3422 = vunpack.c.l.b16 %v459
    %v3423 = vunpack.c.l.b16 %v460
    %v3424 = vunpack.c.l.b16 %v461
    %v3425 = vunpack.c.l.b16 %v462
    %v3426 = vunpack.c.l.b16 %v463
    %v3427 = vunpack.c.l.b16 %v464
    %v3428 = vunpack.c.l.b16 %v465
    %v3429 = vunpack.c.l.b16 %v466
    %v3430 = vunpack.c.l.b16 %v467
    %v3431 = vunpack.c.l.b16 %v468
    %v3432 = vunpack.c.l.b16 %v469
    %v3433 = vunpack.c.l.b16 %v470
    %v3434 = vunpack.c.l.b16 %v471
    %v3435 = vunpack.c.l.b16 %v472
    %v3436 = vunpack.c.l.b16 %v473
    %v3437 = vunpack.c.l.b16 %v474
    %v3438 = vunpack.c.l.b16 %v475
    %v3439 = vunpack.c.l.b16 %v476
    %v3440 = vunpack.c.l.b16 %v477
    %v3441 = vunpack.c.l.b16 %v478
    %v3442 = vunpack.c.l.b16 %v479
    %v3443 = vunpack.c.l.b16 %v480
    %v3444 = vunpack.c.l.b16 %v481
    %v3445 = vunpack.c.l.b16 %v482
    %v3446 = vunpack.c.l.b16 %v483
    %v3447 = vunpack.c.l.b16 %v484
    %v3448 = vunpack.c.l.b16 %v485
    %v3449 = vunpack.c.l.b16 %v486
    %v3450 = vunpack.c.l.b16 %v487
    %v3451 = vunpack.c.l.b16 %v488
    %v3452 = vunpack.c.l.b16 %v489
    %v3453 = vunpack.c.l.b16 %v490
    %v3454 = vunpack.c.l.b16 %v491
    %v3455 = vunpack.c.l.b16 %v492
    %v3456 = vunpack.c.l.b16 %v493
    %v3457 = vunpack.c.l.b16 %v494
    %v3458 = vunpack.c.l.b16 %v495
    %v3459 = vunpack.c.l.b16 %v496
    %v3460 = vunpack.c.l.b16 %v497
    %v3461 = vunpack.c.l.b16 %v498
    %v3462 = vunpack.c.l.b16 %v499
    %v3463 = vunpack.c.l.b16 %v500
    %v3464 = vunpack.c.l.b16 %v501
    %v3465 = vunpack.c.l.b16 %v502
    %v3466 = vunpack.c.l.b16 %v503
    %v3467 = vunpack.c.l.b16 %v504
    %v3468 = vunpack.c.l.b16 %v505
    %v3469 = vunpack.c.l.b16 %v506
    %v3470 = vunpack.c.l.b16 %v507
    %v3471 = vunpack.c.l.b16 %v508
    %v3472 = vunpack.c.l.b16 %v509
    %v3473 = vunpack.c.l.b16 %v510
    %v3474 = vunpack.c.l.b16 %v511
    %v3475 = vunpack.c.l.b16 %v512
    %v3476 = vunpack.c.l.b16 %v513
    %v3477 = vunpack.c.l.b16 %v514
    %v3478 = vunpack.c.l.b16 %v515
    %v3479 = vunpack.c.l.b16 %v516
    %v3480 = vunpack.c.l.b16 %v517
    %v3481 = vunpack.c.l.b16 %v518
    %v3482 = vunpack.c.l.b16 %v519
    %v3483 = vunpack.c.l.b16 %v520
    %v3484 = vunpack.c.l.b16 %v521
    %v3485 = vunpack.c.l.b16 %v522
    %v3486 = vunpack.c.l.b16 %v523
    %v3487 = vunpack.c.l.b16 %v524
    %v3488 = vunpack.c.l.b16 %v525
    %v3489 = vunpack.c.l.b16 %v526
    %v3490 = vunpack.c.l.b16 %v527
    %v3491 = vunpack.c.l.b16 %v528
    %v3492 = vunpack.c.l.b16 %v529
    %v3493 = vunpack.c.l.b16 %v530
    %v3494 = vunpack.c.l.b16 %v531
    %v3495 = vunpack.c.l.b16 %v532
    %v3496 = vunpack.c.l.b16 %v533
    %v3497 = vunpack.c.l.b16 %v534
    %v3498 = vunpack.c.l.b16 %v535
    %v3499 = vunpack.c.l.b16 %v536
    %v3500 = vunpack.c.l.b16 %v537
    %v3501 = vunpack.c.l.b16 %v538
    %v3502 = vunpack.c.l.b16 %v539
    %v3503 = vunpack.c.l.b16 %v540
    %v3504 = vunpack.c.l.b16 %v541
    %v3505 = vunpack.c.l.b16 %v542
    %v3506 = vunpack.c.l.b16 %v543
    %v3507 = vunpack.c.l.b16 %v544
    %v3508 = vunpack.c.l.b16 %v545
    %v3509 = vunpack.c.l.b16 %v546
    %v3510 = vunpack.c.l.b16 %v547
    %v3511 = vunpack.c.l.b16 %v548
    %v3512 = vunpack.c.l.b16 %v549
    %v3513 = vunpack.c.l.b16 %v550
    %v3514 = vunpack.c.l.b16 %v551
    %v3515 = vunpack.c.l.b16 %v552
    %v3516 = vunpack.c.l.b16 %v553
    %v3517 = vunpack.c.l.b16 %v554
    %v3518 = vunpack.c.l.b16 %v555
    %v3519 = vunpack.c.l.b16 %v556
    %v3520 = vunpack.c.l.b16 %v557
    %v3521 = vunpack.c.l.b16 %v558
    %v3522 = vunpack.c.l.b16 %v559
    %v3523 = vunpack.c.l.b16 %v560
    %v3524 = vunpack.c.l.b16 %v561
    %v3525 = vunpack.c.l.b16 %v562
    %v3526 = vunpack.c.l.b16 %v563
    %v3527 = vunpack.c.l.b16 %v564
    %v3528 = vunpack.c.l.b16 %v565
    %v3529 = vunpack.c.l.b16 %v566
    %v3530 = vunpack.c.l.b16 %v567
    %v3531 = vunpack.c.l.b16 %v568
    %v3532 = vunpack.c.l.b16 %v569
    %v3533 = vunpack.c.l.b16 %v570
    %v3534 = vunpack.c.l.b16 %v571
    %v3535 = vunpack.c.l.b16 %v572
    %v3536 = vunpack.c.l.b16 %v573
    %v3537 = vunpack.c.l.b16 %v574
    %v3538 = vunpack.c.l.b16 %v575
    %v3539 = vunpack.c.l.b16 %v576
    %v3540 = vunpack.c.l.b16 %v577
    %v3541 = vunpack.c.l.b16 %v578
    %v3542 = vunpack.c.l.b16 %v579
    %v3543 = vunpack.c.l.b16 %v580
    %v3544 = vunpack.c.l.b16 %v581
    %v3545 = vunpack.c.l.b16 %v582
    %v3546 = vunpack.c.l.b16 %v583
    %v3547 = vunpack.c.l.b16 %v584
    %v3548 = vunpack.c.l.b16 %v585
    %v3549 = vunpack.c.l.b16 %v586
    %v3550 = vunpack.c.l.b16 %v587
    %v3551 = vunpack.c.l.b16 %v588
    %v3552 = vunpack.c.l.b16 %v589
    %v3553 = vunpack.c.l.b16 %v590
    %v3554 = vunpack.c.l.b16 %v591
    %v3555 = vunpack.c.l.b16 %v592
    %v3556 = vunpack.c.l.b16 %v593
    %v3557 = vunpack.c.l.b16 %v594
    %v3558 = vunpack.c.l.b16 %v595
    %v3559 = vunpack.c.l.b16 %v596
    %v3560 = vunpack.c.l.b16 %v597
    %v3561 = vunpack.c.l.b16 %v598
    %v3562 = vunpack.c.l.b16 %v599
    %v3563 = vunpack.c.l.b16 %v600
    %v3564 = vunpack.c.l.b16 %v601
    %v3565 = vunpack.c.l.b16 %v602
    %v3566 = vunpack.c.l.b16 %v603
    %v3567 = vunpack.c.l.b16 %v604
    %v3568 = vunpack.c.l.b16 %v605
    %v3569 = vunpack.c.l.b16 %v606
    %v3570 = vunpack.c.l.b16 %v607
    %v3571 = vunpack.c.l.b16 %v608
    %v3572 = vunpack.c.l.b16 %v609
    %v3573 = vunpack.c.l.b16 %v610
    %v3574 = vunpack.c.l.b16 %v611
    %v3575 = vunpack.c.l.b16 %v612
    %v3576 = vunpack.c.l.b16 %v613
    %v3577 = vunpack.c.l.b16 %v614
    %v3578 = vunpack.c.l.b16 %v615
    %v3579 = vunpack.c.l.b16 %v616
    %v3580 = vunpack.c.l.b16 %v617
    %v3581 = vunpack.c.l.b16 %v618
    %v3582 = vunpack.c.l.b16 %v619
    %v3583 = vunpack.c.l.b16 %v620
    %v3584 = vunpack.c.l.b16 %v621
    %v3585 = vunpack.c.l.b16 %v622
    %v3586 = vunpack.c.l.b16 %v623
    %v3587 = vunpack.c.l.b16 %v624
    %v3588 = vunpack.c.l.b16 %v625
    %v3589 = vunpack.c.l.b16 %v626
    %v3590 = vunpack.c.l.b16 %v627
    %v3591 = vunpack.c.l.b16 %v628
    %v3592 = vunpack.c.l.b16 %v629
    %v3593 = vunpack.c.l.b16 %v630
    %v3594 = vunpack.c.l.b16 %v631
    %v3595 = vunpack.c.l.b16 %v632
    %v3596 = vunpack.c.l.b16 %v633
    %v3597 = vunpack.c.l.b16 %v634
    %v3598 = vunpack.c.l.b16 %v635
    %v3599 = vunpack.c.l.b16 %v636
    %v3600 = vunpack.c.l.b16 %v637
    %v3601 = vunpack.c.l.b16 %v638
    %v3602 = vunpack.c.l.b16 %v639
    %v3603 = vunpack.c.l.b16 %v640
    %v3604 = vunpack.c.l.b16 %v641
    %v3605 = vunpack.c.l.b16 %v642
    %v3606 = vunpack.c.l.b16 %v643
    %v3607 = vunpack.c.l.b16 %v644
    %v3608 = vunpack.c.l.b16 %v645
    %v3609 = vunpack.c.l.b16 %v646
    %v3610 = vunpack.c.l.b16 %v647
    %v3611 = vunpack.c.l.b16 %v648
    %v3612 = vunpack.c.l.b16 %v649
    %v3613 = vunpack.c.l.b16 %v650
    %v3614 = vunpack.c.l.b16 %v651
    %v3615 = vunpack.c.l.b16 %v652
    %v3616 = vunpack.c.l.b16 %v653
    %v3617 = vunpack.c.l.b16 %v654
    %v3618 = vunpack.c.l.b16 %v655
    %v3619 = vunpack.c.l.b16 %v656
    %v3620 = vunpack.c.l.b16 %v657
    %v3621 = vunpack.c.l.b16 %v658
    %v3622 = vunpack.c.l.b16 %v659
    %v3623 = vunpack.c.l.b16 %v660
    %v3624 = vunpack.c.l.b16 %v661
    %v3625 = vunpack.c.l.b16 %v662
    %v3626 = vunpack.c.l.b16 %v663
    %v3627 = vunpack.c.l.b16 %v664
    %v3628 = vunpack.c.l.b16 %v665
    %v3629 = vunpack.c.l.b16 %v666
    %v3630 = vunpack.c.l.b16 %v667
    %v3631 = vunpack.c.l.b16 %v668
    %v3632 = vunpack.c.l.b16 %v669
    %v3633 = vunpack.c.l.b16 %v670
    %v3634 = vunpack.c.l.b16 %v671
    %v3635 = vunpack.c.l.b16 %v672
    %v3636 = vunpack.c.l.b16 %v673
    %v3637 = vunpack.c.l.b16 %v674
    %v3638 = vunpack.c.l.b16 %v675
    %v3639 = vunpack.c.l.b16 %v676
    %v3640 = vunpack.c.l.b16 %v677
    %v3641 = vunpack.c.l.b16 %v678
    %v3642 = vunpack.c.l.b16 %v679
    %v3643 = vunpack.c.l.b16 %v680
    %v3644 = vunpack.c.l.b16 %v681
    %v3645 = vunpack.c.l.b16 %v682
    %v3646 = vunpack.c.l.b16 %v683
    %v3647 = vunpack.c.l.b16 %v684
    %v3648 = vunpack.c.l.b16 %v685
    %v3649 = vunpack.c.l.b16 %v686
    %v3650 = vunpack.c.l.b16 %v687
    %v3651 = vunpack.c.l.b16 %v688
    %v3652 = vunpack.c.l.b16 %v689
    %v3653 = vunpack.c.l.b16 %v690
    %v3654 = vunpack.c.l.b16 %v691
    %v3655 = vunpack.c.l.b16 %v692
    %v3656 = vunpack.c.l.b16 %v693
    %v3657 = vunpack.c.l.b16 %v694
    %v3658 = vunpack.c.l.b16 %v695
    %v3659 = vunpack.c.l.b16 %v696
    %v3660 = vunpack.c.l.b16 %v697
    %v3661 = vunpack.c.l.b16 %v698
    %v3662 = vunpack.c.l.b16 %v699
    %v3663 = vunpack.c.l.b16 %v700
    %v3664 = vunpack.c.l.b16 %v701
    %v3665 = vunpack.c.l.b16 %v702
    %v3666 = vunpack.c.l.b16 %v703
    %v3667 = vunpack.c.l.b16 %v704
    %v3668 = vunpack.c.l.b16 %v705
    %v3669 = vunpack.c.l.b16 %v706
    %v3670 = vunpack.c.l.b16 %v707
    %v3671 = vunpack.c.l.b16 %v708
    %v3672 = vunpack.c.l.b16 %v709
    %v3673 = vunpack.c.l.b16 %v710
    %v3674 = vunpack.c.l.b16 %v711
    %v3675 = vunpack.c.l.b16 %v712
    %v3676 = vunpack.c.l.b16 %v713
    %v3677 = vunpack.c.l.b16 %v714
    %v3678 = vunpack.c.l.b16 %v715
    %v3679 = vunpack.c.l.b16 %v716
    %v3680 = vunpack.c.l.b16 %v717
    %v3681 = vunpack.c.l.b16 %v718
    %v3682 = vunpack.c.l.b16 %v719
    %v3683 = vunpack.c.l.b16 %v720
    %v3684 = vunpack.c.l.b16 %v721
    %v3685 = vunpack.c.l.b16 %v722
    %v3686 = vunpack.c.l.b16 %v723
    %v3687 = vunpack.c.l.b16 %v724
    %v3688 = vunpack.c.l.b16 %v725
    %v3689 = vunpack.c.l.b16 %v726
    %v3690 = vunpack.c.l.b16 %v727
    %v3691 = vunpack.c.l.b16 %v728
    %v3692 = vunpack.c.l.b16 %v729
    %v3693 = vunpack.c.l.b16 %v730
    %v3694 = vunpack.c.l.b16 %v731
    %v3695 = vunpack.c.l.b16 %v732
    %v3696 = vunpack.c.l.b16 %v733
    %v3697 = vunpack.c.l.b16 %v734
    %v3698 = vunpack.c.l.b16 %v735
    %v3699 = vunpack.c.l.b16 %v736
    %v3700 = vunpack.c.l.b16 %v737
    %v3701 = vunpack.c.l.b16 %v738
    %v3702 = vunpack.c.l.b16 %v739
    %v3703 = vunpack.c.l.b16 %v740
    %v3704 = vunpack.c.l.b16 %v741
    %v3705 = vunpack.c.l.b16 %v742
    %v3706 = vunpack.c.l.b16 %v743
    %v3707 = vunpack.c.l.b16 %v744
    %v3708 = vunpack.c.l.b16 %v745
    %v3709 = vunpack.c.l.b16 %v746
    %v3710 = vunpack.c.l.b16 %v747
    %v3711 = vunpack.c.l.b16 %v748
    %v3712 = vunpack.c.l.b16 %v749
    %v3713 = vunpack.c.l.b16 %v750
    %v3714 = vunpack.c.l.b16 %v751
    %v3715 = vunpack.c.l.b16 %v752
    %v3716 = vunpack.c.l.b16 %v753
    %v3717 = vunpack.c.l.b16 %v754
    %v3718 = vunpack.c.l.b16 %v755
    %v3719 = vunpack.c.l.b16 %v756
    %v3720 = vunpack.c.l.b16 %v757
    %v3721 = vunpack.c.l.b16 %v758
    %v3722 = vunpack.c.l.b16 %v759
    %v3723 = vunpack.c.l.b16 %v760
    %v3724 = vunpack.c.l.b16 %v761
    %v3725 = vunpack.c.l.b16 %v762
    %v3726 = vunpack.c.l.b16 %v763
    %v3727 = vunpack.c.l.b16 %v764
    %v3728 = vunpack.c.l.b16 %v765
    %v3729 = vunpack.c.l.b16 %v766
    %v3730 = vunpack.c.l.b16 %v767
    %v3731 = vunpack.c.l.b16 %v768
    %v3732 = vunpack.c.l.b16 %v769
    %v3733 = vunpack.c.l.b16 %v770
    %v3734 = vunpack.c.l.b16 %v771
    %v3735 = vunpack.c.l.b16 %v772
    %v3736 = vunpack.c.l.b16 %v773
    %v3737 = vunpack.c.l.b16 %v774
    %v3738 = vunpack.c.l.b16 %v775
    %v3739 = vunpack.c.l.b16 %v776
    %v3740 = vunpack.c.l.b16 %v777
    %v3741 = vunpack.c.l.b16 %v778
    %v3742 = vunpack.c.l.b16 %v779
    %v3743 = vunpack.c.l.b16 %v780
    %v3744 = vunpack.c.l.b16 %v781
    %v3745 = vunpack.c.l.b16 %v782
    %v3746 = vunpack.c.l.b16 %v783
    %v3747 = vunpack.c.l.b16 %v784
    %v3748 = vunpack.c.l.b16 %v785
    %v3749 = vunpack.c.l.b16 %v786
    %v3750 = vunpack.c.l.b16 %v787
    %v3751 = vunpack.c.l.b16 %v788
    %v3752 = vunpack.c.l.b16 %v789
    %v3753 = vunpack.c.l.b16 %v790
    %v3754 = vunpack.c.l.b16 %v791
    %v3755 = vunpack.c.l.b16 %v792
    %v3756 = vunpack.c.l.b16 %v793
    %v3757 = vunpack.c.l.b16 %v794
    %v3758 = vunpack.c.l.b16 %v795
    %v3759 = vunpack.c.l.b16 %v796
    %v3760 = vunpack.c.l.b16 %v797
    %v3761 = vunpack.c.l.b16 %v798
    %v3762 = vunpack.c.l.b16 %v799
    %v3763 = vunpack.c.l.b16 %v800
    %v3764 = vunpack.c.l.b16 %v801
    %v3765 = vunpack.c.l.b16 %v802
    %v3766 = vunpack.c.l.b16 %v803
    %v3767 = vunpack.c.l.b16 %v804
    %v3768 = vunpack.c.l.b16 %v805
    %v3769 = vunpack.c.l.b16 %v806
    %v3770 = vunpack.c.l.b16 %v807
    %v3771 = vunpack.c.l.b16 %v808
    %v3772 = vunpack.c.l.b16 %v809
    %v3773 = vunpack.c.l.b16 %v810
    %v3774 = vunpack.c.l.b16 %v811
    %v3775 = vunpack.c.l.b16 %v812
    %v3776 = vunpack.c.l.b16 %v813
    %v3777 = vunpack.c.l.b16 %v814
    %v3778 = vunpack.c.l.b16 %v815
    %v3779 = vunpack.c.l.b16 %v816
    %v3780 = vunpack.c.l.b16 %v817
    %v3781 = vunpack.c.l.b16 %v818
    %v3782 = vunpack.c.l.b16 %v819
    %v3783 = vunpack.c.l.b16 %v820
    %v3784 = vunpack.c.l.b16 %v821
    %v3785 = vunpack.c.l.b16 %v822
    %v3786 = vunpack.c.l.b16 %v823
    %v3787 = vunpack.c.l.b16 %v824
    %v3788 = vunpack.c.l.b16 %v825
    %v3789 = vunpack.c.l.b16 %v826
    %v3790 = vunpack.c.l.b16 %v827
    %v3791 = vunpack.c.l.b16 %v828
    %v3792 = vunpack.c.l.b16 %v829
    %v3793 = vunpack.c.l.b16 %v830
    %v3794 = vunpack.c.l.b16 %v831
    %v3795 = vunpack.c.l.b16 %v832
    %v3796 = vunpack.c.l.b16 %v833
    %v3797 = vunpack.c.l.b16 %v834
    %v3798 = vunpack.c.l.b16 %v835
    %v3799 = vunpack.c.l.b16 %v836
    %v3800 = vunpack.c.l.b16 %v837
    %v3801 = vunpack.c.l.b16 %v838
    %v3802 = vunpack.c.l.b16 %v839
    %v3803 = vunpack.c.l.b16 %v840
    %v3804 = vunpack.c.l.b16 %v841
    %v3805 = vunpack.c.l.b16 %v842
    %v3806 = vunpack.c.l.b16 %v843
    %v3807 = vunpack.c.l.b16 %v844
    %v3808 = vunpack.c.l.b16 %v845
    %v3809 = vunpack.c.l.b16 %v846
    %v3810 = vunpack.c.l.b16 %v847
    %v3811 = vunpack.c.l.b16 %v848
    %v3812 = vunpack.c.l.b16 %v849
    %v3813 = vunpack.c.l.b16 %v850
    %v3814 = vunpack.c.l.b16 %v851
    %v3815 = vunpack.c.l.b16 %v852
    %v3816 = vunpack.c.l.b16 %v853
    %v3817 = vunpack.c.l.b16 %v854
    %v3818 = vunpack.c.l.b16 %v855
    %v3819 = vunpack.c.l.b16 %v856
    %v3820 = vunpack.c.l.b16 %v857
    %v3821 = vunpack.c.l.b16 %v858
    %v3822 = vunpack.c.l.b16 %v859
    %v3823 = vunpack.c.l.b16 %v860
    %v3824 = vunpack.c.l.b16 %v861
    %v3825 = vunpack.c.l.b16 %v862
    %v3826 = vunpack.c.l.b16 %v863
    %v3827 = vunpack.c.l.b16 %v864
    %v3828 = vunpack.c.l.b16 %v865
    %v3829 = vunpack.c.l.b16 %v866
    %v3830 = vunpack.c.l.b16 %v867
    %v3831 = vunpack.c.l.b16 %v868
    %v3832 = vunpack.c.l.b16 %v869
    %v3833 = vunpack.c.l.b16 %v870
    %v3834 = vunpack.c.l.b16 %v871
    %v3835 = vunpack.c.l.b16 %v872
    %v3836 = vunpack.c.l.b16 %v873
    %v3837 = vunpack.c.l.b16 %v874
    %v3838 = vunpack.c.l.b16 %v875
    %v3839 = vunpack.c.l.b16 %v876
    %v3840 = vunpack.c.l.b16 %v877
    %v3841 = vunpack.c.l.b16 %v878
    %v3842 = vunpack.c.l.b16 %v879
    %v3843 = vunpack.c.l.b16 %v880
    %v3844 = vunpack.c.l.b16 %v881
    %v3845 = vunpack.c.l.b16 %v882
    %v3846 = vunpack.c.l.b16 %v883
    %v3847 = vunpack.c.l.b16 %v884
    %v3848 = vunpack.c.l.b16 %v885
    %v3849 = vunpack.c.l.b16 %v886
    %v3850 = vunpack.c.l.b16 %v887
    %v3851 = vunpack.c.l.b16 %v888
    %v3852 = vunpack.c.l.b16 %v889
    %v3853 = vunpack.c.l.b16 %v890
    %v3854 = vunpack.c.l.b16 %v891
    %v3855 = vunpack.c.l.b16 %v892
    %v3856 = vunpack.c.l.b16 %v893
    %v3857 = vunpack.c.l.b16 %v894
    %v3858 = vunpack.c.l.b16 %v895
    %v3859 = vunpack.c.l.b16 %v896
    %v3860 = vunpack.c.l.b16 %v897
    %v3861 = vunpack.c.l.b16 %v898
    %v3862 = vunpack.c.l.b16 %v899
    %v3863 = vunpack.c.l.b16 %v900
    %v3864 = vunpack.c.l.b16 %v901
    %v3865 = vunpack.c.l.b16 %v902
    %v3866 = vunpack.c.l.b16 %v903
    %v3867 = vunpack.c.l.b16 %v904
    %v3868 = vunpack.c.l.b16 %v905
    %v3869 = vunpack.c.l.b16 %v906
    %v3870 = vunpack.c.l.b16 %v907
    %v3871 = vunpack.c.l.b16 %v908
    %v3872 = vunpack.c.l.b16 %v909
    %v3873 = vunpack.c.l.b16 %v910
    %v3874 = vunpack.c.l.b16 %v911
    %v3875 = vunpack.c.l.b16 %v912
    %v3876 = vunpack.c.l.b16 %v913
    %v3877 = vunpack.c.l.b16 %v914
    %v3878 = vunpack.c.l.b16 %v915
    %v3879 = vunpack.c.l.b16 %v916
    %v3880 = vunpack.c.l.b16 %v917
    %v3881 = vunpack.c.l.b16 %v918
    %v3882 = vunpack.c.l.b16 %v919
    %v3883 = vunpack.c.l.b16 %v920
    %v3884 = vunpack.c.l.b16 %v921
    %v3885 = vunpack.c.l.b16 %v922
    %v3886 = vunpack.c.l.b16 %v923
    %v3887 = vunpack.c.l.b16 %v924
    %v3888 = vunpack.c.l.b16 %v925
    %v3889 = vunpack.c.l.b16 %v926
    %v3890 = vunpack.c.l.b16 %v927
    %v3891 = vunpack.c.l.b16 %v928
    %v3892 = vunpack.c.l.b16 %v929
    %v3893 = vunpack.c.l.b16 %v930
    %v3894 = vunpack.c.l.b16 %v931
    %v3895 = vunpack.c.l.b16 %v932
    %v3896 = vunpack.c.l.b16 %v933
    %v3897 = vunpack.c.l.b16 %v934
    %v3898 = vunpack.c.l.b16 %v935
    %v3899 = vunpack.c.l.b16 %v936
    %v3900 = vunpack.c.l.b16 %v937
    %v3901 = vunpack.c.l.b16 %v938
    %v3902 = vunpack.c.l.b16 %v939
    %v3903 = vunpack.c.l.b16 %v940
    %v3904 = vunpack.c.l.b16 %v941
    %v3905 = vunpack.c.l.b16 %v942
    %v3906 = vunpack.c.l.b16 %v943
    %v3907 = vunpack.c.l.b16 %v944
    %v3908 = vunpack.c.l.b16 %v945
    %v3909 = vunpack.c.l.b16 %v946
    %v3910 = vunpack.c.l.b16 %v947
    %v3911 = vunpack.c.l.b16 %v948
    %v3912 = vunpack.c.l.b16 %v949
    %v3913 = vunpack.c.l.b16 %v950
    %v3914 = vunpack.c.l.b16 %v951
    %v3915 = vunpack.c.l.b16 %v952
    %v3916 = vunpack.c.l.b16 %v953
    %v3917 = vunpack.c.l.b16 %v954
    %v3918 = vunpack.c.l.b16 %v955
    %v3919 = vunpack.c.l.b16 %v956
    %v3920 = vunpack.c.l.b16 %v957
    %v3921 = vunpack.c.l.b16 %v958
    %v3922 = vunpack.c.l.b16 %v959
    %v3923 = vunpack.c.l.b16 %v960
    %v3924 = vunpack.c.l.b16 %v961
    %v3925 = vunpack.c.l.b16 %v962
    %v3926 = vunpack.c.l.b16 %v963
    %v3927 = vunpack.c.l.b16 %v964
    %v3928 = vunpack.c.l.b16 %v965
    %v3929 = vunpack.c.l.b16 %v966
    %v3930 = vunpack.c.l.b16 %v967
    %v3931 = vunpack.c.l.b16 %v968
    %v3932 = vunpack.c.l.b16 %v969
    %v3933 = vunpack.c.l.b16 %v970
    %v3934 = vunpack.c.l.b16 %v971
    %v3935 = vunpack.c.l.b16 %v972
    %v3936 = vunpack.c.l.b16 %v973
    %v3937 = vunpack.c.l.b16 %v974
    %v3938 = vunpack.c.l.b16 %v975
    %v3939 = vunpack.c.l.b16 %v976
    %v3940 = vunpack.c.l.b16 %v977
    %v3941 = vunpack.c.l.b16 %v978
    %v3942 = vunpack.c.l.b16 %v979
    %v3943 = vunpack.c.l.b16 %v980
    %v3944 = vunpack.c.l.b16 %v981
    %v3945 = vunpack.c.l.b16 %v982
    %v3946 = vunpack.c.l.b16 %v983
    %v3947 = vunpack.c.l.b16 %v984
    %v3948 = vunpack.c.l.b16 %v985
    %v3949 = vunpack.c.l.b16 %v986
    %v3950 = vunpack.c.l.b16 %v987
    %v3951 = vunpack.c.l.b16 %v988
    %v3952 = vunpack.c.l.b16 %v989
    %v3953 = vunpack.c.l.b16 %v990
    %v3954 = vunpack.c.l.b16 %v991
    %v3955 = vunpack.c.l.b16 %v992
    %v3956 = vunpack.c.l.b16 %v993
    %v3957 = vunpack.c.l.b16 %v994
    %v3958 = vunpack.c.l.b16 %v995
    %v3959 = vunpack.c.l.b16 %v996
    %v3960 = vunpack.c.l.b16 %v997
    %v3961 = vunpack.c.l.b16 %v998
    %v3962 = vunpack.c.l.b16 %v999
    %v3963 = vunpack.c.l.b16 %v1000
    %v3964 = vunpack.c.l.b16 %v1001
    %v3965 = vunpack.c.l.b16 %v1002
    %v3966 = vunpack.c.l.b16 %v1003
    %v3967 = vunpack.c.l.b16 %v1004
    %v3968 = vunpack.c.l.b16 %v1005
    %v3969 = vunpack.c.l.b16 %v1006
    %v3970 = vunpack.c.l.b16 %v1007
    %v3971 = vunpack.c.l.b16 %v1008
    %v3972 = vunpack.c.l.b16 %v1009
    %v3973 = vunpack.c.l.b16 %v1010
    %v3974 = vunpack.c.l.b16 %v1011
    %v3975 = vunpack.c.l.b16 %v1012
    %v3976 = vunpack.c.l.b16 %v1013
    %v3977 = vunpack.c.l.b16 %v1014
    %v3978 = vunpack.c.l.b16 %v1015
    %v3979 = vunpack.c.l.b16 %v1016
    %v3980 = vunpack.c.l.b16 %v1017
    %v3981 = vunpack.c.l.b16 %v1018
    %v3982 = vunpack.c.l.b16 %v1019
    %v3983 = vunpack.c.l.b16 %v1020
    %v3984 = vunpack.c.l.b16 %v1021
    %v3985 = vunpack.c.l.b16 %v1022
    %v3986 = vunpack.c.l.b16 %v1023
    %v3987 = vunpack.c.l.b16 %v1024
    %v3988 = vunpack.c.l.b16 %v1025
    %v3989 = vunpack.c.l.b16 %v1026
    %v3990 = vunpack.c.l.b16 %v1027
    %v3991 = vunpack.c.l.b16 %v1028
    %v3992 = vunpack.c.l.b16 %v1029
    %v3993 = vunpack.c.l.b16 %v1030
    %v3994 = vunpack.c.l.b16 %v1031
    %v3995 = vunpack.c.l.b16 %v1032
    %v3996 = vunpack.c.l.b16 %v1033
    %v3997 = vunpack.c.l.b16 %v1034
    %v3998 = vunpack.c.l.b16 %v1035
    %v3999 = vunpack.c.l.b16 %v1036
    %v4000 = vunpack.c.l.b16 %v1037
    %v4001 = vunpack.c.l.b16 %v1038
    %v4002 = vunpack.c.l.b16 %v1039
    %v4003 = vunpack.c.l.b16 %v1040
    %v4004 = vunpack.c.l.b16 %v1041
    %v4005 = vunpack.c.l.b16 %v1042
    %v4006 = vunpack.c.l.b16 %v1043
    %v4007 = vunpack.c.l.b16 %v1044
    %v4008 = vunpack.c.l.b16 %v1045
    %v4009 = vunpack.c.l.b16 %v1046
    %v4010 = vunpack.c.l.b16 %v1047
    %v4011 = vunpack.c.l.b16 %v1048
    %v4012 = vunpack.c.l.b16 %v1049
    %v4013 = vunpack.c.l.b16 %v1050
    %v4014 = vunpack.c.l.b16 %v1051
    %v4015 = vunpack.c.l.b16 %v1052
    %v4016 = vunpack.c.l.b16 %v1053
    %v4017 = vunpack.c.l.b16 %v1054
    %v4018 = vunpack.c.l.b16 %v1055
    %v4019 = vunpack.c.l.b16 %v1056
    %v4020 = vunpack.c.l.b16 %v1057
    %v4021 = vunpack.c.l.b16 %v1058
    %v4022 = vunpack.c.l.b16 %v1059
    %v4023 = vunpack.c.l.b16 %v1060
    %v4024 = vunpack.c.l.b16 %v1061
    %v4025 = vunpack.c.l.b16 %v1062
    %v4026 = vunpack.c.l.b16 %v1063
    %v4027 = vunpack.c.l.b16 %v1064
    %v4028 = vunpack.c.l.b16 %v1065
    %v4029 = vunpack.c.l.b16 %v1066
    %v4030 = vunpack.c.l.b16 %v1067
    %v4031 = vunpack.c.l.b16 %v1068
    %v4032 = vunpack.c.l.b16 %v1069
    %v4033 = vunpack.c.l.b16 %v1070
    %v4034 = vunpack.c.l.b16 %v1071
    %v4035 = vunpack.c.l.b16 %v1072
    %v4036 = vunpack.c.l.b16 %v1073
    %v4037 = vunpack.c.l.b16 %v1074
    %v4038 = vunpack.c.l.b16 %v1075
    %v4039 = vunpack.c.l.b16 %v1076
    %v4040 = vunpack.c.l.b16 %v1077
    %v4041 = vunpack.c.l.b16 %v1078
    %v4042 = vunpack.c.l.b16 %v1079
    %v4043 = vunpack.c.l.b16 %v1080
    %v4044 = vunpack.c.l.b16 %v1081
    %v4045 = vunpack.c.l.b16 %v1082
    %v4046 = vunpack.c.l.b16 %v1083
    %v4047 = vunpack.c.l.b16 %v1084
    %v4048 = vunpack.c.l.b16 %v1085
    %v4049 = vunpack.c.l.b16 %v1086
    %v4050 = vunpack.c.l.b16 %v1087
    %v4051 = vunpack.c.l.b16 %v1088
    %v4052 = vunpack.c.l.b16 %v1089
    %v4053 = vunpack.c.l.b16 %v1090
    %v4054 = vunpack.c.l.b16 %v1091
    %v4055 = vunpack.c.l.b16 %v1092
    %v4056 = vunpack.c.l.b16 %v1093
    %v4057 = vunpack.c.l.b16 %v1094
    %v4058 = vunpack.c.l.b16 %v1095
    %v4059 = vunpack.c.l.b16 %v1096
    %v4060 = vunpack.c.l.b16 %v1097
    %v4061 = vunpack.c.l.b16 %v1098
    %v4062 = vunpack.c.l.b16 %v1099
    %v4063 = vunpack.c.l.b16 %v1100
    %v4064 = vunpack.c.l.b16 %v1101
    %v4065 = vunpack.c.l.b16 %v1102
    %v4066 = vunpack.c.l.b16 %v1103
    %v4067 = vunpack.c.l.b16 %v1104
    %v4068 = vunpack.c.l.b16 %v1105
    %v4069 = vunpack.c.l.b16 %v1106
    %v4070 = vunpack.c.l.b16 %v1107
    %v4071 = vunpack.c.l.b16 %v1108
    %v4072 = vunpack.c.l.b16 %v1109
    %v4073 = vunpack.c.l.b16 %v1110
    %v4074 = vunpack.c.l.b16 %v1111
    %v4075 = vunpack.c.l.b16 %v1112
    %v4076 = vunpack.c.l.b16 %v1113
    %v4077 = vunpack.c.l.b16 %v1114
    %v4078 = vunpack.c.l.b16 %v1115
    %v4079 = vunpack.c.l.b16 %v1116
    %v4080 = vunpack.c.l.b16 %v1117
    %v4081 = vunpack.c.l.b16 %v1118
    %v4082 = vunpack.c.l.b16 %v1119
    %v4083 = vunpack.c.l.b16 %v1120
    %v4084 = vunpack.c.l.b16 %v1121
    %v4085 = vunpack.c.l.b16 %v1122
    %v4086 = vunpack.c.l.b16 %v1123
    %v4087 = vunpack.c.l.b16 %v1124
    %v4088 = vunpack.c.l.b16 %v1125
    %v4089 = vunpack.c.l.b16 %v1126
    %v4090 = vunpack.c.l.b16 %v1127
    %v4091 = vunpack.c.l.b16 %v1128
    %v4092 = vunpack.c.l.b16 %v1129
    %v4093 = vunpack.c.l.b16 %v1130
    %v4094 = vunpack.c.l.b16 %v1131
    %v4095 = vunpack.c.l.b16 %v1132
    %v4096 = vunpack.c.l.b16 %v1133
    %v4097 = vunpack.c.l.b16 %v1134
    %v4098 = vunpack.c.l.b16 %v1135
    %v4099 = vunpack.c.l.b16 %v1136
    %v4100 = vunpack.c.l.b16 %v1137
    %v4101 = vunpack.c.l.b16 %v1138
    %v4102 = vunpack.c.l.b16 %v1139
    %v4103 = vunpack.c.l.b16 %v1140
    %v4104 = vunpack.c.l.b16 %v1141
    %v4105 = vunpack.c.l.b16 %v1142
    %v4106 = vunpack.c.l.b16 %v1143
    %v4107 = vunpack.c.l.b16 %v1144
    %v4108 = vunpack.c.l.b16 %v1145
    %v4109 = vunpack.c.l.b16 %v1146
    %v4110 = vunpack.c.l.b16 %v1147
    %v4111 = vunpack.c.l.b16 %v1148
    %v4112 = vunpack.c.l.b16 %v1149
    %v4113 = vunpack.c.l.b16 %v1150
    %v4114 = vunpack.c.l.b16 %v1151
    %v4115 = vunpack.c.l.b16 %v1152
    %v4116 = vunpack.c.l.b16 %v1153
    %v4117 = vunpack.c.l.b16 %v1154
    %v4118 = vunpack.c.l.b16 %v1155
    %v4119 = vunpack.c.l.b16 %v1156
    %v4120 = vunpack.c.l.b16 %v1157
    %v4121 = vunpack.c.l.b16 %v1158
    %v4122 = vunpack.c.l.b16 %v1159
    %v4123 = vunpack.c.l.b16 %v1160
    %v4124 = vunpack.c.l.b16 %v1161
    %v4125 = vunpack.c.l.b16 %v1162
    %v4126 = vunpack.c.l.b16 %v1163
    %v4127 = vunpack.c.l.b16 %v1164
    %v4128 = vunpack.c.l.b16 %v1165
    %v4129 = vunpack.c.l.b16 %v1166
    %v4130 = vunpack.c.l.b16 %v1167
    %v4131 = vunpack.c.l.b16 %v1168
    %v4132 = vunpack.c.l.b16 %v1169
    %v4133 = vunpack.c.l.b16 %v1170
    %v4134 = vunpack.c.l.b16 %v1171
    %v4135 = vunpack.c.l.b16 %v1172
    %v4136 = vunpack.c.l.b16 %v1173
    %v4137 = vunpack.c.l.b16 %v1174
    %v4138 = vunpack.c.l.b16 %v1175
    %v4139 = vunpack.c.l.b16 %v1176
    %v4140 = vunpack.c.l.b16 %v1177
    %v4141 = vunpack.c.l.b16 %v1178
    %v4142 = vunpack.c.l.b16 %v1179
    %v4143 = vunpack.c.l.b16 %v1180
    %v4144 = vunpack.c.l.b16 %v1181
    %v4145 = vunpack.c.l.b16 %v1182
    %v4146 = vunpack.c.l.b16 %v1183
    %v4147 = vunpack.c.l.b16 %v1184
    %v4148 = vunpack.c.l.b16 %v1185
    %v4149 = vunpack.c.l.b16 %v1186
    %v4150 = vunpack.c.l.b16 %v1187
    %v4151 = vunpack.c.l.b16 %v1188
    %v4152 = vunpack.c.l.b16 %v1189
    %v4153 = vunpack.c.l.b16 %v1190
    %v4154 = vunpack.c.l.b16 %v1191
    %v4155 = vunpack.c.l.b16 %v1192
    %v4156 = vunpack.c.l.b16 %v1193
    %v4157 = vunpack.c.l.b16 %v1194
    %v4158 = vunpack.c.l.b16 %v1195
    %v4159 = vunpack.c.l.b16 %v1196
    %v4160 = vunpack.c.l.b16 %v1197
    %v4161 = vunpack.c.l.b16 %v1198
    %v4162 = vunpack.c.l.b16 %v1199
    %v4163 = vunpack.c.l.b16 %v1200
    %v4164 = vunpack.c.l.b16 %v1201
    %v4165 = vunpack.c.l.b16 %v1202
    %v4166 = vunpack.c.l.b16 %v1203
    %v4167 = vunpack.c.l.b16 %v1204
    %v4168 = vunpack.c.l.b16 %v1205
    %v4169 = vunpack.c.l.b16 %v1206
    %v4170 = vunpack.c.l.b16 %v1207
    %v4171 = vunpack.c.l.b16 %v1208
    %v4172 = vunpack.c.l.b16 %v1209
    %v4173 = vunpack.c.l.b16 %v1210
    %v4174 = vunpack.c.l.b16 %v1211
    %v4175 = vunpack.c.l.b16 %v1212
    %v4176 = vunpack.c.l.b16 %v1213
    %v4177 = vunpack.c.l.b16 %v1214
    %v4178 = vunpack.c.l.b16 %v1215
    %v4179 = vunpack.c.l.b16 %v1216
    %v4180 = vunpack.c.l.b16 %v1217
    %v4181 = vunpack.c.l.b16 %v1218
    %v4182 = vunpack.c.l.b16 %v1219
    %v4183 = vunpack.c.l.b16 %v1220
    %v4184 = vunpack.c.l.b16 %v1221
    %v4185 = vunpack.c.l.b16 %v1222
    %v4186 = vunpack.c.l.b16 %v1223
    %v4187 = vunpack.c.l.b16 %v1224
    %v4188 = vunpack.c.l.b16 %v1225
    %v4189 = vunpack.c.l.b16 %v1226
    %v4190 = vunpack.c.l.b16 %v1227
    %v4191 = vunpack.c.l.b16 %v1228
    %v4192 = vunpack.c.l.b16 %v1229
    %v4193 = vunpack.c.l.b16 %v1230
    %v4194 = vunpack.c.l.b16 %v1231
    %v4195 = vunpack.c.l.b16 %v1232
    %v4196 = vunpack.c.l.b16 %v1233
    %v4197 = vunpack.c.l.b16 %v1234
    %v4198 = vunpack.c.l.b16 %v1235
    %v4199 = vunpack.c.l.b16 %v1236
    %v4200 = vunpack.c.l.b16 %v1237
    %v4201 = vunpack.c.l.b16 %v1238
    %v4202 = vunpack.c.l.b16 %v1239
    %v4203 = vunpack.c.l.b16 %v1240
    %v4204 = vunpack.c.l.b16 %v1241
    %v4205 = vunpack.c.l.b16 %v1242
    %v4206 = vunpack.c.l.b16 %v1243
    %v4207 = vpack.c.b16 %v3008, %v3007
    %v4208 = vpack.c.b16 %v3010, %v3009
    %v4209 = vpack.c.b16 %v3012, %v3011
    %v4210 = vpack.c.b16 %v3014, %v3013
    %v4211 = vpack.c.b16 %v3016, %v3015
    %v4212 = vpack.c.b16 %v3018, %v3017
    %v4213 = vpack.c.b16 %v3020, %v3019
    %v4214 = vpack.c.b16 %v3022, %v3021
    %v4215 = vpack.c.b16 %v3024, %v3023
    %v4216 = vpack.c.b16 %v3026, %v3025
    %v4217 = vpack.c.b16 %v3028, %v3027
    %v4218 = vpack.c.b16 %v3030, %v3029
    %v4219 = vpack.c.b16 %v3032, %v3031
    %v4220 = vpack.c.b16 %v3034, %v3033
    %v4221 = vpack.c.b16 %v3036, %v3035
    %v4222 = vpack.c.b16 %v3038, %v3037
    %v4223 = vpack.c.b16 %v3040, %v3039
    %v4224 = vpack.c.b16 %v3042, %v3041
    %v4225 = vpack.c.b16 %v3044, %v3043
    %v4226 = vpack.c.b16 %v3046, %v3045
    %v4227 = vpack.c.b16 %v3048, %v3047
    %v4228 = vpack.c.b16 %v3050, %v3049
    %v4229 = vpack.c.b16 %v3052, %v3051
    %v4230 = vpack.c.b16 %v3054, %v3053
    %v4231 = vpack.c.b16 %v3056, %v3055
    %v4232 = vpack.c.b16 %v3058, %v3057
    %v4233 = vpack.c.b16 %v3060, %v3059
    %v4234 = vpack.c.b16 %v3062, %v3061
    %v4235 = vpack.c.b16 %v3064, %v3063
    %v4236 = vpack.c.b16 %v3066, %v3065
    %v4237 = vpack.c.b16 %v3068, %v3067
    %v4238 = vpack.c.b16 %v3070, %v3069
    %v4239 = vpack.c.b16 %v3072, %v3071
    %v4240 = vpack.c.b16 %v3074, %v3073
    %v4241 = vpack.c.b16 %v3076, %v3075
    %v4242 = vpack.c.b16 %v3078, %v3077
    %v4243 = vpack.c.b16 %v3080, %v3079
    %v4244 = vpack.c.b16 %v3082, %v3081
    %v4245 = vpack.c.b16 %v3084, %v3083
    %v4246 = vpack.c.b16 %v3086, %v3085
    %v4247 = vpack.c.b16 %v3088, %v3087
    %v4248 = vpack.c.b16 %v3090, %v3089
    %v4249 = vpack.c.b16 %v3092, %v3091
    %v4250 = vpack.c.b16 %v3094, %v3093
    %v4251 = vpack.c.b16 %v3096, %v3095
    %v4252 = vpack.c.b16 %v3098, %v3097
    %v4253 = vpack.c.b16 %v3100, %v3099
    %v4254 = vpack.c.b16 %v3102, %v3101
    %v4255 = vpack.c.b16 %v3104, %v3103
    %v4256 = vpack.c.b16 %v3106, %v3105
    %v4257 = vpack.c.b16 %v3108, %v3107
    %v4258 = vpack.c.b16 %v3110, %v3109
    %v4259 = vpack.c.b16 %v3112, %v3111
    %v4260 = vpack.c.b16 %v3114, %v3113
    %v4261 = vpack.c.b16 %v3116, %v3115
    %v4262 = vpack.c.b16 %v3118, %v3117
    %v4263 = vpack.c.b16 %v3120, %v3119
    %v4264 = vpack.c.b16 %v3122, %v3121
    %v4265 = vpack.c.b16 %v3124, %v3123
    %v4266 = vpack.c.b16 %v3126, %v3125
    %v4267 = vpack.c.b16 %v3128, %v3127
    %v4268 = vpack.c.b16 %v3130, %v3129
    %v4269 = vpack.c.b16 %v3132, %v3131
    %v4270 = vpack.c.b16 %v3134, %v3133
    %v4271 = vpack.c.b16 %v3136, %v3135
    %v4272 = vpack.c.b16 %v3138, %v3137
    %v4273 = vpack.c.b16 %v3140, %v3139
    %v4274 = vpack.c.b16 %v3142, %v3141
    %v4275 = vpack.c.b16 %v3144, %v3143
    %v4276 = vpack.c.b16 %v3146, %v3145
    %v4277 = vpack.c.b16 %v3148, %v3147
    %v4278 = vpack.c.b16 %v3150, %v3149
    %v4279 = vpack.c.b16 %v3152, %v3151
    %v4280 = vpack.c.b16 %v3154, %v3153
    %v4281 = vpack.c.b16 %v3156, %v3155
    %v4282 = vpack.c.b16 %v3158, %v3157
    %v4283 = vpack.c.b16 %v3160, %v3159
    %v4284 = vpack.c.b16 %v3162, %v3161
    %v4285 = vpack.c.b16 %v3164, %v3163
    %v4286 = vpack.c.b16 %v3166, %v3165
    %v4287 = vpack.c.b16 %v3168, %v3167
    %v4288 = vpack.c.b16 %v3170, %v3169
    %v4289 = vpack.c.b16 %v3172, %v3171
    %v4290 = vpack.c.b16 %v3174, %v3173
    %v4291 = vpack.c.b16 %v3176, %v3175
    %v4292 = vpack.c.b16 %v3178, %v3177
    %v4293 = vpack.c.b16 %v3180, %v3179
    %v4294 = vpack.c.b16 %v3182, %v3181
    %v4295 = vpack.c.b16 %v3184, %v3183
    %v4296 = vpack.c.b16 %v3186, %v3185
    %v4297 = vpack.c.b16 %v3188, %v3187
    %v4298 = vpack.c.b16 %v3190, %v3189
    %v4299 = vpack.c.b16 %v3192, %v3191
    %v4300 = vpack.c.b16 %v3194, %v3193
    %v4301 = vpack.c.b16 %v3196, %v3195
    %v4302 = vpack.c.b16 %v3198, %v3197
    %v4303 = vpack.c.b16 %v3200, %v3199
    %v4304 = vpack.c.b16 %v3202, %v3201
    %v4305 = vpack.c.b16 %v3204, %v3203
    %v4306 = vpack.c.b16 %v3206, %v3205
    %v4307 = vpack.c.b16 %v3208, %v3207
    %v4308 = vpack.c.b16 %v3210, %v3209
    %v4309 = vpack.c.b16 %v3212, %v3211
    %v4310 = vpack.c.b16 %v3214, %v3213
    %v4311 = vpack.c.b16 %v3216, %v3215
    %v4312 = vpack.c.b16 %v3218, %v3217
    %v4313 = vpack.c.b16 %v3220, %v3219
    %v4314 = vpack.c.b16 %v3222, %v3221
    %v4315 = vpack.c.b16 %v3224, %v3223
    %v4316 = vpack.c.b16 %v3226, %v3225
    %v4317 = vpack.c.b16 %v3228, %v3227
    %v4318 = vpack.c.b16 %v3230, %v3229
    %v4319 = vpack.c.b16 %v3232, %v3231
    %v4320 = vpack.c.b16 %v3234, %v3233
    %v4321 = vpack.c.b16 %v3236, %v3235
    %v4322 = vpack.c.b16 %v3238, %v3237
    %v4323 = vpack.c.b16 %v3240, %v3239
    %v4324 = vpack.c.b16 %v3242, %v3241
    %v4325 = vpack.c.b16 %v3244, %v3243
    %v4326 = vpack.c.b16 %v3246, %v3245
    %v4327 = vpack.c.b16 %v3248, %v3247
    %v4328 = vpack.c.b16 %v3250, %v3249
    %v4329 = vpack.c.b16 %v3252, %v3251
    %v4330 = vpack.c.b16 %v3254, %v3253
    %v4331 = vpack.c.b16 %v3256, %v3255
    %v4332 = vpack.c.b16 %v3258, %v3257
    %v4333 = vpack.c.b16 %v3260, %v3259
    %v4334 = vpack.c.b16 %v3262, %v3261
    %v4335 = vpack.c.b16 %v3264, %v3263
    %v4336 = vpack.c.b16 %v3266, %v3265
    %v4337 = vpack.c.b16 %v3268, %v3267
    %v4338 = vpack.c.b16 %v3270, %v3269
    %v4339 = vpack.c.b16 %v3272, %v3271
    %v4340 = vpack.c.b16 %v3274, %v3273
    %v4341 = vpack.c.b16 %v3276, %v3275
    %v4342 = vpack.c.b16 %v3278, %v3277
    %v4343 = vpack.c.b16 %v3280, %v3279
    %v4344 = vpack.c.b16 %v3282, %v3281
    %v4345 = vpack.c.b16 %v3284, %v3283
    %v4346 = vpack.c.b16 %v3286, %v3285
    %v4347 = vpack.c.b16 %v3288, %v3287
    %v4348 = vpack.c.b16 %v3290, %v3289
    %v4349 = vpack.c.b16 %v3292, %v3291
    %v4350 = vpack.c.b16 %v3294, %v3293
    %v4351 = vpack.c.b16 %v3296, %v3295
    %v4352 = vpack.c.b16 %v3298, %v3297
    %v4353 = vpack.c.b16 %v3300, %v3299
    %v4354 = vpack.c.b16 %v3302, %v3301
    %v4355 = vpack.c.b16 %v3304, %v3303
    %v4356 = vpack.c.b16 %v3306, %v3305
    %v4357 = vpack.c.b16 %v3308, %v3307
    %v4358 = vpack.c.b16 %v3310, %v3309
    %v4359 = vpack.c.b16 %v3312, %v3311
    %v4360 = vpack.c.b16 %v3314, %v3313
    %v4361 = vpack.c.b16 %v3316, %v3315
    %v4362 = vpack.c.b16 %v3318, %v3317
    %v4363 = vpack.c.b16 %v3320, %v3319
    %v4364 = vpack.c.b16 %v3322, %v3321
    %v4365 = vpack.c.b16 %v3324, %v3323
    %v4366 = vpack.c.b16 %v3326, %v3325
    %v4367 = vpack.c.b16 %v3328, %v3327
    %v4368 = vpack.c.b16 %v3330, %v3329
    %v4369 = vpack.c.b16 %v3332, %v3331
    %v4370 = vpack.c.b16 %v3334, %v3333
    %v4371 = vpack.c.b16 %v3336, %v3335
    %v4372 = vpack.c.b16 %v3338, %v3337
    %v4373 = vpack.c.b16 %v3340, %v3339
    %v4374 = vpack.c.b16 %v3342, %v3341
    %v4375 = vpack.c.b16 %v3344, %v3343
    %v4376 = vpack.c.b16 %v3346, %v3345
    %v4377 = vpack.c.b16 %v3348, %v3347
    %v4378 = vpack.c.b16 %v3350, %v3349
    %v4379 = vpack.c.b16 %v3352, %v3351
    %v4380 = vpack.c.b16 %v3354, %v3353
    %v4381 = vpack.c.b16 %v3356, %v3355
    %v4382 = vpack.c.b16 %v3358, %v3357
    %v4383 = vpack.c.b16 %v3360, %v3359
    %v4384 = vpack.c.b16 %v3362, %v3361
    %v4385 = vpack.c.b16 %v3364, %v3363
    %v4386 = vpack.c.b16 %v3366, %v3365
    %v4387 = vpack.c.b16 %v3368, %v3367
    %v4388 = vpack.c.b16 %v3370, %v3369
    %v4389 = vpack.c.b16 %v3372, %v3371
    %v4390 = vpack.c.b16 %v3374, %v3373
    %v4391 = vpack.c.b16 %v3376, %v3375
    %v4392 = vpack.c.b16 %v3378, %v3377
    %v4393 = vpack.c.b16 %v3380, %v3379
    %v4394 = vpack.c.b16 %v3382, %v3381
    %v4395 = vpack.c.b16 %v3384, %v3383
    %v4396 = vpack.c.b16 %v3386, %v3385
    %v4397 = vpack.c.b16 %v3388, %v3387
    %v4398 = vpack.c.b16 %v3390, %v3389
    %v4399 = vpack.c.b16 %v3392, %v3391
    %v4400 = vpack.c.b16 %v3394, %v3393
    %v4401 = vpack.c.b16 %v3396, %v3395
    %v4402 = vpack.c.b16 %v3398, %v3397
    %v4403 = vpack.c.b16 %v3400, %v3399
    %v4404 = vpack.c.b16 %v3402, %v3401
    %v4405 = vpack.c.b16 %v3404, %v3403
    %v4406 = vpack.c.b16 %v3406, %v3405
    %v4407 = vpack.c.b16 %v3408, %v3407
    %v4408 = vpack.c.b16 %v3410, %v3409
    %v4409 = vpack.c.b16 %v3412, %v3411
    %v4410 = vpack.c.b16 %v3414, %v3413
    %v4411 = vpack.c.b16 %v3416, %v3415
    %v4412 = vpack.c.b16 %v3418, %v3417
    %v4413 = vpack.c.b16 %v3420, %v3419
    %v4414 = vpack.c.b16 %v3422, %v3421
    %v4415 = vpack.c.b16 %v3424, %v3423
    %v4416 = vpack.c.b16 %v3426, %v3425
    %v4417 = vpack.c.b16 %v3428, %v3427
    %v4418 = vpack.c.b16 %v3430, %v3429
    %v4419 = vpack.c.b16 %v3432, %v3431
    %v4420 = vpack.c.b16 %v3434, %v3433
    %v4421 = vpack.c.b16 %v3436, %v3435
    %v4422 = vpack.c.b16 %v3438, %v3437
    %v4423 = vpack.c.b16 %v3440, %v3439
    %v4424 = vpack.c.b16 %v3442, %v3441
    %v4425 = vpack.c.b16 %v3444, %v3443
    %v4426 = vpack.c.b16 %v3446, %v3445
    %v4427 = vpack.c.b16 %v3448, %v3447
    %v4428 = vpack.c.b16 %v3450, %v3449
    %v4429 = vpack.c.b16 %v3452, %v3451
    %v4430 = vpack.c.b16 %v3454, %v3453
    %v4431 = vpack.c.b16 %v3456, %v3455
    %v4432 = vpack.c.b16 %v3458, %v3457
    %v4433 = vpack.c.b16 %v3460, %v3459
    %v4434 = vpack.c.b16 %v3462, %v3461
    %v4435 = vpack.c.b16 %v3464, %v3463
    %v4436 = vpack.c.b16 %v3466, %v3465
    %v4437 = vpack.c.b16 %v3468, %v3467
    %v4438 = vpack.c.b16 %v3470, %v3469
    %v4439 = vpack.c.b16 %v3472, %v3471
    %v4440 = vpack.c.b16 %v3474, %v3473
    %v4441 = vpack.c.b16 %v3476, %v3475
    %v4442 = vpack.c.b16 %v3478, %v3477
    %v4443 = vpack.c.b16 %v3480, %v3479
    %v4444 = vpack.c.b16 %v3482, %v3481
    %v4445 = vpack.c.b16 %v3484, %v3483
    %v4446 = vpack.c.b16 %v3486, %v3485
    %v4447 = vpack.c.b16 %v3488, %v3487
    %v4448 = vpack.c.b16 %v3490, %v3489
    %v4449 = vpack.c.b16 %v3492, %v3491
    %v4450 = vpack.c.b16 %v3494, %v3493
    %v4451 = vpack.c.b16 %v3496, %v3495
    %v4452 = vpack.c.b16 %v3498, %v3497
    %v4453 = vpack.c.b16 %v3500, %v3499
    %v4454 = vpack.c.b16 %v3502, %v3501
    %v4455 = vpack.c.b16 %v3504, %v3503
    %v4456 = vpack.c.b16 %v3506, %v3505
    %v4457 = vpack.c.b16 %v3508, %v3507
    %v4458 = vpack.c.b16 %v3510, %v3509
    %v4459 = vpack.c.b16 %v3512, %v3511
    %v4460 = vpack.c.b16 %v3514, %v3513
    %v4461 = vpack.c.b16 %v3516, %v3515
    %v4462 = vpack.c.b16 %v3518, %v3517
    %v4463 = vpack.c.b16 %v3520, %v3519
    %v4464 = vpack.c.b16 %v3522, %v3521
    %v4465 = vpack.c.b16 %v3524, %v3523
    %v4466 = vpack.c.b16 %v3526, %v3525
    %v4467 = vpack.c.b16 %v3528, %v3527
    %v4468 = vpack.c.b16 %v3530, %v3529
    %v4469 = vpack.c.b16 %v3532, %v3531
    %v4470 = vpack.c.b16 %v3534, %v3533
    %v4471 = vpack.c.b16 %v3536, %v3535
    %v4472 = vpack.c.b16 %v3538, %v3537
    %v4473 = vpack.c.b16 %v3540, %v3539
    %v4474 = vpack.c.b16 %v3542, %v3541
    %v4475 = vpack.c.b16 %v3544, %v3543
    %v4476 = vpack.c.b16 %v3546, %v3545
    %v4477 = vpack.c.b16 %v3548, %v3547
    %v4478 = vpack.c.b16 %v3550, %v3549
    %v4479 = vpack.c.b16 %v3552, %v3551
    %v4480 = vpack.c.b16 %v3554, %v3553
    %v4481 = vpack.c.b16 %v3556, %v3555
    %v4482 = vpack.c.b16 %v3558, %v3557
    %v4483 = vpack.c.b16 %v3560, %v3559
    %v4484 = vpack.c.b16 %v3562, %v3561
    %v4485 = vpack.c.b16 %v3564, %v3563
    %v4486 = vpack.c.b16 %v3566, %v3565
    %v4487 = vpack.c.b16 %v3568, %v3567
    %v4488 = vpack.c.b16 %v3570, %v3569
    %v4489 = vpack.c.b16 %v3572, %v3571
    %v4490 = vpack.c.b16 %v3574, %v3573
    %v4491 = vpack.c.b16 %v3576, %v3575
    %v4492 = vpack.c.b16 %v3578, %v3577
    %v4493 = vpack.c.b16 %v3580, %v3579
    %v4494 = vpack.c.b16 %v3582, %v3581
    %v4495 = vpack.c.b16 %v3584, %v3583
    %v4496 = vpack.c.b16 %v3586, %v3585
    %v4497 = vpack.c.b16 %v3588, %v3587
    %v4498 = vpack.c.b16 %v3590, %v3589
    %v4499 = vpack.c.b16 %v3592, %v3591
    %v4500 = vpack.c.b16 %v3594, %v3593
    %v4501 = vpack.c.b16 %v3596, %v3595
    %v4502 = vpack.c.b16 %v3598, %v3597
    %v4503 = vpack.c.b16 %v3600, %v3599
    %v4504 = vpack.c.b16 %v3602, %v3601
    %v4505 = vpack.c.b16 %v3604, %v3603
    %v4506 = vpack.c.b16 %v3606, %v3605
    %v4507 = vpack.c.b16 %v3608, %v3607
    %v4508 = vpack.c.b16 %v3610, %v3609
    %v4509 = vpack.c.b16 %v3612, %v3611
    %v4510 = vpack.c.b16 %v3614, %v3613
    %v4511 = vpack.c.b16 %v3616, %v3615
    %v4512 = vpack.c.b16 %v3618, %v3617
    %v4513 = vpack.c.b16 %v3620, %v3619
    %v4514 = vpack.c.b16 %v3622, %v3621
    %v4515 = vpack.c.b16 %v3624, %v3623
    %v4516 = vpack.c.b16 %v3626, %v3625
    %v4517 = vpack.c.b16 %v3628, %v3627
    %v4518 = vpack.c.b16 %v3630, %v3629
    %v4519 = vpack.c.b16 %v3632, %v3631
    %v4520 = vpack.c.b16 %v3634, %v3633
    %v4521 = vpack.c.b16 %v3636, %v3635
    %v4522 = vpack.c.b16 %v3638, %v3637
    %v4523 = vpack.c.b16 %v3640, %v3639
    %v4524 = vpack.c.b16 %v3642, %v3641
    %v4525 = vpack.c.b16 %v3644, %v3643
    %v4526 = vpack.c.b16 %v3646, %v3645
    %v4527 = vpack.c.b16 %v3648, %v3647
    %v4528 = vpack.c.b16 %v3650, %v3649
    %v4529 = vpack.c.b16 %v3652, %v3651
    %v4530 = vpack.c.b16 %v3654, %v3653
    %v4531 = vpack.c.b16 %v3656, %v3655
    %v4532 = vpack.c.b16 %v3658, %v3657
    %v4533 = vpack.c.b16 %v3660, %v3659
    %v4534 = vpack.c.b16 %v3662, %v3661
    %v4535 = vpack.c.b16 %v3664, %v3663
    %v4536 = vpack.c.b16 %v3666, %v3665
    %v4537 = vpack.c.b16 %v3668, %v3667
    %v4538 = vpack.c.b16 %v3670, %v3669
    %v4539 = vpack.c.b16 %v3672, %v3671
    %v4540 = vpack.c.b16 %v3674, %v3673
    %v4541 = vpack.c.b16 %v3676, %v3675
    %v4542 = vpack.c.b16 %v3678, %v3677
    %v4543 = vpack.c.b16 %v3680, %v3679
    %v4544 = vpack.c.b16 %v3682, %v3681
    %v4545 = vpack.c.b16 %v3684, %v3683
    %v4546 = vpack.c.b16 %v3686, %v3685
    %v4547 = vpack.c.b16 %v3688, %v3687
    %v4548 = vpack.c.b16 %v3690, %v3689
    %v4549 = vpack.c.b16 %v3692, %v3691
    %v4550 = vpack.c.b16 %v3694, %v3693
    %v4551 = vpack.c.b16 %v3696, %v3695
    %v4552 = vpack.c.b16 %v3698, %v3697
    %v4553 = vpack.c.b16 %v3700, %v3699
    %v4554 = vpack.c.b16 %v3702, %v3701
    %v4555 = vpack.c.b16 %v3704, %v3703
    %v4556 = vpack.c.b16 %v3706, %v3705
    %v4557 = vpack.c.b16 %v3708, %v3707
    %v4558 = vpack.c.b16 %v3710, %v3709
    %v4559 = vpack.c.b16 %v3712, %v3711
    %v4560 = vpack.c.b16 %v3714, %v3713
    %v4561 = vpack.c.b16 %v3716, %v3715
    %v4562 = vpack.c.b16 %v3718, %v3717
    %v4563 = vpack.c.b16 %v3720, %v3719
    %v4564 = vpack.c.b16 %v3722, %v3721
    %v4565 = vpack.c.b16 %v3724, %v3723
    %v4566 = vpack.c.b16 %v3726, %v3725
    %v4567 = vpack.c.b16 %v3728, %v3727
    %v4568 = vpack.c.b16 %v3730, %v3729
    %v4569 = vpack.c.b16 %v3732, %v3731
    %v4570 = vpack.c.b16 %v3734, %v3733
    %v4571 = vpack.c.b16 %v3736, %v3735
    %v4572 = vpack.c.b16 %v3738, %v3737
    %v4573 = vpack.c.b16 %v3740, %v3739
    %v4574 = vpack.c.b16 %v3742, %v3741
    %v4575 = vpack.c.b16 %v3744, %v3743
    %v4576 = vpack.c.b16 %v3746, %v3745
    %v4577 = vpack.c.b16 %v3748, %v3747
    %v4578 = vpack.c.b16 %v3750, %v3749
    %v4579 = vpack.c.b16 %v3752, %v3751
    %v4580 = vpack.c.b16 %v3754, %v3753
    %v4581 = vpack.c.b16 %v3756, %v3755
    %v4582 = vpack.c.b16 %v3758, %v3757
    %v4583 = vpack.c.b16 %v3760, %v3759
    %v4584 = vpack.c.b16 %v3762, %v3761
    %v4585 = vpack.c.b16 %v3764, %v3763
    %v4586 = vpack.c.b16 %v3766, %v3765
    %v4587 = vpack.c.b16 %v3768, %v3767
    %v4588 = vpack.c.b16 %v3770, %v3769
    %v4589 = vpack.c.b16 %v3772, %v3771
    %v4590 = vpack.c.b16 %v3774, %v3773
    %v4591 = vpack.c.b16 %v3776, %v3775
    %v4592 = vpack.c.b16 %v3778, %v3777
    %v4593 = vpack.c.b16 %v3780, %v3779
    %v4594 = vpack.c.b16 %v3782, %v3781
    %v4595 = vpack.c.b16 %v3784, %v3783
    %v4596 = vpack.c.b16 %v3786, %v3785
    %v4597 = vpack.c.b16 %v3788, %v3787
    %v4598 = vpack.c.b16 %v3790, %v3789
    %v4599 = vpack.c.b16 %v3792, %v3791
    %v4600 = vpack.c.b16 %v3794, %v3793
    %v4601 = vpack.c.b16 %v3796, %v3795
    %v4602 = vpack.c.b16 %v3798, %v3797
    %v4603 = vpack.c.b16 %v3800, %v3799
    %v4604 = vpack.c.b16 %v3802, %v3801
    %v4605 = vpack.c.b16 %v3804, %v3803
    %v4606 = vpack.c.b16 %v3806, %v3805
    %v4607 = vpack.c.b16 %v3808, %v3807
    %v4608 = vpack.c.b16 %v3810, %v3809
    %v4609 = vpack.c.b16 %v3812, %v3811
    %v4610 = vpack.c.b16 %v3814, %v3813
    %v4611 = vpack.c.b16 %v3816, %v3815
    %v4612 = vpack.c.b16 %v3818, %v3817
    %v4613 = vpack.c.b16 %v3820, %v3819
    %v4614 = vpack.c.b16 %v3822, %v3821
    %v4615 = vpack.c.b16 %v3824, %v3823
    %v4616 = vpack.c.b16 %v3826, %v3825
    %v4617 = vpack.c.b16 %v3828, %v3827
    %v4618 = vpack.c.b16 %v3830, %v3829
    %v4619 = vpack.c.b16 %v3832, %v3831
    %v4620 = vpack.c.b16 %v3834, %v3833
    %v4621 = vpack.c.b16 %v3836, %v3835
    %v4622 = vpack.c.b16 %v3838, %v3837
    %v4623 = vpack.c.b16 %v3840, %v3839
    %v4624 = vpack.c.b16 %v3842, %v3841
    %v4625 = vpack.c.b16 %v3844, %v3843
    %v4626 = vpack.c.b16 %v3846, %v3845
    %v4627 = vpack.c.b16 %v3848, %v3847
    %v4628 = vpack.c.b16 %v3850, %v3849
    %v4629 = vpack.c.b16 %v3852, %v3851
    %v4630 = vpack.c.b16 %v3854, %v3853
    %v4631 = vpack.c.b16 %v3856, %v3855
    %v4632 = vpack.c.b16 %v3858, %v3857
    %v4633 = vpack.c.b16 %v3860, %v3859
    %v4634 = vpack.c.b16 %v3862, %v3861
    %v4635 = vpack.c.b16 %v3864, %v3863
    %v4636 = vpack.c.b16 %v3866, %v3865
    %v4637 = vpack.c.b16 %v3868, %v3867
    %v4638 = vpack.c.b16 %v3870, %v3869
    %v4639 = vpack.c.b16 %v3872, %v3871
    %v4640 = vpack.c.b16 %v3874, %v3873
    %v4641 = vpack.c.b16 %v3876, %v3875
    %v4642 = vpack.c.b16 %v3878, %v3877
    %v4643 = vpack.c.b16 %v3880, %v3879
    %v4644 = vpack.c.b16 %v3882, %v3881
    %v4645 = vpack.c.b16 %v3884, %v3883
    %v4646 = vpack.c.b16 %v3886, %v3885
    %v4647 = vpack.c.b16 %v3888, %v3887
    %v4648 = vpack.c.b16 %v3890, %v3889
    %v4649 = vpack.c.b16 %v3892, %v3891
    %v4650 = vpack.c.b16 %v3894, %v3893
    %v4651 = vpack.c.b16 %v3896, %v3895
    %v4652 = vpack.c.b16 %v3898, %v3897
    %v4653 = vpack.c.b16 %v3900, %v3899
    %v4654 = vpack.c.b16 %v3902, %v3901
    %v4655 = vpack.c.b16 %v3904, %v3903
    %v4656 = vpack.c.b16 %v3906, %v3905
    %v4657 = vpack.c.b16 %v3908, %v3907
    %v4658 = vpack.c.b16 %v3910, %v3909
    %v4659 = vpack.c.b16 %v3912, %v3911
    %v4660 = vpack.c.b16 %v3914, %v3913
    %v4661 = vpack.c.b16 %v3916, %v3915
    %v4662 = vpack.c.b16 %v3918, %v3917
    %v4663 = vpack.c.b16 %v3920, %v3919
    %v4664 = vpack.c.b16 %v3922, %v3921
    %v4665 = vpack.c.b16 %v3924, %v3923
    %v4666 = vpack.c.b16 %v3926, %v3925
    %v4667 = vpack.c.b16 %v3928, %v3927
    %v4668 = vpack.c.b16 %v3930, %v3929
    %v4669 = vpack.c.b16 %v3932, %v3931
    %v4670 = vpack.c.b16 %v3934, %v3933
    %v4671 = vpack.c.b16 %v3936, %v3935
    %v4672 = vpack.c.b16 %v3938, %v3937
    %v4673 = vpack.c.b16 %v3940, %v3939
    %v4674 = vpack.c.b16 %v3942, %v3941
    %v4675 = vpack.c.b16 %v3944, %v3943
    %v4676 = vpack.c.b16 %v3946, %v3945
    %v4677 = vpack.c.b16 %v3948, %v3947
    %v4678 = vpack.c.b16 %v3950, %v3949
    %v4679 = vpack.c.b16 %v3952, %v3951
    %v4680 = vpack.c.b16 %v3954, %v3953
    %v4681 = vpack.c.b16 %v3956, %v3955
    %v4682 = vpack.c.b16 %v3958, %v3957
    %v4683 = vpack.c.b16 %v3960, %v3959
    %v4684 = vpack.c.b16 %v3962, %v3961
    %v4685 = vpack.c.b16 %v3964, %v3963
    %v4686 = vpack.c.b16 %v3966, %v3965
    %v4687 = vpack.c.b16 %v3968, %v3967
    %v4688 = vpack.c.b16 %v3970, %v3969
    %v4689 = vpack.c.b16 %v3972, %v3971
    %v4690 = vpack.c.b16 %v3974, %v3973
    %v4691 = vpack.c.b16 %v3976, %v3975
    %v4692 = vpack.c.b16 %v3978, %v3977
    %v4693 = vpack.c.b16 %v3980, %v3979
    %v4694 = vpack.c.b16 %v3982, %v3981
    %v4695 = vpack.c.b16 %v3984, %v3983
    %v4696 = vpack.c.b16 %v3986, %v3985
    %v4697 = vpack.c.b16 %v3988, %v3987
    %v4698 = vpack.c.b16 %v3990, %v3989
    %v4699 = vpack.c.b16 %v3992, %v3991
    %v4700 = vpack.c.b16 %v3994, %v3993
    %v4701 = vpack.c.b16 %v3996, %v3995
    %v4702 = vpack.c.b16 %v3998, %v3997
    %v4703 = vpack.c.b16 %v4000, %v3999
    %v4704 = vpack.c.b16 %v4002, %v4001
    %v4705 = vpack.c.b16 %v4004, %v4003
    %v4706 = vpack.c.b16 %v4006, %v4005
    %v4707 = vpack.c.b16 %v4008, %v4007
    %v4708 = vpack.c.b16 %v4010, %v4009
    %v4709 = vpack.c.b16 %v4012, %v4011
    %v4710 = vpack.c.b16 %v4014, %v4013
    %v4711 = vpack.c.b16 %v4016, %v4015
    %v4712 = vpack.c.b16 %v4018, %v4017
    %v4713 = vpack.c.b16 %v4020, %v4019
    %v4714 = vpack.c.b16 %v4022, %v4021
    %v4715 = vpack.c.b16 %v4024, %v4023
    %v4716 = vpack.c.b16 %v4026, %v4025
    %v4717 = vpack.c.b16 %v4028, %v4027
    %v4718 = vpack.c.b16 %v4030, %v4029
    %v4719 = vpack.c.b16 %v4032, %v4031
    %v4720 = vpack.c.b16 %v4034, %v4033
    %v4721 = vpack.c.b16 %v4036, %v4035
    %v4722 = vpack.c.b16 %v4038, %v4037
    %v4723 = vpack.c.b16 %v4040, %v4039
    %v4724 = vpack.c.b16 %v4042, %v4041
    %v4725 = vpack.c.b16 %v4044, %v4043
    %v4726 = vpack.c.b16 %v4046, %v4045
    %v4727 = vpack.c.b16 %v4048, %v4047
    %v4728 = vpack.c.b16 %v4050, %v4049
    %v4729 = vpack.c.b16 %v4052, %v4051
    %v4730 = vpack.c.b16 %v4054, %v4053
    %v4731 = vpack.c.b16 %v4056, %v4055
    %v4732 = vpack.c.b16 %v4058, %v4057
    %v4733 = vpack.c.b16 %v4060, %v4059
    %v4734 = vpack.c.b16 %v4062, %v4061
    %v4735 = vpack.c.b16 %v4064, %v4063
    %v4736 = vpack.c.b16 %v4066, %v4065
    %v4737 = vpack.c.b16 %v4068, %v4067
    %v4738 = vpack.c.b16 %v4070, %v4069
    %v4739 = vpack.c.b16 %v4072, %v4071
    %v4740 = vpack.c.b16 %v4074, %v4073
    %v4741 = vpack.c.b16 %v4076, %v4075
    %v4742 = vpack.c.b16 %v4078, %v4077
    %v4743 = vpack.c.b16 %v4080, %v4079
    %v4744 = vpack.c.b16 %v4082, %v4081
    %v4745 = vpack.c.b16 %v4084, %v4083
    %v4746 = vpack.c.b16 %v4086, %v4085
    %v4747 = vpack.c.b16 %v4088, %v4087
    %v4748 = vpack.c.b16 %v4090, %v4089
    %v4749 = vpack.c.b16 %v4092, %v4091
    %v4750 = vpack.c.b16 %v4094, %v4093
    %v4751 = vpack.c.b16 %v4096, %v4095
    %v4752 = vpack.c.b16 %v4098, %v4097
    %v4753 = vpack.c.b16 %v4100, %v4099
    %v4754 = vpack.c.b16 %v4102, %v4101
    %v4755 = vpack.c.b16 %v4104, %v4103
    %v4756 = vpack.c.b16 %v4106, %v4105
    %v4757 = vpack.c.b16 %v4108, %v4107
    %v4758 = vpack.c.b16 %v4110, %v4109
    %v4759 = vpack.c.b16 %v4112, %v4111
    %v4760 = vpack.c.b16 %v4114, %v4113
    %v4761 = vpack.c.b16 %v4116, %v4115
    %v4762 = vpack.c.b16 %v4118, %v4117
    %v4763 = vpack.c.b16 %v4120, %v4119
    %v4764 = vpack.c.b16 %v4122, %v4121
    %v4765 = vpack.c.b16 %v4124, %v4123
    %v4766 = vpack.c.b16 %v4126, %v4125
    %v4767 = vpack.c.b16 %v4128, %v4127
    %v4768 = vpack.c.b16 %v4130, %v4129
    %v4769 = vpack.c.b16 %v4132, %v4131
    %v4770 = vpack.c.b16 %v4134, %v4133
    %v4771 = vpack.c.b16 %v4136, %v4135
    %v4772 = vpack.c.b16 %v4138, %v4137
    %v4773 = vpack.c.b16 %v4140, %v4139
    %v4774 = vpack.c.b16 %v4142, %v4141
    %v4775 = vpack.c.b16 %v4144, %v4143
    %v4776 = vpack.c.b16 %v4146, %v4145
    %v4777 = vpack.c.b16 %v4148, %v4147
    %v4778 = vpack.c.b16 %v4150, %v4149
    %v4779 = vpack.c.b16 %v4152, %v4151
    %v4780 = vpack.c.b16 %v4154, %v4153
    %v4781 = vpack.c.b16 %v4156, %v4155
    %v4782 = vpack.c.b16 %v4158, %v4157
    %v4783 = vpack.c.b16 %v4160, %v4159
    %v4784 = vpack.c.b16 %v4162, %v4161
    %v4785 = vpack.c.b16 %v4164, %v4163
    %v4786 = vpack.c.b16 %v4166, %v4165
    %v4787 = vpack.c.b16 %v4168, %v4167
    %v4788 = vpack.c.b16 %v4170, %v4169
    %v4789 = vpack.c.b16 %v4172, %v4171
    %v4790 = vpack.c.b16 %v4174, %v4173
    %v4791 = vpack.c.b16 %v4176, %v4175
    %v4792 = vpack.c.b16 %v4178, %v4177
    %v4793 = vpack.c.b16 %v4180, %v4179
    %v4794 = vpack.c.b16 %v4182, %v4181
    %v4795 = vpack.c.b16 %v4184, %v4183
    %v4796 = vpack.c.b16 %v4186, %v4185
    %v4797 = vpack.c.b16 %v4188, %v4187
    %v4798 = vpack.c.b16 %v4190, %v4189
    %v4799 = vpack.c.b16 %v4192, %v4191
    %v4800 = vpack.c.b16 %v4194, %v4193
    %v4801 = vpack.c.b16 %v4196, %v4195
    %v4802 = vpack.c.b16 %v4198, %v4197
    %v4803 = vpack.c.b16 %v4200, %v4199
    %v4804 = vpack.c.b16 %v4202, %v4201
    %v4805 = vpack.c.b16 %v4204, %v4203
    %v4806 = vpack.c.b16 %v4206, %v4205
    %5407 = vmatprep.subr.bf16.mxu0 0
    %5408 = vmatpush1.bf16.msra.mxu0 %v4207
    %5409 = vmatprep.subr.bf16.mxu0 0
    %5410 = vmatpush1.bf16.msra.mxu0 %v4208
    %5411 = vmatprep.subr.bf16.mxu0 0
    %5412 = vmatpush1.bf16.msra.mxu0 %v4209
    %5413 = vmatprep.subr.bf16.mxu0 0
    %5414 = vmatpush1.bf16.msra.mxu0 %v4210
    %5415 = vmatprep.subr.bf16.mxu0 0
    %5416 = vmatpush1.bf16.msra.mxu0 %v4211
    %5417 = vmatprep.subr.bf16.mxu0 0
    %5418 = vmatpush1.bf16.msra.mxu0 %v4212
    %5419 = vmatprep.subr.bf16.mxu0 0
    %5420 = vmatpush1.bf16.msra.mxu0 %v4213
    %5421 = vmatprep.subr.bf16.mxu0 0
    %5422 = vmatpush1.bf16.msra.mxu0 %v4214
    %5423 = vmatprep.subr.bf16.mxu0 0
    %5424 = vmatpush1.bf16.msra.mxu0 %v4215
    %5425 = vmatprep.subr.bf16.mxu0 0
    %5426 = vmatpush1.bf16.msra.mxu0 %v4216
    %5427 = vmatprep.subr.bf16.mxu0 0
    %5428 = vmatpush1.bf16.msra.mxu0 %v4217
    %5429 = vmatprep.subr.bf16.mxu0 0
    %5430 = vmatpush1.bf16.msra.mxu0 %v4218
    %5431 = vmatprep.subr.bf16.mxu0 0
    %5432 = vmatpush1.bf16.msra.mxu0 %v4219
    %5433 = vmatprep.subr.bf16.mxu0 0
    %5434 = vmatpush1.bf16.msra.mxu0 %v4220
    %5435 = vmatprep.subr.bf16.mxu0 0
    %5436 = vmatpush1.bf16.msra.mxu0 %v4221
    %5437 = vmatprep.subr.bf16.mxu0 0
    %5438 = vmatpush1.bf16.msra.mxu0 %v4222
    %5439 = vmatprep.mubr.bf16.mxu0 %v1305
    %5440 = vmatmul.mubr.bf16.gmra.mrb[0].mxu0 %v1291
    %v5441 = vpop.f32.mrb[0].mxu0
    %v5442 = vadd.f32 %v1257, %v5441
    %v5443 = vpop.f32.mrb[0].mxu0
    %v5444 = vpop.f32.mrb[0].mxu0
    %v5445 = vpop.f32.mrb[0].mxu0
    %5446 = vdwg.mxu0
    %5447 = vmatprep.subr.bf16.mxu0 0
    %5448 = vmatpush1.bf16.msra.mxu0 %v4223
    %5449 = vmatprep.subr.bf16.mxu0 0
    %5450 = vmatpush1.bf16.msra.mxu0 %v4224
    %5451 = vmatprep.subr.bf16.mxu0 0
    %5452 = vmatpush1.bf16.msra.mxu0 %v4225
    %5453 = vmatprep.subr.bf16.mxu0 0
    %5454 = vmatpush1.bf16.msra.mxu0 %v4226
    %5455 = vmatprep.subr.bf16.mxu0 0
    %5456 = vmatpush1.bf16.msra.mxu0 %v4227
    %5457 = vmatprep.subr.bf16.mxu0 0
    %5458 = vmatpush1.bf16.msra.mxu0 %v4228
    %5459 = vmatprep.subr.bf16.mxu0 0
    %5460 = vmatpush1.bf16.msra.mxu0 %v4229
    %5461 = vmatprep.subr.bf16.mxu0 0
    %5462 = vmatpush1.bf16.msra.mxu0 %v4230
    %5463 = vmatprep.subr.bf16.mxu0 0
    %5464 = vmatpush1.bf16.msra.mxu0 %v4231
    %5465 = vmatprep.subr.bf16.mxu0 0
    %5466 = vmatpush1.bf16.msra.mxu0 %v4232
    %5467 = vmatprep.subr.bf16.mxu0 0
    %5468 = vmatpush1.bf16.msra.mxu0 %v4233
    %5469 = vmatprep.subr.bf16.mxu0 0
    %5470 = vmatpush1.bf16.msra.mxu0 %v4234
    %5471 = vmatprep.subr.bf16.mxu0 0
    %5472 = vmatpush1.bf16.msra.mxu0 %v4235
    %5473 = vmatprep.subr.bf16.mxu0 0
    %5474 = vmatpush1.bf16.msra.mxu0 %v4236
    %5475 = vmatprep.subr.bf16.mxu0 0
    %5476 = vmatpush1.bf16.msra.mxu0 %v4237
    %5477 = vmatprep.subr.bf16.mxu0 0
    %5478 = vmatpush1.bf16.msra.mxu0 %v4238
    %5479 = vmatprep.mubr.bf16.mxu0 %v1315
    %5480 = vmatmul.mubr.bf16.gmra.mrb[0].mxu0 %v1313
    %v5481 = vpop.f32.mrb[0].mxu0
    %v5482 = vadd.f32 %v5442, %v5481
    %v5483 = vpop.f32.mrb[0].mxu0
    %v5484 = vpop.f32.mrb[0].mxu0
    %v5485 = vpop.f32.mrb[0].mxu0
    %5486 = vdwg.mxu0
    %5487 = vmatprep.subr.bf16.mxu0 0
    %5488 = vmatpush1.bf16.msra.mxu0 %v4239
    %5489 = vmatprep.subr.bf16.mxu0 0
    %5490 = vmatpush1.bf16.msra.mxu0 %v4240
    %5491 = vmatprep.subr.bf16.mxu0 0
    %5492 = vmatpush1.bf16.msra.mxu0 %v4241
    %5493 = vmatprep.subr.bf16.mxu0 0
    %5494 = vmatpush1.bf16.msra.mxu0 %v4242
    %5495 = vmatprep.subr.bf16.mxu0 0
    %5496 = vmatpush1.bf16.msra.mxu0 %v4243
    %5497 = vmatprep.subr.bf16.mxu0 0
    %5498 = vmatpush1.bf16.msra.mxu0 %v4244
    %5499 = vmatprep.subr.bf16.mxu0 0
    %5500 = vmatpush1.bf16.msra.mxu0 %v4245
    %5501 = vmatprep.subr.bf16.mxu0 0
    %5502 = vmatpush1.bf16.msra.mxu0 %v4246
    %5503 = vmatprep.subr.bf16.mxu0 0
    %5504 = vmatpush1.bf16.msra.mxu0 %v4247
    %5505 = vmatprep.subr.bf16.mxu0 0
    %5506 = vmatpush1.bf16.msra.mxu0 %v4248
    %5507 = vmatprep.subr.bf16.mxu0 0
    %5508 = vmatpush1.bf16.msra.mxu0 %v4249
    %5509 = vmatprep.subr.bf16.mxu0 0
    %5510 = vmatpush1.bf16.msra.mxu0 %v4250
    %5511 = vmatprep.subr.bf16.mxu0 0
    %5512 = vmatpush1.bf16.msra.mxu0 %v4251
    %5513 = vmatprep.subr.bf16.mxu0 0
    %5514 = vmatpush1.bf16.msra.mxu0 %v4252
    %5515 = vmatprep.subr.bf16.mxu0 0
    %5516 = vmatpush1.bf16.msra.mxu0 %v4253
    %5517 = vmatprep.subr.bf16.mxu0 0
    %5518 = vmatpush1.bf16.msra.mxu0 %v4254
    %5519 = vmatprep.mubr.bf16.mxu0 %v1312
    %5520 = vmatmul.mubr.bf16.gmra.mrb[0].mxu0 %v1298
    %v5521 = vpop.f32.mrb[0].mxu0
    %v5522 = vadd.f32 %v5482, %v5521
    %v5523 = vpop.f32.mrb[0].mxu0
    %v5524 = vpop.f32.mrb[0].mxu0
    %v5525 = vpop.f32.mrb[0].mxu0
    %5526 = vdwg.mxu0
    %5527 = vmatprep.subr.bf16.mxu0 0
    %5528 = vmatpush1.bf16.msra.mxu0 %v4255
    %5529 = vmatprep.subr.bf16.mxu0 0
    %5530 = vmatpush1.bf16.msra.mxu0 %v4256
    %5531 = vmatprep.subr.bf16.mxu0 0
    %5532 = vmatpush1.bf16.msra.mxu0 %v4257
    %5533 = vmatprep.subr.bf16.mxu0 0
    %5534 = vmatpush1.bf16.msra.mxu0 %v4258
    %5535 = vmatprep.subr.bf16.mxu0 0
    %5536 = vmatpush1.bf16.msra.mxu0 %v4259
    %5537 = vmatprep.subr.bf16.mxu0 0
    %5538 = vmatpush1.bf16.msra.mxu0 %v4260
    %5539 = vmatprep.subr.bf16.mxu0 0
    %5540 = vmatpush1.bf16.msra.mxu0 %v4261
    %5541 = vmatprep.subr.bf16.mxu0 0
    %5542 = vmatpush1.bf16.msra.mxu0 %v4262
    %5543 = vmatprep.subr.bf16.mxu0 0
    %5544 = vmatpush1.bf16.msra.mxu0 %v4263
    %5545 = vmatprep.subr.bf16.mxu0 0
    %5546 = vmatpush1.bf16.msra.mxu0 %v4264
    %5547 = vmatprep.subr.bf16.mxu0 0
    %5548 = vmatpush1.bf16.msra.mxu0 %v4265
    %5549 = vmatprep.subr.bf16.mxu0 0
    %5550 = vmatpush1.bf16.msra.mxu0 %v4266
    %5551 = vmatprep.subr.bf16.mxu0 0
    %5552 = vmatpush1.bf16.msra.mxu0 %v4267
    %5553 = vmatprep.subr.bf16.mxu0 0
    %5554 = vmatpush1.bf16.msra.mxu0 %v4268
    %5555 = vmatprep.subr.bf16.mxu0 0
    %5556 = vmatpush1.bf16.msra.mxu0 %v4269
    %5557 = vmatprep.subr.bf16.mxu0 0
    %5558 = vmatpush1.bf16.msra.mxu0 %v4270
    %5559 = vmatprep.mubr.bf16.mxu0 %v1316
    %5560 = vmatmul.mubr.bf16.gmra.mrb[0].mxu0 %v1314
    %v5561 = vpop.f32.mrb[0].mxu0
    %v5562 = vadd.f32 %v5522, %v5561
    %v5563 = vpop.f32.mrb[0].mxu0
    %v5564 = vpop.f32.mrb[0].mxu0
    %v5565 = vpop.f32.mrb[0].mxu0
    %5566 = vdwg.mxu0
    %5567 = vmatprep.subr.bf16.mxu0 0
    %5568 = vmatpush1.bf16.msra.mxu0 %v4271
    %5569 = vmatprep.subr.bf16.mxu0 0
    %5570 = vmatpush1.bf16.msra.mxu0 %v4272
    %5571 = vmatprep.subr.bf16.mxu0 0
    %5572 = vmatpush1.bf16.msra.mxu0 %v4273
    %5573 = vmatprep.subr.bf16.mxu0 0
    %5574 = vmatpush1.bf16.msra.mxu0 %v4274
    %5575 = vmatprep.subr.bf16.mxu0 0
    %5576 = vmatpush1.bf16.msra.mxu0 %v4275
    %5577 = vmatprep.subr.bf16.mxu0 0
    %5578 = vmatpush1.bf16.msra.mxu0 %v4276
    %5579 = vmatprep.subr.bf16.mxu0 0
    %5580 = vmatpush1.bf16.msra.mxu0 %v4277
    %5581 = vmatprep.subr.bf16.mxu0 0
    %5582 = vmatpush1.bf16.msra.mxu0 %v4278
    %5583 = vmatprep.subr.bf16.mxu0 0
    %5584 = vmatpush1.bf16.msra.mxu0 %v4279
    %5585 = vmatprep.subr.bf16.mxu0 0
    %5586 = vmatpush1.bf16.msra.mxu0 %v4280
    %5587 = vmatprep.subr.bf16.mxu0 0
    %5588 = vmatpush1.bf16.msra.mxu0 %v4281
    %5589 = vmatprep.subr.bf16.mxu0 0
    %5590 = vmatpush1.bf16.msra.mxu0 %v4282
    %5591 = vmatprep.subr.bf16.mxu0 0
    %5592 = vmatpush1.bf16.msra.mxu0 %v4283
    %5593 = vmatprep.subr.bf16.mxu0 0
    %5594 = vmatpush1.bf16.msra.mxu0 %v4284
    %5595 = vmatprep.subr.bf16.mxu0 0
    %5596 = vmatpush1.bf16.msra.mxu0 %v4285
    %5597 = vmatprep.subr.bf16.mxu0 0
    %5598 = vmatpush1.bf16.msra.mxu0 %v4286
    %5599 = vmatprep.mubr.bf16.mxu0 %v1354
    %5600 = vmatmul.mubr.bf16.gmra.mrb[0].mxu0 %v1340
    %v5601 = vpop.f32.mrb[0].mxu0
    %v5602 = vadd.f32 %v5562, %v5601
    %v5603 = vpop.f32.mrb[0].mxu0
    %v5604 = vpop.f32.mrb[0].mxu0
    %v5605 = vpop.f32.mrb[0].mxu0
    %5606 = vdwg.mxu0
    %5607 = vmatprep.subr.bf16.mxu0 0
    %5608 = vmatpush1.bf16.msra.mxu0 %v4287
    %5609 = vmatprep.subr.bf16.mxu0 0
    %5610 = vmatpush1.bf16.msra.mxu0 %v4288
    %5611 = vmatprep.subr.bf16.mxu0 0
    %5612 = vmatpush1.bf16.msra.mxu0 %v4289
    %5613 = vmatprep.subr.bf16.mxu0 0
    %5614 = vmatpush1.bf16.msra.mxu0 %v4290
    %5615 = vmatprep.subr.bf16.mxu0 0
    %5616 = vmatpush1.bf16.msra.mxu0 %v4291
    %5617 = vmatprep.subr.bf16.mxu0 0
    %5618 = vmatpush1.bf16.msra.mxu0 %v4292
    %5619 = vmatprep.subr.bf16.mxu0 0
    %5620 = vmatpush1.bf16.msra.mxu0 %v4293
    %5621 = vmatprep.subr.bf16.mxu0 0
    %5622 = vmatpush1.bf16.msra.mxu0 %v4294
    %5623 = vmatprep.subr.bf16.mxu0 0
    %5624 = vmatpush1.bf16.msra.mxu0 %v4295
    %5625 = vmatprep.subr.bf16.mxu0 0
    %5626 = vmatpush1.bf16.msra.mxu0 %v4296
    %5627 = vmatprep.subr.bf16.mxu0 0
    %5628 = vmatpush1.bf16.msra.mxu0 %v4297
    %5629 = vmatprep.subr.bf16.mxu0 0
    %5630 = vmatpush1.bf16.msra.mxu0 %v4298
    %5631 = vmatprep.subr.bf16.mxu0 0
    %5632 = vmatpush1.bf16.msra.mxu0 %v4299
    %5633 = vmatprep.subr.bf16.mxu0 0
    %5634 = vmatpush1.bf16.msra.mxu0 %v4300
    %5635 = vmatprep.subr.bf16.mxu0 0
    %5636 = vmatpush1.bf16.msra.mxu0 %v4301
    %5637 = vmatprep.subr.bf16.mxu0 0
    %5638 = vmatpush1.bf16.msra.mxu0 %v4302
    %5639 = vmatprep.mubr.bf16.mxu0 %v1364
    %5640 = vmatmul.mubr.bf16.gmra.mrb[0].mxu0 %v1362
    %v5641 = vpop.f32.mrb[0].mxu0
    %v5642 = vadd.f32 %v5602, %v5641
    %v5643 = vpop.f32.mrb[0].mxu0
    %v5644 = vpop.f32.mrb[0].mxu0
    %v5645 = vpop.f32.mrb[0].mxu0
    %5646 = vdwg.mxu0
    %5647 = vmatprep.subr.bf16.mxu0 0
    %5648 = vmatpush1.bf16.msra.mxu0 %v4303
    %5649 = vmatprep.subr.bf16.mxu0 0
    %5650 = vmatpush1.bf16.msra.mxu0 %v4304
    %5651 = vmatprep.subr.bf16.mxu0 0
    %5652 = vmatpush1.bf16.msra.mxu0 %v4305
    %5653 = vmatprep.subr.bf16.mxu0 0
    %5654 = vmatpush1.bf16.msra.mxu0 %v4306
    %5655 = vmatprep.subr.bf16.mxu0 0
    %5656 = vmatpush1.bf16.msra.mxu0 %v4307
    %5657 = vmatprep.subr.bf16.mxu0 0
    %5658 = vmatpush1.bf16.msra.mxu0 %v4308
    %5659 = vmatprep.subr.bf16.mxu0 0
    %5660 = vmatpush1.bf16.msra.mxu0 %v4309
    %5661 = vmatprep.subr.bf16.mxu0 0
    %5662 = vmatpush1.bf16.msra.mxu0 %v4310
    %5663 = vmatprep.subr.bf16.mxu0 0
    %5664 = vmatpush1.bf16.msra.mxu0 %v4311
    %5665 = vmatprep.subr.bf16.mxu0 0
    %5666 = vmatpush1.bf16.msra.mxu0 %v4312
    %5667 = vmatprep.subr.bf16.mxu0 0
    %5668 = vmatpush1.bf16.msra.mxu0 %v4313
    %5669 = vmatprep.subr.bf16.mxu0 0
    %5670 = vmatpush1.bf16.msra.mxu0 %v4314
    %5671 = vmatprep.subr.bf16.mxu0 0
    %5672 = vmatpush1.bf16.msra.mxu0 %v4315
    %5673 = vmatprep.subr.bf16.mxu0 0
    %5674 = vmatpush1.bf16.msra.mxu0 %v4316
    %5675 = vmatprep.subr.bf16.mxu0 0
    %5676 = vmatpush1.bf16.msra.mxu0 %v4317
    %5677 = vmatprep.subr.bf16.mxu0 0
    %5678 = vmatpush1.bf16.msra.mxu0 %v4318
    %5679 = vmatprep.mubr.bf16.mxu0 %v1361
    %5680 = vmatmul.mubr.bf16.gmra.mrb[0].mxu0 %v1347
    %v5681 = vpop.f32.mrb[0].mxu0
    %v5682 = vadd.f32 %v5642, %v5681
    %v5683 = vpop.f32.mrb[0].mxu0
    %v5684 = vpop.f32.mrb[0].mxu0
    %v5685 = vpop.f32.mrb[0].mxu0
    %5686 = vdwg.mxu0
    %5687 = vmatprep.subr.bf16.mxu0 0
    %5688 = vmatpush1.bf16.msra.mxu0 %v4319
    %5689 = vmatprep.subr.bf16.mxu0 0
    %5690 = vmatpush1.bf16.msra.mxu0 %v4320
    %5691 = vmatprep.subr.bf16.mxu0 0
    %5692 = vmatpush1.bf16.msra.mxu0 %v4321
    %5693 = vmatprep.subr.bf16.mxu0 0
    %5694 = vmatpush1.bf16.msra.mxu0 %v4322
    %5695 = vmatprep.subr.bf16.mxu0 0
    %5696 = vmatpush1.bf16.msra.mxu0 %v4323
    %5697 = vmatprep.subr.bf16.mxu0 0
    %5698 = vmatpush1.bf16.msra.mxu0 %v4324
    %5699 = vmatprep.subr.bf16.mxu0 0
    %5700 = vmatpush1.bf16.msra.mxu0 %v4325
    %5701 = vmatprep.subr.bf16.mxu0 0
    %5702 = vmatpush1.bf16.msra.mxu0 %v4326
    %5703 = vmatprep.subr.bf16.mxu0 0
    %5704 = vmatpush1.bf16.msra.mxu0 %v4327
    %5705 = vmatprep.subr.bf16.mxu0 0
    %5706 = vmatpush1.bf16.msra.mxu0 %v4328
    %5707 = vmatprep.subr.bf16.mxu0 0
    %5708 = vmatpush1.bf16.msra.mxu0 %v4329
    %5709 = vmatprep.subr.bf16.mxu0 0
    %5710 = vmatpush1.bf16.msra.mxu0 %v4330
    %5711 = vmatprep.subr.bf16.mxu0 0
    %5712 = vmatpush1.bf16.msra.mxu0 %v4331
    %5713 = vmatprep.subr.bf16.mxu0 0
    %5714 = vmatpush1.bf16.msra.mxu0 %v4332
    %5715 = vmatprep.subr.bf16.mxu0 0
    %5716 = vmatpush1.bf16.msra.mxu0 %v4333
    %5717 = vmatprep.subr.bf16.mxu0 0
    %5718 = vmatpush1.bf16.msra.mxu0 %v4334
    %5719 = vmatprep.mubr.bf16.mxu0 %v1365
    %5720 = vmatmul.mubr.bf16.gmra.mrb[0].mxu0 %v1363
    %v5721 = vpop.f32.mrb[0].mxu0
    %v5722 = vadd.f32 %v5682, %v5721
    %v5723 = vpop.f32.mrb[0].mxu0
    %v5724 = vpop.f32.mrb[0].mxu0
    %v5725 = vpop.f32.mrb[0].mxu0
    %5726 = vdwg.mxu0
    %5727 = vmatprep.subr.bf16.mxu0 0
    %5728 = vmatpush1.bf16.msra.mxu0 %v4335
    %5729 = vmatprep.subr.bf16.mxu0 0
    %5730 = vmatpush1.bf16.msra.mxu0 %v4336
    %5731 = vmatprep.subr.bf16.mxu0 0
    %5732 = vmatpush1.bf16.msra.mxu0 %v4337
    %5733 = vmatprep.subr.bf16.mxu0 0
    %5734 = vmatpush1.bf16.msra.mxu0 %v4338
    %5735 = vmatprep.subr.bf16.mxu0 0
    %5736 = vmatpush1.bf16.msra.mxu0 %v4339
    %5737 = vmatprep.subr.bf16.mxu0 0
    %5738 = vmatpush1.bf16.msra.mxu0 %v4340
    %5739 = vmatprep.subr.bf16.mxu0 0
    %5740 = vmatpush1.bf16.msra.mxu0 %v4341
    %5741 = vmatprep.subr.bf16.mxu0 0
    %5742 = vmatpush1.bf16.msra.mxu0 %v4342
    %5743 = vmatprep.subr.bf16.mxu0 0
    %5744 = vmatpush1.bf16.msra.mxu0 %v4343
    %5745 = vmatprep.subr.bf16.mxu0 0
    %5746 = vmatpush1.bf16.msra.mxu0 %v4344
    %5747 = vmatprep.subr.bf16.mxu0 0
    %5748 = vmatpush1.bf16.msra.mxu0 %v4345
    %5749 = vmatprep.subr.bf16.mxu0 0
    %5750 = vmatpush1.bf16.msra.mxu0 %v4346
    %5751 = vmatprep.subr.bf16.mxu0 0
    %5752 = vmatpush1.bf16.msra.mxu0 %v4347
    %5753 = vmatprep.subr.bf16.mxu0 0
    %5754 = vmatpush1.bf16.msra.mxu0 %v4348
    %5755 = vmatprep.subr.bf16.mxu0 0
    %5756 = vmatpush1.bf16.msra.mxu0 %v4349
    %5757 = vmatprep.subr.bf16.mxu0 0
    %5758 = vmatpush1.bf16.msra.mxu0 %v4350
    %5759 = vmatprep.mubr.bf16.mxu0 %v1403
    %5760 = vmatmul.mubr.bf16.gmra.mrb[0].mxu0 %v1389
    %v5761 = vpop.f32.mrb[0].mxu0
    %v5762 = vadd.f32 %v5722, %v5761
    %v5763 = vpop.f32.mrb[0].mxu0
    %v5764 = vpop.f32.mrb[0].mxu0
    %v5765 = vpop.f32.mrb[0].mxu0
    %5766 = vdwg.mxu0
    %5767 = vmatprep.subr.bf16.mxu0 0
    %5768 = vmatpush1.bf16.msra.mxu0 %v4351
    %5769 = vmatprep.subr.bf16.mxu0 0
    %5770 = vmatpush1.bf16.msra.mxu0 %v4352
    %5771 = vmatprep.subr.bf16.mxu0 0
    %5772 = vmatpush1.bf16.msra.mxu0 %v4353
    %5773 = vmatprep.subr.bf16.mxu0 0
    %5774 = vmatpush1.bf16.msra.mxu0 %v4354
    %5775 = vmatprep.subr.bf16.mxu0 0
    %5776 = vmatpush1.bf16.msra.mxu0 %v4355
    %5777 = vmatprep.subr.bf16.mxu0 0
    %5778 = vmatpush1.bf16.msra.mxu0 %v4356
    %5779 = vmatprep.subr.bf16.mxu0 0
    %5780 = vmatpush1.bf16.msra.mxu0 %v4357
    %5781 = vmatprep.subr.bf16.mxu0 0
    %5782 = vmatpush1.bf16.msra.mxu0 %v4358
    %5783 = vmatprep.subr.bf16.mxu0 0
    %5784 = vmatpush1.bf16.msra.mxu0 %v4359
    %5785 = vmatprep.subr.bf16.mxu0 0
    %5786 = vmatpush1.bf16.msra.mxu0 %v4360
    %5787 = vmatprep.subr.bf16.mxu0 0
    %5788 = vmatpush1.bf16.msra.mxu0 %v4361
    %5789 = vmatprep.subr.bf16.mxu0 0
    %5790 = vmatpush1.bf16.msra.mxu0 %v4362
    %5791 = vmatprep.subr.bf16.mxu0 0
    %5792 = vmatpush1.bf16.msra.mxu0 %v4363
    %5793 = vmatprep.subr.bf16.mxu0 0
    %5794 = vmatpush1.bf16.msra.mxu0 %v4364
    %5795 = vmatprep.subr.bf16.mxu0 0
    %5796 = vmatpush1.bf16.msra.mxu0 %v4365
    %5797 = vmatprep.subr.bf16.mxu0 0
    %5798 = vmatpush1.bf16.msra.mxu0 %v4366
    %5799 = vmatprep.mubr.bf16.mxu0 %v1413
    %5800 = vmatmul.mubr.bf16.gmra.mrb[0].mxu0 %v1411
    %v5801 = vpop.f32.mrb[0].mxu0
    %v5802 = vadd.f32 %v5762, %v5801
    %v5803 = vpop.f32.mrb[0].mxu0
    %v5804 = vpop.f32.mrb[0].mxu0
    %v5805 = vpop.f32.mrb[0].mxu0
    %5806 = vdwg.mxu0
    %5807 = vmatprep.subr.bf16.mxu0 0
    %5808 = vmatpush1.bf16.msra.mxu0 %v4367
    %5809 = vmatprep.subr.bf16.mxu0 0
    %5810 = vmatpush1.bf16.msra.mxu0 %v4368
    %5811 = vmatprep.subr.bf16.mxu0 0
    %5812 = vmatpush1.bf16.msra.mxu0 %v4369
    %5813 = vmatprep.subr.bf16.mxu0 0
    %5814 = vmatpush1.bf16.msra.mxu0 %v4370
    %5815 = vmatprep.subr.bf16.mxu0 0
    %5816 = vmatpush1.bf16.msra.mxu0 %v4371
    %5817 = vmatprep.subr.bf16.mxu0 0
    %5818 = vmatpush1.bf16.msra.mxu0 %v4372
    %5819 = vmatprep.subr.bf16.mxu0 0
    %5820 = vmatpush1.bf16.msra.mxu0 %v4373
    %5821 = vmatprep.subr.bf16.mxu0 0
    %5822 = vmatpush1.bf16.msra.mxu0 %v4374
    %5823 = vmatprep.subr.bf16.mxu0 0
    %5824 = vmatpush1.bf16.msra.mxu0 %v4375
    %5825 = vmatprep.subr.bf16.mxu0 0
    %5826 = vmatpush1.bf16.msra.mxu0 %v4376
    %5827 = vmatprep.subr.bf16.mxu0 0
    %5828 = vmatpush1.bf16.msra.mxu0 %v4377
    %5829 = vmatprep.subr.bf16.mxu0 0
    %5830 = vmatpush1.bf16.msra.mxu0 %v4378
    %5831 = vmatprep.subr.bf16.mxu0 0
    %5832 = vmatpush1.bf16.msra.mxu0 %v4379
    %5833 = vmatprep.subr.bf16.mxu0 0
    %5834 = vmatpush1.bf16.msra.mxu0 %v4380
    %5835 = vmatprep.subr.bf16.mxu0 0
    %5836 = vmatpush1.bf16.msra.mxu0 %v4381
    %5837 = vmatprep.subr.bf16.mxu0 0
    %5838 = vmatpush1.bf16.msra.mxu0 %v4382
    %5839 = vmatprep.mubr.bf16.mxu0 %v1410
    %5840 = vmatmul.mubr.bf16.gmra.mrb[0].mxu0 %v1396
    %v5841 = vpop.f32.mrb[0].mxu0
    %v5842 = vadd.f32 %v5802, %v5841
    %v5843 = vpop.f32.mrb[0].mxu0
    %v5844 = vpop.f32.mrb[0].mxu0
    %v5845 = vpop.f32.mrb[0].mxu0
    %5846 = vdwg.mxu0
    %5847 = vmatprep.subr.bf16.mxu0 0
    %5848 = vmatpush1.bf16.msra.mxu0 %v4383
    %5849 = vmatprep.subr.bf16.mxu0 0
    %5850 = vmatpush1.bf16.msra.mxu0 %v4384
    %5851 = vmatprep.subr.bf16.mxu0 0
    %5852 = vmatpush1.bf16.msra.mxu0 %v4385
    %5853 = vmatprep.subr.bf16.mxu0 0
    %5854 = vmatpush1.bf16.msra.mxu0 %v4386
    %5855 = vmatprep.subr.bf16.mxu0 0
    %5856 = vmatpush1.bf16.msra.mxu0 %v4387
    %5857 = vmatprep.subr.bf16.mxu0 0
    %5858 = vmatpush1.bf16.msra.mxu0 %v4388
    %5859 = vmatprep.subr.bf16.mxu0 0
    %5860 = vmatpush1.bf16.msra.mxu0 %v4389
    %5861 = vmatprep.subr.bf16.mxu0 0
    %5862 = vmatpush1.bf16.msra.mxu0 %v4390
    %5863 = vmatprep.subr.bf16.mxu0 0
    %5864 = vmatpush1.bf16.msra.mxu0 %v4391
    %5865 = vmatprep.subr.bf16.mxu0 0
    %5866 = vmatpush1.bf16.msra.mxu0 %v4392
    %5867 = vmatprep.subr.bf16.mxu0 0
    %5868 = vmatpush1.bf16.msra.mxu0 %v4393
    %5869 = vmatprep.subr.bf16.mxu0 0
    %5870 = vmatpush1.bf16.msra.mxu0 %v4394
    %5871 = vmatprep.subr.bf16.mxu0 0
    %5872 = vmatpush1.bf16.msra.mxu0 %v4395
    %5873 = vmatprep.subr.bf16.mxu0 0
    %5874 = vmatpush1.bf16.msra.mxu0 %v4396
    %5875 = vmatprep.subr.bf16.mxu0 0
    %5876 = vmatpush1.bf16.msra.mxu0 %v4397
    %5877 = vmatprep.subr.bf16.mxu0 0
    %5878 = vmatpush1.bf16.msra.mxu0 %v4398
    %5879 = vmatprep.mubr.bf16.mxu0 %v1414
    %5880 = vmatmul.mubr.bf16.gmra.mrb[0].mxu0 %v1412
    %v5881 = vpop.f32.mrb[0].mxu0
    %v5882 = vadd.f32 %v5842, %v5881
    %v5883 = vpop.f32.mrb[0].mxu0
    %v5884 = vpop.f32.mrb[0].mxu0
    %v5885 = vpop.f32.mrb[0].mxu0
    %5886 = vdwg.mxu0
    %5887 = vmatprep.subr.bf16.mxu0 0
    %5888 = vmatpush1.bf16.msra.mxu0 %v4399
    %5889 = vmatprep.subr.bf16.mxu0 0
    %5890 = vmatpush1.bf16.msra.mxu0 %v4400
    %5891 = vmatprep.subr.bf16.mxu0 0
    %5892 = vmatpush1.bf16.msra.mxu0 %v4401
    %5893 = vmatprep.subr.bf16.mxu0 0
    %5894 = vmatpush1.bf16.msra.mxu0 %v4402
    %5895 = vmatprep.subr.bf16.mxu0 0
    %5896 = vmatpush1.bf16.msra.mxu0 %v4403
    %5897 = vmatprep.subr.bf16.mxu0 0
    %5898 = vmatpush1.bf16.msra.mxu0 %v4404
    %5899 = vmatprep.subr.bf16.mxu0 0
    %5900 = vmatpush1.bf16.msra.mxu0 %v4405
    %5901 = vmatprep.subr.bf16.mxu0 0
    %5902 = vmatpush1.bf16.msra.mxu0 %v4406
    %5903 = vmatprep.subr.bf16.mxu0 0
    %5904 = vmatpush1.bf16.msra.mxu0 %v4407
    %5905 = vmatprep.subr.bf16.mxu0 0
    %5906 = vmatpush1.bf16.msra.mxu0 %v4408
    %5907 = vmatprep.subr.bf16.mxu0 0
    %5908 = vmatpush1.bf16.msra.mxu0 %v4409
    %5909 = vmatprep.subr.bf16.mxu0 0
    %5910 = vmatpush1.bf16.msra.mxu0 %v4410
    %5911 = vmatprep.subr.bf16.mxu0 0
    %5912 = vmatpush1.bf16.msra.mxu0 %v4411
    %5913 = vmatprep.subr.bf16.mxu0 0
    %5914 = vmatpush1.bf16.msra.mxu0 %v4412
    %5915 = vmatprep.subr.bf16.mxu0 0
    %5916 = vmatpush1.bf16.msra.mxu0 %v4413
    %5917 = vmatprep.subr.bf16.mxu0 0
    %5918 = vmatpush1.bf16.msra.mxu0 %v4414
    %5919 = vmatprep.mubr.bf16.mxu0 %v1452
    %5920 = vmatmul.mubr.bf16.gmra.mrb[0].mxu0 %v1438
    %v5921 = vpop.f32.mrb[0].mxu0
    %v5922 = vadd.f32 %v5882, %v5921
    %v5923 = vpop.f32.mrb[0].mxu0
    %v5924 = vpop.f32.mrb[0].mxu0
    %v5925 = vpop.f32.mrb[0].mxu0
    %5926 = vdwg.mxu0
    %5927 = vmatprep.subr.bf16.mxu0 0
    %5928 = vmatpush1.bf16.msra.mxu0 %v4415
    %5929 = vmatprep.subr.bf16.mxu0 0
    %5930 = vmatpush1.bf16.msra.mxu0 %v4416
    %5931 = vmatprep.subr.bf16.mxu0 0
    %5932 = vmatpush1.bf16.msra.mxu0 %v4417
    %5933 = vmatprep.subr.bf16.mxu0 0
    %5934 = vmatpush1.bf16.msra.mxu0 %v4418
    %5935 = vmatprep.subr.bf16.mxu0 0
    %5936 = vmatpush1.bf16.msra.mxu0 %v4419
    %5937 = vmatprep.subr.bf16.mxu0 0
    %5938 = vmatpush1.bf16.msra.mxu0 %v4420
    %5939 = vmatprep.subr.bf16.mxu0 0
    %5940 = vmatpush1.bf16.msra.mxu0 %v4421
    %5941 = vmatprep.subr.bf16.mxu0 0
    %5942 = vmatpush1.bf16.msra.mxu0 %v4422
    %5943 = vmatprep.subr.bf16.mxu0 0
    %5944 = vmatpush1.bf16.msra.mxu0 %v4423
    %5945 = vmatprep.subr.bf16.mxu0 0
    %5946 = vmatpush1.bf16.msra.mxu0 %v4424
    %5947 = vmatprep.subr.bf16.mxu0 0
    %5948 = vmatpush1.bf16.msra.mxu0 %v4425
    %5949 = vmatprep.subr.bf16.mxu0 0
    %5950 = vmatpush1.bf16.msra.mxu0 %v4426
    %5951 = vmatprep.subr.bf16.mxu0 0
    %5952 = vmatpush1.bf16.msra.mxu0 %v4427
    %5953 = vmatprep.subr.bf16.mxu0 0
    %5954 = vmatpush1.bf16.msra.mxu0 %v4428
    %5955 = vmatprep.subr.bf16.mxu0 0
    %5956 = vmatpush1.bf16.msra.mxu0 %v4429
    %5957 = vmatprep.subr.bf16.mxu0 0
    %5958 = vmatpush1.bf16.msra.mxu0 %v4430
    %5959 = vmatprep.mubr.bf16.mxu0 %v1462
    %5960 = vmatmul.mubr.bf16.gmra.mrb[0].mxu0 %v1460
    %v5961 = vpop.f32.mrb[0].mxu0
    %v5962 = vadd.f32 %v5922, %v5961
    %v5963 = vpop.f32.mrb[0].mxu0
    %v5964 = vpop.f32.mrb[0].mxu0
    %v5965 = vpop.f32.mrb[0].mxu0
    %5966 = vdwg.mxu0
    %5967 = vmatprep.subr.bf16.mxu0 0
    %5968 = vmatpush1.bf16.msra.mxu0 %v4431
    %5969 = vmatprep.subr.bf16.mxu0 0
    %5970 = vmatpush1.bf16.msra.mxu0 %v4432
    %5971 = vmatprep.subr.bf16.mxu0 0
    %5972 = vmatpush1.bf16.msra.mxu0 %v4433
    %5973 = vmatprep.subr.bf16.mxu0 0
    %5974 = vmatpush1.bf16.msra.mxu0 %v4434
    %5975 = vmatprep.subr.bf16.mxu0 0
    %5976 = vmatpush1.bf16.msra.mxu0 %v4435
    %5977 = vmatprep.subr.bf16.mxu0 0
    %5978 = vmatpush1.bf16.msra.mxu0 %v4436
    %5979 = vmatprep.subr.bf16.mxu0 0
    %5980 = vmatpush1.bf16.msra.mxu0 %v4437
    %5981 = vmatprep.subr.bf16.mxu0 0
    %5982 = vmatpush1.bf16.msra.mxu0 %v4438
    %5983 = vmatprep.subr.bf16.mxu0 0
    %5984 = vmatpush1.bf16.msra.mxu0 %v4439
    %5985 = vmatprep.subr.bf16.mxu0 0
    %5986 = vmatpush1.bf16.msra.mxu0 %v4440
    %5987 = vmatprep.subr.bf16.mxu0 0
    %5988 = vmatpush1.bf16.msra.mxu0 %v4441
    %5989 = vmatprep.subr.bf16.mxu0 0
    %5990 = vmatpush1.bf16.msra.mxu0 %v4442
    %5991 = vmatprep.subr.bf16.mxu0 0
    %5992 = vmatpush1.bf16.msra.mxu0 %v4443
    %5993 = vmatprep.subr.bf16.mxu0 0
    %5994 = vmatpush1.bf16.msra.mxu0 %v4444
    %5995 = vmatprep.subr.bf16.mxu0 0
    %5996 = vmatpush1.bf16.msra.mxu0 %v4445
    %5997 = vmatprep.subr.bf16.mxu0 0
    %5998 = vmatpush1.bf16.msra.mxu0 %v4446
    %5999 = vmatprep.mubr.bf16.mxu0 %v1459
    %6000 = vmatmul.mubr.bf16.gmra.mrb[0].mxu0 %v1445
    %v6001 = vpop.f32.mrb[0].mxu0
    %v6002 = vadd.f32 %v5962, %v6001
    %v6003 = vpop.f32.mrb[0].mxu0
    %v6004 = vpop.f32.mrb[0].mxu0
    %v6005 = vpop.f32.mrb[0].mxu0
    %6006 = vdwg.mxu0
    %6007 = vmatprep.subr.bf16.mxu0 0
    %6008 = vmatpush1.bf16.msra.mxu0 %v4447
    %6009 = vmatprep.subr.bf16.mxu0 0
    %6010 = vmatpush1.bf16.msra.mxu0 %v4448
    %6011 = vmatprep.subr.bf16.mxu0 0
    %6012 = vmatpush1.bf16.msra.mxu0 %v4449
    %6013 = vmatprep.subr.bf16.mxu0 0
    %6014 = vmatpush1.bf16.msra.mxu0 %v4450
    %6015 = vmatprep.subr.bf16.mxu0 0
    %6016 = vmatpush1.bf16.msra.mxu0 %v4451
    %6017 = vmatprep.subr.bf16.mxu0 0
    %6018 = vmatpush1.bf16.msra.mxu0 %v4452
    %6019 = vmatprep.subr.bf16.mxu0 0
    %6020 = vmatpush1.bf16.msra.mxu0 %v4453
    %6021 = vmatprep.subr.bf16.mxu0 0
    %6022 = vmatpush1.bf16.msra.mxu0 %v4454
    %6023 = vmatprep.subr.bf16.mxu0 0
    %6024 = vmatpush1.bf16.msra.mxu0 %v4455
    %6025 = vmatprep.subr.bf16.mxu0 0
    %6026 = vmatpush1.bf16.msra.mxu0 %v4456
    %6027 = vmatprep.subr.bf16.mxu0 0
    %6028 = vmatpush1.bf16.msra.mxu0 %v4457
    %6029 = vmatprep.subr.bf16.mxu0 0
    %6030 = vmatpush1.bf16.msra.mxu0 %v4458
    %6031 = vmatprep.subr.bf16.mxu0 0
    %6032 = vmatpush1.bf16.msra.mxu0 %v4459
    %6033 = vmatprep.subr.bf16.mxu0 0
    %6034 = vmatpush1.bf16.msra.mxu0 %v4460
    %6035 = vmatprep.subr.bf16.mxu0 0
    %6036 = vmatpush1.bf16.msra.mxu0 %v4461
    %6037 = vmatprep.subr.bf16.mxu0 0
    %6038 = vmatpush1.bf16.msra.mxu0 %v4462
    %6039 = vmatprep.mubr.bf16.mxu0 %v1463
    %6040 = vmatmul.mubr.bf16.gmra.mrb[0].mxu0 %v1461
    %v6041 = vpop.f32.mrb[0].mxu0
    %v6042 = vadd.f32 %v6002, %v6041
    %v6043 = vpop.f32.mrb[0].mxu0
    %v6044 = vpop.f32.mrb[0].mxu0
    %v6045 = vpop.f32.mrb[0].mxu0
    %6046 = vdwg.mxu0
    %6047 = vmatprep.subr.bf16.mxu0 0
    %6048 = vmatpush1.bf16.msra.mxu0 %v4463
    %6049 = vmatprep.subr.bf16.mxu0 0
    %6050 = vmatpush1.bf16.msra.mxu0 %v4464
    %6051 = vmatprep.subr.bf16.mxu0 0
    %6052 = vmatpush1.bf16.msra.mxu0 %v4465
    %6053 = vmatprep.subr.bf16.mxu0 0
    %6054 = vmatpush1.bf16.msra.mxu0 %v4466
    %6055 = vmatprep.subr.bf16.mxu0 0
    %6056 = vmatpush1.bf16.msra.mxu0 %v4467
    %6057 = vmatprep.subr.bf16.mxu0 0
    %6058 = vmatpush1.bf16.msra.mxu0 %v4468
    %6059 = vmatprep.subr.bf16.mxu0 0
    %6060 = vmatpush1.bf16.msra.mxu0 %v4469
    %6061 = vmatprep.subr.bf16.mxu0 0
    %6062 = vmatpush1.bf16.msra.mxu0 %v4470
    %6063 = vmatprep.subr.bf16.mxu0 0
    %6064 = vmatpush1.bf16.msra.mxu0 %v4471
    %6065 = vmatprep.subr.bf16.mxu0 0
    %6066 = vmatpush1.bf16.msra.mxu0 %v4472
    %6067 = vmatprep.subr.bf16.mxu0 0
    %6068 = vmatpush1.bf16.msra.mxu0 %v4473
    %6069 = vmatprep.subr.bf16.mxu0 0
    %6070 = vmatpush1.bf16.msra.mxu0 %v4474
    %6071 = vmatprep.subr.bf16.mxu0 0
    %6072 = vmatpush1.bf16.msra.mxu0 %v4475
    %6073 = vmatprep.subr.bf16.mxu0 0
    %6074 = vmatpush1.bf16.msra.mxu0 %v4476
    %6075 = vmatprep.subr.bf16.mxu0 0
    %6076 = vmatpush1.bf16.msra.mxu0 %v4477
    %6077 = vmatprep.subr.bf16.mxu0 0
    %6078 = vmatpush1.bf16.msra.mxu0 %v4478
    %6079 = vmatprep.mubr.bf16.mxu0 %v1501
    %6080 = vmatmul.mubr.bf16.gmra.mrb[0].mxu0 %v1487
    %v6081 = vpop.f32.mrb[0].mxu0
    %v6082 = vadd.f32 %v6042, %v6081
    %v6083 = vpop.f32.mrb[0].mxu0
    %v6084 = vpop.f32.mrb[0].mxu0
    %v6085 = vpop.f32.mrb[0].mxu0
    %6086 = vdwg.mxu0
    %6087 = vmatprep.subr.bf16.mxu0 0
    %6088 = vmatpush1.bf16.msra.mxu0 %v4479
    %6089 = vmatprep.subr.bf16.mxu0 0
    %6090 = vmatpush1.bf16.msra.mxu0 %v4480
    %6091 = vmatprep.subr.bf16.mxu0 0
    %6092 = vmatpush1.bf16.msra.mxu0 %v4481
    %6093 = vmatprep.subr.bf16.mxu0 0
    %6094 = vmatpush1.bf16.msra.mxu0 %v4482
    %6095 = vmatprep.subr.bf16.mxu0 0
    %6096 = vmatpush1.bf16.msra.mxu0 %v4483
    %6097 = vmatprep.subr.bf16.mxu0 0
    %6098 = vmatpush1.bf16.msra.mxu0 %v4484
    %6099 = vmatprep.subr.bf16.mxu0 0
    %6100 = vmatpush1.bf16.msra.mxu0 %v4485
    %6101 = vmatprep.subr.bf16.mxu0 0
    %6102 = vmatpush1.bf16.msra.mxu0 %v4486
    %6103 = vmatprep.subr.bf16.mxu0 0
    %6104 = vmatpush1.bf16.msra.mxu0 %v4487
    %6105 = vmatprep.subr.bf16.mxu0 0
    %6106 = vmatpush1.bf16.msra.mxu0 %v4488
    %6107 = vmatprep.subr.bf16.mxu0 0
    %6108 = vmatpush1.bf16.msra.mxu0 %v4489
    %6109 = vmatprep.subr.bf16.mxu0 0
    %6110 = vmatpush1.bf16.msra.mxu0 %v4490
    %6111 = vmatprep.subr.bf16.mxu0 0
    %6112 = vmatpush1.bf16.msra.mxu0 %v4491
    %6113 = vmatprep.subr.bf16.mxu0 0
    %6114 = vmatpush1.bf16.msra.mxu0 %v4492
    %6115 = vmatprep.subr.bf16.mxu0 0
    %6116 = vmatpush1.bf16.msra.mxu0 %v4493
    %6117 = vmatprep.subr.bf16.mxu0 0
    %6118 = vmatpush1.bf16.msra.mxu0 %v4494
    %6119 = vmatprep.mubr.bf16.mxu0 %v1511
    %6120 = vmatmul.mubr.bf16.gmra.mrb[0].mxu0 %v1509
    %v6121 = vpop.f32.mrb[0].mxu0
    %v6122 = vadd.f32 %v6082, %v6121
    %v6123 = vpop.f32.mrb[0].mxu0
    %v6124 = vpop.f32.mrb[0].mxu0
    %v6125 = vpop.f32.mrb[0].mxu0
    %6126 = vdwg.mxu0
    %6127 = vmatprep.subr.bf16.mxu0 0
    %6128 = vmatpush1.bf16.msra.mxu0 %v4495
    %6129 = vmatprep.subr.bf16.mxu0 0
    %6130 = vmatpush1.bf16.msra.mxu0 %v4496
    %6131 = vmatprep.subr.bf16.mxu0 0
    %6132 = vmatpush1.bf16.msra.mxu0 %v4497
    %6133 = vmatprep.subr.bf16.mxu0 0
    %6134 = vmatpush1.bf16.msra.mxu0 %v4498
    %6135 = vmatprep.subr.bf16.mxu0 0
    %6136 = vmatpush1.bf16.msra.mxu0 %v4499
    %6137 = vmatprep.subr.bf16.mxu0 0
    %6138 = vmatpush1.bf16.msra.mxu0 %v4500
    %6139 = vmatprep.subr.bf16.mxu0 0
    %6140 = vmatpush1.bf16.msra.mxu0 %v4501
    %6141 = vmatprep.subr.bf16.mxu0 0
    %6142 = vmatpush1.bf16.msra.mxu0 %v4502
    %6143 = vmatprep.subr.bf16.mxu0 0
    %6144 = vmatpush1.bf16.msra.mxu0 %v4503
    %6145 = vmatprep.subr.bf16.mxu0 0
    %6146 = vmatpush1.bf16.msra.mxu0 %v4504
    %6147 = vmatprep.subr.bf16.mxu0 0
    %6148 = vmatpush1.bf16.msra.mxu0 %v4505
    %6149 = vmatprep.subr.bf16.mxu0 0
    %6150 = vmatpush1.bf16.msra.mxu0 %v4506
    %6151 = vmatprep.subr.bf16.mxu0 0
    %6152 = vmatpush1.bf16.msra.mxu0 %v4507
    %6153 = vmatprep.subr.bf16.mxu0 0
    %6154 = vmatpush1.bf16.msra.mxu0 %v4508
    %6155 = vmatprep.subr.bf16.mxu0 0
    %6156 = vmatpush1.bf16.msra.mxu0 %v4509
    %6157 = vmatprep.subr.bf16.mxu0 0
    %6158 = vmatpush1.bf16.msra.mxu0 %v4510
    %6159 = vmatprep.mubr.bf16.mxu0 %v1508
    %6160 = vmatmul.mubr.bf16.gmra.mrb[0].mxu0 %v1494
    %v6161 = vpop.f32.mrb[0].mxu0
    %v6162 = vadd.f32 %v6122, %v6161
    %v6163 = vpop.f32.mrb[0].mxu0
    %v6164 = vpop.f32.mrb[0].mxu0
    %v6165 = vpop.f32.mrb[0].mxu0
    %6166 = vdwg.mxu0
    %6167 = vmatprep.subr.bf16.mxu0 0
    %6168 = vmatpush1.bf16.msra.mxu0 %v4511
    %6169 = vmatprep.subr.bf16.mxu0 0
    %6170 = vmatpush1.bf16.msra.mxu0 %v4512
    %6171 = vmatprep.subr.bf16.mxu0 0
    %6172 = vmatpush1.bf16.msra.mxu0 %v4513
    %6173 = vmatprep.subr.bf16.mxu0 0
    %6174 = vmatpush1.bf16.msra.mxu0 %v4514
    %6175 = vmatprep.subr.bf16.mxu0 0
    %6176 = vmatpush1.bf16.msra.mxu0 %v4515
    %6177 = vmatprep.subr.bf16.mxu0 0
    %6178 = vmatpush1.bf16.msra.mxu0 %v4516
    %6179 = vmatprep.subr.bf16.mxu0 0
    %6180 = vmatpush1.bf16.msra.mxu0 %v4517
    %6181 = vmatprep.subr.bf16.mxu0 0
    %6182 = vmatpush1.bf16.msra.mxu0 %v4518
    %6183 = vmatprep.subr.bf16.mxu0 0
    %6184 = vmatpush1.bf16.msra.mxu0 %v4519
    %6185 = vmatprep.subr.bf16.mxu0 0
    %6186 = vmatpush1.bf16.msra.mxu0 %v4520
    %6187 = vmatprep.subr.bf16.mxu0 0
    %6188 = vmatpush1.bf16.msra.mxu0 %v4521
    %6189 = vmatprep.subr.bf16.mxu0 0
    %6190 = vmatpush1.bf16.msra.mxu0 %v4522
    %6191 = vmatprep.subr.bf16.mxu0 0
    %6192 = vmatpush1.bf16.msra.mxu0 %v4523
    %6193 = vmatprep.subr.bf16.mxu0 0
    %6194 = vmatpush1.bf16.msra.mxu0 %v4524
    %6195 = vmatprep.subr.bf16.mxu0 0
    %6196 = vmatpush1.bf16.msra.mxu0 %v4525
    %6197 = vmatprep.subr.bf16.mxu0 0
    %6198 = vmatpush1.bf16.msra.mxu0 %v4526
    %6199 = vmatprep.mubr.bf16.mxu0 %v1512
    %6200 = vmatmul.mubr.bf16.gmra.mrb[0].mxu0 %v1510
    %v6201 = vpop.f32.mrb[0].mxu0
    %v6202 = vadd.f32 %v6162, %v6201
    %v6203 = vpop.f32.mrb[0].mxu0
    %v6204 = vpop.f32.mrb[0].mxu0
    %v6205 = vpop.f32.mrb[0].mxu0
    %6206 = vdwg.mxu0
    %6207 = vmatprep.subr.bf16.mxu0 0
    %6208 = vmatpush1.bf16.msra.mxu0 %v4527
    %6209 = vmatprep.subr.bf16.mxu0 0
    %6210 = vmatpush1.bf16.msra.mxu0 %v4528
    %6211 = vmatprep.subr.bf16.mxu0 0
    %6212 = vmatpush1.bf16.msra.mxu0 %v4529
    %6213 = vmatprep.subr.bf16.mxu0 0
    %6214 = vmatpush1.bf16.msra.mxu0 %v4530
    %6215 = vmatprep.subr.bf16.mxu0 0
    %6216 = vmatpush1.bf16.msra.mxu0 %v4531
    %6217 = vmatprep.subr.bf16.mxu0 0
    %6218 = vmatpush1.bf16.msra.mxu0 %v4532
    %6219 = vmatprep.subr.bf16.mxu0 0
    %6220 = vmatpush1.bf16.msra.mxu0 %v4533
    %6221 = vmatprep.subr.bf16.mxu0 0
    %6222 = vmatpush1.bf16.msra.mxu0 %v4534
    %6223 = vmatprep.subr.bf16.mxu0 0
    %6224 = vmatpush1.bf16.msra.mxu0 %v4535
    %6225 = vmatprep.subr.bf16.mxu0 0
    %6226 = vmatpush1.bf16.msra.mxu0 %v4536
    %6227 = vmatprep.subr.bf16.mxu0 0
    %6228 = vmatpush1.bf16.msra.mxu0 %v4537
    %6229 = vmatprep.subr.bf16.mxu0 0
    %6230 = vmatpush1.bf16.msra.mxu0 %v4538
    %6231 = vmatprep.subr.bf16.mxu0 0
    %6232 = vmatpush1.bf16.msra.mxu0 %v4539
    %6233 = vmatprep.subr.bf16.mxu0 0
    %6234 = vmatpush1.bf16.msra.mxu0 %v4540
    %6235 = vmatprep.subr.bf16.mxu0 0
    %6236 = vmatpush1.bf16.msra.mxu0 %v4541
    %6237 = vmatprep.subr.bf16.mxu0 0
    %6238 = vmatpush1.bf16.msra.mxu0 %v4542
    %6239 = vmatprep.mubr.bf16.mxu0 %v1550
    %6240 = vmatmul.mubr.bf16.gmra.mrb[0].mxu0 %v1536
    %v6241 = vpop.f32.mrb[0].mxu0
    %v6242 = vadd.f32 %v6202, %v6241
    %v6243 = vpop.f32.mrb[0].mxu0
    %v6244 = vpop.f32.mrb[0].mxu0
    %v6245 = vpop.f32.mrb[0].mxu0
    %6246 = vdwg.mxu0
    %6247 = vmatprep.subr.bf16.mxu0 0
    %6248 = vmatpush1.bf16.msra.mxu0 %v4543
    %6249 = vmatprep.subr.bf16.mxu0 0
    %6250 = vmatpush1.bf16.msra.mxu0 %v4544
    %6251 = vmatprep.subr.bf16.mxu0 0
    %6252 = vmatpush1.bf16.msra.mxu0 %v4545
    %6253 = vmatprep.subr.bf16.mxu0 0
    %6254 = vmatpush1.bf16.msra.mxu0 %v4546
    %6255 = vmatprep.subr.bf16.mxu0 0
    %6256 = vmatpush1.bf16.msra.mxu0 %v4547
    %6257 = vmatprep.subr.bf16.mxu0 0
    %6258 = vmatpush1.bf16.msra.mxu0 %v4548
    %6259 = vmatprep.subr.bf16.mxu0 0
    %6260 = vmatpush1.bf16.msra.mxu0 %v4549
    %6261 = vmatprep.subr.bf16.mxu0 0
    %6262 = vmatpush1.bf16.msra.mxu0 %v4550
    %6263 = vmatprep.subr.bf16.mxu0 0
    %6264 = vmatpush1.bf16.msra.mxu0 %v4551
    %6265 = vmatprep.subr.bf16.mxu0 0
    %6266 = vmatpush1.bf16.msra.mxu0 %v4552
    %6267 = vmatprep.subr.bf16.mxu0 0
    %6268 = vmatpush1.bf16.msra.mxu0 %v4553
    %6269 = vmatprep.subr.bf16.mxu0 0
    %6270 = vmatpush1.bf16.msra.mxu0 %v4554
    %6271 = vmatprep.subr.bf16.mxu0 0
    %6272 = vmatpush1.bf16.msra.mxu0 %v4555
    %6273 = vmatprep.subr.bf16.mxu0 0
    %6274 = vmatpush1.bf16.msra.mxu0 %v4556
    %6275 = vmatprep.subr.bf16.mxu0 0
    %6276 = vmatpush1.bf16.msra.mxu0 %v4557
    %6277 = vmatprep.subr.bf16.mxu0 0
    %6278 = vmatpush1.bf16.msra.mxu0 %v4558
    %6279 = vmatprep.mubr.bf16.mxu0 %v1560
    %6280 = vmatmul.mubr.bf16.gmra.mrb[0].mxu0 %v1558
    %v6281 = vpop.f32.mrb[0].mxu0
    %v6282 = vadd.f32 %v6242, %v6281
    %v6283 = vpop.f32.mrb[0].mxu0
    %v6284 = vpop.f32.mrb[0].mxu0
    %v6285 = vpop.f32.mrb[0].mxu0
    %6286 = vdwg.mxu0
    %6287 = vmatprep.subr.bf16.mxu0 0
    %6288 = vmatpush1.bf16.msra.mxu0 %v4559
    %6289 = vmatprep.subr.bf16.mxu0 0
    %6290 = vmatpush1.bf16.msra.mxu0 %v4560
    %6291 = vmatprep.subr.bf16.mxu0 0
    %6292 = vmatpush1.bf16.msra.mxu0 %v4561
    %6293 = vmatprep.subr.bf16.mxu0 0
    %6294 = vmatpush1.bf16.msra.mxu0 %v4562
    %6295 = vmatprep.subr.bf16.mxu0 0
    %6296 = vmatpush1.bf16.msra.mxu0 %v4563
    %6297 = vmatprep.subr.bf16.mxu0 0
    %6298 = vmatpush1.bf16.msra.mxu0 %v4564
    %6299 = vmatprep.subr.bf16.mxu0 0
    %6300 = vmatpush1.bf16.msra.mxu0 %v4565
    %6301 = vmatprep.subr.bf16.mxu0 0
    %6302 = vmatpush1.bf16.msra.mxu0 %v4566
    %6303 = vmatprep.subr.bf16.mxu0 0
    %6304 = vmatpush1.bf16.msra.mxu0 %v4567
    %6305 = vmatprep.subr.bf16.mxu0 0
    %6306 = vmatpush1.bf16.msra.mxu0 %v4568
    %6307 = vmatprep.subr.bf16.mxu0 0
    %6308 = vmatpush1.bf16.msra.mxu0 %v4569
    %6309 = vmatprep.subr.bf16.mxu0 0
    %6310 = vmatpush1.bf16.msra.mxu0 %v4570
    %6311 = vmatprep.subr.bf16.mxu0 0
    %6312 = vmatpush1.bf16.msra.mxu0 %v4571
    %6313 = vmatprep.subr.bf16.mxu0 0
    %6314 = vmatpush1.bf16.msra.mxu0 %v4572
    %6315 = vmatprep.subr.bf16.mxu0 0
    %6316 = vmatpush1.bf16.msra.mxu0 %v4573
    %6317 = vmatprep.subr.bf16.mxu0 0
    %6318 = vmatpush1.bf16.msra.mxu0 %v4574
    %6319 = vmatprep.mubr.bf16.mxu0 %v1557
    %6320 = vmatmul.mubr.bf16.gmra.mrb[0].mxu0 %v1543
    %v6321 = vpop.f32.mrb[0].mxu0
    %v6322 = vadd.f32 %v6282, %v6321
    %v6323 = vpop.f32.mrb[0].mxu0
    %v6324 = vpop.f32.mrb[0].mxu0
    %v6325 = vpop.f32.mrb[0].mxu0
    %6326 = vdwg.mxu0
    %6327 = vmatprep.subr.bf16.mxu0 0
    %6328 = vmatpush1.bf16.msra.mxu0 %v4575
    %6329 = vmatprep.subr.bf16.mxu0 0
    %6330 = vmatpush1.bf16.msra.mxu0 %v4576
    %6331 = vmatprep.subr.bf16.mxu0 0
    %6332 = vmatpush1.bf16.msra.mxu0 %v4577
    %6333 = vmatprep.subr.bf16.mxu0 0
    %6334 = vmatpush1.bf16.msra.mxu0 %v4578
    %6335 = vmatprep.subr.bf16.mxu0 0
    %6336 = vmatpush1.bf16.msra.mxu0 %v4579
    %6337 = vmatprep.subr.bf16.mxu0 0
    %6338 = vmatpush1.bf16.msra.mxu0 %v4580
    %6339 = vmatprep.subr.bf16.mxu0 0
    %6340 = vmatpush1.bf16.msra.mxu0 %v4581
    %6341 = vmatprep.subr.bf16.mxu0 0
    %6342 = vmatpush1.bf16.msra.mxu0 %v4582
    %6343 = vmatprep.subr.bf16.mxu0 0
    %6344 = vmatpush1.bf16.msra.mxu0 %v4583
    %6345 = vmatprep.subr.bf16.mxu0 0
    %6346 = vmatpush1.bf16.msra.mxu0 %v4584
    %6347 = vmatprep.subr.bf16.mxu0 0
    %6348 = vmatpush1.bf16.msra.mxu0 %v4585
    %6349 = vmatprep.subr.bf16.mxu0 0
    %6350 = vmatpush1.bf16.msra.mxu0 %v4586
    %6351 = vmatprep.subr.bf16.mxu0 0
    %6352 = vmatpush1.bf16.msra.mxu0 %v4587
    %6353 = vmatprep.subr.bf16.mxu0 0
    %6354 = vmatpush1.bf16.msra.mxu0 %v4588
    %6355 = vmatprep.subr.bf16.mxu0 0
    %6356 = vmatpush1.bf16.msra.mxu0 %v4589
    %6357 = vmatprep.subr.bf16.mxu0 0
    %6358 = vmatpush1.bf16.msra.mxu0 %v4590
    %6359 = vmatprep.mubr.bf16.mxu0 %v1561
    %6360 = vmatmul.mubr.bf16.gmra.mrb[0].mxu0 %v1559
    %v6361 = vpop.f32.mrb[0].mxu0
    %v6362 = vadd.f32 %v6322, %v6361
    %v6363 = vpop.f32.mrb[0].mxu0
    %v6364 = vpop.f32.mrb[0].mxu0
    %v6365 = vpop.f32.mrb[0].mxu0
    %6366 = vdwg.mxu0
    %6367 = vmatprep.subr.bf16.mxu0 0
    %6368 = vmatpush1.bf16.msra.mxu0 %v4591
    %6369 = vmatprep.subr.bf16.mxu0 0
    %6370 = vmatpush1.bf16.msra.mxu0 %v4592
    %6371 = vmatprep.subr.bf16.mxu0 0
    %6372 = vmatpush1.bf16.msra.mxu0 %v4593
    %6373 = vmatprep.subr.bf16.mxu0 0
    %6374 = vmatpush1.bf16.msra.mxu0 %v4594
    %6375 = vmatprep.subr.bf16.mxu0 0
    %6376 = vmatpush1.bf16.msra.mxu0 %v4595
    %6377 = vmatprep.subr.bf16.mxu0 0
    %6378 = vmatpush1.bf16.msra.mxu0 %v4596
    %6379 = vmatprep.subr.bf16.mxu0 0
    %6380 = vmatpush1.bf16.msra.mxu0 %v4597
    %6381 = vmatprep.subr.bf16.mxu0 0
    %6382 = vmatpush1.bf16.msra.mxu0 %v4598
    %6383 = vmatprep.subr.bf16.mxu0 0
    %6384 = vmatpush1.bf16.msra.mxu0 %v4599
    %6385 = vmatprep.subr.bf16.mxu0 0
    %6386 = vmatpush1.bf16.msra.mxu0 %v4600
    %6387 = vmatprep.subr.bf16.mxu0 0
    %6388 = vmatpush1.bf16.msra.mxu0 %v4601
    %6389 = vmatprep.subr.bf16.mxu0 0
    %6390 = vmatpush1.bf16.msra.mxu0 %v4602
    %6391 = vmatprep.subr.bf16.mxu0 0
    %6392 = vmatpush1.bf16.msra.mxu0 %v4603
    %6393 = vmatprep.subr.bf16.mxu0 0
    %6394 = vmatpush1.bf16.msra.mxu0 %v4604
    %6395 = vmatprep.subr.bf16.mxu0 0
    %6396 = vmatpush1.bf16.msra.mxu0 %v4605
    %6397 = vmatprep.subr.bf16.mxu0 0
    %6398 = vmatpush1.bf16.msra.mxu0 %v4606
    %6399 = vmatprep.mubr.bf16.mxu0 %v1599
    %6400 = vmatmul.mubr.bf16.gmra.mrb[0].mxu0 %v1585
    %v6401 = vpop.f32.mrb[0].mxu0
    %v6402 = vadd.f32 %v6362, %v6401
    %v6403 = vpop.f32.mrb[0].mxu0
    %v6404 = vpop.f32.mrb[0].mxu0
    %v6405 = vpop.f32.mrb[0].mxu0
    %6406 = vdwg.mxu0
    %6407 = vmatprep.subr.bf16.mxu0 0
    %6408 = vmatpush1.bf16.msra.mxu0 %v4607
    %6409 = vmatprep.subr.bf16.mxu0 0
    %6410 = vmatpush1.bf16.msra.mxu0 %v4608
    %6411 = vmatprep.subr.bf16.mxu0 0
    %6412 = vmatpush1.bf16.msra.mxu0 %v4609
    %6413 = vmatprep.subr.bf16.mxu0 0
    %6414 = vmatpush1.bf16.msra.mxu0 %v4610
    %6415 = vmatprep.subr.bf16.mxu0 0
    %6416 = vmatpush1.bf16.msra.mxu0 %v4611
    %6417 = vmatprep.subr.bf16.mxu0 0
    %6418 = vmatpush1.bf16.msra.mxu0 %v4612
    %6419 = vmatprep.subr.bf16.mxu0 0
    %6420 = vmatpush1.bf16.msra.mxu0 %v4613
    %6421 = vmatprep.subr.bf16.mxu0 0
    %6422 = vmatpush1.bf16.msra.mxu0 %v4614
    %6423 = vmatprep.subr.bf16.mxu0 0
    %6424 = vmatpush1.bf16.msra.mxu0 %v4615
    %6425 = vmatprep.subr.bf16.mxu0 0
    %6426 = vmatpush1.bf16.msra.mxu0 %v4616
    %6427 = vmatprep.subr.bf16.mxu0 0
    %6428 = vmatpush1.bf16.msra.mxu0 %v4617
    %6429 = vmatprep.subr.bf16.mxu0 0
    %6430 = vmatpush1.bf16.msra.mxu0 %v4618
    %6431 = vmatprep.subr.bf16.mxu0 0
    %6432 = vmatpush1.bf16.msra.mxu0 %v4619
    %6433 = vmatprep.subr.bf16.mxu0 0
    %6434 = vmatpush1.bf16.msra.mxu0 %v4620
    %6435 = vmatprep.subr.bf16.mxu0 0
    %6436 = vmatpush1.bf16.msra.mxu0 %v4621
    %6437 = vmatprep.subr.bf16.mxu0 0
    %6438 = vmatpush1.bf16.msra.mxu0 %v4622
    %6439 = vmatprep.mubr.bf16.mxu0 %v1609
    %6440 = vmatmul.mubr.bf16.gmra.mrb[0].mxu0 %v1607
    %v6441 = vpop.f32.mrb[0].mxu0
    %v6442 = vadd.f32 %v6402, %v6441
    %v6443 = vpop.f32.mrb[0].mxu0
    %v6444 = vpop.f32.mrb[0].mxu0
    %v6445 = vpop.f32.mrb[0].mxu0
    %6446 = vdwg.mxu0
    %6447 = vmatprep.subr.bf16.mxu0 0
    %6448 = vmatpush1.bf16.msra.mxu0 %v4623
    %6449 = vmatprep.subr.bf16.mxu0 0
    %6450 = vmatpush1.bf16.msra.mxu0 %v4624
    %6451 = vmatprep.subr.bf16.mxu0 0
    %6452 = vmatpush1.bf16.msra.mxu0 %v4625
    %6453 = vmatprep.subr.bf16.mxu0 0
    %6454 = vmatpush1.bf16.msra.mxu0 %v4626
    %6455 = vmatprep.subr.bf16.mxu0 0
    %6456 = vmatpush1.bf16.msra.mxu0 %v4627
    %6457 = vmatprep.subr.bf16.mxu0 0
    %6458 = vmatpush1.bf16.msra.mxu0 %v4628
    %6459 = vmatprep.subr.bf16.mxu0 0
    %6460 = vmatpush1.bf16.msra.mxu0 %v4629
    %6461 = vmatprep.subr.bf16.mxu0 0
    %6462 = vmatpush1.bf16.msra.mxu0 %v4630
    %6463 = vmatprep.subr.bf16.mxu0 0
    %6464 = vmatpush1.bf16.msra.mxu0 %v4631
    %6465 = vmatprep.subr.bf16.mxu0 0
    %6466 = vmatpush1.bf16.msra.mxu0 %v4632
    %6467 = vmatprep.subr.bf16.mxu0 0
    %6468 = vmatpush1.bf16.msra.mxu0 %v4633
    %6469 = vmatprep.subr.bf16.mxu0 0
    %6470 = vmatpush1.bf16.msra.mxu0 %v4634
    %6471 = vmatprep.subr.bf16.mxu0 0
    %6472 = vmatpush1.bf16.msra.mxu0 %v4635
    %6473 = vmatprep.subr.bf16.mxu0 0
    %6474 = vmatpush1.bf16.msra.mxu0 %v4636
    %6475 = vmatprep.subr.bf16.mxu0 0
    %6476 = vmatpush1.bf16.msra.mxu0 %v4637
    %6477 = vmatprep.subr.bf16.mxu0 0
    %6478 = vmatpush1.bf16.msra.mxu0 %v4638
    %6479 = vmatprep.mubr.bf16.mxu0 %v1606
    %6480 = vmatmul.mubr.bf16.gmra.mrb[0].mxu0 %v1592
    %v6481 = vpop.f32.mrb[0].mxu0
    %v6482 = vadd.f32 %v6442, %v6481
    %v6483 = vpop.f32.mrb[0].mxu0
    %v6484 = vpop.f32.mrb[0].mxu0
    %v6485 = vpop.f32.mrb[0].mxu0
    %6486 = vdwg.mxu0
    %6487 = vmatprep.subr.bf16.mxu0 0
    %6488 = vmatpush1.bf16.msra.mxu0 %v4639
    %6489 = vmatprep.subr.bf16.mxu0 0
    %6490 = vmatpush1.bf16.msra.mxu0 %v4640
    %6491 = vmatprep.subr.bf16.mxu0 0
    %6492 = vmatpush1.bf16.msra.mxu0 %v4641
    %6493 = vmatprep.subr.bf16.mxu0 0
    %6494 = vmatpush1.bf16.msra.mxu0 %v4642
    %6495 = vmatprep.subr.bf16.mxu0 0
    %6496 = vmatpush1.bf16.msra.mxu0 %v4643
    %6497 = vmatprep.subr.bf16.mxu0 0
    %6498 = vmatpush1.bf16.msra.mxu0 %v4644
    %6499 = vmatprep.subr.bf16.mxu0 0
    %6500 = vmatpush1.bf16.msra.mxu0 %v4645
    %6501 = vmatprep.subr.bf16.mxu0 0
    %6502 = vmatpush1.bf16.msra.mxu0 %v4646
    %6503 = vmatprep.subr.bf16.mxu0 0
    %6504 = vmatpush1.bf16.msra.mxu0 %v4647
    %6505 = vmatprep.subr.bf16.mxu0 0
    %6506 = vmatpush1.bf16.msra.mxu0 %v4648
    %6507 = vmatprep.subr.bf16.mxu0 0
    %6508 = vmatpush1.bf16.msra.mxu0 %v4649
    %6509 = vmatprep.subr.bf16.mxu0 0
    %6510 = vmatpush1.bf16.msra.mxu0 %v4650
    %6511 = vmatprep.subr.bf16.mxu0 0
    %6512 = vmatpush1.bf16.msra.mxu0 %v4651
    %6513 = vmatprep.subr.bf16.mxu0 0
    %6514 = vmatpush1.bf16.msra.mxu0 %v4652
    %6515 = vmatprep.subr.bf16.mxu0 0
    %6516 = vmatpush1.bf16.msra.mxu0 %v4653
    %6517 = vmatprep.subr.bf16.mxu0 0
    %6518 = vmatpush1.bf16.msra.mxu0 %v4654
    %6519 = vmatprep.mubr.bf16.mxu0 %v1610
    %6520 = vmatmul.mubr.bf16.gmra.mrb[0].mxu0 %v1608
    %v6521 = vpop.f32.mrb[0].mxu0
    %v6522 = vadd.f32 %v6482, %v6521
    %v6523 = vpop.f32.mrb[0].mxu0
    %v6524 = vpop.f32.mrb[0].mxu0
    %v6525 = vpop.f32.mrb[0].mxu0
    %6526 = vdwg.mxu0
    %6527 = vmatprep.subr.bf16.mxu0 0
    %6528 = vmatpush1.bf16.msra.mxu0 %v4655
    %6529 = vmatprep.subr.bf16.mxu0 0
    %6530 = vmatpush1.bf16.msra.mxu0 %v4656
    %6531 = vmatprep.subr.bf16.mxu0 0
    %6532 = vmatpush1.bf16.msra.mxu0 %v4657
    %6533 = vmatprep.subr.bf16.mxu0 0
    %6534 = vmatpush1.bf16.msra.mxu0 %v4658
    %6535 = vmatprep.subr.bf16.mxu0 0
    %6536 = vmatpush1.bf16.msra.mxu0 %v4659
    %6537 = vmatprep.subr.bf16.mxu0 0
    %6538 = vmatpush1.bf16.msra.mxu0 %v4660
    %6539 = vmatprep.subr.bf16.mxu0 0
    %6540 = vmatpush1.bf16.msra.mxu0 %v4661
    %6541 = vmatprep.subr.bf16.mxu0 0
    %6542 = vmatpush1.bf16.msra.mxu0 %v4662
    %6543 = vmatprep.subr.bf16.mxu0 0
    %6544 = vmatpush1.bf16.msra.mxu0 %v4663
    %6545 = vmatprep.subr.bf16.mxu0 0
    %6546 = vmatpush1.bf16.msra.mxu0 %v4664
    %6547 = vmatprep.subr.bf16.mxu0 0
    %6548 = vmatpush1.bf16.msra.mxu0 %v4665
    %6549 = vmatprep.subr.bf16.mxu0 0
    %6550 = vmatpush1.bf16.msra.mxu0 %v4666
    %6551 = vmatprep.subr.bf16.mxu0 0
    %6552 = vmatpush1.bf16.msra.mxu0 %v4667
    %6553 = vmatprep.subr.bf16.mxu0 0
    %6554 = vmatpush1.bf16.msra.mxu0 %v4668
    %6555 = vmatprep.subr.bf16.mxu0 0
    %6556 = vmatpush1.bf16.msra.mxu0 %v4669
    %6557 = vmatprep.subr.bf16.mxu0 0
    %6558 = vmatpush1.bf16.msra.mxu0 %v4670
    %6559 = vmatprep.mubr.bf16.mxu0 %v1648
    %6560 = vmatmul.mubr.bf16.gmra.mrb[0].mxu0 %v1634
    %v6561 = vpop.f32.mrb[0].mxu0
    %v6562 = vadd.f32 %v6522, %v6561
    %v6563 = vpop.f32.mrb[0].mxu0
    %v6564 = vpop.f32.mrb[0].mxu0
    %v6565 = vpop.f32.mrb[0].mxu0
    %6566 = vdwg.mxu0
    %6567 = vmatprep.subr.bf16.mxu0 0
    %6568 = vmatpush1.bf16.msra.mxu0 %v4671
    %6569 = vmatprep.subr.bf16.mxu0 0
    %6570 = vmatpush1.bf16.msra.mxu0 %v4672
    %6571 = vmatprep.subr.bf16.mxu0 0
    %6572 = vmatpush1.bf16.msra.mxu0 %v4673
    %6573 = vmatprep.subr.bf16.mxu0 0
    %6574 = vmatpush1.bf16.msra.mxu0 %v4674
    %6575 = vmatprep.subr.bf16.mxu0 0
    %6576 = vmatpush1.bf16.msra.mxu0 %v4675
    %6577 = vmatprep.subr.bf16.mxu0 0
    %6578 = vmatpush1.bf16.msra.mxu0 %v4676
    %6579 = vmatprep.subr.bf16.mxu0 0
    %6580 = vmatpush1.bf16.msra.mxu0 %v4677
    %6581 = vmatprep.subr.bf16.mxu0 0
    %6582 = vmatpush1.bf16.msra.mxu0 %v4678
    %6583 = vmatprep.subr.bf16.mxu0 0
    %6584 = vmatpush1.bf16.msra.mxu0 %v4679
    %6585 = vmatprep.subr.bf16.mxu0 0
    %6586 = vmatpush1.bf16.msra.mxu0 %v4680
    %6587 = vmatprep.subr.bf16.mxu0 0
    %6588 = vmatpush1.bf16.msra.mxu0 %v4681
    %6589 = vmatprep.subr.bf16.mxu0 0
    %6590 = vmatpush1.bf16.msra.mxu0 %v4682
    %6591 = vmatprep.subr.bf16.mxu0 0
    %6592 = vmatpush1.bf16.msra.mxu0 %v4683
    %6593 = vmatprep.subr.bf16.mxu0 0
    %6594 = vmatpush1.bf16.msra.mxu0 %v4684
    %6595 = vmatprep.subr.bf16.mxu0 0
    %6596 = vmatpush1.bf16.msra.mxu0 %v4685
    %6597 = vmatprep.subr.bf16.mxu0 0
    %6598 = vmatpush1.bf16.msra.mxu0 %v4686
    %6599 = vmatprep.mubr.bf16.mxu0 %v1658
    %6600 = vmatmul.mubr.bf16.gmra.mrb[0].mxu0 %v1656
    %v6601 = vpop.f32.mrb[0].mxu0
    %v6602 = vadd.f32 %v6562, %v6601
    %v6603 = vpop.f32.mrb[0].mxu0
    %v6604 = vpop.f32.mrb[0].mxu0
    %v6605 = vpop.f32.mrb[0].mxu0
    %6606 = vdwg.mxu0
    %6607 = vmatprep.subr.bf16.mxu0 0
    %6608 = vmatpush1.bf16.msra.mxu0 %v4687
    %6609 = vmatprep.subr.bf16.mxu0 0
    %6610 = vmatpush1.bf16.msra.mxu0 %v4688
    %6611 = vmatprep.subr.bf16.mxu0 0
    %6612 = vmatpush1.bf16.msra.mxu0 %v4689
    %6613 = vmatprep.subr.bf16.mxu0 0
    %6614 = vmatpush1.bf16.msra.mxu0 %v4690
    %6615 = vmatprep.subr.bf16.mxu0 0
    %6616 = vmatpush1.bf16.msra.mxu0 %v4691
    %6617 = vmatprep.subr.bf16.mxu0 0
    %6618 = vmatpush1.bf16.msra.mxu0 %v4692
    %6619 = vmatprep.subr.bf16.mxu0 0
    %6620 = vmatpush1.bf16.msra.mxu0 %v4693
    %6621 = vmatprep.subr.bf16.mxu0 0
    %6622 = vmatpush1.bf16.msra.mxu0 %v4694
    %6623 = vmatprep.subr.bf16.mxu0 0
    %6624 = vmatpush1.bf16.msra.mxu0 %v4695
    %6625 = vmatprep.subr.bf16.mxu0 0
    %6626 = vmatpush1.bf16.msra.mxu0 %v4696
    %6627 = vmatprep.subr.bf16.mxu0 0
    %6628 = vmatpush1.bf16.msra.mxu0 %v4697
    %6629 = vmatprep.subr.bf16.mxu0 0
    %6630 = vmatpush1.bf16.msra.mxu0 %v4698
    %6631 = vmatprep.subr.bf16.mxu0 0
    %6632 = vmatpush1.bf16.msra.mxu0 %v4699
    %6633 = vmatprep.subr.bf16.mxu0 0
    %6634 = vmatpush1.bf16.msra.mxu0 %v4700
    %6635 = vmatprep.subr.bf16.mxu0 0
    %6636 = vmatpush1.bf16.msra.mxu0 %v4701
    %6637 = vmatprep.subr.bf16.mxu0 0
    %6638 = vmatpush1.bf16.msra.mxu0 %v4702
    %6639 = vmatprep.mubr.bf16.mxu0 %v1655
    %6640 = vmatmul.mubr.bf16.gmra.mrb[0].mxu0 %v1641
    %v6641 = vpop.f32.mrb[0].mxu0
    %v6642 = vadd.f32 %v6602, %v6641
    %v6643 = vpop.f32.mrb[0].mxu0
    %v6644 = vpop.f32.mrb[0].mxu0
    %v6645 = vpop.f32.mrb[0].mxu0
    %6646 = vdwg.mxu0
    %6647 = vmatprep.subr.bf16.mxu0 0
    %6648 = vmatpush1.bf16.msra.mxu0 %v4703
    %6649 = vmatprep.subr.bf16.mxu0 0
    %6650 = vmatpush1.bf16.msra.mxu0 %v4704
    %6651 = vmatprep.subr.bf16.mxu0 0
    %6652 = vmatpush1.bf16.msra.mxu0 %v4705
    %6653 = vmatprep.subr.bf16.mxu0 0
    %6654 = vmatpush1.bf16.msra.mxu0 %v4706
    %6655 = vmatprep.subr.bf16.mxu0 0
    %6656 = vmatpush1.bf16.msra.mxu0 %v4707
    %6657 = vmatprep.subr.bf16.mxu0 0
    %6658 = vmatpush1.bf16.msra.mxu0 %v4708
    %6659 = vmatprep.subr.bf16.mxu0 0
    %6660 = vmatpush1.bf16.msra.mxu0 %v4709
    %6661 = vmatprep.subr.bf16.mxu0 0
    %6662 = vmatpush1.bf16.msra.mxu0 %v4710
    %6663 = vmatprep.subr.bf16.mxu0 0
    %6664 = vmatpush1.bf16.msra.mxu0 %v4711
    %6665 = vmatprep.subr.bf16.mxu0 0
    %6666 = vmatpush1.bf16.msra.mxu0 %v4712
    %6667 = vmatprep.subr.bf16.mxu0 0
    %6668 = vmatpush1.bf16.msra.mxu0 %v4713
    %6669 = vmatprep.subr.bf16.mxu0 0
    %6670 = vmatpush1.bf16.msra.mxu0 %v4714
    %6671 = vmatprep.subr.bf16.mxu0 0
    %6672 = vmatpush1.bf16.msra.mxu0 %v4715
    %6673 = vmatprep.subr.bf16.mxu0 0
    %6674 = vmatpush1.bf16.msra.mxu0 %v4716
    %6675 = vmatprep.subr.bf16.mxu0 0
    %6676 = vmatpush1.bf16.msra.mxu0 %v4717
    %6677 = vmatprep.subr.bf16.mxu0 0
    %6678 = vmatpush1.bf16.msra.mxu0 %v4718
    %6679 = vmatprep.mubr.bf16.mxu0 %v1659
    %6680 = vmatmul.mubr.bf16.gmra.mrb[0].mxu0 %v1657
    %v6681 = vpop.f32.mrb[0].mxu0
    %v6682 = vadd.f32 %v6642, %v6681
    %v6683 = vpop.f32.mrb[0].mxu0
    %v6684 = vpop.f32.mrb[0].mxu0
    %v6685 = vpop.f32.mrb[0].mxu0
    %6686 = vdwg.mxu0
    %6687 = vmatprep.subr.bf16.mxu0 0
    %6688 = vmatpush1.bf16.msra.mxu0 %v4719
    %6689 = vmatprep.subr.bf16.mxu0 0
    %6690 = vmatpush1.bf16.msra.mxu0 %v4720
    %6691 = vmatprep.subr.bf16.mxu0 0
    %6692 = vmatpush1.bf16.msra.mxu0 %v4721
    %6693 = vmatprep.subr.bf16.mxu0 0
    %6694 = vmatpush1.bf16.msra.mxu0 %v4722
    %6695 = vmatprep.subr.bf16.mxu0 0
    %6696 = vmatpush1.bf16.msra.mxu0 %v4723
    %6697 = vmatprep.subr.bf16.mxu0 0
    %6698 = vmatpush1.bf16.msra.mxu0 %v4724
    %6699 = vmatprep.subr.bf16.mxu0 0
    %6700 = vmatpush1.bf16.msra.mxu0 %v4725
    %6701 = vmatprep.subr.bf16.mxu0 0
    %6702 = vmatpush1.bf16.msra.mxu0 %v4726
    %6703 = vmatprep.subr.bf16.mxu0 0
    %6704 = vmatpush1.bf16.msra.mxu0 %v4727
    %6705 = vmatprep.subr.bf16.mxu0 0
    %6706 = vmatpush1.bf16.msra.mxu0 %v4728
    %6707 = vmatprep.subr.bf16.mxu0 0
    %6708 = vmatpush1.bf16.msra.mxu0 %v4729
    %6709 = vmatprep.subr.bf16.mxu0 0
    %6710 = vmatpush1.bf16.msra.mxu0 %v4730
    %6711 = vmatprep.subr.bf16.mxu0 0
    %6712 = vmatpush1.bf16.msra.mxu0 %v4731
    %6713 = vmatprep.subr.bf16.mxu0 0
    %6714 = vmatpush1.bf16.msra.mxu0 %v4732
    %6715 = vmatprep.subr.bf16.mxu0 0
    %6716 = vmatpush1.bf16.msra.mxu0 %v4733
    %6717 = vmatprep.subr.bf16.mxu0 0
    %6718 = vmatpush1.bf16.msra.mxu0 %v4734
    %6719 = vmatprep.mubr.bf16.mxu0 %v1697
    %6720 = vmatmul.mubr.bf16.gmra.mrb[0].mxu0 %v1683
    %v6721 = vpop.f32.mrb[0].mxu0
    %v6722 = vadd.f32 %v6682, %v6721
    %v6723 = vpop.f32.mrb[0].mxu0
    %v6724 = vpop.f32.mrb[0].mxu0
    %v6725 = vpop.f32.mrb[0].mxu0
    %6726 = vdwg.mxu0
    %6727 = vmatprep.subr.bf16.mxu0 0
    %6728 = vmatpush1.bf16.msra.mxu0 %v4735
    %6729 = vmatprep.subr.bf16.mxu0 0
    %6730 = vmatpush1.bf16.msra.mxu0 %v4736
    %6731 = vmatprep.subr.bf16.mxu0 0
    %6732 = vmatpush1.bf16.msra.mxu0 %v4737
    %6733 = vmatprep.subr.bf16.mxu0 0
    %6734 = vmatpush1.bf16.msra.mxu0 %v4738
    %6735 = vmatprep.subr.bf16.mxu0 0
    %6736 = vmatpush1.bf16.msra.mxu0 %v4739
    %6737 = vmatprep.subr.bf16.mxu0 0
    %6738 = vmatpush1.bf16.msra.mxu0 %v4740
    %6739 = vmatprep.subr.bf16.mxu0 0
    %6740 = vmatpush1.bf16.msra.mxu0 %v4741
    %6741 = vmatprep.subr.bf16.mxu0 0
    %6742 = vmatpush1.bf16.msra.mxu0 %v4742
    %6743 = vmatprep.subr.bf16.mxu0 0
    %6744 = vmatpush1.bf16.msra.mxu0 %v4743
    %6745 = vmatprep.subr.bf16.mxu0 0
    %6746 = vmatpush1.bf16.msra.mxu0 %v4744
    %6747 = vmatprep.subr.bf16.mxu0 0
    %6748 = vmatpush1.bf16.msra.mxu0 %v4745
    %6749 = vmatprep.subr.bf16.mxu0 0
    %6750 = vmatpush1.bf16.msra.mxu0 %v4746
    %6751 = vmatprep.subr.bf16.mxu0 0
    %6752 = vmatpush1.bf16.msra.mxu0 %v4747
    %6753 = vmatprep.subr.bf16.mxu0 0
    %6754 = vmatpush1.bf16.msra.mxu0 %v4748
    %6755 = vmatprep.subr.bf16.mxu0 0
    %6756 = vmatpush1.bf16.msra.mxu0 %v4749
    %6757 = vmatprep.subr.bf16.mxu0 0
    %6758 = vmatpush1.bf16.msra.mxu0 %v4750
    %6759 = vmatprep.mubr.bf16.mxu0 %v1707
    %6760 = vmatmul.mubr.bf16.gmra.mrb[0].mxu0 %v1705
    %v6761 = vpop.f32.mrb[0].mxu0
    %v6762 = vadd.f32 %v6722, %v6761
    %v6763 = vpop.f32.mrb[0].mxu0
    %v6764 = vpop.f32.mrb[0].mxu0
    %v6765 = vpop.f32.mrb[0].mxu0
    %6766 = vdwg.mxu0
    %6767 = vmatprep.subr.bf16.mxu0 0
    %6768 = vmatpush1.bf16.msra.mxu0 %v4751
    %6769 = vmatprep.subr.bf16.mxu0 0
    %6770 = vmatpush1.bf16.msra.mxu0 %v4752
    %6771 = vmatprep.subr.bf16.mxu0 0
    %6772 = vmatpush1.bf16.msra.mxu0 %v4753
    %6773 = vmatprep.subr.bf16.mxu0 0
    %6774 = vmatpush1.bf16.msra.mxu0 %v4754
    %6775 = vmatprep.subr.bf16.mxu0 0
    %6776 = vmatpush1.bf16.msra.mxu0 %v4755
    %6777 = vmatprep.subr.bf16.mxu0 0
    %6778 = vmatpush1.bf16.msra.mxu0 %v4756
    %6779 = vmatprep.subr.bf16.mxu0 0
    %6780 = vmatpush1.bf16.msra.mxu0 %v4757
    %6781 = vmatprep.subr.bf16.mxu0 0
    %6782 = vmatpush1.bf16.msra.mxu0 %v4758
    %6783 = vmatprep.subr.bf16.mxu0 0
    %6784 = vmatpush1.bf16.msra.mxu0 %v4759
    %6785 = vmatprep.subr.bf16.mxu0 0
    %6786 = vmatpush1.bf16.msra.mxu0 %v4760
    %6787 = vmatprep.subr.bf16.mxu0 0
    %6788 = vmatpush1.bf16.msra.mxu0 %v4761
    %6789 = vmatprep.subr.bf16.mxu0 0
    %6790 = vmatpush1.bf16.msra.mxu0 %v4762
    %6791 = vmatprep.subr.bf16.mxu0 0
    %6792 = vmatpush1.bf16.msra.mxu0 %v4763
    %6793 = vmatprep.subr.bf16.mxu0 0
    %6794 = vmatpush1.bf16.msra.mxu0 %v4764
    %6795 = vmatprep.subr.bf16.mxu0 0
    %6796 = vmatpush1.bf16.msra.mxu0 %v4765
    %6797 = vmatprep.subr.bf16.mxu0 0
    %6798 = vmatpush1.bf16.msra.mxu0 %v4766
    %6799 = vmatprep.mubr.bf16.mxu0 %v1704
    %6800 = vmatmul.mubr.bf16.gmra.mrb[0].mxu0 %v1690
    %v6801 = vpop.f32.mrb[0].mxu0
    %v6802 = vadd.f32 %v6762, %v6801
    %v6803 = vpop.f32.mrb[0].mxu0
    %v6804 = vpop.f32.mrb[0].mxu0
    %v6805 = vpop.f32.mrb[0].mxu0
    %6806 = vdwg.mxu0
    %6807 = vmatprep.subr.bf16.mxu0 0
    %6808 = vmatpush1.bf16.msra.mxu0 %v4767
    %6809 = vmatprep.subr.bf16.mxu0 0
    %6810 = vmatpush1.bf16.msra.mxu0 %v4768
    %6811 = vmatprep.subr.bf16.mxu0 0
    %6812 = vmatpush1.bf16.msra.mxu0 %v4769
    %6813 = vmatprep.subr.bf16.mxu0 0
    %6814 = vmatpush1.bf16.msra.mxu0 %v4770
    %6815 = vmatprep.subr.bf16.mxu0 0
    %6816 = vmatpush1.bf16.msra.mxu0 %v4771
    %6817 = vmatprep.subr.bf16.mxu0 0
    %6818 = vmatpush1.bf16.msra.mxu0 %v4772
    %6819 = vmatprep.subr.bf16.mxu0 0
    %6820 = vmatpush1.bf16.msra.mxu0 %v4773
    %6821 = vmatprep.subr.bf16.mxu0 0
    %6822 = vmatpush1.bf16.msra.mxu0 %v4774
    %6823 = vmatprep.subr.bf16.mxu0 0
    %6824 = vmatpush1.bf16.msra.mxu0 %v4775
    %6825 = vmatprep.subr.bf16.mxu0 0
    %6826 = vmatpush1.bf16.msra.mxu0 %v4776
    %6827 = vmatprep.subr.bf16.mxu0 0
    %6828 = vmatpush1.bf16.msra.mxu0 %v4777
    %6829 = vmatprep.subr.bf16.mxu0 0
    %6830 = vmatpush1.bf16.msra.mxu0 %v4778
    %6831 = vmatprep.subr.bf16.mxu0 0
    %6832 = vmatpush1.bf16.msra.mxu0 %v4779
    %6833 = vmatprep.subr.bf16.mxu0 0
    %6834 = vmatpush1.bf16.msra.mxu0 %v4780
    %6835 = vmatprep.subr.bf16.mxu0 0
    %6836 = vmatpush1.bf16.msra.mxu0 %v4781
    %6837 = vmatprep.subr.bf16.mxu0 0
    %6838 = vmatpush1.bf16.msra.mxu0 %v4782
    %6839 = vmatprep.mubr.bf16.mxu0 %v1708
    %6840 = vmatmul.mubr.bf16.gmra.mrb[0].mxu0 %v1706
    %v6841 = vpop.f32.mrb[0].mxu0
    %v6842 = vadd.f32 %v6802, %v6841
    %v6843 = vpop.f32.mrb[0].mxu0
    %v6844 = vpop.f32.mrb[0].mxu0
    %v6845 = vpop.f32.mrb[0].mxu0
    %6846 = vdwg.mxu0
    %6847 = vmatprep.subr.bf16.mxu0 0
    %6848 = vmatpush1.bf16.msra.mxu0 %v4783
    %6849 = vmatprep.subr.bf16.mxu0 0
    %6850 = vmatpush1.bf16.msra.mxu0 %v4784
    %6851 = vmatprep.subr.bf16.mxu0 0
    %6852 = vmatpush1.bf16.msra.mxu0 %v4785
    %6853 = vmatprep.subr.bf16.mxu0 0
    %6854 = vmatpush1.bf16.msra.mxu0 %v4786
    %6855 = vmatprep.subr.bf16.mxu0 0
    %6856 = vmatpush1.bf16.msra.mxu0 %v4787
    %6857 = vmatprep.subr.bf16.mxu0 0
    %6858 = vmatpush1.bf16.msra.mxu0 %v4788
    %6859 = vmatprep.subr.bf16.mxu0 0
    %6860 = vmatpush1.bf16.msra.mxu0 %v4789
    %6861 = vmatprep.subr.bf16.mxu0 0
    %6862 = vmatpush1.bf16.msra.mxu0 %v4790
    %6863 = vmatprep.subr.bf16.mxu0 0
    %6864 = vmatpush1.bf16.msra.mxu0 %v4791
    %6865 = vmatprep.subr.bf16.mxu0 0
    %6866 = vmatpush1.bf16.msra.mxu0 %v4792
    %6867 = vmatprep.subr.bf16.mxu0 0
    %6868 = vmatpush1.bf16.msra.mxu0 %v4793
    %6869 = vmatprep.subr.bf16.mxu0 0
    %6870 = vmatpush1.bf16.msra.mxu0 %v4794
    %6871 = vmatprep.subr.bf16.mxu0 0
    %6872 = vmatpush1.bf16.msra.mxu0 %v4795
    %6873 = vmatprep.subr.bf16.mxu0 0
    %6874 = vmatpush1.bf16.msra.mxu0 %v4796
    %6875 = vmatprep.subr.bf16.mxu0 0
    %6876 = vmatpush1.bf16.msra.mxu0 %v4797
    %6877 = vmatprep.subr.bf16.mxu0 0
    %6878 = vmatpush1.bf16.msra.mxu0 %v4798
    %6879 = vmatprep.mubr.bf16.mxu0 %v1730
    %6880 = vmatmul.mubr.bf16.gmra.mrb[0].mxu0 %v1723
    %v6881 = vpop.f32.mrb[0].mxu0
    %v6882 = vadd.f32 %v6842, %v6881
    %v6883 = vpop.f32.mrb[0].mxu0
    %v6884 = vpop.f32.mrb[0].mxu0
    %v6885 = vpop.f32.mrb[0].mxu0
    %6886 = vdwg.mxu0
    %6887 = vmatprep.subr.bf16.mxu0 0
    %6888 = vmatpush1.bf16.msra.mxu0 %v4799
    %6889 = vmatprep.subr.bf16.mxu0 0
    %6890 = vmatpush1.bf16.msra.mxu0 %v4800
    %6891 = vmatprep.subr.bf16.mxu0 0
    %6892 = vmatpush1.bf16.msra.mxu0 %v4801
    %6893 = vmatprep.subr.bf16.mxu0 0
    %6894 = vmatpush1.bf16.msra.mxu0 %v4802
    %6895 = vmatprep.subr.bf16.mxu0 0
    %6896 = vmatpush1.bf16.msra.mxu0 %v4803
    %6897 = vmatprep.subr.bf16.mxu0 0
    %6898 = vmatpush1.bf16.msra.mxu0 %v4804
    %6899 = vmatprep.subr.bf16.mxu0 0
    %6900 = vmatpush1.bf16.msra.mxu0 %v4805
    %6901 = vmatprep.subr.bf16.mxu0 0
    %6902 = vmatpush1.bf16.msra.mxu0 %v4806
    %6903 = vmatprep.subr.bf16.mxu0 0
    %6904 = vmatpush1.bf16.msra.mxu0 0
    %6905 = vmatprep.subr.bf16.mxu0 0
    %6906 = vmatpush1.bf16.msra.mxu0 0
    %6907 = vmatprep.subr.bf16.mxu0 0
    %6908 = vmatpush1.bf16.msra.mxu0 0
    %6909 = vmatprep.subr.bf16.mxu0 0
    %6910 = vmatpush1.bf16.msra.mxu0 0
    %6911 = vmatprep.subr.bf16.mxu0 0
    %6912 = vmatpush1.bf16.msra.mxu0 0
    %6913 = vmatprep.subr.bf16.mxu0 0
    %6914 = vmatpush1.bf16.msra.mxu0 0
    %6915 = vmatprep.subr.bf16.mxu0 0
    %6916 = vmatpush1.bf16.msra.mxu0 0
    %6917 = vmatprep.subr.bf16.mxu0 0
    %6918 = vmatpush1.bf16.msra.mxu0 0
    %6919 = vmatprep.mubr.bf16.mxu0 0
    %6920 = vmatmul.mubr.bf16.gmra.mrb[0].mxu0 %v1731
    %v6921 = vpop.f32.mrb[0].mxu0
    %v6922 = vadd.f32 %v6882, %v6921
    %v6923 = vpop.f32.mrb[0].mxu0
    %v6924 = vpop.f32.mrb[0].mxu0
    %v6925 = vpop.f32.mrb[0].mxu0
    %6926 = vdwg.mxu0
    %v6927 = vld [vmem:[%s4] sm:$0x1]
    %v6929 = vlaneseq
    %v6930 = vshrl.u32 %v6929, 7
    %v6931 = vsub.s32 0, %v6930
    %v6932 = vrot.slane %v6927, %v6931
    %v6934 = vadd.f32 %v6922, %v6932
    %v6935 = vmax.f32 %v6934, 0.0
    %v6936 = vpack.c.bf16 %v6935, %v6935
    %v6937 = vld [vmem:[%s5] sm:$0xf]
    %v6938 = vld [vmem:[%s5 + $0x4] sm:$0xf]
    %v6939 = vld [vmem:[%s5 + $0x8] sm:$0xf]
    %v6940 = vld [vmem:[%s5 + $0xc] sm:$0xf]
    %v6941 = vld [vmem:[%s6] sm:$0x1]
    %v6943 = vlaneseq
    %v6944 = vshrl.u32 %v6943, 7
    %v6945 = vsub.s32 0, %v6944
    %v6946 = vrot.slane %v6941, %v6945
    %v6952 = vunpack.c.l.b16 %v6937
    %v6953 = vunpack.c.l.b16 %v6938
    %v6954 = vunpack.c.l.b16 %v6939
    %v6955 = vunpack.c.l.b16 %v6940
    %v6956 = vpack.c.b16 %v6953, %v6952
    %v6957 = vpack.c.b16 %v6955, %v6954
    %vm6960 = vcmask 261120
    %v6962 = vsel %vm6960, %v6936, 0
    %6964 = vmatprep.subr.bf16.mxu0 0
    %6965 = vmatpush1.bf16.msra.mxu0 %v6956
    %6966 = vmatprep.subr.bf16.mxu0 0
    %6967 = vmatpush1.bf16.msra.mxu0 %v6957
    %6968 = vmatprep.subr.bf16.mxu0 0
    %6969 = vmatpush1.bf16.msra.mxu0 0
    %6970 = vmatprep.subr.bf16.mxu0 0
    %6971 = vmatpush1.bf16.msra.mxu0 0
    %6972 = vmatprep.subr.bf16.mxu0 0
    %6973 = vmatpush1.bf16.msra.mxu0 0
    %6974 = vmatprep.subr.bf16.mxu0 0
    %6975 = vmatpush1.bf16.msra.mxu0 0
    %6976 = vmatprep.subr.bf16.mxu0 0
    %6977 = vmatpush1.bf16.msra.mxu0 0
    %6978 = vmatprep.subr.bf16.mxu0 0
    %6979 = vmatpush1.bf16.msra.mxu0 0
    %6980 = vmatprep.subr.bf16.mxu0 0
    %6981 = vmatpush1.bf16.msra.mxu0 0
    %6982 = vmatprep.subr.bf16.mxu0 0
    %6983 = vmatpush1.bf16.msra.mxu0 0
    %6984 = vmatprep.subr.bf16.mxu0 0
    %6985 = vmatpush1.bf16.msra.mxu0 0
    %6986 = vmatprep.subr.bf16.mxu0 0
    %6987 = vmatpush1.bf16.msra.mxu0 0
    %6988 = vmatprep.subr.bf16.mxu0 0
    %6989 = vmatpush1.bf16.msra.mxu0 0
    %6990 = vmatprep.subr.bf16.mxu0 0
    %6991 = vmatpush1.bf16.msra.mxu0 0
    %6992 = vmatprep.subr.bf16.mxu0 0
    %6993 = vmatpush1.bf16.msra.mxu0 0
    %6994 = vmatprep.subr.bf16.mxu0 0
    %6995 = vmatpush1.bf16.msra.mxu0 0
    %6996 = vmatprep.mubr.bf16.mxu0 0
    %6997 = vmatmul.mubr.bf16.gmra.mrb[0].mxu0 %v6962
    %v6998 = vpop.f32.mrb[0].mxu0
    %v6999 = vadd.f32 %v6946, %v6998
    %v7000 = vpop.f32.mrb[0].mxu0
    %v7001 = vpop.f32.mrb[0].mxu0
    %v7002 = vpop.f32.mrb[0].mxu0
    %7003 = vdwg.mxu0
    %v7004 = vmax.f32 %v6999, 0.0
    %v7005 = vpack.c.bf16 %v7004, %v7004
    %v7006 = vld [vmem:[%s7] sm:$0xf]
    %v7007 = vld [vmem:[%s7 + $0x4] sm:$0xf]
    %v7008 = vld [vmem:[%s7 + $0x8] sm:$0xf]
    %v7009 = vld [vmem:[%s7 + $0xc] sm:$0xf]
    %v7010 = vld [vmem:[%s8] sm:$0x1]
    %v7012 = vlaneseq
    %v7013 = vshrl.u32 %v7012, 7
    %v7014 = vsub.s32 0, %v7013
    %v7015 = vrot.slane %v7010, %v7014
    %v7021 = vunpack.c.l.b16 %v7006
    %v7022 = vunpack.c.l.b16 %v7007
    %v7023 = vunpack.c.l.b16 %v7008
    %v7024 = vunpack.c.l.b16 %v7009
    %v7025 = vpack.c.b16 %v7022, %v7021
    %v7026 = vpack.c.b16 %v7024, %v7023
    %v7030 = vsel %vm6960, %v7005, 0
    %7032 = vmatprep.subr.bf16.mxu0 0
    %7033 = vmatpush1.bf16.msra.mxu0 %v7025
    %7034 = vmatprep.subr.bf16.mxu0 0
    %7035 = vmatpush1.bf16.msra.mxu0 %v7026
    %7036 = vmatprep.subr.bf16.mxu0 0
    %7037 = vmatpush1.bf16.msra.mxu0 0
    %7038 = vmatprep.subr.bf16.mxu0 0
    %7039 = vmatpush1.bf16.msra.mxu0 0
    %7040 = vmatprep.subr.bf16.mxu0 0
    %7041 = vmatpush1.bf16.msra.mxu0 0
    %7042 = vmatprep.subr.bf16.mxu0 0
    %7043 = vmatpush1.bf16.msra.mxu0 0
    %7044 = vmatprep.subr.bf16.mxu0 0
    %7045 = vmatpush1.bf16.msra.mxu0 0
    %7046 = vmatprep.subr.bf16.mxu0 0
    %7047 = vmatpush1.bf16.msra.mxu0 0
    %7048 = vmatprep.subr.bf16.mxu0 0
    %7049 = vmatpush1.bf16.msra.mxu0 0
    %7050 = vmatprep.subr.bf16.mxu0 0
    %7051 = vmatpush1.bf16.msra.mxu0 0
    %7052 = vmatprep.subr.bf16.mxu0 0
    %7053 = vmatpush1.bf16.msra.mxu0 0
    %7054 = vmatprep.subr.bf16.mxu0 0
    %7055 = vmatpush1.bf16.msra.mxu0 0
    %7056 = vmatprep.subr.bf16.mxu0 0
    %7057 = vmatpush1.bf16.msra.mxu0 0
    %7058 = vmatprep.subr.bf16.mxu0 0
    %7059 = vmatpush1.bf16.msra.mxu0 0
    %7060 = vmatprep.subr.bf16.mxu0 0
    %7061 = vmatpush1.bf16.msra.mxu0 0
    %7062 = vmatprep.subr.bf16.mxu0 0
    %7063 = vmatpush1.bf16.msra.mxu0 0
    %7064 = vmatprep.mubr.bf16.mxu0 0
    %7065 = vmatmul.mubr.bf16.gmra.mrb[0].mxu0 %v7030
    %v7066 = vpop.f32.mrb[0].mxu0
    %v7067 = vadd.f32 %v7015, %v7066
    %v7068 = vpop.f32.mrb[0].mxu0
    %v7069 = vpop.f32.mrb[0].mxu0
    %v7070 = vpop.f32.mrb[0].mxu0
    %7071 = vdwg.mxu0
    %vm7072 = vcmask 9216
    %7073 = vst.msk [vmem:[#allocation2] sm:$0x3] %vm7072, %v7067
    // Predicated region
    $region38: #{convnet_forward.5} parent=1 // pred_check
      _
    $region39: #{convnet_forward.5} parent=1 // pred_check_branch
      %7075 = sbr.rel (0) target = $region41
    $region40: #{convnet_forward.5} parent=1 // pred_region
      %s7077 = ssub.s32 32, 32
      %7078 = vsyncadd [#allocation3], %s7077
      %s7080 = sshll.u32 [#allocation2], 4
      %s7081 = int_to_ptr.vmem [resolvable:$true] %s7080
      %7083 = dma.vmem_to_hbm [thread:$0]  %s7081, 32, %s9, [#allocation3]
    $region41: #{convnet_forward.5} parent=1 // pred_fallthru
      _
    // Predicated region
    $region42: #{convnet_forward.5} parent=1 // pred_check
      _
    $region43: #{convnet_forward.5} parent=1 // pred_check_branch
      %7085 = sbr.rel (0) target = $region45
    $region44: #{convnet_forward.5} parent=1 // pred_region
      %7086 = dma.done [#allocation3], 32
    $region45: #{convnet_forward.5} parent=1 // pred_fallthru
      _
    %7087 = vsyncpa [#allocation3], 1

</llo_original>
